<compile_context>
chip_gen: v6e
topology: v6e:2x2x1
jax: 0.10.0
libtpu: 0.0.40
codegen_flags: <defaults>
</compile_context>

<pallas_src>
import math

import jax
import jax.numpy as jnp
from jax.experimental import pallas as pl
from jax.experimental.pallas import tpu as pltpu


def _bayer2rgb_kernel(x_ref, xh_ref, w2_ref, o_ref):
    # x_ref : (1, 4, TH, W)  VMEM  current row-tile of the Bayer input
    # xh_ref: (1, 4, 8,  W)  VMEM  next 8-row group; row 0 is the bottom halo row
    # w2_ref: (81,)          SMEM  flattened (3, 3, 3, 3) = (ci, co, kh, kw)
    # o_ref : (1, 3, TH, 4W) VMEM  o[0, co, i, a*2W + q] == out[co, 2*(i0+i)+a, q]
    TH, W = x_ref.shape[2], x_ref.shape[3]
    h = pl.program_id(1)
    is_last = h == (pl.num_programs(1) - 1)

    x = x_ref[0].astype(jnp.float32)                    # (4, TH, W)
    xh = xh_ref[0, :, 0:1, :].astype(jnp.float32)       # (4, 1, W) halo row
    # Halo is only valid for interior tiles; at the true bottom border it is zero.
    xh = jnp.where(is_last, jnp.zeros_like(xh), xh)

    def w2(ci, co, kh, kw):
        return w2_ref[((ci * 3 + co) * 3 + kh) * 3 + kw]

    # ---- l1: fixed 1x1 conv, hardcoded (9 of 12 weights are zero) ----
    ys = [x[2], 0.5 * (x[0] + x[3]), x[1]]              # (TH, W) each
    yhs = [xh[2], 0.5 * (xh[0] + xh[3]), xh[1]]         # (1, W)  each

    # Shifted taps needed by the transposed conv (right/bottom neighbors).
    zcol = jnp.zeros((TH, 1), jnp.float32)
    taps = []
    for ci in range(3):
        y = ys[ci]
        y_d = jnp.concatenate([y[1:, :], yhs[ci]], axis=0)    # y[i+1, j]
        y_r = jnp.concatenate([y[:, 1:], zcol], axis=1)       # y[i,   j+1]
        y_dr = jnp.concatenate([y_d[:, 1:], zcol], axis=1)    # y[i+1, j+1]
        taps.append((y, y_r, y_d, y_dr))

    # Lane-interleave matrices: E_even[j, 2j] = 1, E_odd[j, 2j+1] = 1.
    jj = jax.lax.broadcasted_iota(jnp.int32, (W, 2 * W), 0)
    qq = jax.lax.broadcasted_iota(jnp.int32, (W, 2 * W), 1)
    e_even = (qq == 2 * jj).astype(jnp.float32)
    e_odd = (qq == 2 * jj + 1).astype(jnp.float32)

    def interleave(a, b):
        # (TH, W), (TH, W) -> (TH, 2W): even lanes from a, odd lanes from b.
        # Done on the otherwise-idle MXU; HIGHEST keeps it (essentially) exact.
        return (jnp.dot(a, e_even, preferred_element_type=jnp.float32,
                        precision=jax.lax.Precision.HIGHEST)
                + jnp.dot(b, e_odd, preferred_element_type=jnp.float32,
                          precision=jax.lax.Precision.HIGHEST))

    # ---- l2: ConvTranspose2d(3,3,k=3,s=2,p=1,output_padding=1) ----
    # out[co, 2i+a, 2j+b]; (a, b) parity selects the contributing 3x3 taps.
    for co in range(3):
        s_ee = jnp.zeros((TH, W), jnp.float32)
        s_eo = jnp.zeros((TH, W), jnp.float32)
        s_oe = jnp.zeros((TH, W), jnp.float32)
        s_oo = jnp.zeros((TH, W), jnp.float32)
        for ci in range(3):
            y, y_r, y_d, y_dr = taps[ci]
            s_ee = s_ee + y * w2(ci, co, 1, 1)
            s_eo = s_eo + y_r * w2(ci, co, 1, 0) + y * w2(ci, co, 1, 2)
            s_oe = s_oe + y_d * w2(ci, co, 0, 1) + y * w2(ci, co, 2, 1)
            s_oo = (s_oo
                    + y_dr * w2(ci, co, 0, 0) + y_d * w2(ci, co, 0, 2)
                    + y_r * w2(ci, co, 2, 0) + y * w2(ci, co, 2, 2))
        row_e = interleave(s_ee, s_eo)            # (TH, 2W): output rows 2i
        row_o = interleave(s_oe, s_oo)            # (TH, 2W): output rows 2i+1
        # (TH, 4W) slab; [.., :2W] = even rows, [.., 2W:] = odd rows.  Lane-dense store.
        o_ref[0, co] = jnp.concatenate([row_e, row_o], axis=-1)


def _pick_block_h(H, W):
    """Largest multiple-of-8 divisor of H that keeps blocks comfortably in VMEM."""
    cap = max(8, min(H, 256, (4 * 1024 * 1024) // (64 * max(W, 1))))
    cap -= cap % 8
    for cand in range(cap, 7, -8):
        if H % cand == 0:
            return cand
    return H


def bayer2rgb_forward(x, w2, *, block_h=None):
    """x: (N, 4, H, W) -> (N, 3, 2H, 2W) f32 (NCHW)."""
    N, C, H, W = x.shape
    assert C == 4, "input must have 4 Bayer channels"
    assert H % 8 == 0, "H must be a multiple of 8"
    if block_h is None:
        block_h = _pick_block_h(H, W)
    assert H % block_h == 0 and block_h % 8 == 0, "block_h must divide H and be a multiple of 8"
    th = block_h
    hb = H // th
    w2f = jnp.asarray(w2, jnp.float32).reshape(-1)      # (81,)

    out4w = pl.pallas_call(
        _bayer2rgb_kernel,
        out_shape=jax.ShapeDtypeStruct((N, 3, H, 4 * W), jnp.float32),
        grid=(N, hb),
        in_specs=[
            # current row-tile
            pl.BlockSpec((1, 4, th, W), lambda n, h: (n, 0, h, 0)),
            # next 8-row group (row 0 = bottom halo); clamped at the last tile
            pl.BlockSpec((1, 4, 8, W),
                         lambda n, h: (n, 0,
                                       jnp.minimum((h + 1) * (th // 8), H // 8 - 1),
                                       0)),
            # l2 weights as SMEM scalars
            pl.BlockSpec(memory_space=pltpu.MemorySpace.SMEM),
        ],
        out_specs=pl.BlockSpec((1, 3, th, 4 * W), lambda n, h: (n, 0, h, 0)),
        compiler_params=pltpu.CompilerParams(
            dimension_semantics=("parallel", "parallel"),
            vmem_limit_bytes=48 * 1024 * 1024),
    )(x, x, w2f)

    # Free (bitcast) view: (N, 3, H, 4W) and (N, 3, 2H, 2W) have identical layout.
    return out4w.reshape(N, 3, 2 * H, 2 * W)


def _reference(x, w2):
    """Pure-JAX reference: fixed 1x1 conv followed by transposed conv."""
    w1 = jnp.array([[0.0, 0.0, 1.0, 0.0],
                    [0.5, 0.0, 0.0, 0.5],
                    [0.0, 1.0, 0.0, 0.0]], dtype=jnp.float32)
    y = jnp.einsum('oc,nchw->nohw', w1, x.astype(jnp.float32),
                   precision=jax.lax.Precision.HIGHEST)
    # transposed conv == conv with lhs_dilation=stride, flipped kernel, swapped ci/co,
    # padding (k-1-p, k-1-p+output_padding) = (1, 2)
    w_conv = jnp.transpose(jnp.flip(w2, axis=(2, 3)), (1, 0, 2, 3))  # (co, ci, kh, kw)
    return jax.lax.conv_general_dilated(
        y, w_conv,
        window_strides=(1, 1),
        padding=((1, 2), (1, 2)),
        lhs_dilation=(2, 2),
        dimension_numbers=('NCHW', 'OIHW', 'NCHW'),
        precision=jax.lax.Precision.HIGHEST)


if __name__ == "__main__":
    key = jax.random.PRNGKey(0)
    k_x, k_w2 = jax.random.split(key)

    N, H, W = 2, 48, 64
    x = jax.random.normal(k_x, (N, 4, H, W), dtype=jnp.float32)

    # l2 weights: deterministic PyTorch-style uniform init,
    # ConvTranspose2d weight shape (in=3, out=3, kH=3, kW=3)
    bound = 1.0 / math.sqrt(3 * 3 * 3)
    w2 = jax.random.uniform(k_w2, (3, 3, 3, 3), dtype=jnp.float32,
                            minval=-bound, maxval=bound)

    ref = _reference(x, w2)

    # Multi-tile path (exercises the bottom-halo fetch and last-tile masking).
    out = jax.block_until_ready(bayer2rgb_forward(x, w2, block_h=16))
    assert out.shape == (N, 3, 2 * H, 2 * W), out.shape
    if not bool(jnp.allclose(out, ref, atol=5e-3, rtol=5e-3)):
        raise AssertionError("Pallas kernel (block_h=16) does not match reference")

    # Auto-tiled path.
    out_auto = jax.block_until_ready(bayer2rgb_forward(x, w2))
    if not bool(jnp.allclose(out_auto, ref, atol=5e-3, rtol=5e-3)):
        raise AssertionError("Pallas kernel (auto block) does not match reference")

    print("KERNEL_OK")
</pallas_src>

<mosaic_0001>
module attributes {stable_mosaic.version = 11 : i64} {
  func.func @_bayer2rgb_kernel(%arg0: i32, %arg1: i32, %arg2: memref<1x4x16x64xf32, #tpu.memory_space<vmem>>, %arg3: memref<1x4x8x64xf32, #tpu.memory_space<vmem>>, %arg4: memref<81xf32, #tpu.memory_space<smem>>, %arg5: memref<1x3x16x256xf32, #tpu.memory_space<vmem>>) attributes {dimension_semantics = [#tpu.dimension_semantics<parallel>, #tpu.dimension_semantics<parallel>], iteration_bounds = array<i64: 2, 3>, scalar_prefetch = 0 : i64, scratch_operands = 0 : i64, tpu.core_type = #tpu.core_type<tc>, window_params = [{transform_indices = @transform_0, window_bounds = array<i64: 1, 4, 16, 64>}, {transform_indices = @transform_1, window_bounds = array<i64: 1, 4, 8, 64>}, {transform_indices = @transform_2, window_bounds = array<i64: 81>}, {transform_indices = @transform_3, window_bounds = array<i64: 1, 3, 16, 256>}]} {
    %c2_i32 = arith.constant 2 : i32
    %0 = arith.cmpi eq, %arg1, %c2_i32 : i32
    %c0 = arith.constant 0 : index
    %c0_0 = arith.constant 0 : index
    %c0_1 = arith.constant 0 : index
    %c0_2 = arith.constant 0 : index
    %1 = vector.load %arg2[%c0, %c0_0, %c0_1, %c0_2] : memref<1x4x16x64xf32, #tpu.memory_space<vmem>>, vector<1x4x16x64xf32>
    %2 = vector.shape_cast %1 : vector<1x4x16x64xf32> to vector<4x16x64xf32>
    %c0_3 = arith.constant 0 : index
    %c0_4 = arith.constant 0 : index
    %c0_5 = arith.constant 0 : index
    %c0_6 = arith.constant 0 : index
    %3 = vector.load %arg3[%c0_3, %c0_4, %c0_5, %c0_6] : memref<1x4x8x64xf32, #tpu.memory_space<vmem>>, vector<1x4x1x64xf32>
    %4 = vector.shape_cast %3 : vector<1x4x1x64xf32> to vector<4x1x64xf32>
    %cst = arith.constant 0.000000e+00 : f32
    %5 = vector.broadcast %cst : f32 to vector<4x1x64xf32>
    %6 = arith.select %0, %5, %4 : vector<4x1x64xf32>
    %7 = vector.extract_strided_slice %2 {offsets = [2, 0, 0], sizes = [1, 16, 64], strides = [1, 1, 1]} : vector<4x16x64xf32> to vector<1x16x64xf32>
    %8 = vector.shape_cast %7 : vector<1x16x64xf32> to vector<16x64xf32>
    %9 = vector.extract_strided_slice %2 {offsets = [0, 0, 0], sizes = [1, 16, 64], strides = [1, 1, 1]} : vector<4x16x64xf32> to vector<1x16x64xf32>
    %10 = vector.shape_cast %9 : vector<1x16x64xf32> to vector<16x64xf32>
    %11 = vector.extract_strided_slice %2 {offsets = [3, 0, 0], sizes = [1, 16, 64], strides = [1, 1, 1]} : vector<4x16x64xf32> to vector<1x16x64xf32>
    %12 = vector.shape_cast %11 : vector<1x16x64xf32> to vector<16x64xf32>
    %13 = arith.addf %10, %12 : vector<16x64xf32>
    %cst_7 = arith.constant 5.000000e-01 : f32
    %14 = vector.broadcast %cst_7 : f32 to vector<16x64xf32>
    %15 = arith.mulf %14, %13 : vector<16x64xf32>
    %16 = vector.extract_strided_slice %2 {offsets = [1, 0, 0], sizes = [1, 16, 64], strides = [1, 1, 1]} : vector<4x16x64xf32> to vector<1x16x64xf32>
    %17 = vector.shape_cast %16 : vector<1x16x64xf32> to vector<16x64xf32>
    %18 = vector.extract_strided_slice %6 {offsets = [2, 0, 0], sizes = [1, 1, 64], strides = [1, 1, 1]} : vector<4x1x64xf32> to vector<1x1x64xf32>
    %19 = vector.shape_cast %18 : vector<1x1x64xf32> to vector<1x64xf32>
    %20 = vector.extract_strided_slice %6 {offsets = [0, 0, 0], sizes = [1, 1, 64], strides = [1, 1, 1]} : vector<4x1x64xf32> to vector<1x1x64xf32>
    %21 = vector.shape_cast %20 : vector<1x1x64xf32> to vector<1x64xf32>
    %22 = vector.extract_strided_slice %6 {offsets = [3, 0, 0], sizes = [1, 1, 64], strides = [1, 1, 1]} : vector<4x1x64xf32> to vector<1x1x64xf32>
    %23 = vector.shape_cast %22 : vector<1x1x64xf32> to vector<1x64xf32>
    %24 = arith.addf %21, %23 : vector<1x64xf32>
    %cst_8 = arith.constant 5.000000e-01 : f32
    %25 = vector.broadcast %cst_8 : f32 to vector<1x64xf32>
    %26 = arith.mulf %25, %24 : vector<1x64xf32>
    %27 = vector.extract_strided_slice %6 {offsets = [1, 0, 0], sizes = [1, 1, 64], strides = [1, 1, 1]} : vector<4x1x64xf32> to vector<1x1x64xf32>
    %28 = vector.shape_cast %27 : vector<1x1x64xf32> to vector<1x64xf32>
    %cst_9 = arith.constant 0.000000e+00 : f32
    %29 = vector.broadcast %cst_9 : f32 to vector<16x1xf32>
    %30 = vector.extract_strided_slice %8 {offsets = [1, 0], sizes = [15, 64], strides = [1, 1]} : vector<16x64xf32> to vector<15x64xf32>
    %31 = tpu.concatenate %30, %19 in 0 : vector<15x64xf32>, vector<1x64xf32> -> vector<16x64xf32>
    %32 = vector.extract_strided_slice %8 {offsets = [0, 1], sizes = [16, 63], strides = [1, 1]} : vector<16x64xf32> to vector<16x63xf32>
    %33 = tpu.concatenate %32, %29 in 1 : vector<16x63xf32>, vector<16x1xf32> -> vector<16x64xf32>
    %34 = vector.extract_strided_slice %31 {offsets = [0, 1], sizes = [16, 63], strides = [1, 1]} : vector<16x64xf32> to vector<16x63xf32>
    %35 = tpu.concatenate %34, %29 in 1 : vector<16x63xf32>, vector<16x1xf32> -> vector<16x64xf32>
    %36 = vector.extract_strided_slice %15 {offsets = [1, 0], sizes = [15, 64], strides = [1, 1]} : vector<16x64xf32> to vector<15x64xf32>
    %37 = tpu.concatenate %36, %26 in 0 : vector<15x64xf32>, vector<1x64xf32> -> vector<16x64xf32>
    %38 = vector.extract_strided_slice %15 {offsets = [0, 1], sizes = [16, 63], strides = [1, 1]} : vector<16x64xf32> to vector<16x63xf32>
    %39 = tpu.concatenate %38, %29 in 1 : vector<16x63xf32>, vector<16x1xf32> -> vector<16x64xf32>
    %40 = vector.extract_strided_slice %37 {offsets = [0, 1], sizes = [16, 63], strides = [1, 1]} : vector<16x64xf32> to vector<16x63xf32>
    %41 = tpu.concatenate %40, %29 in 1 : vector<16x63xf32>, vector<16x1xf32> -> vector<16x64xf32>
    %42 = vector.extract_strided_slice %17 {offsets = [1, 0], sizes = [15, 64], strides = [1, 1]} : vector<16x64xf32> to vector<15x64xf32>
    %43 = tpu.concatenate %42, %28 in 0 : vector<15x64xf32>, vector<1x64xf32> -> vector<16x64xf32>
    %44 = vector.extract_strided_slice %17 {offsets = [0, 1], sizes = [16, 63], strides = [1, 1]} : vector<16x64xf32> to vector<16x63xf32>
    %45 = tpu.concatenate %44, %29 in 1 : vector<16x63xf32>, vector<16x1xf32> -> vector<16x64xf32>
    %46 = vector.extract_strided_slice %43 {offsets = [0, 1], sizes = [16, 63], strides = [1, 1]} : vector<16x64xf32> to vector<16x63xf32>
    %47 = tpu.concatenate %46, %29 in 1 : vector<16x63xf32>, vector<16x1xf32> -> vector<16x64xf32>
    %48 = tpu.iota {dimensions = array<i32: 0>} : vector<64x128xi32>
    %49 = tpu.iota {dimensions = array<i32: 1>} : vector<64x128xi32>
    %c2_i32_10 = arith.constant 2 : i32
    %50 = vector.broadcast %c2_i32_10 : i32 to vector<64x128xi32>
    %51 = arith.muli %50, %48 : vector<64x128xi32>
    %52 = arith.cmpi eq, %49, %51 : vector<64x128xi32>
    %53 = arith.extui %52 : vector<64x128xi1> to vector<64x128xi32>
    %54 = arith.sitofp %53 : vector<64x128xi32> to vector<64x128xf32>
    %c2_i32_11 = arith.constant 2 : i32
    %55 = vector.broadcast %c2_i32_11 : i32 to vector<64x128xi32>
    %56 = arith.muli %55, %48 : vector<64x128xi32>
    %c1_i32 = arith.constant 1 : i32
    %57 = vector.broadcast %c1_i32 : i32 to vector<64x128xi32>
    %58 = arith.addi %56, %57 : vector<64x128xi32>
    %59 = arith.cmpi eq, %49, %58 : vector<64x128xi32>
    %60 = arith.extui %59 : vector<64x128xi1> to vector<64x128xi32>
    %61 = arith.sitofp %60 : vector<64x128xi32> to vector<64x128xf32>
    %cst_12 = arith.constant 0.000000e+00 : f32
    %62 = vector.broadcast %cst_12 : f32 to vector<16x64xf32>
    %cst_13 = arith.constant 0.000000e+00 : f32
    %63 = vector.broadcast %cst_13 : f32 to vector<16x64xf32>
    %cst_14 = arith.constant 0.000000e+00 : f32
    %64 = vector.broadcast %cst_14 : f32 to vector<16x64xf32>
    %cst_15 = arith.constant 0.000000e+00 : f32
    %65 = vector.broadcast %cst_15 : f32 to vector<16x64xf32>
    %c4 = arith.constant 4 : index
    %66 = memref.load %arg4[%c4] : memref<81xf32, #tpu.memory_space<smem>>
    %67 = vector.broadcast %66 : f32 to vector<16x64xf32>
    %68 = arith.mulf %8, %67 : vector<16x64xf32>
    %69 = arith.addf %62, %68 : vector<16x64xf32>
    %c3 = arith.constant 3 : index
    %70 = memref.load %arg4[%c3] : memref<81xf32, #tpu.memory_space<smem>>
    %71 = vector.broadcast %70 : f32 to vector<16x64xf32>
    %72 = arith.mulf %33, %71 : vector<16x64xf32>
    %73 = arith.addf %63, %72 : vector<16x64xf32>
    %c5 = arith.constant 5 : index
    %74 = memref.load %arg4[%c5] : memref<81xf32, #tpu.memory_space<smem>>
    %75 = vector.broadcast %74 : f32 to vector<16x64xf32>
    %76 = arith.mulf %8, %75 : vector<16x64xf32>
    %77 = arith.addf %73, %76 : vector<16x64xf32>
    %c1 = arith.constant 1 : index
    %78 = memref.load %arg4[%c1] : memref<81xf32, #tpu.memory_space<smem>>
    %79 = vector.broadcast %78 : f32 to vector<16x64xf32>
    %80 = arith.mulf %31, %79 : vector<16x64xf32>
    %81 = arith.addf %64, %80 : vector<16x64xf32>
    %c7 = arith.constant 7 : index
    %82 = memref.load %arg4[%c7] : memref<81xf32, #tpu.memory_space<smem>>
    %83 = vector.broadcast %82 : f32 to vector<16x64xf32>
    %84 = arith.mulf %8, %83 : vector<16x64xf32>
    %85 = arith.addf %81, %84 : vector<16x64xf32>
    %c0_16 = arith.constant 0 : index
    %86 = memref.load %arg4[%c0_16] : memref<81xf32, #tpu.memory_space<smem>>
    %87 = vector.broadcast %86 : f32 to vector<16x64xf32>
    %88 = arith.mulf %35, %87 : vector<16x64xf32>
    %89 = arith.addf %65, %88 : vector<16x64xf32>
    %c2 = arith.constant 2 : index
    %90 = memref.load %arg4[%c2] : memref<81xf32, #tpu.memory_space<smem>>
    %91 = vector.broadcast %90 : f32 to vector<16x64xf32>
    %92 = arith.mulf %31, %91 : vector<16x64xf32>
    %93 = arith.addf %89, %92 : vector<16x64xf32>
    %c6 = arith.constant 6 : index
    %94 = memref.load %arg4[%c6] : memref<81xf32, #tpu.memory_space<smem>>
    %95 = vector.broadcast %94 : f32 to vector<16x64xf32>
    %96 = arith.mulf %33, %95 : vector<16x64xf32>
    %97 = arith.addf %93, %96 : vector<16x64xf32>
    %c8 = arith.constant 8 : index
    %98 = memref.load %arg4[%c8] : memref<81xf32, #tpu.memory_space<smem>>
    %99 = vector.broadcast %98 : f32 to vector<16x64xf32>
    %100 = arith.mulf %8, %99 : vector<16x64xf32>
    %101 = arith.addf %97, %100 : vector<16x64xf32>
    %c31 = arith.constant 31 : index
    %102 = memref.load %arg4[%c31] : memref<81xf32, #tpu.memory_space<smem>>
    %103 = vector.broadcast %102 : f32 to vector<16x64xf32>
    %104 = arith.mulf %15, %103 : vector<16x64xf32>
    %105 = arith.addf %69, %104 : vector<16x64xf32>
    %c30 = arith.constant 30 : index
    %106 = memref.load %arg4[%c30] : memref<81xf32, #tpu.memory_space<smem>>
    %107 = vector.broadcast %106 : f32 to vector<16x64xf32>
    %108 = arith.mulf %39, %107 : vector<16x64xf32>
    %109 = arith.addf %77, %108 : vector<16x64xf32>
    %c32 = arith.constant 32 : index
    %110 = memref.load %arg4[%c32] : memref<81xf32, #tpu.memory_space<smem>>
    %111 = vector.broadcast %110 : f32 to vector<16x64xf32>
    %112 = arith.mulf %15, %111 : vector<16x64xf32>
    %113 = arith.addf %109, %112 : vector<16x64xf32>
    %c28 = arith.constant 28 : index
    %114 = memref.load %arg4[%c28] : memref<81xf32, #tpu.memory_space<smem>>
    %115 = vector.broadcast %114 : f32 to vector<16x64xf32>
    %116 = arith.mulf %37, %115 : vector<16x64xf32>
    %117 = arith.addf %85, %116 : vector<16x64xf32>
    %c34 = arith.constant 34 : index
    %118 = memref.load %arg4[%c34] : memref<81xf32, #tpu.memory_space<smem>>
    %119 = vector.broadcast %118 : f32 to vector<16x64xf32>
    %120 = arith.mulf %15, %119 : vector<16x64xf32>
    %121 = arith.addf %117, %120 : vector<16x64xf32>
    %c27 = arith.constant 27 : index
    %122 = memref.load %arg4[%c27] : memref<81xf32, #tpu.memory_space<smem>>
    %123 = vector.broadcast %122 : f32 to vector<16x64xf32>
    %124 = arith.mulf %41, %123 : vector<16x64xf32>
    %125 = arith.addf %101, %124 : vector<16x64xf32>
    %c29 = arith.constant 29 : index
    %126 = memref.load %arg4[%c29] : memref<81xf32, #tpu.memory_space<smem>>
    %127 = vector.broadcast %126 : f32 to vector<16x64xf32>
    %128 = arith.mulf %37, %127 : vector<16x64xf32>
    %129 = arith.addf %125, %128 : vector<16x64xf32>
    %c33 = arith.constant 33 : index
    %130 = memref.load %arg4[%c33] : memref<81xf32, #tpu.memory_space<smem>>
    %131 = vector.broadcast %130 : f32 to vector<16x64xf32>
    %132 = arith.mulf %39, %131 : vector<16x64xf32>
    %133 = arith.addf %129, %132 : vector<16x64xf32>
    %c35 = arith.constant 35 : index
    %134 = memref.load %arg4[%c35] : memref<81xf32, #tpu.memory_space<smem>>
    %135 = vector.broadcast %134 : f32 to vector<16x64xf32>
    %136 = arith.mulf %15, %135 : vector<16x64xf32>
    %137 = arith.addf %133, %136 : vector<16x64xf32>
    %c58 = arith.constant 58 : index
    %138 = memref.load %arg4[%c58] : memref<81xf32, #tpu.memory_space<smem>>
    %139 = vector.broadcast %138 : f32 to vector<16x64xf32>
    %140 = arith.mulf %17, %139 : vector<16x64xf32>
    %141 = arith.addf %105, %140 : vector<16x64xf32>
    %c57 = arith.constant 57 : index
    %142 = memref.load %arg4[%c57] : memref<81xf32, #tpu.memory_space<smem>>
    %143 = vector.broadcast %142 : f32 to vector<16x64xf32>
    %144 = arith.mulf %45, %143 : vector<16x64xf32>
    %145 = arith.addf %113, %144 : vector<16x64xf32>
    %c59 = arith.constant 59 : index
    %146 = memref.load %arg4[%c59] : memref<81xf32, #tpu.memory_space<smem>>
    %147 = vector.broadcast %146 : f32 to vector<16x64xf32>
    %148 = arith.mulf %17, %147 : vector<16x64xf32>
    %149 = arith.addf %145, %148 : vector<16x64xf32>
    %c55 = arith.constant 55 : index
    %150 = memref.load %arg4[%c55] : memref<81xf32, #tpu.memory_space<smem>>
    %151 = vector.broadcast %150 : f32 to vector<16x64xf32>
    %152 = arith.mulf %43, %151 : vector<16x64xf32>
    %153 = arith.addf %121, %152 : vector<16x64xf32>
    %c61 = arith.constant 61 : index
    %154 = memref.load %arg4[%c61] : memref<81xf32, #tpu.memory_space<smem>>
    %155 = vector.broadcast %154 : f32 to vector<16x64xf32>
    %156 = arith.mulf %17, %155 : vector<16x64xf32>
    %157 = arith.addf %153, %156 : vector<16x64xf32>
    %c54 = arith.constant 54 : index
    %158 = memref.load %arg4[%c54] : memref<81xf32, #tpu.memory_space<smem>>
    %159 = vector.broadcast %158 : f32 to vector<16x64xf32>
    %160 = arith.mulf %47, %159 : vector<16x64xf32>
    %161 = arith.addf %137, %160 : vector<16x64xf32>
    %c56 = arith.constant 56 : index
    %162 = memref.load %arg4[%c56] : memref<81xf32, #tpu.memory_space<smem>>
    %163 = vector.broadcast %162 : f32 to vector<16x64xf32>
    %164 = arith.mulf %43, %163 : vector<16x64xf32>
    %165 = arith.addf %161, %164 : vector<16x64xf32>
    %c60 = arith.constant 60 : index
    %166 = memref.load %arg4[%c60] : memref<81xf32, #tpu.memory_space<smem>>
    %167 = vector.broadcast %166 : f32 to vector<16x64xf32>
    %168 = arith.mulf %45, %167 : vector<16x64xf32>
    %169 = arith.addf %165, %168 : vector<16x64xf32>
    %c62 = arith.constant 62 : index
    %170 = memref.load %arg4[%c62] : memref<81xf32, #tpu.memory_space<smem>>
    %171 = vector.broadcast %170 : f32 to vector<16x64xf32>
    %172 = arith.mulf %17, %171 : vector<16x64xf32>
    %173 = arith.addf %169, %172 : vector<16x64xf32>
    %cst_17 = arith.constant dense<0.000000e+00> : vector<16x128xf32>
    %174 = tpu.matmul %141, %54, %cst_17 {dimension_numbers = #tpu.dot_dimension_numbers<[1], [0], [0], [1], [0, 0, 1, 1], [], []>, precision = #tpu.contract_precision<fp32>} : vector<16x64xf32>, vector<64x128xf32>, vector<16x128xf32> -> vector<16x128xf32>
    %cst_18 = arith.constant dense<0.000000e+00> : vector<16x128xf32>
    %175 = tpu.matmul %149, %61, %cst_18 {dimension_numbers = #tpu.dot_dimension_numbers<[1], [0], [0], [1], [0, 0, 1, 1], [], []>, precision = #tpu.contract_precision<fp32>} : vector<16x64xf32>, vector<64x128xf32>, vector<16x128xf32> -> vector<16x128xf32>
    %176 = arith.addf %174, %175 : vector<16x128xf32>
    %cst_19 = arith.constant dense<0.000000e+00> : vector<16x128xf32>
    %177 = tpu.matmul %157, %54, %cst_19 {dimension_numbers = #tpu.dot_dimension_numbers<[1], [0], [0], [1], [0, 0, 1, 1], [], []>, precision = #tpu.contract_precision<fp32>} : vector<16x64xf32>, vector<64x128xf32>, vector<16x128xf32> -> vector<16x128xf32>
    %cst_20 = arith.constant dense<0.000000e+00> : vector<16x128xf32>
    %178 = tpu.matmul %173, %61, %cst_20 {dimension_numbers = #tpu.dot_dimension_numbers<[1], [0], [0], [1], [0, 0, 1, 1], [], []>, precision = #tpu.contract_precision<fp32>} : vector<16x64xf32>, vector<64x128xf32>, vector<16x128xf32> -> vector<16x128xf32>
    %179 = arith.addf %177, %178 : vector<16x128xf32>
    %180 = tpu.concatenate %176, %179 in 1 : vector<16x128xf32>, vector<16x128xf32> -> vector<16x256xf32>
    %c0_21 = arith.constant 0 : index
    %c0_22 = arith.constant 0 : index
    %c0_23 = arith.constant 0 : index
    %c0_24 = arith.constant 0 : index
    %181 = vector.load %arg5[%c0_21, %c0_22, %c0_23, %c0_24] : memref<1x3x16x256xf32, #tpu.memory_space<vmem>>, vector<1x1x16x256xf32>
    %182 = vector.shape_cast %181 : vector<1x1x16x256xf32> to vector<16x256xf32>
    %183 = vector.shape_cast %180 : vector<16x256xf32> to vector<1x1x16x256xf32>
    tpu.vector_store %arg5[%c0_21, %c0_22, %c0_23, %c0_24], %183 {strides = array<i32>} : memref<1x3x16x256xf32, #tpu.memory_space<vmem>>, vector<1x1x16x256xf32>,
    %cst_25 = arith.constant 0.000000e+00 : f32
    %184 = vector.broadcast %cst_25 : f32 to vector<16x64xf32>
    %cst_26 = arith.constant 0.000000e+00 : f32
    %185 = vector.broadcast %cst_26 : f32 to vector<16x64xf32>
    %cst_27 = arith.constant 0.000000e+00 : f32
    %186 = vector.broadcast %cst_27 : f32 to vector<16x64xf32>
    %cst_28 = arith.constant 0.000000e+00 : f32
    %187 = vector.broadcast %cst_28 : f32 to vector<16x64xf32>
    %c13 = arith.constant 13 : index
    %188 = memref.load %arg4[%c13] : memref<81xf32, #tpu.memory_space<smem>>
    %189 = vector.broadcast %188 : f32 to vector<16x64xf32>
    %190 = arith.mulf %8, %189 : vector<16x64xf32>
    %191 = arith.addf %184, %190 : vector<16x64xf32>
    %c12 = arith.constant 12 : index
    %192 = memref.load %arg4[%c12] : memref<81xf32, #tpu.memory_space<smem>>
    %193 = vector.broadcast %192 : f32 to vector<16x64xf32>
    %194 = arith.mulf %33, %193 : vector<16x64xf32>
    %195 = arith.addf %185, %194 : vector<16x64xf32>
    %c14 = arith.constant 14 : index
    %196 = memref.load %arg4[%c14] : memref<81xf32, #tpu.memory_space<smem>>
    %197 = vector.broadcast %196 : f32 to vector<16x64xf32>
    %198 = arith.mulf %8, %197 : vector<16x64xf32>
    %199 = arith.addf %195, %198 : vector<16x64xf32>
    %c10 = arith.constant 10 : index
    %200 = memref.load %arg4[%c10] : memref<81xf32, #tpu.memory_space<smem>>
    %201 = vector.broadcast %200 : f32 to vector<16x64xf32>
    %202 = arith.mulf %31, %201 : vector<16x64xf32>
    %203 = arith.addf %186, %202 : vector<16x64xf32>
    %c16 = arith.constant 16 : index
    %204 = memref.load %arg4[%c16] : memref<81xf32, #tpu.memory_space<smem>>
    %205 = vector.broadcast %204 : f32 to vector<16x64xf32>
    %206 = arith.mulf %8, %205 : vector<16x64xf32>
    %207 = arith.addf %203, %206 : vector<16x64xf32>
    %c9 = arith.constant 9 : index
    %208 = memref.load %arg4[%c9] : memref<81xf32, #tpu.memory_space<smem>>
    %209 = vector.broadcast %208 : f32 to vector<16x64xf32>
    %210 = arith.mulf %35, %209 : vector<16x64xf32>
    %211 = arith.addf %187, %210 : vector<16x64xf32>
    %c11 = arith.constant 11 : index
    %212 = memref.load %arg4[%c11] : memref<81xf32, #tpu.memory_space<smem>>
    %213 = vector.broadcast %212 : f32 to vector<16x64xf32>
    %214 = arith.mulf %31, %213 : vector<16x64xf32>
    %215 = arith.addf %211, %214 : vector<16x64xf32>
    %c15 = arith.constant 15 : index
    %216 = memref.load %arg4[%c15] : memref<81xf32, #tpu.memory_space<smem>>
    %217 = vector.broadcast %216 : f32 to vector<16x64xf32>
    %218 = arith.mulf %33, %217 : vector<16x64xf32>
    %219 = arith.addf %215, %218 : vector<16x64xf32>
    %c17 = arith.constant 17 : index
    %220 = memref.load %arg4[%c17] : memref<81xf32, #tpu.memory_space<smem>>
    %221 = vector.broadcast %220 : f32 to vector<16x64xf32>
    %222 = arith.mulf %8, %221 : vector<16x64xf32>
    %223 = arith.addf %219, %222 : vector<16x64xf32>
    %c40 = arith.constant 40 : index
    %224 = memref.load %arg4[%c40] : memref<81xf32, #tpu.memory_space<smem>>
    %225 = vector.broadcast %224 : f32 to vector<16x64xf32>
    %226 = arith.mulf %15, %225 : vector<16x64xf32>
    %227 = arith.addf %191, %226 : vector<16x64xf32>
    %c39 = arith.constant 39 : index
    %228 = memref.load %arg4[%c39] : memref<81xf32, #tpu.memory_space<smem>>
    %229 = vector.broadcast %228 : f32 to vector<16x64xf32>
    %230 = arith.mulf %39, %229 : vector<16x64xf32>
    %231 = arith.addf %199, %230 : vector<16x64xf32>
    %c41 = arith.constant 41 : index
    %232 = memref.load %arg4[%c41] : memref<81xf32, #tpu.memory_space<smem>>
    %233 = vector.broadcast %232 : f32 to vector<16x64xf32>
    %234 = arith.mulf %15, %233 : vector<16x64xf32>
    %235 = arith.addf %231, %234 : vector<16x64xf32>
    %c37 = arith.constant 37 : index
    %236 = memref.load %arg4[%c37] : memref<81xf32, #tpu.memory_space<smem>>
    %237 = vector.broadcast %236 : f32 to vector<16x64xf32>
    %238 = arith.mulf %37, %237 : vector<16x64xf32>
    %239 = arith.addf %207, %238 : vector<16x64xf32>
    %c43 = arith.constant 43 : index
    %240 = memref.load %arg4[%c43] : memref<81xf32, #tpu.memory_space<smem>>
    %241 = vector.broadcast %240 : f32 to vector<16x64xf32>
    %242 = arith.mulf %15, %241 : vector<16x64xf32>
    %243 = arith.addf %239, %242 : vector<16x64xf32>
    %c36 = arith.constant 36 : index
    %244 = memref.load %arg4[%c36] : memref<81xf32, #tpu.memory_space<smem>>
    %245 = vector.broadcast %244 : f32 to vector<16x64xf32>
    %246 = arith.mulf %41, %245 : vector<16x64xf32>
    %247 = arith.addf %223, %246 : vector<16x64xf32>
    %c38 = arith.constant 38 : index
    %248 = memref.load %arg4[%c38] : memref<81xf32, #tpu.memory_space<smem>>
    %249 = vector.broadcast %248 : f32 to vector<16x64xf32>
    %250 = arith.mulf %37, %249 : vector<16x64xf32>
    %251 = arith.addf %247, %250 : vector<16x64xf32>
    %c42 = arith.constant 42 : index
    %252 = memref.load %arg4[%c42] : memref<81xf32, #tpu.memory_space<smem>>
    %253 = vector.broadcast %252 : f32 to vector<16x64xf32>
    %254 = arith.mulf %39, %253 : vector<16x64xf32>
    %255 = arith.addf %251, %254 : vector<16x64xf32>
    %c44 = arith.constant 44 : index
    %256 = memref.load %arg4[%c44] : memref<81xf32, #tpu.memory_space<smem>>
    %257 = vector.broadcast %256 : f32 to vector<16x64xf32>
    %258 = arith.mulf %15, %257 : vector<16x64xf32>
    %259 = arith.addf %255, %258 : vector<16x64xf32>
    %c67 = arith.constant 67 : index
    %260 = memref.load %arg4[%c67] : memref<81xf32, #tpu.memory_space<smem>>
    %261 = vector.broadcast %260 : f32 to vector<16x64xf32>
    %262 = arith.mulf %17, %261 : vector<16x64xf32>
    %263 = arith.addf %227, %262 : vector<16x64xf32>
    %c66 = arith.constant 66 : index
    %264 = memref.load %arg4[%c66] : memref<81xf32, #tpu.memory_space<smem>>
    %265 = vector.broadcast %264 : f32 to vector<16x64xf32>
    %266 = arith.mulf %45, %265 : vector<16x64xf32>
    %267 = arith.addf %235, %266 : vector<16x64xf32>
    %c68 = arith.constant 68 : index
    %268 = memref.load %arg4[%c68] : memref<81xf32, #tpu.memory_space<smem>>
    %269 = vector.broadcast %268 : f32 to vector<16x64xf32>
    %270 = arith.mulf %17, %269 : vector<16x64xf32>
    %271 = arith.addf %267, %270 : vector<16x64xf32>
    %c64 = arith.constant 64 : index
    %272 = memref.load %arg4[%c64] : memref<81xf32, #tpu.memory_space<smem>>
    %273 = vector.broadcast %272 : f32 to vector<16x64xf32>
    %274 = arith.mulf %43, %273 : vector<16x64xf32>
    %275 = arith.addf %243, %274 : vector<16x64xf32>
    %c70 = arith.constant 70 : index
    %276 = memref.load %arg4[%c70] : memref<81xf32, #tpu.memory_space<smem>>
    %277 = vector.broadcast %276 : f32 to vector<16x64xf32>
    %278 = arith.mulf %17, %277 : vector<16x64xf32>
    %279 = arith.addf %275, %278 : vector<16x64xf32>
    %c63 = arith.constant 63 : index
    %280 = memref.load %arg4[%c63] : memref<81xf32, #tpu.memory_space<smem>>
    %281 = vector.broadcast %280 : f32 to vector<16x64xf32>
    %282 = arith.mulf %47, %281 : vector<16x64xf32>
    %283 = arith.addf %259, %282 : vector<16x64xf32>
    %c65 = arith.constant 65 : index
    %284 = memref.load %arg4[%c65] : memref<81xf32, #tpu.memory_space<smem>>
    %285 = vector.broadcast %284 : f32 to vector<16x64xf32>
    %286 = arith.mulf %43, %285 : vector<16x64xf32>
    %287 = arith.addf %283, %286 : vector<16x64xf32>
    %c69 = arith.constant 69 : index
    %288 = memref.load %arg4[%c69] : memref<81xf32, #tpu.memory_space<smem>>
    %289 = vector.broadcast %288 : f32 to vector<16x64xf32>
    %290 = arith.mulf %45, %289 : vector<16x64xf32>
    %291 = arith.addf %287, %290 : vector<16x64xf32>
    %c71 = arith.constant 71 : index
    %292 = memref.load %arg4[%c71] : memref<81xf32, #tpu.memory_space<smem>>
    %293 = vector.broadcast %292 : f32 to vector<16x64xf32>
    %294 = arith.mulf %17, %293 : vector<16x64xf32>
    %295 = arith.addf %291, %294 : vector<16x64xf32>
    %cst_29 = arith.constant dense<0.000000e+00> : vector<16x128xf32>
    %296 = tpu.matmul %263, %54, %cst_29 {dimension_numbers = #tpu.dot_dimension_numbers<[1], [0], [0], [1], [0, 0, 1, 1], [], []>, precision = #tpu.contract_precision<fp32>} : vector<16x64xf32>, vector<64x128xf32>, vector<16x128xf32> -> vector<16x128xf32>
    %cst_30 = arith.constant dense<0.000000e+00> : vector<16x128xf32>
    %297 = tpu.matmul %271, %61, %cst_30 {dimension_numbers = #tpu.dot_dimension_numbers<[1], [0], [0], [1], [0, 0, 1, 1], [], []>, precision = #tpu.contract_precision<fp32>} : vector<16x64xf32>, vector<64x128xf32>, vector<16x128xf32> -> vector<16x128xf32>
    %298 = arith.addf %296, %297 : vector<16x128xf32>
    %cst_31 = arith.constant dense<0.000000e+00> : vector<16x128xf32>
    %299 = tpu.matmul %279, %54, %cst_31 {dimension_numbers = #tpu.dot_dimension_numbers<[1], [0], [0], [1], [0, 0, 1, 1], [], []>, precision = #tpu.contract_precision<fp32>} : vector<16x64xf32>, vector<64x128xf32>, vector<16x128xf32> -> vector<16x128xf32>
    %cst_32 = arith.constant dense<0.000000e+00> : vector<16x128xf32>
    %300 = tpu.matmul %295, %61, %cst_32 {dimension_numbers = #tpu.dot_dimension_numbers<[1], [0], [0], [1], [0, 0, 1, 1], [], []>, precision = #tpu.contract_precision<fp32>} : vector<16x64xf32>, vector<64x128xf32>, vector<16x128xf32> -> vector<16x128xf32>
    %301 = arith.addf %299, %300 : vector<16x128xf32>
    %302 = tpu.concatenate %298, %301 in 1 : vector<16x128xf32>, vector<16x128xf32> -> vector<16x256xf32>
    %c0_33 = arith.constant 0 : index
    %c1_34 = arith.constant 1 : index
    %c0_35 = arith.constant 0 : index
    %c0_36 = arith.constant 0 : index
    %303 = vector.load %arg5[%c0_33, %c1_34, %c0_35, %c0_36] : memref<1x3x16x256xf32, #tpu.memory_space<vmem>>, vector<1x1x16x256xf32>
    %304 = vector.shape_cast %303 : vector<1x1x16x256xf32> to vector<16x256xf32>
    %305 = vector.shape_cast %302 : vector<16x256xf32> to vector<1x1x16x256xf32>
    tpu.vector_store %arg5[%c0_33, %c1_34, %c0_35, %c0_36], %305 {strides = array<i32>} : memref<1x3x16x256xf32, #tpu.memory_space<vmem>>, vector<1x1x16x256xf32>,
    %cst_37 = arith.constant 0.000000e+00 : f32
    %306 = vector.broadcast %cst_37 : f32 to vector<16x64xf32>
    %cst_38 = arith.constant 0.000000e+00 : f32
    %307 = vector.broadcast %cst_38 : f32 to vector<16x64xf32>
    %cst_39 = arith.constant 0.000000e+00 : f32
    %308 = vector.broadcast %cst_39 : f32 to vector<16x64xf32>
    %cst_40 = arith.constant 0.000000e+00 : f32
    %309 = vector.broadcast %cst_40 : f32 to vector<16x64xf32>
    %c22 = arith.constant 22 : index
    %310 = memref.load %arg4[%c22] : memref<81xf32, #tpu.memory_space<smem>>
    %311 = vector.broadcast %310 : f32 to vector<16x64xf32>
    %312 = arith.mulf %8, %311 : vector<16x64xf32>
    %313 = arith.addf %306, %312 : vector<16x64xf32>
    %c21 = arith.constant 21 : index
    %314 = memref.load %arg4[%c21] : memref<81xf32, #tpu.memory_space<smem>>
    %315 = vector.broadcast %314 : f32 to vector<16x64xf32>
    %316 = arith.mulf %33, %315 : vector<16x64xf32>
    %317 = arith.addf %307, %316 : vector<16x64xf32>
    %c23 = arith.constant 23 : index
    %318 = memref.load %arg4[%c23] : memref<81xf32, #tpu.memory_space<smem>>
    %319 = vector.broadcast %318 : f32 to vector<16x64xf32>
    %320 = arith.mulf %8, %319 : vector<16x64xf32>
    %321 = arith.addf %317, %320 : vector<16x64xf32>
    %c19 = arith.constant 19 : index
    %322 = memref.load %arg4[%c19] : memref<81xf32, #tpu.memory_space<smem>>
    %323 = vector.broadcast %322 : f32 to vector<16x64xf32>
    %324 = arith.mulf %31, %323 : vector<16x64xf32>
    %325 = arith.addf %308, %324 : vector<16x64xf32>
    %c25 = arith.constant 25 : index
    %326 = memref.load %arg4[%c25] : memref<81xf32, #tpu.memory_space<smem>>
    %327 = vector.broadcast %326 : f32 to vector<16x64xf32>
    %328 = arith.mulf %8, %327 : vector<16x64xf32>
    %329 = arith.addf %325, %328 : vector<16x64xf32>
    %c18 = arith.constant 18 : index
    %330 = memref.load %arg4[%c18] : memref<81xf32, #tpu.memory_space<smem>>
    %331 = vector.broadcast %330 : f32 to vector<16x64xf32>
    %332 = arith.mulf %35, %331 : vector<16x64xf32>
    %333 = arith.addf %309, %332 : vector<16x64xf32>
    %c20 = arith.constant 20 : index
    %334 = memref.load %arg4[%c20] : memref<81xf32, #tpu.memory_space<smem>>
    %335 = vector.broadcast %334 : f32 to vector<16x64xf32>
    %336 = arith.mulf %31, %335 : vector<16x64xf32>
    %337 = arith.addf %333, %336 : vector<16x64xf32>
    %c24 = arith.constant 24 : index
    %338 = memref.load %arg4[%c24] : memref<81xf32, #tpu.memory_space<smem>>
    %339 = vector.broadcast %338 : f32 to vector<16x64xf32>
    %340 = arith.mulf %33, %339 : vector<16x64xf32>
    %341 = arith.addf %337, %340 : vector<16x64xf32>
    %c26 = arith.constant 26 : index
    %342 = memref.load %arg4[%c26] : memref<81xf32, #tpu.memory_space<smem>>
    %343 = vector.broadcast %342 : f32 to vector<16x64xf32>
    %344 = arith.mulf %8, %343 : vector<16x64xf32>
    %345 = arith.addf %341, %344 : vector<16x64xf32>
    %c49 = arith.constant 49 : index
    %346 = memref.load %arg4[%c49] : memref<81xf32, #tpu.memory_space<smem>>
    %347 = vector.broadcast %346 : f32 to vector<16x64xf32>
    %348 = arith.mulf %15, %347 : vector<16x64xf32>
    %349 = arith.addf %313, %348 : vector<16x64xf32>
    %c48 = arith.constant 48 : index
    %350 = memref.load %arg4[%c48] : memref<81xf32, #tpu.memory_space<smem>>
    %351 = vector.broadcast %350 : f32 to vector<16x64xf32>
    %352 = arith.mulf %39, %351 : vector<16x64xf32>
    %353 = arith.addf %321, %352 : vector<16x64xf32>
    %c50 = arith.constant 50 : index
    %354 = memref.load %arg4[%c50] : memref<81xf32, #tpu.memory_space<smem>>
    %355 = vector.broadcast %354 : f32 to vector<16x64xf32>
    %356 = arith.mulf %15, %355 : vector<16x64xf32>
    %357 = arith.addf %353, %356 : vector<16x64xf32>
    %c46 = arith.constant 46 : index
    %358 = memref.load %arg4[%c46] : memref<81xf32, #tpu.memory_space<smem>>
    %359 = vector.broadcast %358 : f32 to vector<16x64xf32>
    %360 = arith.mulf %37, %359 : vector<16x64xf32>
    %361 = arith.addf %329, %360 : vector<16x64xf32>
    %c52 = arith.constant 52 : index
    %362 = memref.load %arg4[%c52] : memref<81xf32, #tpu.memory_space<smem>>
    %363 = vector.broadcast %362 : f32 to vector<16x64xf32>
    %364 = arith.mulf %15, %363 : vector<16x64xf32>
    %365 = arith.addf %361, %364 : vector<16x64xf32>
    %c45 = arith.constant 45 : index
    %366 = memref.load %arg4[%c45] : memref<81xf32, #tpu.memory_space<smem>>
    %367 = vector.broadcast %366 : f32 to vector<16x64xf32>
    %368 = arith.mulf %41, %367 : vector<16x64xf32>
    %369 = arith.addf %345, %368 : vector<16x64xf32>
    %c47 = arith.constant 47 : index
    %370 = memref.load %arg4[%c47] : memref<81xf32, #tpu.memory_space<smem>>
    %371 = vector.broadcast %370 : f32 to vector<16x64xf32>
    %372 = arith.mulf %37, %371 : vector<16x64xf32>
    %373 = arith.addf %369, %372 : vector<16x64xf32>
    %c51 = arith.constant 51 : index
    %374 = memref.load %arg4[%c51] : memref<81xf32, #tpu.memory_space<smem>>
    %375 = vector.broadcast %374 : f32 to vector<16x64xf32>
    %376 = arith.mulf %39, %375 : vector<16x64xf32>
    %377 = arith.addf %373, %376 : vector<16x64xf32>
    %c53 = arith.constant 53 : index
    %378 = memref.load %arg4[%c53] : memref<81xf32, #tpu.memory_space<smem>>
    %379 = vector.broadcast %378 : f32 to vector<16x64xf32>
    %380 = arith.mulf %15, %379 : vector<16x64xf32>
    %381 = arith.addf %377, %380 : vector<16x64xf32>
    %c76 = arith.constant 76 : index
    %382 = memref.load %arg4[%c76] : memref<81xf32, #tpu.memory_space<smem>>
    %383 = vector.broadcast %382 : f32 to vector<16x64xf32>
    %384 = arith.mulf %17, %383 : vector<16x64xf32>
    %385 = arith.addf %349, %384 : vector<16x64xf32>
    %c75 = arith.constant 75 : index
    %386 = memref.load %arg4[%c75] : memref<81xf32, #tpu.memory_space<smem>>
    %387 = vector.broadcast %386 : f32 to vector<16x64xf32>
    %388 = arith.mulf %45, %387 : vector<16x64xf32>
    %389 = arith.addf %357, %388 : vector<16x64xf32>
    %c77 = arith.constant 77 : index
    %390 = memref.load %arg4[%c77] : memref<81xf32, #tpu.memory_space<smem>>
    %391 = vector.broadcast %390 : f32 to vector<16x64xf32>
    %392 = arith.mulf %17, %391 : vector<16x64xf32>
    %393 = arith.addf %389, %392 : vector<16x64xf32>
    %c73 = arith.constant 73 : index
    %394 = memref.load %arg4[%c73] : memref<81xf32, #tpu.memory_space<smem>>
    %395 = vector.broadcast %394 : f32 to vector<16x64xf32>
    %396 = arith.mulf %43, %395 : vector<16x64xf32>
    %397 = arith.addf %365, %396 : vector<16x64xf32>
    %c79 = arith.constant 79 : index
    %398 = memref.load %arg4[%c79] : memref<81xf32, #tpu.memory_space<smem>>
    %399 = vector.broadcast %398 : f32 to vector<16x64xf32>
    %400 = arith.mulf %17, %399 : vector<16x64xf32>
    %401 = arith.addf %397, %400 : vector<16x64xf32>
    %c72 = arith.constant 72 : index
    %402 = memref.load %arg4[%c72] : memref<81xf32, #tpu.memory_space<smem>>
    %403 = vector.broadcast %402 : f32 to vector<16x64xf32>
    %404 = arith.mulf %47, %403 : vector<16x64xf32>
    %405 = arith.addf %381, %404 : vector<16x64xf32>
    %c74 = arith.constant 74 : index
    %406 = memref.load %arg4[%c74] : memref<81xf32, #tpu.memory_space<smem>>
    %407 = vector.broadcast %406 : f32 to vector<16x64xf32>
    %408 = arith.mulf %43, %407 : vector<16x64xf32>
    %409 = arith.addf %405, %408 : vector<16x64xf32>
    %c78 = arith.constant 78 : index
    %410 = memref.load %arg4[%c78] : memref<81xf32, #tpu.memory_space<smem>>
    %411 = vector.broadcast %410 : f32 to vector<16x64xf32>
    %412 = arith.mulf %45, %411 : vector<16x64xf32>
    %413 = arith.addf %409, %412 : vector<16x64xf32>
    %c80 = arith.constant 80 : index
    %414 = memref.load %arg4[%c80] : memref<81xf32, #tpu.memory_space<smem>>
    %415 = vector.broadcast %414 : f32 to vector<16x64xf32>
    %416 = arith.mulf %17, %415 : vector<16x64xf32>
    %417 = arith.addf %413, %416 : vector<16x64xf32>
    %cst_41 = arith.constant dense<0.000000e+00> : vector<16x128xf32>
    %418 = tpu.matmul %385, %54, %cst_41 {dimension_numbers = #tpu.dot_dimension_numbers<[1], [0], [0], [1], [0, 0, 1, 1], [], []>, precision = #tpu.contract_precision<fp32>} : vector<16x64xf32>, vector<64x128xf32>, vector<16x128xf32> -> vector<16x128xf32>
    %cst_42 = arith.constant dense<0.000000e+00> : vector<16x128xf32>
    %419 = tpu.matmul %393, %61, %cst_42 {dimension_numbers = #tpu.dot_dimension_numbers<[1], [0], [0], [1], [0, 0, 1, 1], [], []>, precision = #tpu.contract_precision<fp32>} : vector<16x64xf32>, vector<64x128xf32>, vector<16x128xf32> -> vector<16x128xf32>
    %420 = arith.addf %418, %419 : vector<16x128xf32>
    %cst_43 = arith.constant dense<0.000000e+00> : vector<16x128xf32>
    %421 = tpu.matmul %401, %54, %cst_43 {dimension_numbers = #tpu.dot_dimension_numbers<[1], [0], [0], [1], [0, 0, 1, 1], [], []>, precision = #tpu.contract_precision<fp32>} : vector<16x64xf32>, vector<64x128xf32>, vector<16x128xf32> -> vector<16x128xf32>
    %cst_44 = arith.constant dense<0.000000e+00> : vector<16x128xf32>
    %422 = tpu.matmul %417, %61, %cst_44 {dimension_numbers = #tpu.dot_dimension_numbers<[1], [0], [0], [1], [0, 0, 1, 1], [], []>, precision = #tpu.contract_precision<fp32>} : vector<16x64xf32>, vector<64x128xf32>, vector<16x128xf32> -> vector<16x128xf32>
    %423 = arith.addf %421, %422 : vector<16x128xf32>
    %424 = tpu.concatenate %420, %423 in 1 : vector<16x128xf32>, vector<16x128xf32> -> vector<16x256xf32>
    %c0_45 = arith.constant 0 : index
    %c2_46 = arith.constant 2 : index
    %c0_47 = arith.constant 0 : index
    %c0_48 = arith.constant 0 : index
    %425 = vector.load %arg5[%c0_45, %c2_46, %c0_47, %c0_48] : memref<1x3x16x256xf32, #tpu.memory_space<vmem>>, vector<1x1x16x256xf32>
    %426 = vector.shape_cast %425 : vector<1x1x16x256xf32> to vector<16x256xf32>
    %427 = vector.shape_cast %424 : vector<16x256xf32> to vector<1x1x16x256xf32>
    tpu.vector_store %arg5[%c0_45, %c2_46, %c0_47, %c0_48], %427 {strides = array<i32>} : memref<1x3x16x256xf32, #tpu.memory_space<vmem>>, vector<1x1x16x256xf32>,
    return
  }
  func.func @transform_0(%arg0: i32, %arg1: i32) -> (i32, i32, i32, i32) {
    %c0_i32 = arith.constant 0 : i32
    %c0_i32_0 = arith.constant 0 : i32
    %c0_i32_1 = arith.constant 0 : i32
    return %arg0, %c0_i32, %arg1, %c0_i32_0 : i32, i32, i32, i32
  }
  func.func @transform_1(%arg0: i32, %arg1: i32) -> (i32, i32, i32, i32) {
    %c1_i32 = arith.constant 1 : i32
    %0 = arith.addi %arg1, %c1_i32 : i32
    %c2_i32 = arith.constant 2 : i32
    %1 = arith.muli %0, %c2_i32 : i32
    %c5_i32 = arith.constant 5 : i32
    %2 = arith.minsi %1, %c5_i32 : i32
    %c0_i32 = arith.constant 0 : i32
    %c0_i32_0 = arith.constant 0 : i32
    %c0_i32_1 = arith.constant 0 : i32
    return %arg0, %c0_i32, %2, %c0_i32_0 : i32, i32, i32, i32
  }
  func.func @transform_2(%arg0: i32, %arg1: i32) -> i32 {
    %c0_i32 = arith.constant 0 : i32
    %c0_i32_0 = arith.constant 0 : i32
    return %c0_i32 : i32
  }
  func.func @transform_3(%arg0: i32, %arg1: i32) -> (i32, i32, i32, i32) {
    %c0_i32 = arith.constant 0 : i32
    %c0_i32_0 = arith.constant 0 : i32
    %c0_i32_1 = arith.constant 0 : i32
    return %arg0, %c0_i32, %arg1, %c0_i32_0 : i32, i32, i32, i32
  }
}

</mosaic_0001>

<llo_original>
// kernel: tpu_custom_call.1
$region0: #{tpu_custom_call.1}
  #allocation0 [shape = 'u32[]', space=smem, size = 0x4, offset = 0x4, fixed_abs, tag = 'smem constant byte address 0x4 - core index']
  #allocation1 [shape = 'u32[144,128]{1,0:T(1,128)}', space=vmem, size = 0x12000, scoped, tag = 'internal scratch']
  #allocation10 [shape = 's32[]', space=sflag, size = 0x4, offset = 0, fixed_abs, tag = 'sflag constant byte address 0x0 - dummy sync flag']
  #allocation12 [shape = 's32[]', space=sflag, size = 0x4, offset = 0, fixed_abs, tag = 'sflag constant byte address 0x0 - dummy sync flag']
  %s0 = inlined_call_operand.hbm [shape: f32[2,4,48,64], index: 0, kind: input, shape index: {}]
  %s1 = inlined_call_operand.hbm [shape: f32[2,4,48,64], index: 1, kind: input, shape index: {}]
  %s2 = inlined_call_operand.vmem [shape: f32[81], index: 2, kind: input, shape index: {}]
  %s3 = inlined_call_operand.hbm [shape: f32[2,3,48,256], index: 3, kind: output, shape index: {}]
  %s4 = sld [smem:[#allocation0]]
  $region57: #{tpu_custom_call.1} parent=0
    _
  %s6 = ssub.s32 1, %s4
  %s7 = scalar_select 0, %s6, %s4
  $region1: #{tpu_custom_call.1} parent=0
    #allocation2 [shape = 'u8[65536]{0}', space=vmem, size = 0x10000, scoped, tag = 'input window, operand 0']
    #allocation3 [shape = 's32[2]{0}', space=sflag, size = 0x8, scoped, tag = 'scoped memory for tpu_custom_call.1']
    #allocation4 [shape = 's32[2]{0}', space=sflag, size = 0x8, scoped, tag = 'scoped memory for tpu_custom_call.1']
    #allocation5 [shape = 's32[2]{0}', space=sflag, size = 0x8, scoped, tag = 'scoped memory for tpu_custom_call.1']
    #allocation6 [shape = 'u8[32768]{0}', space=vmem, size = 0x8000, scoped, tag = 'input window, operand 1']
    #allocation7 [shape = 's32[2]{0}', space=sflag, size = 0x8, scoped, tag = 'scoped memory for tpu_custom_call.1']
    #allocation8 [shape = 'u8[512]{0}', space=smem, size = 0x200, scoped, tag = 'input window, operand 2, single buffered']
    #allocation9 [shape = 'u8[98304]{0}', space=vmem, size = 0x18000, scoped, tag = 'output window, operand 0']
    %8 = vsyncpa [#allocation3], 0
    %s9 = scalar_lea.sflag [#allocation3], 1
    %10 = vsyncpa %s9, 0
    %11 = vsyncpa [#allocation7], 0
    %s12 = scalar_lea.sflag [#allocation7], 1
    %13 = vsyncpa %s12, 0
    %14 = vsyncpa [#allocation5], 0
    %15 = vsyncpa [#allocation4], 0
    %s16 = scalar_lea.sflag [#allocation4], 1
    %17 = vsyncpa %s16, 0
    loop: start=0, step=1, limit=8
    $region2: #{tpu_custom_call.1} parent=1 // loop_pre_header
      _
    $region3: #{tpu_custom_call.1} parent=1 // loop_header
      %s19 = sphi 0, %s23
      %p20 = scmp.ge.s32.totalorder %s19, 8
      %s26 = sphi 0, %s38
      %s27 = sphi 0, %s34
      %s28 = sphi 0, %s26
      %s29 = sphi 0, %s27
      %s30 = sphi 0, %s28
      %s31 = sphi 0, %s29
      %s43 = sphi 0, %s45
      %s46 = sphi 0, %s43
      %s47 = sphi 0, %s46
      %s63 = sphi 0, %s47
      %s79 = sphi 0, %s81
      %s82 = sphi 0, %s79
      %s83 = sphi 0, %s82
      %s99 = sphi 0, %s83
      %s103 = sphi 0, %s103
      %s105 = sphi 0, %s103
      %s106 = sphi 0, %s105
      %s120 = sphi 0, %s106
      %s128 = sphi 0, %s130
      %s131 = sphi 0, %s128
      %s132 = sphi 0, %s131
      %s148 = sphi 0, %s132
    $region4: #{tpu_custom_call.1} parent=1 // loop_header_branch
      %22 = sbr.rel (%p20) target = $region8
    $region5: #{tpu_custom_call.1} parent=1 // loop_body
      %s24 = ssub.s32 %s19, 1
      %s25 = ssub.s32 %s19, 2
      %s32 = sadd.s32 1, %s27
      %p33 = scmp.ge.s32.totalorder %s32, 3
      %s34 = scalar_select %p33, 0, %s32
      %s35 = sadd.s32 1, %s26
      %s36 = scalar_select %p33, %s35, %s26
      %p37 = scmp.ge.s32.totalorder %s36, 2
      %s38 = scalar_select %p37, 0, %s36
      %s39 = ssub.s32 %s26, %s38
      %s40 = ssub.s32 %s27, %s34
      %s41 = sor.u32 %s39, %s40
      %p42 = scmp.eq.s32.totalorder %s41, 0
      %s44 = sadd.s32 %s43, 1
      %s45 = scalar_select %p42, %s43, %s44
      %p48 = pneg %p42
      %p49 = scmp.eq.s32.totalorder %s19, 5
      %p50 = por %p48, %p49
      %p51 = scmp.ne.s32.totalorder %s43, %s46
      %p52 = scmp.eq.s32.totalorder %s19, 0
      %p53 = por %p51, %p52
      %p54 = scmp.ne.s32.totalorder %s43, %s46
      %p55 = scmp.eq.s32.totalorder %s24, 5
      %p56 = por %p54, %p55
      %p57 = scmp.ne.s32.totalorder %s46, %s47
      %p58 = scmp.eq.s32.totalorder %s24, 0
      %p59 = por %p57, %p58
      %p60 = scmp.ne.s32.totalorder %s46, %s47
      %p61 = scmp.eq.s32.totalorder %s25, 5
      %p62 = por %p60, %p61
      %p64 = scmp.ne.s32.totalorder %s47, %s63
      %p65 = scmp.eq.s32.totalorder %s25, 0
      %p66 = por %p64, %p65
      %s67 = sadd.s32 %s27, 1
      %s68 = smul.u32 %s67, 2
      %p69 = scmp.lt.s32.totalorder %s68, 5
      %s70 = scalar_select %p69, %s68, 5
      %s71 = sadd.s32 %s34, 1
      %s72 = smul.u32 %s71, 2
      %p73 = scmp.lt.s32.totalorder %s72, 5
      %s74 = scalar_select %p73, %s72, 5
      %s75 = ssub.s32 %s26, %s38
      %s76 = ssub.s32 %s70, %s74
      %s77 = sor.u32 %s75, %s76
      %p78 = scmp.eq.s32.totalorder %s77, 0
      %s80 = sadd.s32 %s79, 1
      %s81 = scalar_select %p78, %s79, %s80
      %p84 = pneg %p78
      %p85 = scmp.eq.s32.totalorder %s19, 5
      %p86 = por %p84, %p85
      %p87 = scmp.ne.s32.totalorder %s79, %s82
      %p88 = scmp.eq.s32.totalorder %s19, 0
      %p89 = por %p87, %p88
      %p90 = scmp.ne.s32.totalorder %s79, %s82
      %p91 = scmp.eq.s32.totalorder %s24, 5
      %p92 = por %p90, %p91
      %p93 = scmp.ne.s32.totalorder %s82, %s83
      %p94 = scmp.eq.s32.totalorder %s24, 0
      %p95 = por %p93, %p94
      %p96 = scmp.ne.s32.totalorder %s82, %s83
      %p97 = scmp.eq.s32.totalorder %s25, 5
      %p98 = por %p96, %p97
      %p100 = scmp.ne.s32.totalorder %s83, %s99
      %p101 = scmp.eq.s32.totalorder %s25, 0
      %p102 = por %p100, %p101
      %s104 = sadd.s32 %s103, 1
      %p107 = scmp.eq.s32.totalorder %s19, 5
      %p108 = scmp.ne.s32.totalorder %s103, %s105
      %p109 = scmp.eq.s32.totalorder %s19, 0
      %p110 = por %p108, %p109
      %p111 = scmp.ne.s32.totalorder %s103, %s105
      %p112 = scmp.eq.s32.totalorder %s24, 5
      %p113 = por %p111, %p112
      %p114 = scmp.ne.s32.totalorder %s105, %s106
      %p115 = scmp.eq.s32.totalorder %s24, 0
      %p116 = por %p114, %p115
      %p117 = scmp.ne.s32.totalorder %s105, %s106
      %p118 = scmp.eq.s32.totalorder %s25, 5
      %p119 = por %p117, %p118
      %p121 = scmp.ne.s32.totalorder %s106, %s120
      %p122 = scmp.eq.s32.totalorder %s25, 0
      %p123 = por %p121, %p122
      %s124 = ssub.s32 %s26, %s38
      %s125 = ssub.s32 %s27, %s34
      %s126 = sor.u32 %s124, %s125
      %p127 = scmp.eq.s32.totalorder %s126, 0
      %s129 = sadd.s32 %s128, 1
      %s130 = scalar_select %p127, %s128, %s129
      %p133 = pneg %p127
      %p134 = scmp.eq.s32.totalorder %s19, 5
      %p135 = por %p133, %p134
      %p136 = scmp.ne.s32.totalorder %s128, %s131
      %p137 = scmp.eq.s32.totalorder %s19, 0
      %p138 = por %p136, %p137
      %p139 = scmp.ne.s32.totalorder %s128, %s131
      %p140 = scmp.eq.s32.totalorder %s24, 5
      %p141 = por %p139, %p140
      %p142 = scmp.ne.s32.totalorder %s131, %s132
      %p143 = scmp.eq.s32.totalorder %s24, 0
      %p144 = por %p142, %p143
      %p145 = scmp.ne.s32.totalorder %s131, %s132
      %p146 = scmp.eq.s32.totalorder %s25, 5
      %p147 = por %p145, %p146
      %p149 = scmp.ne.s32.totalorder %s132, %s148
      %p150 = scmp.eq.s32.totalorder %s25, 0
      %p151 = por %p149, %p150
      %p152 = scmp.le.s32.totalorder 1, %s19
      %p153 = scmp.lt.s32.totalorder %s19, 7
      %p154 = pnand %p152, %p153
      %p155 = pneg %p154
      // Predicated region
      $region9: #{tpu_custom_call.1} parent=5 // pred_check
        _
      $region10: #{tpu_custom_call.1} parent=5 // pred_check_branch
        %157 = sbr.rel (%p154) target = $region12
      $region11: #{tpu_custom_call.1} parent=5 // pred_region
        %s158 = ssub.s32 %s19, 1
        // Predicated region
        $region13: #{tpu_custom_call.1} parent=11 // pred_check
          %p159 = pneg %p116
        $region14: #{tpu_custom_call.1} parent=11 // pred_check_branch
          %161 = sbr.rel (%p159) target = $region16
        $region15: #{tpu_custom_call.1} parent=11 // pred_region
          %s163 = ssub.s32 16, 16
          %164 = vsyncadd [#allocation5], %s163
          %s166 = sshll.u32 %s2, 4
          %s167 = int_to_ptr.vmem [resolvable:$true] %s166
          %169 = dma.vmem_to_smem %s167, 16, [#allocation8], [#allocation5]
        $region16: #{tpu_custom_call.1} parent=11 // pred_fallthru
          _
      $region12: #{tpu_custom_call.1} parent=5 // pred_fallthru
        _
      %p170 = scmp.lt.s32.totalorder %s19, 6
      // Predicated region
      $region17: #{tpu_custom_call.1} parent=5 // pred_check
        %p171 = pneg %p170
      $region18: #{tpu_custom_call.1} parent=5 // pred_check_branch
        %173 = sbr.rel (%p171) target = $region20
      $region19: #{tpu_custom_call.1} parent=5 // pred_region
        // Predicated region
        $region21: #{tpu_custom_call.1} parent=19 // pred_check
          %p174 = pneg %p53
        $region22: #{tpu_custom_call.1} parent=19 // pred_check_branch
          %176 = sbr.rel (%p174) target = $region24
        $region23: #{tpu_custom_call.1} parent=19 // pred_region
          #allocation11 [shape = 'u32[6]{0}', space=smem, size = 0x18, scoped, tag = 'DMA stride descriptor']
          %s177 = sand.u32 %s43, 1
          %s178 = scalar_lea.sflag [#allocation3], %s177
          %s179 = sand.u32 %s43, 1
          %s180 = smul.addr %s179, 64
          %s181 = scalar_lea.vmem [#allocation2], %s180
          %s182 = smul.u32 2, %s27
          %s184 = ssub.s32 1024, 1024
          %185 = vsyncadd %s178, %s184
          %s186 = smul.addr %s26, 24
          %s187 = sadd.s32 %s182, %s186
          %s188 = smul.addr %s187, 128
          %s189 = scalar_lea.hbm %s0, %s188
          %s191 = sshll.u32 1, 14
          %s192 = sxor.u32 4294967295, %s191
          %s194 = sld [smem:[#allocation0]]
          %s195 = sadd.s32 2, %s194
          %s197 = sshll.u32 7, 26
          %s198 = sxor.u32 4294967295, %s197
          %s199 = sand.u32 0, %s198
          %s200 = sshll.u32 %s195, 26
          %s201 = sor.u32 %s199, %s200
          %s202 = sshll.u32 %s181, 4
          %s203 = int_to_ptr.vmem [resolvable:$true] %s202
          %209 = sst [smem:[#allocation11]] 768
          %s210 = scalar_lea.smem [#allocation11], 1
          %211 = sst [smem:[%s210]] 256
          %s212 = scalar_lea.smem [#allocation11], 2
          %213 = sst [smem:[%s212]] 2
          %s214 = scalar_lea.smem [#allocation11], 3
          %215 = sst [smem:[%s214]] 128
          %s216 = scalar_lea.smem [#allocation11], 4
          %217 = sst [smem:[%s216]] 128
          %s218 = scalar_lea.smem [#allocation11], 5
          %219 = sst [smem:[%s218]] 8
          %221 = dma.general %s189, 1024, %s203, %s178, 131072, [#allocation11], %s201, 0
        $region24: #{tpu_custom_call.1} parent=19 // pred_fallthru
          _
        // Predicated region
        $region25: #{tpu_custom_call.1} parent=19 // pred_check
          %p222 = pneg %p89
        $region26: #{tpu_custom_call.1} parent=19 // pred_check_branch
          %224 = sbr.rel (%p222) target = $region28
        $region27: #{tpu_custom_call.1} parent=19 // pred_region
          %s225 = sand.u32 %s79, 1
          %s226 = scalar_lea.sflag [#allocation7], %s225
          %s227 = sand.u32 %s79, 1
          %s228 = smul.addr %s227, 32
          %s229 = scalar_lea.vmem [#allocation6], %s228
          %s230 = sadd.s32 %s27, 1
          %s231 = smul.u32 %s230, 2
          %p232 = scmp.lt.s32.totalorder %s231, 5
          %s233 = scalar_select %p232, %s231, 5
          %s235 = ssub.s32 512, 512
          %236 = vsyncadd %s226, %s235
          %s237 = smul.addr %s26, 24
          %s238 = sadd.s32 %s233, %s237
          %s239 = smul.addr %s238, 128
          %s240 = scalar_lea.hbm %s1, %s239
          %s241 = sshll.u32 %s229, 4
          %s242 = int_to_ptr.vmem [resolvable:$true] %s241
          %247 = dma.hbm_to_vmem [thread:$0]  %s240, 512, %s242, %s226, 768, 128, 8
        $region28: #{tpu_custom_call.1} parent=19 // pred_fallthru
          _
      $region20: #{tpu_custom_call.1} parent=5 // pred_fallthru
        _
      %p248 = scmp.le.s32.totalorder 1, %s19
      %p249 = scmp.lt.s32.totalorder %s19, 7
      %p250 = pnand %p248, %p249
      %p251 = pneg %p250
      // Predicated region
      $region29: #{tpu_custom_call.1} parent=5 // pred_check
        _
      $region30: #{tpu_custom_call.1} parent=5 // pred_check_branch
        %253 = sbr.rel (%p250) target = $region32
      $region31: #{tpu_custom_call.1} parent=5 // pred_region
        %s254 = ssub.s32 %s19, 1
        %s255 = sand.u32 %s46, 1
        %s256 = scalar_lea.sflag [#allocation3], %s255
        %s257 = sand.u32 %s46, 1
        %s258 = smul.addr %s257, 64
        %s259 = scalar_lea.vmem [#allocation2], %s258
        // Predicated region
        $region33: #{tpu_custom_call.1} parent=31 // pred_check
          %p260 = pneg %p59
        $region34: #{tpu_custom_call.1} parent=31 // pred_check_branch
          %262 = sbr.rel (%p260) target = $region36
        $region35: #{tpu_custom_call.1} parent=31 // pred_region
          %263 = dma.done %s256, 1024
        $region36: #{tpu_custom_call.1} parent=31 // pred_fallthru
          _
        %s264 = sand.u32 %s82, 1
        %s265 = scalar_lea.sflag [#allocation7], %s264
        %s266 = sand.u32 %s82, 1
        %s267 = smul.addr %s266, 32
        %s268 = scalar_lea.vmem [#allocation6], %s267
        // Predicated region
        $region37: #{tpu_custom_call.1} parent=31 // pred_check
          %p269 = pneg %p95
        $region38: #{tpu_custom_call.1} parent=31 // pred_check_branch
          %271 = sbr.rel (%p269) target = $region40
        $region39: #{tpu_custom_call.1} parent=31 // pred_region
          %272 = dma.done %s265, 512
        $region40: #{tpu_custom_call.1} parent=31 // pred_fallthru
          _
        // Predicated region
        $region41: #{tpu_custom_call.1} parent=31 // pred_check
          %p273 = pneg %p116
        $region42: #{tpu_custom_call.1} parent=31 // pred_check_branch
          %275 = sbr.rel (%p273) target = $region44
        $region43: #{tpu_custom_call.1} parent=31 // pred_region
          %276 = dma.done [#allocation5], 16
        $region44: #{tpu_custom_call.1} parent=31 // pred_fallthru
          _
        %277 = sfence
        %s278 = sand.u32 %s46, 1
        %s279 = scalar_lea.sflag [#allocation3], %s278
        %s280 = sand.u32 %s46, 1
        %s281 = smul.addr %s280, 64
        %s282 = scalar_lea.vmem [#allocation2], %s281
        %p283 = pneg %p59
        %p284 = pneg %p56
        %s285 = sand.u32 %s82, 1
        %s286 = scalar_lea.sflag [#allocation7], %s285
        %s287 = sand.u32 %s82, 1
        %s288 = smul.addr %s287, 32
        %s289 = scalar_lea.vmem [#allocation6], %s288
        %p290 = pneg %p95
        %p291 = pneg %p92
        %p292 = pneg %p116
        %p293 = pneg %p113
        %p294 = pneg %p144
        %p295 = pneg %p141
        %s296 = sand.u32 %s131, 1
        %s297 = scalar_lea.sflag [#allocation4], %s296
        %s298 = sand.u32 %s131, 1
        %s299 = smul.addr %s298, 96
        %s300 = scalar_lea.vmem [#allocation9], %s299
        %s301 = smul.u32 2, %s29
        %s302 = sadd.s32 %s29, 1
        %s303 = smul.u32 %s302, 2
        %p304 = scmp.lt.s32.totalorder %s303, 5
        %s305 = scalar_select %p304, %s303, 5
        %s306 = smul.u32 2, %s29
        %p307 = scmp.eq.s32.totalorder %s29, 2
        %v308 = vld [vmem:[%s259] sm:$0xff]
        %v309 = vld [vmem:[%s259 + $0x8] sm:$0xff]
        %v310 = vld [vmem:[%s259 + $0x10] sm:$0xff]
        %v311 = vld [vmem:[%s259 + $0x18] sm:$0xff]
        %v312 = vld [vmem:[%s259 + $0x20] sm:$0xff]
        %v313 = vld [vmem:[%s259 + $0x28] sm:$0xff]
        %v314 = vld [vmem:[%s259 + $0x30] sm:$0xff]
        %v315 = vld [vmem:[%s259 + $0x38] sm:$0xff]
        %v316 = vld [vmem:[%s268] sm:$0x1]
        %v317 = vld [vmem:[%s268 + $0x8] sm:$0x1]
        %v318 = vld [vmem:[%s268 + $0x10] sm:$0x1]
        %v319 = vld [vmem:[%s268 + $0x18] sm:$0x1]
        %s320 = scalar_select %p307, 1, 0
        %v321 = vstv %s320
        %vm322 = vcmp.eq.s32.totalorder %v321, 1
        %v323 = vsel %vm322, 0.0, %v316
        %v324 = vsel %vm322, 0.0, %v317
        %v325 = vsel %vm322, 0.0, %v318
        %v326 = vsel %vm322, 0.0, %v319
        %v327 = vadd.f32 %v308, %v314
        %v328 = vadd.f32 %v309, %v315
        %v329 = vmul.f32 %v327, 0.5
        %v330 = vmul.f32 %v328, 0.5
        %v331 = vadd.f32 %v323, %v326
        %v332 = vmul.f32 %v331, 0.5
        %vm335 = vcmask 1046528
        %v336 = vrot.slane %v312, 1
        %v337 = vrot.slane %v313, 1
        %v338 = vsel %vm335, %v336, %v337
        %v342 = vrot.slane %v325, 1
        %v344 = vsel %vm335, %v337, %v342
        %345 = vrot.lane.b32.xlu0 %v312, 127
        %v346 = vpop.permute.xlu0 %345
        %347 = vrot.lane.b32.xlu0 %v313, 127
        %v348 = vpop.permute.xlu0 %347
        %vm351 = vcmask 515072
        %v352 = vsel %vm351, %v346, 0.0
        %v353 = vsel %vm351, %v348, 0.0
        %355 = vrot.lane.b32.xlu0 %v338, 127
        %v356 = vpop.permute.xlu0 %355
        %357 = vrot.lane.b32.xlu0 %v344, 127
        %v358 = vpop.permute.xlu0 %357
        %v361 = vsel %vm351, %v356, 0.0
        %v362 = vsel %vm351, %v358, 0.0
        %v365 = vrot.slane %v329, 1
        %v366 = vrot.slane %v330, 1
        %v367 = vsel %vm335, %v365, %v366
        %v371 = vrot.slane %v332, 1
        %v373 = vsel %vm335, %v366, %v371
        %374 = vrot.lane.b32.xlu0 %v329, 127
        %v375 = vpop.permute.xlu0 %374
        %376 = vrot.lane.b32.xlu0 %v330, 127
        %v377 = vpop.permute.xlu0 %376
        %v380 = vsel %vm351, %v375, 0.0
        %v381 = vsel %vm351, %v377, 0.0
        %383 = vrot.lane.b32.xlu0 %v367, 127
        %v384 = vpop.permute.xlu0 %383
        %385 = vrot.lane.b32.xlu0 %v373, 127
        %v386 = vpop.permute.xlu0 %385
        %v389 = vsel %vm351, %v384, 0.0
        %v390 = vsel %vm351, %v386, 0.0
        %v393 = vrot.slane %v310, 1
        %v394 = vrot.slane %v311, 1
        %v395 = vsel %vm335, %v393, %v394
        %v399 = vrot.slane %v324, 1
        %v401 = vsel %vm335, %v394, %v399
        %402 = vrot.lane.b32.xlu0 %v310, 127
        %v403 = vpop.permute.xlu0 %402
        %404 = vrot.lane.b32.xlu0 %v311, 127
        %v405 = vpop.permute.xlu0 %404
        %v408 = vsel %vm351, %v403, 0.0
        %v409 = vsel %vm351, %v405, 0.0
        %411 = vrot.lane.b32.xlu0 %v395, 127
        %v412 = vpop.permute.xlu0 %411
        %413 = vrot.lane.b32.xlu0 %v401, 127
        %v414 = vpop.permute.xlu0 %413
        %v417 = vsel %vm351, %v412, 0.0
        %v418 = vsel %vm351, %v414, 0.0
        %v419 = vlaneseq
        %v420 = vshrl.u32 %v419, 7
        %v421 = vadd.s32 %v420, 8
        %v422 = vadd.s32 %v420, 16
        %v423 = vadd.s32 %v420, 24
        %v424 = vadd.s32 %v420, 32
        %v425 = vadd.s32 %v420, 40
        %v426 = vadd.s32 %v420, 48
        %v427 = vadd.s32 %v420, 56
        %v428 = vlaneseq
        %v429 = vand.u32 %v428, 127
        %v430 = vmul.u32 %v420, 2
        %v431 = vmul.u32 %v421, 2
        %v432 = vmul.u32 %v422, 2
        %v433 = vmul.u32 %v423, 2
        %v434 = vmul.u32 %v424, 2
        %v435 = vmul.u32 %v425, 2
        %v436 = vmul.u32 %v426, 2
        %v437 = vmul.u32 %v427, 2
        %vm438 = vcmp.eq.s32.totalorder %v429, %v430
        %vm439 = vcmp.eq.s32.totalorder %v429, %v431
        %vm440 = vcmp.eq.s32.totalorder %v429, %v432
        %vm441 = vcmp.eq.s32.totalorder %v429, %v433
        %vm442 = vcmp.eq.s32.totalorder %v429, %v434
        %vm443 = vcmp.eq.s32.totalorder %v429, %v435
        %vm444 = vcmp.eq.s32.totalorder %v429, %v436
        %vm445 = vcmp.eq.s32.totalorder %v429, %v437
        %v446 = vsel %vm438, 1, 0
        %v447 = vsel %vm439, 1, 0
        %v448 = vsel %vm440, 1, 0
        %v449 = vsel %vm441, 1, 0
        %v450 = vsel %vm442, 1, 0
        %v451 = vsel %vm443, 1, 0
        %v452 = vsel %vm444, 1, 0
        %v453 = vsel %vm445, 1, 0
        %v454 = vcvt.s32.f32 %v446
        %v455 = vcvt.s32.f32 %v447
        %v456 = vcvt.s32.f32 %v448
        %v457 = vcvt.s32.f32 %v449
        %v458 = vcvt.s32.f32 %v450
        %v459 = vcvt.s32.f32 %v451
        %v460 = vcvt.s32.f32 %v452
        %v461 = vcvt.s32.f32 %v453
        %v462 = vadd.s32 %v430, 1
        %v463 = vadd.s32 %v431, 1
        %v464 = vadd.s32 %v432, 1
        %v465 = vadd.s32 %v433, 1
        %v466 = vadd.s32 %v434, 1
        %v467 = vadd.s32 %v435, 1
        %v468 = vadd.s32 %v436, 1
        %v469 = vadd.s32 %v437, 1
        %vm470 = vcmp.eq.s32.totalorder %v429, %v462
        %vm471 = vcmp.eq.s32.totalorder %v429, %v463
        %vm472 = vcmp.eq.s32.totalorder %v429, %v464
        %vm473 = vcmp.eq.s32.totalorder %v429, %v465
        %vm474 = vcmp.eq.s32.totalorder %v429, %v466
        %vm475 = vcmp.eq.s32.totalorder %v429, %v467
        %vm476 = vcmp.eq.s32.totalorder %v429, %v468
        %vm477 = vcmp.eq.s32.totalorder %v429, %v469
        %v478 = vsel %vm470, 1, 0
        %v479 = vsel %vm471, 1, 0
        %v480 = vsel %vm472, 1, 0
        %v481 = vsel %vm473, 1, 0
        %v482 = vsel %vm474, 1, 0
        %v483 = vsel %vm475, 1, 0
        %v484 = vsel %vm476, 1, 0
        %v485 = vsel %vm477, 1, 0
        %v486 = vcvt.s32.f32 %v478
        %v487 = vcvt.s32.f32 %v479
        %v488 = vcvt.s32.f32 %v480
        %v489 = vcvt.s32.f32 %v481
        %v490 = vcvt.s32.f32 %v482
        %v491 = vcvt.s32.f32 %v483
        %v492 = vcvt.s32.f32 %v484
        %v493 = vcvt.s32.f32 %v485
        %s494 = sld [smem:[#allocation8 + $0x4]]
        %v495 = vstv %s494
        %v496 = vmul.f32 %v312, %v495
        %v497 = vmul.f32 %v313, %v495
        %v498 = vadd.f32 %v496, 0.0
        %v499 = vadd.f32 %v497, 0.0
        %s500 = sld [smem:[#allocation8 + $0x3]]
        %v501 = vstv %s500
        %v502 = vmul.f32 %v352, %v501
        %v503 = vmul.f32 %v353, %v501
        %v504 = vadd.f32 %v502, 0.0
        %v505 = vadd.f32 %v503, 0.0
        %s506 = sld [smem:[#allocation8 + $0x5]]
        %v507 = vstv %s506
        %v508 = vmul.f32 %v312, %v507
        %v509 = vmul.f32 %v313, %v507
        %v510 = vadd.f32 %v504, %v508
        %v511 = vadd.f32 %v505, %v509
        %s512 = sld [smem:[#allocation8 + $0x1]]
        %v513 = vstv %s512
        %v514 = vmul.f32 %v338, %v513
        %v515 = vmul.f32 %v344, %v513
        %v516 = vadd.f32 %v514, 0.0
        %v517 = vadd.f32 %v515, 0.0
        %s518 = sld [smem:[#allocation8 + $0x7]]
        %v519 = vstv %s518
        %v520 = vmul.f32 %v312, %v519
        %v521 = vmul.f32 %v313, %v519
        %v522 = vadd.f32 %v516, %v520
        %v523 = vadd.f32 %v517, %v521
        %s524 = sld [smem:[#allocation8]]
        %v525 = vstv %s524
        %v526 = vmul.f32 %v361, %v525
        %v527 = vmul.f32 %v362, %v525
        %v528 = vadd.f32 %v526, 0.0
        %v529 = vadd.f32 %v527, 0.0
        %s530 = sld [smem:[#allocation8 + $0x2]]
        %v531 = vstv %s530
        %v532 = vmul.f32 %v338, %v531
        %v533 = vmul.f32 %v344, %v531
        %v534 = vadd.f32 %v528, %v532
        %v535 = vadd.f32 %v529, %v533
        %s536 = sld [smem:[#allocation8 + $0x6]]
        %v537 = vstv %s536
        %v538 = vmul.f32 %v352, %v537
        %v539 = vmul.f32 %v353, %v537
        %v540 = vadd.f32 %v534, %v538
        %v541 = vadd.f32 %v535, %v539
        %s542 = sld [smem:[#allocation8 + $0x8]]
        %v543 = vstv %s542
        %v544 = vmul.f32 %v312, %v543
        %v545 = vmul.f32 %v313, %v543
        %v546 = vadd.f32 %v540, %v544
        %v547 = vadd.f32 %v541, %v545
        %s548 = sld [smem:[#allocation8 + $0x1f]]
        %v549 = vstv %s548
        %v550 = vmul.f32 %v329, %v549
        %v551 = vmul.f32 %v330, %v549
        %v552 = vadd.f32 %v498, %v550
        %v553 = vadd.f32 %v499, %v551
        %s554 = sld [smem:[#allocation8 + $0x1e]]
        %v555 = vstv %s554
        %v556 = vmul.f32 %v380, %v555
        %v557 = vmul.f32 %v381, %v555
        %v558 = vadd.f32 %v510, %v556
        %v559 = vadd.f32 %v511, %v557
        %s560 = sld [smem:[#allocation8 + $0x20]]
        %v561 = vstv %s560
        %v562 = vmul.f32 %v329, %v561
        %v563 = vmul.f32 %v330, %v561
        %v564 = vadd.f32 %v558, %v562
        %v565 = vadd.f32 %v559, %v563
        %s566 = sld [smem:[#allocation8 + $0x1c]]
        %v567 = vstv %s566
        %v568 = vmul.f32 %v367, %v567
        %v569 = vmul.f32 %v373, %v567
        %v570 = vadd.f32 %v522, %v568
        %v571 = vadd.f32 %v523, %v569
        %s572 = sld [smem:[#allocation8 + $0x22]]
        %v573 = vstv %s572
        %v574 = vmul.f32 %v329, %v573
        %v575 = vmul.f32 %v330, %v573
        %v576 = vadd.f32 %v570, %v574
        %v577 = vadd.f32 %v571, %v575
        %s578 = sld [smem:[#allocation8 + $0x1b]]
        %v579 = vstv %s578
        %v580 = vmul.f32 %v389, %v579
        %v581 = vmul.f32 %v390, %v579
        %v582 = vadd.f32 %v546, %v580
        %v583 = vadd.f32 %v547, %v581
        %s584 = sld [smem:[#allocation8 + $0x1d]]
        %v585 = vstv %s584
        %v586 = vmul.f32 %v367, %v585
        %v587 = vmul.f32 %v373, %v585
        %v588 = vadd.f32 %v582, %v586
        %v589 = vadd.f32 %v583, %v587
        %s590 = sld [smem:[#allocation8 + $0x21]]
        %v591 = vstv %s590
        %v592 = vmul.f32 %v380, %v591
        %v593 = vmul.f32 %v381, %v591
        %v594 = vadd.f32 %v588, %v592
        %v595 = vadd.f32 %v589, %v593
        %s596 = sld [smem:[#allocation8 + $0x23]]
        %v597 = vstv %s596
        %v598 = vmul.f32 %v329, %v597
        %v599 = vmul.f32 %v330, %v597
        %v600 = vadd.f32 %v594, %v598
        %v601 = vadd.f32 %v595, %v599
        %s602 = sld [smem:[#allocation8 + $0x3a]]
        %v603 = vstv %s602
        %v604 = vmul.f32 %v310, %v603
        %v605 = vmul.f32 %v311, %v603
        %v606 = vadd.f32 %v552, %v604
        %v607 = vadd.f32 %v553, %v605
        %s608 = sld [smem:[#allocation8 + $0x39]]
        %v609 = vstv %s608
        %v610 = vmul.f32 %v408, %v609
        %v611 = vmul.f32 %v409, %v609
        %v612 = vadd.f32 %v564, %v610
        %v613 = vadd.f32 %v565, %v611
        %s614 = sld [smem:[#allocation8 + $0x3b]]
        %v615 = vstv %s614
        %v616 = vmul.f32 %v310, %v615
        %v617 = vmul.f32 %v311, %v615
        %v618 = vadd.f32 %v612, %v616
        %v619 = vadd.f32 %v613, %v617
        %s620 = sld [smem:[#allocation8 + $0x37]]
        %v621 = vstv %s620
        %v622 = vmul.f32 %v395, %v621
        %v623 = vmul.f32 %v401, %v621
        %v624 = vadd.f32 %v576, %v622
        %v625 = vadd.f32 %v577, %v623
        %s626 = sld [smem:[#allocation8 + $0x3d]]
        %v627 = vstv %s626
        %v628 = vmul.f32 %v310, %v627
        %v629 = vmul.f32 %v311, %v627
        %v630 = vadd.f32 %v624, %v628
        %v631 = vadd.f32 %v625, %v629
        %s632 = sld [smem:[#allocation8 + $0x36]]
        %v633 = vstv %s632
        %v634 = vmul.f32 %v417, %v633
        %v635 = vmul.f32 %v418, %v633
        %v636 = vadd.f32 %v600, %v634
        %v637 = vadd.f32 %v601, %v635
        %s638 = sld [smem:[#allocation8 + $0x38]]
        %v639 = vstv %s638
        %v640 = vmul.f32 %v395, %v639
        %v641 = vmul.f32 %v401, %v639
        %v642 = vadd.f32 %v636, %v640
        %v643 = vadd.f32 %v637, %v641
        %s644 = sld [smem:[#allocation8 + $0x3c]]
        %v645 = vstv %s644
        %v646 = vmul.f32 %v408, %v645
        %v647 = vmul.f32 %v409, %v645
        %v648 = vadd.f32 %v642, %v646
        %v649 = vadd.f32 %v643, %v647
        %s650 = sld [smem:[#allocation8 + $0x3e]]
        %v651 = vstv %s650
        %v652 = vmul.f32 %v310, %v651
        %v653 = vmul.f32 %v311, %v651
        %v654 = vadd.f32 %v648, %v652
        %v655 = vadd.f32 %v649, %v653
        %vm656 = vcmask 523264
        %v658 = vsel %vm656, %v618, 0
        %v661 = vsel %vm656, %v619, 0
        %663 = vmatprep.subr.mxu0 0.0
        %664 = vmatpush1.msra.mxu0 0.0
        %665 = vmatprep.subr.mxu0 0.0
        %666 = vmatpush1.msra.mxu0 0.0
        %667 = vmatprep.subr.mxu0 0.0
        %668 = vmatpush1.msra.mxu0 0.0
        %669 = vmatprep.subr.mxu0 0.0
        %670 = vmatpush1.msra.mxu0 0.0
        %671 = vmatprep.subr.mxu0 0.0
        %672 = vmatpush1.msra.mxu0 0.0
        %673 = vmatprep.subr.mxu0 0.0
        %674 = vmatpush1.msra.mxu0 0.0
        %675 = vmatprep.subr.mxu0 0.0
        %676 = vmatpush1.msra.mxu0 0.0
        %677 = vmatprep.subr.mxu0 0.0
        %678 = vmatpush1.msra.mxu0 0.0
        %679 = vmatprep.subr.mxu0 0.0
        %v680 = vand.u32 %v493, 4294901760
        %681 = vmatpush1.msra.mxu0 %v680
        %682 = vmatprep.subr.mxu0 0.0
        %v683 = vand.u32 %v492, 4294901760
        %684 = vmatpush1.msra.mxu0 %v683
        %685 = vmatprep.subr.mxu0 0.0
        %v686 = vand.u32 %v491, 4294901760
        %687 = vmatpush1.msra.mxu0 %v686
        %688 = vmatprep.subr.mxu0 0.0
        %v689 = vand.u32 %v490, 4294901760
        %690 = vmatpush1.msra.mxu0 %v689
        %691 = vmatprep.subr.mxu0 0.0
        %v692 = vand.u32 %v489, 4294901760
        %693 = vmatpush1.msra.mxu0 %v692
        %694 = vmatprep.subr.mxu0 0.0
        %v695 = vand.u32 %v488, 4294901760
        %696 = vmatpush1.msra.mxu0 %v695
        %697 = vmatprep.subr.mxu0 0.0
        %v698 = vand.u32 %v487, 4294901760
        %699 = vmatpush1.msra.mxu0 %v698
        %700 = vmatprep.subr.mxu0 0.0
        %v701 = vand.u32 %v486, 4294901760
        %702 = vmatpush1.msra.mxu0 %v701
        %703 = vmatprep.subr.mxu0 0.0
        %704 = vmatpush2.msra.mxu0 0.0
        %705 = vmatprep.subr.mxu0 0.0
        %706 = vmatpush2.msra.mxu0 0.0
        %707 = vmatprep.subr.mxu0 0.0
        %708 = vmatpush2.msra.mxu0 0.0
        %709 = vmatprep.subr.mxu0 0.0
        %710 = vmatpush2.msra.mxu0 0.0
        %711 = vmatprep.subr.mxu0 0.0
        %712 = vmatpush2.msra.mxu0 0.0
        %713 = vmatprep.subr.mxu0 0.0
        %714 = vmatpush2.msra.mxu0 0.0
        %715 = vmatprep.subr.mxu0 0.0
        %716 = vmatpush2.msra.mxu0 0.0
        %717 = vmatprep.subr.mxu0 0.0
        %718 = vmatpush2.msra.mxu0 0.0
        %719 = vmatprep.subr.mxu0 0.0
        %720 = vmatpush2.msra.mxu0 0.0
        %721 = vmatprep.subr.mxu0 0.0
        %722 = vmatpush2.msra.mxu0 0.0
        %723 = vmatprep.subr.mxu0 0.0
        %724 = vmatpush2.msra.mxu0 0.0
        %725 = vmatprep.subr.mxu0 0.0
        %726 = vmatpush2.msra.mxu0 0.0
        %727 = vmatprep.subr.mxu0 0.0
        %728 = vmatpush2.msra.mxu0 0.0
        %729 = vmatprep.subr.mxu0 0.0
        %730 = vmatpush2.msra.mxu0 0.0
        %731 = vmatprep.subr.mxu0 0.0
        %732 = vmatpush2.msra.mxu0 0.0
        %733 = vmatprep.subr.mxu0 0.0
        %734 = vmatpush2.msra.mxu0 0.0
        %735 = vmatprep.mubr.f32.mxu0 0.0
        %v736 = vand.u32 %v658, 4294901760
        %v737 = vsub.f32 %v658, %v736
        %v738 = vand.u32 %v737, 4294901760
        %v739 = vsub.f32 %v737, %v738
        %v740 = vand.u32 %v739, 4294901760
        %741 = vmatmul.mubr.f32.gmra.mxu0 %v740
        %v742 = vpop.f32.mrf.mxu0
        %v743 = vadd.f32 0.0, %v742
        %v744 = vpop.f32.mrf.mxu0
        %745 = vmatprep.mubr.f32.mxu0 0.0
        %v746 = vand.u32 %v661, 4294901760
        %v747 = vsub.f32 %v661, %v746
        %v748 = vand.u32 %v747, 4294901760
        %v749 = vsub.f32 %v747, %v748
        %v750 = vand.u32 %v749, 4294901760
        %751 = vmatmul.mubr.f32.gmra.mxu0 %v750
        %v752 = vpop.f32.mrf.mxu0
        %v753 = vadd.f32 0.0, %v752
        %v754 = vpop.f32.mrf.mxu0
        %755 = vdwg.mxu0
        %756 = vmatprep.subr.mxu0 0.0
        %757 = vmatpush1.msra.mxu0 0.0
        %758 = vmatprep.subr.mxu0 0.0
        %759 = vmatpush1.msra.mxu0 0.0
        %760 = vmatprep.subr.mxu0 0.0
        %761 = vmatpush1.msra.mxu0 0.0
        %762 = vmatprep.subr.mxu0 0.0
        %763 = vmatpush1.msra.mxu0 0.0
        %764 = vmatprep.subr.mxu0 0.0
        %765 = vmatpush1.msra.mxu0 0.0
        %766 = vmatprep.subr.mxu0 0.0
        %767 = vmatpush1.msra.mxu0 0.0
        %768 = vmatprep.subr.mxu0 0.0
        %769 = vmatpush1.msra.mxu0 0.0
        %770 = vmatprep.subr.mxu0 0.0
        %771 = vmatpush1.msra.mxu0 0.0
        %772 = vmatprep.subr.mxu0 0.0
        %v773 = vand.u32 %v493, 4294901760
        %v774 = vsub.f32 %v493, %v773
        %v775 = vand.u32 %v774, 4294901760
        %v776 = vsub.f32 %v774, %v775
        %v777 = vand.u32 %v776, 4294901760
        %778 = vmatpush1.msra.mxu0 %v777
        %779 = vmatprep.subr.mxu0 0.0
        %v780 = vand.u32 %v492, 4294901760
        %v781 = vsub.f32 %v492, %v780
        %v782 = vand.u32 %v781, 4294901760
        %v783 = vsub.f32 %v781, %v782
        %v784 = vand.u32 %v783, 4294901760
        %785 = vmatpush1.msra.mxu0 %v784
        %786 = vmatprep.subr.mxu0 0.0
        %v787 = vand.u32 %v491, 4294901760
        %v788 = vsub.f32 %v491, %v787
        %v789 = vand.u32 %v788, 4294901760
        %v790 = vsub.f32 %v788, %v789
        %v791 = vand.u32 %v790, 4294901760
        %792 = vmatpush1.msra.mxu0 %v791
        %793 = vmatprep.subr.mxu0 0.0
        %v794 = vand.u32 %v490, 4294901760
        %v795 = vsub.f32 %v490, %v794
        %v796 = vand.u32 %v795, 4294901760
        %v797 = vsub.f32 %v795, %v796
        %v798 = vand.u32 %v797, 4294901760
        %799 = vmatpush1.msra.mxu0 %v798
        %800 = vmatprep.subr.mxu0 0.0
        %v801 = vand.u32 %v489, 4294901760
        %v802 = vsub.f32 %v489, %v801
        %v803 = vand.u32 %v802, 4294901760
        %v804 = vsub.f32 %v802, %v803
        %v805 = vand.u32 %v804, 4294901760
        %806 = vmatpush1.msra.mxu0 %v805
        %807 = vmatprep.subr.mxu0 0.0
        %v808 = vand.u32 %v488, 4294901760
        %v809 = vsub.f32 %v488, %v808
        %v810 = vand.u32 %v809, 4294901760
        %v811 = vsub.f32 %v809, %v810
        %v812 = vand.u32 %v811, 4294901760
        %813 = vmatpush1.msra.mxu0 %v812
        %814 = vmatprep.subr.mxu0 0.0
        %v815 = vand.u32 %v487, 4294901760
        %v816 = vsub.f32 %v487, %v815
        %v817 = vand.u32 %v816, 4294901760
        %v818 = vsub.f32 %v816, %v817
        %v819 = vand.u32 %v818, 4294901760
        %820 = vmatpush1.msra.mxu0 %v819
        %821 = vmatprep.subr.mxu0 0.0
        %v822 = vand.u32 %v486, 4294901760
        %v823 = vsub.f32 %v486, %v822
        %v824 = vand.u32 %v823, 4294901760
        %v825 = vsub.f32 %v823, %v824
        %v826 = vand.u32 %v825, 4294901760
        %827 = vmatpush1.msra.mxu0 %v826
        %828 = vmatprep.subr.mxu0 0.0
        %829 = vmatpush2.msra.mxu0 0.0
        %830 = vmatprep.subr.mxu0 0.0
        %831 = vmatpush2.msra.mxu0 0.0
        %832 = vmatprep.subr.mxu0 0.0
        %833 = vmatpush2.msra.mxu0 0.0
        %834 = vmatprep.subr.mxu0 0.0
        %835 = vmatpush2.msra.mxu0 0.0
        %836 = vmatprep.subr.mxu0 0.0
        %837 = vmatpush2.msra.mxu0 0.0
        %838 = vmatprep.subr.mxu0 0.0
        %839 = vmatpush2.msra.mxu0 0.0
        %840 = vmatprep.subr.mxu0 0.0
        %841 = vmatpush2.msra.mxu0 0.0
        %842 = vmatprep.subr.mxu0 0.0
        %843 = vmatpush2.msra.mxu0 0.0
        %844 = vmatprep.subr.mxu0 0.0
        %845 = vmatpush2.msra.mxu0 0.0
        %846 = vmatprep.subr.mxu0 0.0
        %847 = vmatpush2.msra.mxu0 0.0
        %848 = vmatprep.subr.mxu0 0.0
        %849 = vmatpush2.msra.mxu0 0.0
        %850 = vmatprep.subr.mxu0 0.0
        %851 = vmatpush2.msra.mxu0 0.0
        %852 = vmatprep.subr.mxu0 0.0
        %853 = vmatpush2.msra.mxu0 0.0
        %854 = vmatprep.subr.mxu0 0.0
        %855 = vmatpush2.msra.mxu0 0.0
        %856 = vmatprep.subr.mxu0 0.0
        %857 = vmatpush2.msra.mxu0 0.0
        %858 = vmatprep.subr.mxu0 0.0
        %859 = vmatpush2.msra.mxu0 0.0
        %860 = vmatprep.mubr.f32.mxu0 0.0
        %v861 = vand.u32 %v658, 4294901760
        %862 = vmatmul.mubr.f32.gmra.mxu0 %v861
        %v863 = vpop.f32.mrf.mxu0
        %v864 = vadd.f32 %v743, %v863
        %v865 = vpop.f32.mrf.mxu0
        %866 = vmatprep.mubr.f32.mxu0 0.0
        %v867 = vand.u32 %v661, 4294901760
        %868 = vmatmul.mubr.f32.gmra.mxu0 %v867
        %v869 = vpop.f32.mrf.mxu0
        %v870 = vadd.f32 %v753, %v869
        %v871 = vpop.f32.mrf.mxu0
        %872 = vdwg.mxu0
        %873 = vmatprep.subr.mxu0 0.0
        %874 = vmatpush1.msra.mxu0 0.0
        %875 = vmatprep.subr.mxu0 0.0
        %876 = vmatpush1.msra.mxu0 0.0
        %877 = vmatprep.subr.mxu0 0.0
        %878 = vmatpush1.msra.mxu0 0.0
        %879 = vmatprep.subr.mxu0 0.0
        %880 = vmatpush1.msra.mxu0 0.0
        %881 = vmatprep.subr.mxu0 0.0
        %882 = vmatpush1.msra.mxu0 0.0
        %883 = vmatprep.subr.mxu0 0.0
        %884 = vmatpush1.msra.mxu0 0.0
        %885 = vmatprep.subr.mxu0 0.0
        %886 = vmatpush1.msra.mxu0 0.0
        %887 = vmatprep.subr.mxu0 0.0
        %888 = vmatpush1.msra.mxu0 0.0
        %889 = vmatprep.subr.mxu0 0.0
        %v890 = vand.u32 %v493, 4294901760
        %v891 = vsub.f32 %v493, %v890
        %892 = vmatpush1.msra.mxu0 %v891
        %893 = vmatprep.subr.mxu0 0.0
        %v894 = vand.u32 %v492, 4294901760
        %v895 = vsub.f32 %v492, %v894
        %896 = vmatpush1.msra.mxu0 %v895
        %897 = vmatprep.subr.mxu0 0.0
        %v898 = vand.u32 %v491, 4294901760
        %v899 = vsub.f32 %v491, %v898
        %900 = vmatpush1.msra.mxu0 %v899
        %901 = vmatprep.subr.mxu0 0.0
        %v902 = vand.u32 %v490, 4294901760
        %v903 = vsub.f32 %v490, %v902
        %904 = vmatpush1.msra.mxu0 %v903
        %905 = vmatprep.subr.mxu0 0.0
        %v906 = vand.u32 %v489, 4294901760
        %v907 = vsub.f32 %v489, %v906
        %908 = vmatpush1.msra.mxu0 %v907
        %909 = vmatprep.subr.mxu0 0.0
        %v910 = vand.u32 %v488, 4294901760
        %v911 = vsub.f32 %v488, %v910
        %912 = vmatpush1.msra.mxu0 %v911
        %913 = vmatprep.subr.mxu0 0.0
        %v914 = vand.u32 %v487, 4294901760
        %v915 = vsub.f32 %v487, %v914
        %916 = vmatpush1.msra.mxu0 %v915
        %917 = vmatprep.subr.mxu0 0.0
        %v918 = vand.u32 %v486, 4294901760
        %v919 = vsub.f32 %v486, %v918
        %920 = vmatpush1.msra.mxu0 %v919
        %921 = vmatprep.subr.mxu0 0.0
        %922 = vmatpush2.msra.mxu0 0.0
        %923 = vmatprep.subr.mxu0 0.0
        %924 = vmatpush2.msra.mxu0 0.0
        %925 = vmatprep.subr.mxu0 0.0
        %926 = vmatpush2.msra.mxu0 0.0
        %927 = vmatprep.subr.mxu0 0.0
        %928 = vmatpush2.msra.mxu0 0.0
        %929 = vmatprep.subr.mxu0 0.0
        %930 = vmatpush2.msra.mxu0 0.0
        %931 = vmatprep.subr.mxu0 0.0
        %932 = vmatpush2.msra.mxu0 0.0
        %933 = vmatprep.subr.mxu0 0.0
        %934 = vmatpush2.msra.mxu0 0.0
        %935 = vmatprep.subr.mxu0 0.0
        %936 = vmatpush2.msra.mxu0 0.0
        %937 = vmatprep.subr.mxu0 0.0
        %938 = vmatpush2.msra.mxu0 0.0
        %939 = vmatprep.subr.mxu0 0.0
        %940 = vmatpush2.msra.mxu0 0.0
        %941 = vmatprep.subr.mxu0 0.0
        %942 = vmatpush2.msra.mxu0 0.0
        %943 = vmatprep.subr.mxu0 0.0
        %944 = vmatpush2.msra.mxu0 0.0
        %945 = vmatprep.subr.mxu0 0.0
        %946 = vmatpush2.msra.mxu0 0.0
        %947 = vmatprep.subr.mxu0 0.0
        %948 = vmatpush2.msra.mxu0 0.0
        %949 = vmatprep.subr.mxu0 0.0
        %950 = vmatpush2.msra.mxu0 0.0
        %951 = vmatprep.subr.mxu0 0.0
        %952 = vmatpush2.msra.mxu0 0.0
        %953 = vmatprep.mubr.f32.mxu0 0.0
        %v954 = vand.u32 %v658, 4294901760
        %v955 = vsub.f32 %v658, %v954
        %956 = vmatmul.mubr.f32.gmra.mxu0 %v955
        %v957 = vpop.f32.mrf.mxu0
        %v958 = vadd.f32 %v864, %v957
        %v959 = vpop.f32.mrf.mxu0
        %960 = vmatprep.mubr.f32.mxu0 0.0
        %v961 = vand.u32 %v661, 4294901760
        %v962 = vsub.f32 %v661, %v961
        %963 = vmatmul.mubr.f32.gmra.mxu0 %v962
        %v964 = vpop.f32.mrf.mxu0
        %v965 = vadd.f32 %v870, %v964
        %v966 = vpop.f32.mrf.mxu0
        %967 = vdwg.mxu0
        %968 = vmatprep.subr.mxu0 0.0
        %969 = vmatpush1.msra.mxu0 0.0
        %970 = vmatprep.subr.mxu0 0.0
        %971 = vmatpush1.msra.mxu0 0.0
        %972 = vmatprep.subr.mxu0 0.0
        %973 = vmatpush1.msra.mxu0 0.0
        %974 = vmatprep.subr.mxu0 0.0
        %975 = vmatpush1.msra.mxu0 0.0
        %976 = vmatprep.subr.mxu0 0.0
        %977 = vmatpush1.msra.mxu0 0.0
        %978 = vmatprep.subr.mxu0 0.0
        %979 = vmatpush1.msra.mxu0 0.0
        %980 = vmatprep.subr.mxu0 0.0
        %981 = vmatpush1.msra.mxu0 0.0
        %982 = vmatprep.subr.mxu0 0.0
        %983 = vmatpush1.msra.mxu0 0.0
        %984 = vmatprep.subr.mxu0 0.0
        %v985 = vand.u32 %v493, 4294901760
        %986 = vmatpush1.msra.mxu0 %v985
        %987 = vmatprep.subr.mxu0 0.0
        %v988 = vand.u32 %v492, 4294901760
        %989 = vmatpush1.msra.mxu0 %v988
        %990 = vmatprep.subr.mxu0 0.0
        %v991 = vand.u32 %v491, 4294901760
        %992 = vmatpush1.msra.mxu0 %v991
        %993 = vmatprep.subr.mxu0 0.0
        %v994 = vand.u32 %v490, 4294901760
        %995 = vmatpush1.msra.mxu0 %v994
        %996 = vmatprep.subr.mxu0 0.0
        %v997 = vand.u32 %v489, 4294901760
        %998 = vmatpush1.msra.mxu0 %v997
        %999 = vmatprep.subr.mxu0 0.0
        %v1000 = vand.u32 %v488, 4294901760
        %1001 = vmatpush1.msra.mxu0 %v1000
        %1002 = vmatprep.subr.mxu0 0.0
        %v1003 = vand.u32 %v487, 4294901760
        %1004 = vmatpush1.msra.mxu0 %v1003
        %1005 = vmatprep.subr.mxu0 0.0
        %v1006 = vand.u32 %v486, 4294901760
        %1007 = vmatpush1.msra.mxu0 %v1006
        %1008 = vmatprep.subr.mxu0 0.0
        %1009 = vmatpush2.msra.mxu0 0.0
        %1010 = vmatprep.subr.mxu0 0.0
        %1011 = vmatpush2.msra.mxu0 0.0
        %1012 = vmatprep.subr.mxu0 0.0
        %1013 = vmatpush2.msra.mxu0 0.0
        %1014 = vmatprep.subr.mxu0 0.0
        %1015 = vmatpush2.msra.mxu0 0.0
        %1016 = vmatprep.subr.mxu0 0.0
        %1017 = vmatpush2.msra.mxu0 0.0
        %1018 = vmatprep.subr.mxu0 0.0
        %1019 = vmatpush2.msra.mxu0 0.0
        %1020 = vmatprep.subr.mxu0 0.0
        %1021 = vmatpush2.msra.mxu0 0.0
        %1022 = vmatprep.subr.mxu0 0.0
        %1023 = vmatpush2.msra.mxu0 0.0
        %1024 = vmatprep.subr.mxu0 0.0
        %1025 = vmatpush2.msra.mxu0 0.0
        %1026 = vmatprep.subr.mxu0 0.0
        %1027 = vmatpush2.msra.mxu0 0.0
        %1028 = vmatprep.subr.mxu0 0.0
        %1029 = vmatpush2.msra.mxu0 0.0
        %1030 = vmatprep.subr.mxu0 0.0
        %1031 = vmatpush2.msra.mxu0 0.0
        %1032 = vmatprep.subr.mxu0 0.0
        %1033 = vmatpush2.msra.mxu0 0.0
        %1034 = vmatprep.subr.mxu0 0.0
        %1035 = vmatpush2.msra.mxu0 0.0
        %1036 = vmatprep.subr.mxu0 0.0
        %1037 = vmatpush2.msra.mxu0 0.0
        %1038 = vmatprep.subr.mxu0 0.0
        %1039 = vmatpush2.msra.mxu0 0.0
        %1040 = vmatprep.mubr.f32.mxu0 0.0
        %v1041 = vand.u32 %v658, 4294901760
        %v1042 = vsub.f32 %v658, %v1041
        %v1043 = vand.u32 %v1042, 4294901760
        %1044 = vmatmul.mubr.f32.gmra.mxu0 %v1043
        %v1045 = vpop.f32.mrf.mxu0
        %v1046 = vadd.f32 %v958, %v1045
        %v1047 = vpop.f32.mrf.mxu0
        %1048 = vmatprep.mubr.f32.mxu0 0.0
        %v1049 = vand.u32 %v661, 4294901760
        %v1050 = vsub.f32 %v661, %v1049
        %v1051 = vand.u32 %v1050, 4294901760
        %1052 = vmatmul.mubr.f32.gmra.mxu0 %v1051
        %v1053 = vpop.f32.mrf.mxu0
        %v1054 = vadd.f32 %v965, %v1053
        %v1055 = vpop.f32.mrf.mxu0
        %1056 = vdwg.mxu0
        %1057 = vmatprep.subr.mxu0 0.0
        %1058 = vmatpush1.msra.mxu0 0.0
        %1059 = vmatprep.subr.mxu0 0.0
        %1060 = vmatpush1.msra.mxu0 0.0
        %1061 = vmatprep.subr.mxu0 0.0
        %1062 = vmatpush1.msra.mxu0 0.0
        %1063 = vmatprep.subr.mxu0 0.0
        %1064 = vmatpush1.msra.mxu0 0.0
        %1065 = vmatprep.subr.mxu0 0.0
        %1066 = vmatpush1.msra.mxu0 0.0
        %1067 = vmatprep.subr.mxu0 0.0
        %1068 = vmatpush1.msra.mxu0 0.0
        %1069 = vmatprep.subr.mxu0 0.0
        %1070 = vmatpush1.msra.mxu0 0.0
        %1071 = vmatprep.subr.mxu0 0.0
        %1072 = vmatpush1.msra.mxu0 0.0
        %1073 = vmatprep.subr.mxu0 0.0
        %v1074 = vand.u32 %v493, 4294901760
        %v1075 = vsub.f32 %v493, %v1074
        %v1076 = vand.u32 %v1075, 4294901760
        %1077 = vmatpush1.msra.mxu0 %v1076
        %1078 = vmatprep.subr.mxu0 0.0
        %v1079 = vand.u32 %v492, 4294901760
        %v1080 = vsub.f32 %v492, %v1079
        %v1081 = vand.u32 %v1080, 4294901760
        %1082 = vmatpush1.msra.mxu0 %v1081
        %1083 = vmatprep.subr.mxu0 0.0
        %v1084 = vand.u32 %v491, 4294901760
        %v1085 = vsub.f32 %v491, %v1084
        %v1086 = vand.u32 %v1085, 4294901760
        %1087 = vmatpush1.msra.mxu0 %v1086
        %1088 = vmatprep.subr.mxu0 0.0
        %v1089 = vand.u32 %v490, 4294901760
        %v1090 = vsub.f32 %v490, %v1089
        %v1091 = vand.u32 %v1090, 4294901760
        %1092 = vmatpush1.msra.mxu0 %v1091
        %1093 = vmatprep.subr.mxu0 0.0
        %v1094 = vand.u32 %v489, 4294901760
        %v1095 = vsub.f32 %v489, %v1094
        %v1096 = vand.u32 %v1095, 4294901760
        %1097 = vmatpush1.msra.mxu0 %v1096
        %1098 = vmatprep.subr.mxu0 0.0
        %v1099 = vand.u32 %v488, 4294901760
        %v1100 = vsub.f32 %v488, %v1099
        %v1101 = vand.u32 %v1100, 4294901760
        %1102 = vmatpush1.msra.mxu0 %v1101
        %1103 = vmatprep.subr.mxu0 0.0
        %v1104 = vand.u32 %v487, 4294901760
        %v1105 = vsub.f32 %v487, %v1104
        %v1106 = vand.u32 %v1105, 4294901760
        %1107 = vmatpush1.msra.mxu0 %v1106
        %1108 = vmatprep.subr.mxu0 0.0
        %v1109 = vand.u32 %v486, 4294901760
        %v1110 = vsub.f32 %v486, %v1109
        %v1111 = vand.u32 %v1110, 4294901760
        %1112 = vmatpush1.msra.mxu0 %v1111
        %1113 = vmatprep.subr.mxu0 0.0
        %1114 = vmatpush2.msra.mxu0 0.0
        %1115 = vmatprep.subr.mxu0 0.0
        %1116 = vmatpush2.msra.mxu0 0.0
        %1117 = vmatprep.subr.mxu0 0.0
        %1118 = vmatpush2.msra.mxu0 0.0
        %1119 = vmatprep.subr.mxu0 0.0
        %1120 = vmatpush2.msra.mxu0 0.0
        %1121 = vmatprep.subr.mxu0 0.0
        %1122 = vmatpush2.msra.mxu0 0.0
        %1123 = vmatprep.subr.mxu0 0.0
        %1124 = vmatpush2.msra.mxu0 0.0
        %1125 = vmatprep.subr.mxu0 0.0
        %1126 = vmatpush2.msra.mxu0 0.0
        %1127 = vmatprep.subr.mxu0 0.0
        %1128 = vmatpush2.msra.mxu0 0.0
        %1129 = vmatprep.subr.mxu0 0.0
        %1130 = vmatpush2.msra.mxu0 0.0
        %1131 = vmatprep.subr.mxu0 0.0
        %1132 = vmatpush2.msra.mxu0 0.0
        %1133 = vmatprep.subr.mxu0 0.0
        %1134 = vmatpush2.msra.mxu0 0.0
        %1135 = vmatprep.subr.mxu0 0.0
        %1136 = vmatpush2.msra.mxu0 0.0
        %1137 = vmatprep.subr.mxu0 0.0
        %1138 = vmatpush2.msra.mxu0 0.0
        %1139 = vmatprep.subr.mxu0 0.0
        %1140 = vmatpush2.msra.mxu0 0.0
        %1141 = vmatprep.subr.mxu0 0.0
        %1142 = vmatpush2.msra.mxu0 0.0
        %1143 = vmatprep.subr.mxu0 0.0
        %1144 = vmatpush2.msra.mxu0 0.0
        %1145 = vmatprep.mubr.f32.mxu0 0.0
        %v1146 = vand.u32 %v658, 4294901760
        %1147 = vmatmul.mubr.f32.gmra.mxu0 %v1146
        %v1148 = vpop.f32.mrf.mxu0
        %v1149 = vadd.f32 %v1046, %v1148
        %v1150 = vpop.f32.mrf.mxu0
        %1151 = vmatprep.mubr.f32.mxu0 0.0
        %v1152 = vand.u32 %v661, 4294901760
        %1153 = vmatmul.mubr.f32.gmra.mxu0 %v1152
        %v1154 = vpop.f32.mrf.mxu0
        %v1155 = vadd.f32 %v1054, %v1154
        %v1156 = vpop.f32.mrf.mxu0
        %1157 = vdwg.mxu0
        %1158 = vmatprep.subr.mxu0 0.0
        %1159 = vmatpush1.msra.mxu0 0.0
        %1160 = vmatprep.subr.mxu0 0.0
        %1161 = vmatpush1.msra.mxu0 0.0
        %1162 = vmatprep.subr.mxu0 0.0
        %1163 = vmatpush1.msra.mxu0 0.0
        %1164 = vmatprep.subr.mxu0 0.0
        %1165 = vmatpush1.msra.mxu0 0.0
        %1166 = vmatprep.subr.mxu0 0.0
        %1167 = vmatpush1.msra.mxu0 0.0
        %1168 = vmatprep.subr.mxu0 0.0
        %1169 = vmatpush1.msra.mxu0 0.0
        %1170 = vmatprep.subr.mxu0 0.0
        %1171 = vmatpush1.msra.mxu0 0.0
        %1172 = vmatprep.subr.mxu0 0.0
        %1173 = vmatpush1.msra.mxu0 0.0
        %1174 = vmatprep.subr.mxu0 0.0
        %v1175 = vand.u32 %v493, 4294901760
        %1176 = vmatpush1.msra.mxu0 %v1175
        %1177 = vmatprep.subr.mxu0 0.0
        %v1178 = vand.u32 %v492, 4294901760
        %1179 = vmatpush1.msra.mxu0 %v1178
        %1180 = vmatprep.subr.mxu0 0.0
        %v1181 = vand.u32 %v491, 4294901760
        %1182 = vmatpush1.msra.mxu0 %v1181
        %1183 = vmatprep.subr.mxu0 0.0
        %v1184 = vand.u32 %v490, 4294901760
        %1185 = vmatpush1.msra.mxu0 %v1184
        %1186 = vmatprep.subr.mxu0 0.0
        %v1187 = vand.u32 %v489, 4294901760
        %1188 = vmatpush1.msra.mxu0 %v1187
        %1189 = vmatprep.subr.mxu0 0.0
        %v1190 = vand.u32 %v488, 4294901760
        %1191 = vmatpush1.msra.mxu0 %v1190
        %1192 = vmatprep.subr.mxu0 0.0
        %v1193 = vand.u32 %v487, 4294901760
        %1194 = vmatpush1.msra.mxu0 %v1193
        %1195 = vmatprep.subr.mxu0 0.0
        %v1196 = vand.u32 %v486, 4294901760
        %1197 = vmatpush1.msra.mxu0 %v1196
        %1198 = vmatprep.subr.mxu0 0.0
        %1199 = vmatpush2.msra.mxu0 0.0
        %1200 = vmatprep.subr.mxu0 0.0
        %1201 = vmatpush2.msra.mxu0 0.0
        %1202 = vmatprep.subr.mxu0 0.0
        %1203 = vmatpush2.msra.mxu0 0.0
        %1204 = vmatprep.subr.mxu0 0.0
        %1205 = vmatpush2.msra.mxu0 0.0
        %1206 = vmatprep.subr.mxu0 0.0
        %1207 = vmatpush2.msra.mxu0 0.0
        %1208 = vmatprep.subr.mxu0 0.0
        %1209 = vmatpush2.msra.mxu0 0.0
        %1210 = vmatprep.subr.mxu0 0.0
        %1211 = vmatpush2.msra.mxu0 0.0
        %1212 = vmatprep.subr.mxu0 0.0
        %1213 = vmatpush2.msra.mxu0 0.0
        %1214 = vmatprep.subr.mxu0 0.0
        %1215 = vmatpush2.msra.mxu0 0.0
        %1216 = vmatprep.subr.mxu0 0.0
        %1217 = vmatpush2.msra.mxu0 0.0
        %1218 = vmatprep.subr.mxu0 0.0
        %1219 = vmatpush2.msra.mxu0 0.0
        %1220 = vmatprep.subr.mxu0 0.0
        %1221 = vmatpush2.msra.mxu0 0.0
        %1222 = vmatprep.subr.mxu0 0.0
        %1223 = vmatpush2.msra.mxu0 0.0
        %1224 = vmatprep.subr.mxu0 0.0
        %1225 = vmatpush2.msra.mxu0 0.0
        %1226 = vmatprep.subr.mxu0 0.0
        %1227 = vmatpush2.msra.mxu0 0.0
        %1228 = vmatprep.subr.mxu0 0.0
        %1229 = vmatpush2.msra.mxu0 0.0
        %1230 = vmatprep.mubr.f32.mxu0 0.0
        %v1231 = vand.u32 %v658, 4294901760
        %1232 = vmatmul.mubr.f32.gmra.mxu0 %v1231
        %v1233 = vpop.f32.mrf.mxu0
        %v1234 = vadd.f32 %v1149, %v1233
        %v1235 = vpop.f32.mrf.mxu0
        %1236 = vmatprep.mubr.f32.mxu0 0.0
        %v1237 = vand.u32 %v661, 4294901760
        %1238 = vmatmul.mubr.f32.gmra.mxu0 %v1237
        %v1239 = vpop.f32.mrf.mxu0
        %v1240 = vadd.f32 %v1155, %v1239
        %v1241 = vpop.f32.mrf.mxu0
        %1242 = vdwg.mxu0
        %v1244 = vsel %vm656, %v606, 0
        %v1247 = vsel %vm656, %v607, 0
        %1249 = vmatprep.subr.mxu0 0.0
        %1250 = vmatpush1.msra.mxu0 0.0
        %1251 = vmatprep.subr.mxu0 0.0
        %1252 = vmatpush1.msra.mxu0 0.0
        %1253 = vmatprep.subr.mxu0 0.0
        %1254 = vmatpush1.msra.mxu0 0.0
        %1255 = vmatprep.subr.mxu0 0.0
        %1256 = vmatpush1.msra.mxu0 0.0
        %1257 = vmatprep.subr.mxu0 0.0
        %1258 = vmatpush1.msra.mxu0 0.0
        %1259 = vmatprep.subr.mxu0 0.0
        %1260 = vmatpush1.msra.mxu0 0.0
        %1261 = vmatprep.subr.mxu0 0.0
        %1262 = vmatpush1.msra.mxu0 0.0
        %1263 = vmatprep.subr.mxu0 0.0
        %1264 = vmatpush1.msra.mxu0 0.0
        %1265 = vmatprep.subr.mxu0 0.0
        %v1266 = vand.u32 %v461, 4294901760
        %1267 = vmatpush1.msra.mxu0 %v1266
        %1268 = vmatprep.subr.mxu0 0.0
        %v1269 = vand.u32 %v460, 4294901760
        %1270 = vmatpush1.msra.mxu0 %v1269
        %1271 = vmatprep.subr.mxu0 0.0
        %v1272 = vand.u32 %v459, 4294901760
        %1273 = vmatpush1.msra.mxu0 %v1272
        %1274 = vmatprep.subr.mxu0 0.0
        %v1275 = vand.u32 %v458, 4294901760
        %1276 = vmatpush1.msra.mxu0 %v1275
        %1277 = vmatprep.subr.mxu0 0.0
        %v1278 = vand.u32 %v457, 4294901760
        %1279 = vmatpush1.msra.mxu0 %v1278
        %1280 = vmatprep.subr.mxu0 0.0
        %v1281 = vand.u32 %v456, 4294901760
        %1282 = vmatpush1.msra.mxu0 %v1281
        %1283 = vmatprep.subr.mxu0 0.0
        %v1284 = vand.u32 %v455, 4294901760
        %1285 = vmatpush1.msra.mxu0 %v1284
        %1286 = vmatprep.subr.mxu0 0.0
        %v1287 = vand.u32 %v454, 4294901760
        %1288 = vmatpush1.msra.mxu0 %v1287
        %1289 = vmatprep.subr.mxu0 0.0
        %1290 = vmatpush2.msra.mxu0 0.0
        %1291 = vmatprep.subr.mxu0 0.0
        %1292 = vmatpush2.msra.mxu0 0.0
        %1293 = vmatprep.subr.mxu0 0.0
        %1294 = vmatpush2.msra.mxu0 0.0
        %1295 = vmatprep.subr.mxu0 0.0
        %1296 = vmatpush2.msra.mxu0 0.0
        %1297 = vmatprep.subr.mxu0 0.0
        %1298 = vmatpush2.msra.mxu0 0.0
        %1299 = vmatprep.subr.mxu0 0.0
        %1300 = vmatpush2.msra.mxu0 0.0
        %1301 = vmatprep.subr.mxu0 0.0
        %1302 = vmatpush2.msra.mxu0 0.0
        %1303 = vmatprep.subr.mxu0 0.0
        %1304 = vmatpush2.msra.mxu0 0.0
        %1305 = vmatprep.subr.mxu0 0.0
        %1306 = vmatpush2.msra.mxu0 0.0
        %1307 = vmatprep.subr.mxu0 0.0
        %1308 = vmatpush2.msra.mxu0 0.0
        %1309 = vmatprep.subr.mxu0 0.0
        %1310 = vmatpush2.msra.mxu0 0.0
        %1311 = vmatprep.subr.mxu0 0.0
        %1312 = vmatpush2.msra.mxu0 0.0
        %1313 = vmatprep.subr.mxu0 0.0
        %1314 = vmatpush2.msra.mxu0 0.0
        %1315 = vmatprep.subr.mxu0 0.0
        %1316 = vmatpush2.msra.mxu0 0.0
        %1317 = vmatprep.subr.mxu0 0.0
        %1318 = vmatpush2.msra.mxu0 0.0
        %1319 = vmatprep.subr.mxu0 0.0
        %1320 = vmatpush2.msra.mxu0 0.0
        %1321 = vmatprep.mubr.f32.mxu0 0.0
        %v1322 = vand.u32 %v1244, 4294901760
        %v1323 = vsub.f32 %v1244, %v1322
        %v1324 = vand.u32 %v1323, 4294901760
        %v1325 = vsub.f32 %v1323, %v1324
        %v1326 = vand.u32 %v1325, 4294901760
        %1327 = vmatmul.mubr.f32.gmra.mxu0 %v1326
        %v1328 = vpop.f32.mrf.mxu0
        %v1329 = vadd.f32 %v1234, %v1328
        %v1330 = vpop.f32.mrf.mxu0
        %1331 = vmatprep.mubr.f32.mxu0 0.0
        %v1332 = vand.u32 %v1247, 4294901760
        %v1333 = vsub.f32 %v1247, %v1332
        %v1334 = vand.u32 %v1333, 4294901760
        %v1335 = vsub.f32 %v1333, %v1334
        %v1336 = vand.u32 %v1335, 4294901760
        %1337 = vmatmul.mubr.f32.gmra.mxu0 %v1336
        %v1338 = vpop.f32.mrf.mxu0
        %v1339 = vadd.f32 %v1240, %v1338
        %v1340 = vpop.f32.mrf.mxu0
        %1341 = vdwg.mxu0
        %1342 = vmatprep.subr.mxu0 0.0
        %1343 = vmatpush1.msra.mxu0 0.0
        %1344 = vmatprep.subr.mxu0 0.0
        %1345 = vmatpush1.msra.mxu0 0.0
        %1346 = vmatprep.subr.mxu0 0.0
        %1347 = vmatpush1.msra.mxu0 0.0
        %1348 = vmatprep.subr.mxu0 0.0
        %1349 = vmatpush1.msra.mxu0 0.0
        %1350 = vmatprep.subr.mxu0 0.0
        %1351 = vmatpush1.msra.mxu0 0.0
        %1352 = vmatprep.subr.mxu0 0.0
        %1353 = vmatpush1.msra.mxu0 0.0
        %1354 = vmatprep.subr.mxu0 0.0
        %1355 = vmatpush1.msra.mxu0 0.0
        %1356 = vmatprep.subr.mxu0 0.0
        %1357 = vmatpush1.msra.mxu0 0.0
        %1358 = vmatprep.subr.mxu0 0.0
        %v1359 = vand.u32 %v461, 4294901760
        %v1360 = vsub.f32 %v461, %v1359
        %v1361 = vand.u32 %v1360, 4294901760
        %v1362 = vsub.f32 %v1360, %v1361
        %v1363 = vand.u32 %v1362, 4294901760
        %1364 = vmatpush1.msra.mxu0 %v1363
        %1365 = vmatprep.subr.mxu0 0.0
        %v1366 = vand.u32 %v460, 4294901760
        %v1367 = vsub.f32 %v460, %v1366
        %v1368 = vand.u32 %v1367, 4294901760
        %v1369 = vsub.f32 %v1367, %v1368
        %v1370 = vand.u32 %v1369, 4294901760
        %1371 = vmatpush1.msra.mxu0 %v1370
        %1372 = vmatprep.subr.mxu0 0.0
        %v1373 = vand.u32 %v459, 4294901760
        %v1374 = vsub.f32 %v459, %v1373
        %v1375 = vand.u32 %v1374, 4294901760
        %v1376 = vsub.f32 %v1374, %v1375
        %v1377 = vand.u32 %v1376, 4294901760
        %1378 = vmatpush1.msra.mxu0 %v1377
        %1379 = vmatprep.subr.mxu0 0.0
        %v1380 = vand.u32 %v458, 4294901760
        %v1381 = vsub.f32 %v458, %v1380
        %v1382 = vand.u32 %v1381, 4294901760
        %v1383 = vsub.f32 %v1381, %v1382
        %v1384 = vand.u32 %v1383, 4294901760
        %1385 = vmatpush1.msra.mxu0 %v1384
        %1386 = vmatprep.subr.mxu0 0.0
        %v1387 = vand.u32 %v457, 4294901760
        %v1388 = vsub.f32 %v457, %v1387
        %v1389 = vand.u32 %v1388, 4294901760
        %v1390 = vsub.f32 %v1388, %v1389
        %v1391 = vand.u32 %v1390, 4294901760
        %1392 = vmatpush1.msra.mxu0 %v1391
        %1393 = vmatprep.subr.mxu0 0.0
        %v1394 = vand.u32 %v456, 4294901760
        %v1395 = vsub.f32 %v456, %v1394
        %v1396 = vand.u32 %v1395, 4294901760
        %v1397 = vsub.f32 %v1395, %v1396
        %v1398 = vand.u32 %v1397, 4294901760
        %1399 = vmatpush1.msra.mxu0 %v1398
        %1400 = vmatprep.subr.mxu0 0.0
        %v1401 = vand.u32 %v455, 4294901760
        %v1402 = vsub.f32 %v455, %v1401
        %v1403 = vand.u32 %v1402, 4294901760
        %v1404 = vsub.f32 %v1402, %v1403
        %v1405 = vand.u32 %v1404, 4294901760
        %1406 = vmatpush1.msra.mxu0 %v1405
        %1407 = vmatprep.subr.mxu0 0.0
        %v1408 = vand.u32 %v454, 4294901760
        %v1409 = vsub.f32 %v454, %v1408
        %v1410 = vand.u32 %v1409, 4294901760
        %v1411 = vsub.f32 %v1409, %v1410
        %v1412 = vand.u32 %v1411, 4294901760
        %1413 = vmatpush1.msra.mxu0 %v1412
        %1414 = vmatprep.subr.mxu0 0.0
        %1415 = vmatpush2.msra.mxu0 0.0
        %1416 = vmatprep.subr.mxu0 0.0
        %1417 = vmatpush2.msra.mxu0 0.0
        %1418 = vmatprep.subr.mxu0 0.0
        %1419 = vmatpush2.msra.mxu0 0.0
        %1420 = vmatprep.subr.mxu0 0.0
        %1421 = vmatpush2.msra.mxu0 0.0
        %1422 = vmatprep.subr.mxu0 0.0
        %1423 = vmatpush2.msra.mxu0 0.0
        %1424 = vmatprep.subr.mxu0 0.0
        %1425 = vmatpush2.msra.mxu0 0.0
        %1426 = vmatprep.subr.mxu0 0.0
        %1427 = vmatpush2.msra.mxu0 0.0
        %1428 = vmatprep.subr.mxu0 0.0
        %1429 = vmatpush2.msra.mxu0 0.0
        %1430 = vmatprep.subr.mxu0 0.0
        %1431 = vmatpush2.msra.mxu0 0.0
        %1432 = vmatprep.subr.mxu0 0.0
        %1433 = vmatpush2.msra.mxu0 0.0
        %1434 = vmatprep.subr.mxu0 0.0
        %1435 = vmatpush2.msra.mxu0 0.0
        %1436 = vmatprep.subr.mxu0 0.0
        %1437 = vmatpush2.msra.mxu0 0.0
        %1438 = vmatprep.subr.mxu0 0.0
        %1439 = vmatpush2.msra.mxu0 0.0
        %1440 = vmatprep.subr.mxu0 0.0
        %1441 = vmatpush2.msra.mxu0 0.0
        %1442 = vmatprep.subr.mxu0 0.0
        %1443 = vmatpush2.msra.mxu0 0.0
        %1444 = vmatprep.subr.mxu0 0.0
        %1445 = vmatpush2.msra.mxu0 0.0
        %1446 = vmatprep.mubr.f32.mxu0 0.0
        %v1447 = vand.u32 %v1244, 4294901760
        %1448 = vmatmul.mubr.f32.gmra.mxu0 %v1447
        %v1449 = vpop.f32.mrf.mxu0
        %v1450 = vadd.f32 %v1329, %v1449
        %v1451 = vpop.f32.mrf.mxu0
        %1452 = vmatprep.mubr.f32.mxu0 0.0
        %v1453 = vand.u32 %v1247, 4294901760
        %1454 = vmatmul.mubr.f32.gmra.mxu0 %v1453
        %v1455 = vpop.f32.mrf.mxu0
        %v1456 = vadd.f32 %v1339, %v1455
        %v1457 = vpop.f32.mrf.mxu0
        %1458 = vdwg.mxu0
        %1459 = vmatprep.subr.mxu0 0.0
        %1460 = vmatpush1.msra.mxu0 0.0
        %1461 = vmatprep.subr.mxu0 0.0
        %1462 = vmatpush1.msra.mxu0 0.0
        %1463 = vmatprep.subr.mxu0 0.0
        %1464 = vmatpush1.msra.mxu0 0.0
        %1465 = vmatprep.subr.mxu0 0.0
        %1466 = vmatpush1.msra.mxu0 0.0
        %1467 = vmatprep.subr.mxu0 0.0
        %1468 = vmatpush1.msra.mxu0 0.0
        %1469 = vmatprep.subr.mxu0 0.0
        %1470 = vmatpush1.msra.mxu0 0.0
        %1471 = vmatprep.subr.mxu0 0.0
        %1472 = vmatpush1.msra.mxu0 0.0
        %1473 = vmatprep.subr.mxu0 0.0
        %1474 = vmatpush1.msra.mxu0 0.0
        %1475 = vmatprep.subr.mxu0 0.0
        %v1476 = vand.u32 %v461, 4294901760
        %v1477 = vsub.f32 %v461, %v1476
        %1478 = vmatpush1.msra.mxu0 %v1477
        %1479 = vmatprep.subr.mxu0 0.0
        %v1480 = vand.u32 %v460, 4294901760
        %v1481 = vsub.f32 %v460, %v1480
        %1482 = vmatpush1.msra.mxu0 %v1481
        %1483 = vmatprep.subr.mxu0 0.0
        %v1484 = vand.u32 %v459, 4294901760
        %v1485 = vsub.f32 %v459, %v1484
        %1486 = vmatpush1.msra.mxu0 %v1485
        %1487 = vmatprep.subr.mxu0 0.0
        %v1488 = vand.u32 %v458, 4294901760
        %v1489 = vsub.f32 %v458, %v1488
        %1490 = vmatpush1.msra.mxu0 %v1489
        %1491 = vmatprep.subr.mxu0 0.0
        %v1492 = vand.u32 %v457, 4294901760
        %v1493 = vsub.f32 %v457, %v1492
        %1494 = vmatpush1.msra.mxu0 %v1493
        %1495 = vmatprep.subr.mxu0 0.0
        %v1496 = vand.u32 %v456, 4294901760
        %v1497 = vsub.f32 %v456, %v1496
        %1498 = vmatpush1.msra.mxu0 %v1497
        %1499 = vmatprep.subr.mxu0 0.0
        %v1500 = vand.u32 %v455, 4294901760
        %v1501 = vsub.f32 %v455, %v1500
        %1502 = vmatpush1.msra.mxu0 %v1501
        %1503 = vmatprep.subr.mxu0 0.0
        %v1504 = vand.u32 %v454, 4294901760
        %v1505 = vsub.f32 %v454, %v1504
        %1506 = vmatpush1.msra.mxu0 %v1505
        %1507 = vmatprep.subr.mxu0 0.0
        %1508 = vmatpush2.msra.mxu0 0.0
        %1509 = vmatprep.subr.mxu0 0.0
        %1510 = vmatpush2.msra.mxu0 0.0
        %1511 = vmatprep.subr.mxu0 0.0
        %1512 = vmatpush2.msra.mxu0 0.0
        %1513 = vmatprep.subr.mxu0 0.0
        %1514 = vmatpush2.msra.mxu0 0.0
        %1515 = vmatprep.subr.mxu0 0.0
        %1516 = vmatpush2.msra.mxu0 0.0
        %1517 = vmatprep.subr.mxu0 0.0
        %1518 = vmatpush2.msra.mxu0 0.0
        %1519 = vmatprep.subr.mxu0 0.0
        %1520 = vmatpush2.msra.mxu0 0.0
        %1521 = vmatprep.subr.mxu0 0.0
        %1522 = vmatpush2.msra.mxu0 0.0
        %1523 = vmatprep.subr.mxu0 0.0
        %1524 = vmatpush2.msra.mxu0 0.0
        %1525 = vmatprep.subr.mxu0 0.0
        %1526 = vmatpush2.msra.mxu0 0.0
        %1527 = vmatprep.subr.mxu0 0.0
        %1528 = vmatpush2.msra.mxu0 0.0
        %1529 = vmatprep.subr.mxu0 0.0
        %1530 = vmatpush2.msra.mxu0 0.0
        %1531 = vmatprep.subr.mxu0 0.0
        %1532 = vmatpush2.msra.mxu0 0.0
        %1533 = vmatprep.subr.mxu0 0.0
        %1534 = vmatpush2.msra.mxu0 0.0
        %1535 = vmatprep.subr.mxu0 0.0
        %1536 = vmatpush2.msra.mxu0 0.0
        %1537 = vmatprep.subr.mxu0 0.0
        %1538 = vmatpush2.msra.mxu0 0.0
        %1539 = vmatprep.mubr.f32.mxu0 0.0
        %v1540 = vand.u32 %v1244, 4294901760
        %v1541 = vsub.f32 %v1244, %v1540
        %1542 = vmatmul.mubr.f32.gmra.mxu0 %v1541
        %v1543 = vpop.f32.mrf.mxu0
        %v1544 = vadd.f32 %v1450, %v1543
        %v1545 = vpop.f32.mrf.mxu0
        %1546 = vmatprep.mubr.f32.mxu0 0.0
        %v1547 = vand.u32 %v1247, 4294901760
        %v1548 = vsub.f32 %v1247, %v1547
        %1549 = vmatmul.mubr.f32.gmra.mxu0 %v1548
        %v1550 = vpop.f32.mrf.mxu0
        %v1551 = vadd.f32 %v1456, %v1550
        %v1552 = vpop.f32.mrf.mxu0
        %1553 = vdwg.mxu0
        %1554 = vmatprep.subr.mxu0 0.0
        %1555 = vmatpush1.msra.mxu0 0.0
        %1556 = vmatprep.subr.mxu0 0.0
        %1557 = vmatpush1.msra.mxu0 0.0
        %1558 = vmatprep.subr.mxu0 0.0
        %1559 = vmatpush1.msra.mxu0 0.0
        %1560 = vmatprep.subr.mxu0 0.0
        %1561 = vmatpush1.msra.mxu0 0.0
        %1562 = vmatprep.subr.mxu0 0.0
        %1563 = vmatpush1.msra.mxu0 0.0
        %1564 = vmatprep.subr.mxu0 0.0
        %1565 = vmatpush1.msra.mxu0 0.0
        %1566 = vmatprep.subr.mxu0 0.0
        %1567 = vmatpush1.msra.mxu0 0.0
        %1568 = vmatprep.subr.mxu0 0.0
        %1569 = vmatpush1.msra.mxu0 0.0
        %1570 = vmatprep.subr.mxu0 0.0
        %v1571 = vand.u32 %v461, 4294901760
        %1572 = vmatpush1.msra.mxu0 %v1571
        %1573 = vmatprep.subr.mxu0 0.0
        %v1574 = vand.u32 %v460, 4294901760
        %1575 = vmatpush1.msra.mxu0 %v1574
        %1576 = vmatprep.subr.mxu0 0.0
        %v1577 = vand.u32 %v459, 4294901760
        %1578 = vmatpush1.msra.mxu0 %v1577
        %1579 = vmatprep.subr.mxu0 0.0
        %v1580 = vand.u32 %v458, 4294901760
        %1581 = vmatpush1.msra.mxu0 %v1580
        %1582 = vmatprep.subr.mxu0 0.0
        %v1583 = vand.u32 %v457, 4294901760
        %1584 = vmatpush1.msra.mxu0 %v1583
        %1585 = vmatprep.subr.mxu0 0.0
        %v1586 = vand.u32 %v456, 4294901760
        %1587 = vmatpush1.msra.mxu0 %v1586
        %1588 = vmatprep.subr.mxu0 0.0
        %v1589 = vand.u32 %v455, 4294901760
        %1590 = vmatpush1.msra.mxu0 %v1589
        %1591 = vmatprep.subr.mxu0 0.0
        %v1592 = vand.u32 %v454, 4294901760
        %1593 = vmatpush1.msra.mxu0 %v1592
        %1594 = vmatprep.subr.mxu0 0.0
        %1595 = vmatpush2.msra.mxu0 0.0
        %1596 = vmatprep.subr.mxu0 0.0
        %1597 = vmatpush2.msra.mxu0 0.0
        %1598 = vmatprep.subr.mxu0 0.0
        %1599 = vmatpush2.msra.mxu0 0.0
        %1600 = vmatprep.subr.mxu0 0.0
        %1601 = vmatpush2.msra.mxu0 0.0
        %1602 = vmatprep.subr.mxu0 0.0
        %1603 = vmatpush2.msra.mxu0 0.0
        %1604 = vmatprep.subr.mxu0 0.0
        %1605 = vmatpush2.msra.mxu0 0.0
        %1606 = vmatprep.subr.mxu0 0.0
        %1607 = vmatpush2.msra.mxu0 0.0
        %1608 = vmatprep.subr.mxu0 0.0
        %1609 = vmatpush2.msra.mxu0 0.0
        %1610 = vmatprep.subr.mxu0 0.0
        %1611 = vmatpush2.msra.mxu0 0.0
        %1612 = vmatprep.subr.mxu0 0.0
        %1613 = vmatpush2.msra.mxu0 0.0
        %1614 = vmatprep.subr.mxu0 0.0
        %1615 = vmatpush2.msra.mxu0 0.0
        %1616 = vmatprep.subr.mxu0 0.0
        %1617 = vmatpush2.msra.mxu0 0.0
        %1618 = vmatprep.subr.mxu0 0.0
        %1619 = vmatpush2.msra.mxu0 0.0
        %1620 = vmatprep.subr.mxu0 0.0
        %1621 = vmatpush2.msra.mxu0 0.0
        %1622 = vmatprep.subr.mxu0 0.0
        %1623 = vmatpush2.msra.mxu0 0.0
        %1624 = vmatprep.subr.mxu0 0.0
        %1625 = vmatpush2.msra.mxu0 0.0
        %1626 = vmatprep.mubr.f32.mxu0 0.0
        %v1627 = vand.u32 %v1244, 4294901760
        %v1628 = vsub.f32 %v1244, %v1627
        %v1629 = vand.u32 %v1628, 4294901760
        %1630 = vmatmul.mubr.f32.gmra.mxu0 %v1629
        %v1631 = vpop.f32.mrf.mxu0
        %v1632 = vadd.f32 %v1544, %v1631
        %v1633 = vpop.f32.mrf.mxu0
        %1634 = vmatprep.mubr.f32.mxu0 0.0
        %v1635 = vand.u32 %v1247, 4294901760
        %v1636 = vsub.f32 %v1247, %v1635
        %v1637 = vand.u32 %v1636, 4294901760
        %1638 = vmatmul.mubr.f32.gmra.mxu0 %v1637
        %v1639 = vpop.f32.mrf.mxu0
        %v1640 = vadd.f32 %v1551, %v1639
        %v1641 = vpop.f32.mrf.mxu0
        %1642 = vdwg.mxu0
        %1643 = vmatprep.subr.mxu0 0.0
        %1644 = vmatpush1.msra.mxu0 0.0
        %1645 = vmatprep.subr.mxu0 0.0
        %1646 = vmatpush1.msra.mxu0 0.0
        %1647 = vmatprep.subr.mxu0 0.0
        %1648 = vmatpush1.msra.mxu0 0.0
        %1649 = vmatprep.subr.mxu0 0.0
        %1650 = vmatpush1.msra.mxu0 0.0
        %1651 = vmatprep.subr.mxu0 0.0
        %1652 = vmatpush1.msra.mxu0 0.0
        %1653 = vmatprep.subr.mxu0 0.0
        %1654 = vmatpush1.msra.mxu0 0.0
        %1655 = vmatprep.subr.mxu0 0.0
        %1656 = vmatpush1.msra.mxu0 0.0
        %1657 = vmatprep.subr.mxu0 0.0
        %1658 = vmatpush1.msra.mxu0 0.0
        %1659 = vmatprep.subr.mxu0 0.0
        %v1660 = vand.u32 %v461, 4294901760
        %v1661 = vsub.f32 %v461, %v1660
        %v1662 = vand.u32 %v1661, 4294901760
        %1663 = vmatpush1.msra.mxu0 %v1662
        %1664 = vmatprep.subr.mxu0 0.0
        %v1665 = vand.u32 %v460, 4294901760
        %v1666 = vsub.f32 %v460, %v1665
        %v1667 = vand.u32 %v1666, 4294901760
        %1668 = vmatpush1.msra.mxu0 %v1667
        %1669 = vmatprep.subr.mxu0 0.0
        %v1670 = vand.u32 %v459, 4294901760
        %v1671 = vsub.f32 %v459, %v1670
        %v1672 = vand.u32 %v1671, 4294901760
        %1673 = vmatpush1.msra.mxu0 %v1672
        %1674 = vmatprep.subr.mxu0 0.0
        %v1675 = vand.u32 %v458, 4294901760
        %v1676 = vsub.f32 %v458, %v1675
        %v1677 = vand.u32 %v1676, 4294901760
        %1678 = vmatpush1.msra.mxu0 %v1677
        %1679 = vmatprep.subr.mxu0 0.0
        %v1680 = vand.u32 %v457, 4294901760
        %v1681 = vsub.f32 %v457, %v1680
        %v1682 = vand.u32 %v1681, 4294901760
        %1683 = vmatpush1.msra.mxu0 %v1682
        %1684 = vmatprep.subr.mxu0 0.0
        %v1685 = vand.u32 %v456, 4294901760
        %v1686 = vsub.f32 %v456, %v1685
        %v1687 = vand.u32 %v1686, 4294901760
        %1688 = vmatpush1.msra.mxu0 %v1687
        %1689 = vmatprep.subr.mxu0 0.0
        %v1690 = vand.u32 %v455, 4294901760
        %v1691 = vsub.f32 %v455, %v1690
        %v1692 = vand.u32 %v1691, 4294901760
        %1693 = vmatpush1.msra.mxu0 %v1692
        %1694 = vmatprep.subr.mxu0 0.0
        %v1695 = vand.u32 %v454, 4294901760
        %v1696 = vsub.f32 %v454, %v1695
        %v1697 = vand.u32 %v1696, 4294901760
        %1698 = vmatpush1.msra.mxu0 %v1697
        %1699 = vmatprep.subr.mxu0 0.0
        %1700 = vmatpush2.msra.mxu0 0.0
        %1701 = vmatprep.subr.mxu0 0.0
        %1702 = vmatpush2.msra.mxu0 0.0
        %1703 = vmatprep.subr.mxu0 0.0
        %1704 = vmatpush2.msra.mxu0 0.0
        %1705 = vmatprep.subr.mxu0 0.0
        %1706 = vmatpush2.msra.mxu0 0.0
        %1707 = vmatprep.subr.mxu0 0.0
        %1708 = vmatpush2.msra.mxu0 0.0
        %1709 = vmatprep.subr.mxu0 0.0
        %1710 = vmatpush2.msra.mxu0 0.0
        %1711 = vmatprep.subr.mxu0 0.0
        %1712 = vmatpush2.msra.mxu0 0.0
        %1713 = vmatprep.subr.mxu0 0.0
        %1714 = vmatpush2.msra.mxu0 0.0
        %1715 = vmatprep.subr.mxu0 0.0
        %1716 = vmatpush2.msra.mxu0 0.0
        %1717 = vmatprep.subr.mxu0 0.0
        %1718 = vmatpush2.msra.mxu0 0.0
        %1719 = vmatprep.subr.mxu0 0.0
        %1720 = vmatpush2.msra.mxu0 0.0
        %1721 = vmatprep.subr.mxu0 0.0
        %1722 = vmatpush2.msra.mxu0 0.0
        %1723 = vmatprep.subr.mxu0 0.0
        %1724 = vmatpush2.msra.mxu0 0.0
        %1725 = vmatprep.subr.mxu0 0.0
        %1726 = vmatpush2.msra.mxu0 0.0
        %1727 = vmatprep.subr.mxu0 0.0
        %1728 = vmatpush2.msra.mxu0 0.0
        %1729 = vmatprep.subr.mxu0 0.0
        %1730 = vmatpush2.msra.mxu0 0.0
        %1731 = vmatprep.mubr.f32.mxu0 0.0
        %v1732 = vand.u32 %v1244, 4294901760
        %1733 = vmatmul.mubr.f32.gmra.mxu0 %v1732
        %v1734 = vpop.f32.mrf.mxu0
        %v1735 = vadd.f32 %v1632, %v1734
        %v1736 = vpop.f32.mrf.mxu0
        %1737 = vmatprep.mubr.f32.mxu0 0.0
        %v1738 = vand.u32 %v1247, 4294901760
        %1739 = vmatmul.mubr.f32.gmra.mxu0 %v1738
        %v1740 = vpop.f32.mrf.mxu0
        %v1741 = vadd.f32 %v1640, %v1740
        %v1742 = vpop.f32.mrf.mxu0
        %1743 = vdwg.mxu0
        %1744 = vmatprep.subr.mxu0 0.0
        %1745 = vmatpush1.msra.mxu0 0.0
        %1746 = vmatprep.subr.mxu0 0.0
        %1747 = vmatpush1.msra.mxu0 0.0
        %1748 = vmatprep.subr.mxu0 0.0
        %1749 = vmatpush1.msra.mxu0 0.0
        %1750 = vmatprep.subr.mxu0 0.0
        %1751 = vmatpush1.msra.mxu0 0.0
        %1752 = vmatprep.subr.mxu0 0.0
        %1753 = vmatpush1.msra.mxu0 0.0
        %1754 = vmatprep.subr.mxu0 0.0
        %1755 = vmatpush1.msra.mxu0 0.0
        %1756 = vmatprep.subr.mxu0 0.0
        %1757 = vmatpush1.msra.mxu0 0.0
        %1758 = vmatprep.subr.mxu0 0.0
        %1759 = vmatpush1.msra.mxu0 0.0
        %1760 = vmatprep.subr.mxu0 0.0
        %v1761 = vand.u32 %v461, 4294901760
        %1762 = vmatpush1.msra.mxu0 %v1761
        %1763 = vmatprep.subr.mxu0 0.0
        %v1764 = vand.u32 %v460, 4294901760
        %1765 = vmatpush1.msra.mxu0 %v1764
        %1766 = vmatprep.subr.mxu0 0.0
        %v1767 = vand.u32 %v459, 4294901760
        %1768 = vmatpush1.msra.mxu0 %v1767
        %1769 = vmatprep.subr.mxu0 0.0
        %v1770 = vand.u32 %v458, 4294901760
        %1771 = vmatpush1.msra.mxu0 %v1770
        %1772 = vmatprep.subr.mxu0 0.0
        %v1773 = vand.u32 %v457, 4294901760
        %1774 = vmatpush1.msra.mxu0 %v1773
        %1775 = vmatprep.subr.mxu0 0.0
        %v1776 = vand.u32 %v456, 4294901760
        %1777 = vmatpush1.msra.mxu0 %v1776
        %1778 = vmatprep.subr.mxu0 0.0
        %v1779 = vand.u32 %v455, 4294901760
        %1780 = vmatpush1.msra.mxu0 %v1779
        %1781 = vmatprep.subr.mxu0 0.0
        %v1782 = vand.u32 %v454, 4294901760
        %1783 = vmatpush1.msra.mxu0 %v1782
        %1784 = vmatprep.subr.mxu0 0.0
        %1785 = vmatpush2.msra.mxu0 0.0
        %1786 = vmatprep.subr.mxu0 0.0
        %1787 = vmatpush2.msra.mxu0 0.0
        %1788 = vmatprep.subr.mxu0 0.0
        %1789 = vmatpush2.msra.mxu0 0.0
        %1790 = vmatprep.subr.mxu0 0.0
        %1791 = vmatpush2.msra.mxu0 0.0
        %1792 = vmatprep.subr.mxu0 0.0
        %1793 = vmatpush2.msra.mxu0 0.0
        %1794 = vmatprep.subr.mxu0 0.0
        %1795 = vmatpush2.msra.mxu0 0.0
        %1796 = vmatprep.subr.mxu0 0.0
        %1797 = vmatpush2.msra.mxu0 0.0
        %1798 = vmatprep.subr.mxu0 0.0
        %1799 = vmatpush2.msra.mxu0 0.0
        %1800 = vmatprep.subr.mxu0 0.0
        %1801 = vmatpush2.msra.mxu0 0.0
        %1802 = vmatprep.subr.mxu0 0.0
        %1803 = vmatpush2.msra.mxu0 0.0
        %1804 = vmatprep.subr.mxu0 0.0
        %1805 = vmatpush2.msra.mxu0 0.0
        %1806 = vmatprep.subr.mxu0 0.0
        %1807 = vmatpush2.msra.mxu0 0.0
        %1808 = vmatprep.subr.mxu0 0.0
        %1809 = vmatpush2.msra.mxu0 0.0
        %1810 = vmatprep.subr.mxu0 0.0
        %1811 = vmatpush2.msra.mxu0 0.0
        %1812 = vmatprep.subr.mxu0 0.0
        %1813 = vmatpush2.msra.mxu0 0.0
        %1814 = vmatprep.subr.mxu0 0.0
        %1815 = vmatpush2.msra.mxu0 0.0
        %1816 = vmatprep.mubr.f32.mxu0 0.0
        %v1817 = vand.u32 %v1244, 4294901760
        %1818 = vmatmul.mubr.f32.gmra.mxu0 %v1817
        %v1819 = vpop.f32.mrf.mxu0
        %v1820 = vadd.f32 %v1735, %v1819
        %v1821 = vpop.f32.mrf.mxu0
        %1822 = vmatprep.mubr.f32.mxu0 0.0
        %v1823 = vand.u32 %v1247, 4294901760
        %1824 = vmatmul.mubr.f32.gmra.mxu0 %v1823
        %v1825 = vpop.f32.mrf.mxu0
        %v1826 = vadd.f32 %v1741, %v1825
        %v1827 = vpop.f32.mrf.mxu0
        %1828 = vdwg.mxu0
        %v1830 = vsel %vm656, %v654, 0
        %v1833 = vsel %vm656, %v655, 0
        %1835 = vmatprep.subr.mxu0 0.0
        %1836 = vmatpush1.msra.mxu0 0.0
        %1837 = vmatprep.subr.mxu0 0.0
        %1838 = vmatpush1.msra.mxu0 0.0
        %1839 = vmatprep.subr.mxu0 0.0
        %1840 = vmatpush1.msra.mxu0 0.0
        %1841 = vmatprep.subr.mxu0 0.0
        %1842 = vmatpush1.msra.mxu0 0.0
        %1843 = vmatprep.subr.mxu0 0.0
        %1844 = vmatpush1.msra.mxu0 0.0
        %1845 = vmatprep.subr.mxu0 0.0
        %1846 = vmatpush1.msra.mxu0 0.0
        %1847 = vmatprep.subr.mxu0 0.0
        %1848 = vmatpush1.msra.mxu0 0.0
        %1849 = vmatprep.subr.mxu0 0.0
        %1850 = vmatpush1.msra.mxu0 0.0
        %1851 = vmatprep.subr.mxu0 0.0
        %v1852 = vand.u32 %v493, 4294901760
        %1853 = vmatpush1.msra.mxu0 %v1852
        %1854 = vmatprep.subr.mxu0 0.0
        %v1855 = vand.u32 %v492, 4294901760
        %1856 = vmatpush1.msra.mxu0 %v1855
        %1857 = vmatprep.subr.mxu0 0.0
        %v1858 = vand.u32 %v491, 4294901760
        %1859 = vmatpush1.msra.mxu0 %v1858
        %1860 = vmatprep.subr.mxu0 0.0
        %v1861 = vand.u32 %v490, 4294901760
        %1862 = vmatpush1.msra.mxu0 %v1861
        %1863 = vmatprep.subr.mxu0 0.0
        %v1864 = vand.u32 %v489, 4294901760
        %1865 = vmatpush1.msra.mxu0 %v1864
        %1866 = vmatprep.subr.mxu0 0.0
        %v1867 = vand.u32 %v488, 4294901760
        %1868 = vmatpush1.msra.mxu0 %v1867
        %1869 = vmatprep.subr.mxu0 0.0
        %v1870 = vand.u32 %v487, 4294901760
        %1871 = vmatpush1.msra.mxu0 %v1870
        %1872 = vmatprep.subr.mxu0 0.0
        %v1873 = vand.u32 %v486, 4294901760
        %1874 = vmatpush1.msra.mxu0 %v1873
        %1875 = vmatprep.subr.mxu0 0.0
        %1876 = vmatpush2.msra.mxu0 0.0
        %1877 = vmatprep.subr.mxu0 0.0
        %1878 = vmatpush2.msra.mxu0 0.0
        %1879 = vmatprep.subr.mxu0 0.0
        %1880 = vmatpush2.msra.mxu0 0.0
        %1881 = vmatprep.subr.mxu0 0.0
        %1882 = vmatpush2.msra.mxu0 0.0
        %1883 = vmatprep.subr.mxu0 0.0
        %1884 = vmatpush2.msra.mxu0 0.0
        %1885 = vmatprep.subr.mxu0 0.0
        %1886 = vmatpush2.msra.mxu0 0.0
        %1887 = vmatprep.subr.mxu0 0.0
        %1888 = vmatpush2.msra.mxu0 0.0
        %1889 = vmatprep.subr.mxu0 0.0
        %1890 = vmatpush2.msra.mxu0 0.0
        %1891 = vmatprep.subr.mxu0 0.0
        %1892 = vmatpush2.msra.mxu0 0.0
        %1893 = vmatprep.subr.mxu0 0.0
        %1894 = vmatpush2.msra.mxu0 0.0
        %1895 = vmatprep.subr.mxu0 0.0
        %1896 = vmatpush2.msra.mxu0 0.0
        %1897 = vmatprep.subr.mxu0 0.0
        %1898 = vmatpush2.msra.mxu0 0.0
        %1899 = vmatprep.subr.mxu0 0.0
        %1900 = vmatpush2.msra.mxu0 0.0
        %1901 = vmatprep.subr.mxu0 0.0
        %1902 = vmatpush2.msra.mxu0 0.0
        %1903 = vmatprep.subr.mxu0 0.0
        %1904 = vmatpush2.msra.mxu0 0.0
        %1905 = vmatprep.subr.mxu0 0.0
        %1906 = vmatpush2.msra.mxu0 0.0
        %1907 = vmatprep.mubr.f32.mxu0 0.0
        %v1908 = vand.u32 %v1830, 4294901760
        %v1909 = vsub.f32 %v1830, %v1908
        %v1910 = vand.u32 %v1909, 4294901760
        %v1911 = vsub.f32 %v1909, %v1910
        %v1912 = vand.u32 %v1911, 4294901760
        %1913 = vmatmul.mubr.f32.gmra.mxu0 %v1912
        %v1914 = vpop.f32.mrf.mxu0
        %v1915 = vadd.f32 0.0, %v1914
        %v1916 = vpop.f32.mrf.mxu0
        %1917 = vmatprep.mubr.f32.mxu0 0.0
        %v1918 = vand.u32 %v1833, 4294901760
        %v1919 = vsub.f32 %v1833, %v1918
        %v1920 = vand.u32 %v1919, 4294901760
        %v1921 = vsub.f32 %v1919, %v1920
        %v1922 = vand.u32 %v1921, 4294901760
        %1923 = vmatmul.mubr.f32.gmra.mxu0 %v1922
        %v1924 = vpop.f32.mrf.mxu0
        %v1925 = vadd.f32 0.0, %v1924
        %v1926 = vpop.f32.mrf.mxu0
        %1927 = vdwg.mxu0
        %1928 = vmatprep.subr.mxu0 0.0
        %1929 = vmatpush1.msra.mxu0 0.0
        %1930 = vmatprep.subr.mxu0 0.0
        %1931 = vmatpush1.msra.mxu0 0.0
        %1932 = vmatprep.subr.mxu0 0.0
        %1933 = vmatpush1.msra.mxu0 0.0
        %1934 = vmatprep.subr.mxu0 0.0
        %1935 = vmatpush1.msra.mxu0 0.0
        %1936 = vmatprep.subr.mxu0 0.0
        %1937 = vmatpush1.msra.mxu0 0.0
        %1938 = vmatprep.subr.mxu0 0.0
        %1939 = vmatpush1.msra.mxu0 0.0
        %1940 = vmatprep.subr.mxu0 0.0
        %1941 = vmatpush1.msra.mxu0 0.0
        %1942 = vmatprep.subr.mxu0 0.0
        %1943 = vmatpush1.msra.mxu0 0.0
        %1944 = vmatprep.subr.mxu0 0.0
        %v1945 = vand.u32 %v493, 4294901760
        %v1946 = vsub.f32 %v493, %v1945
        %v1947 = vand.u32 %v1946, 4294901760
        %v1948 = vsub.f32 %v1946, %v1947
        %v1949 = vand.u32 %v1948, 4294901760
        %1950 = vmatpush1.msra.mxu0 %v1949
        %1951 = vmatprep.subr.mxu0 0.0
        %v1952 = vand.u32 %v492, 4294901760
        %v1953 = vsub.f32 %v492, %v1952
        %v1954 = vand.u32 %v1953, 4294901760
        %v1955 = vsub.f32 %v1953, %v1954
        %v1956 = vand.u32 %v1955, 4294901760
        %1957 = vmatpush1.msra.mxu0 %v1956
        %1958 = vmatprep.subr.mxu0 0.0
        %v1959 = vand.u32 %v491, 4294901760
        %v1960 = vsub.f32 %v491, %v1959
        %v1961 = vand.u32 %v1960, 4294901760
        %v1962 = vsub.f32 %v1960, %v1961
        %v1963 = vand.u32 %v1962, 4294901760
        %1964 = vmatpush1.msra.mxu0 %v1963
        %1965 = vmatprep.subr.mxu0 0.0
        %v1966 = vand.u32 %v490, 4294901760
        %v1967 = vsub.f32 %v490, %v1966
        %v1968 = vand.u32 %v1967, 4294901760
        %v1969 = vsub.f32 %v1967, %v1968
        %v1970 = vand.u32 %v1969, 4294901760
        %1971 = vmatpush1.msra.mxu0 %v1970
        %1972 = vmatprep.subr.mxu0 0.0
        %v1973 = vand.u32 %v489, 4294901760
        %v1974 = vsub.f32 %v489, %v1973
        %v1975 = vand.u32 %v1974, 4294901760
        %v1976 = vsub.f32 %v1974, %v1975
        %v1977 = vand.u32 %v1976, 4294901760
        %1978 = vmatpush1.msra.mxu0 %v1977
        %1979 = vmatprep.subr.mxu0 0.0
        %v1980 = vand.u32 %v488, 4294901760
        %v1981 = vsub.f32 %v488, %v1980
        %v1982 = vand.u32 %v1981, 4294901760
        %v1983 = vsub.f32 %v1981, %v1982
        %v1984 = vand.u32 %v1983, 4294901760
        %1985 = vmatpush1.msra.mxu0 %v1984
        %1986 = vmatprep.subr.mxu0 0.0
        %v1987 = vand.u32 %v487, 4294901760
        %v1988 = vsub.f32 %v487, %v1987
        %v1989 = vand.u32 %v1988, 4294901760
        %v1990 = vsub.f32 %v1988, %v1989
        %v1991 = vand.u32 %v1990, 4294901760
        %1992 = vmatpush1.msra.mxu0 %v1991
        %1993 = vmatprep.subr.mxu0 0.0
        %v1994 = vand.u32 %v486, 4294901760
        %v1995 = vsub.f32 %v486, %v1994
        %v1996 = vand.u32 %v1995, 4294901760
        %v1997 = vsub.f32 %v1995, %v1996
        %v1998 = vand.u32 %v1997, 4294901760
        %1999 = vmatpush1.msra.mxu0 %v1998
        %2000 = vmatprep.subr.mxu0 0.0
        %2001 = vmatpush2.msra.mxu0 0.0
        %2002 = vmatprep.subr.mxu0 0.0
        %2003 = vmatpush2.msra.mxu0 0.0
        %2004 = vmatprep.subr.mxu0 0.0
        %2005 = vmatpush2.msra.mxu0 0.0
        %2006 = vmatprep.subr.mxu0 0.0
        %2007 = vmatpush2.msra.mxu0 0.0
        %2008 = vmatprep.subr.mxu0 0.0
        %2009 = vmatpush2.msra.mxu0 0.0
        %2010 = vmatprep.subr.mxu0 0.0
        %2011 = vmatpush2.msra.mxu0 0.0
        %2012 = vmatprep.subr.mxu0 0.0
        %2013 = vmatpush2.msra.mxu0 0.0
        %2014 = vmatprep.subr.mxu0 0.0
        %2015 = vmatpush2.msra.mxu0 0.0
        %2016 = vmatprep.subr.mxu0 0.0
        %2017 = vmatpush2.msra.mxu0 0.0
        %2018 = vmatprep.subr.mxu0 0.0
        %2019 = vmatpush2.msra.mxu0 0.0
        %2020 = vmatprep.subr.mxu0 0.0
        %2021 = vmatpush2.msra.mxu0 0.0
        %2022 = vmatprep.subr.mxu0 0.0
        %2023 = vmatpush2.msra.mxu0 0.0
        %2024 = vmatprep.subr.mxu0 0.0
        %2025 = vmatpush2.msra.mxu0 0.0
        %2026 = vmatprep.subr.mxu0 0.0
        %2027 = vmatpush2.msra.mxu0 0.0
        %2028 = vmatprep.subr.mxu0 0.0
        %2029 = vmatpush2.msra.mxu0 0.0
        %2030 = vmatprep.subr.mxu0 0.0
        %2031 = vmatpush2.msra.mxu0 0.0
        %2032 = vmatprep.mubr.f32.mxu0 0.0
        %v2033 = vand.u32 %v1830, 4294901760
        %2034 = vmatmul.mubr.f32.gmra.mxu0 %v2033
        %v2035 = vpop.f32.mrf.mxu0
        %v2036 = vadd.f32 %v1915, %v2035
        %v2037 = vpop.f32.mrf.mxu0
        %2038 = vmatprep.mubr.f32.mxu0 0.0
        %v2039 = vand.u32 %v1833, 4294901760
        %2040 = vmatmul.mubr.f32.gmra.mxu0 %v2039
        %v2041 = vpop.f32.mrf.mxu0
        %v2042 = vadd.f32 %v1925, %v2041
        %v2043 = vpop.f32.mrf.mxu0
        %2044 = vdwg.mxu0
        %2045 = vmatprep.subr.mxu0 0.0
        %2046 = vmatpush1.msra.mxu0 0.0
        %2047 = vmatprep.subr.mxu0 0.0
        %2048 = vmatpush1.msra.mxu0 0.0
        %2049 = vmatprep.subr.mxu0 0.0
        %2050 = vmatpush1.msra.mxu0 0.0
        %2051 = vmatprep.subr.mxu0 0.0
        %2052 = vmatpush1.msra.mxu0 0.0
        %2053 = vmatprep.subr.mxu0 0.0
        %2054 = vmatpush1.msra.mxu0 0.0
        %2055 = vmatprep.subr.mxu0 0.0
        %2056 = vmatpush1.msra.mxu0 0.0
        %2057 = vmatprep.subr.mxu0 0.0
        %2058 = vmatpush1.msra.mxu0 0.0
        %2059 = vmatprep.subr.mxu0 0.0
        %2060 = vmatpush1.msra.mxu0 0.0
        %2061 = vmatprep.subr.mxu0 0.0
        %v2062 = vand.u32 %v493, 4294901760
        %v2063 = vsub.f32 %v493, %v2062
        %2064 = vmatpush1.msra.mxu0 %v2063
        %2065 = vmatprep.subr.mxu0 0.0
        %v2066 = vand.u32 %v492, 4294901760
        %v2067 = vsub.f32 %v492, %v2066
        %2068 = vmatpush1.msra.mxu0 %v2067
        %2069 = vmatprep.subr.mxu0 0.0
        %v2070 = vand.u32 %v491, 4294901760
        %v2071 = vsub.f32 %v491, %v2070
        %2072 = vmatpush1.msra.mxu0 %v2071
        %2073 = vmatprep.subr.mxu0 0.0
        %v2074 = vand.u32 %v490, 4294901760
        %v2075 = vsub.f32 %v490, %v2074
        %2076 = vmatpush1.msra.mxu0 %v2075
        %2077 = vmatprep.subr.mxu0 0.0
        %v2078 = vand.u32 %v489, 4294901760
        %v2079 = vsub.f32 %v489, %v2078
        %2080 = vmatpush1.msra.mxu0 %v2079
        %2081 = vmatprep.subr.mxu0 0.0
        %v2082 = vand.u32 %v488, 4294901760
        %v2083 = vsub.f32 %v488, %v2082
        %2084 = vmatpush1.msra.mxu0 %v2083
        %2085 = vmatprep.subr.mxu0 0.0
        %v2086 = vand.u32 %v487, 4294901760
        %v2087 = vsub.f32 %v487, %v2086
        %2088 = vmatpush1.msra.mxu0 %v2087
        %2089 = vmatprep.subr.mxu0 0.0
        %v2090 = vand.u32 %v486, 4294901760
        %v2091 = vsub.f32 %v486, %v2090
        %2092 = vmatpush1.msra.mxu0 %v2091
        %2093 = vmatprep.subr.mxu0 0.0
        %2094 = vmatpush2.msra.mxu0 0.0
        %2095 = vmatprep.subr.mxu0 0.0
        %2096 = vmatpush2.msra.mxu0 0.0
        %2097 = vmatprep.subr.mxu0 0.0
        %2098 = vmatpush2.msra.mxu0 0.0
        %2099 = vmatprep.subr.mxu0 0.0
        %2100 = vmatpush2.msra.mxu0 0.0
        %2101 = vmatprep.subr.mxu0 0.0
        %2102 = vmatpush2.msra.mxu0 0.0
        %2103 = vmatprep.subr.mxu0 0.0
        %2104 = vmatpush2.msra.mxu0 0.0
        %2105 = vmatprep.subr.mxu0 0.0
        %2106 = vmatpush2.msra.mxu0 0.0
        %2107 = vmatprep.subr.mxu0 0.0
        %2108 = vmatpush2.msra.mxu0 0.0
        %2109 = vmatprep.subr.mxu0 0.0
        %2110 = vmatpush2.msra.mxu0 0.0
        %2111 = vmatprep.subr.mxu0 0.0
        %2112 = vmatpush2.msra.mxu0 0.0
        %2113 = vmatprep.subr.mxu0 0.0
        %2114 = vmatpush2.msra.mxu0 0.0
        %2115 = vmatprep.subr.mxu0 0.0
        %2116 = vmatpush2.msra.mxu0 0.0
        %2117 = vmatprep.subr.mxu0 0.0
        %2118 = vmatpush2.msra.mxu0 0.0
        %2119 = vmatprep.subr.mxu0 0.0
        %2120 = vmatpush2.msra.mxu0 0.0
        %2121 = vmatprep.subr.mxu0 0.0
        %2122 = vmatpush2.msra.mxu0 0.0
        %2123 = vmatprep.subr.mxu0 0.0
        %2124 = vmatpush2.msra.mxu0 0.0
        %2125 = vmatprep.mubr.f32.mxu0 0.0
        %v2126 = vand.u32 %v1830, 4294901760
        %v2127 = vsub.f32 %v1830, %v2126
        %2128 = vmatmul.mubr.f32.gmra.mxu0 %v2127
        %v2129 = vpop.f32.mrf.mxu0
        %v2130 = vadd.f32 %v2036, %v2129
        %v2131 = vpop.f32.mrf.mxu0
        %2132 = vmatprep.mubr.f32.mxu0 0.0
        %v2133 = vand.u32 %v1833, 4294901760
        %v2134 = vsub.f32 %v1833, %v2133
        %2135 = vmatmul.mubr.f32.gmra.mxu0 %v2134
        %v2136 = vpop.f32.mrf.mxu0
        %v2137 = vadd.f32 %v2042, %v2136
        %v2138 = vpop.f32.mrf.mxu0
        %2139 = vdwg.mxu0
        %2140 = vmatprep.subr.mxu0 0.0
        %2141 = vmatpush1.msra.mxu0 0.0
        %2142 = vmatprep.subr.mxu0 0.0
        %2143 = vmatpush1.msra.mxu0 0.0
        %2144 = vmatprep.subr.mxu0 0.0
        %2145 = vmatpush1.msra.mxu0 0.0
        %2146 = vmatprep.subr.mxu0 0.0
        %2147 = vmatpush1.msra.mxu0 0.0
        %2148 = vmatprep.subr.mxu0 0.0
        %2149 = vmatpush1.msra.mxu0 0.0
        %2150 = vmatprep.subr.mxu0 0.0
        %2151 = vmatpush1.msra.mxu0 0.0
        %2152 = vmatprep.subr.mxu0 0.0
        %2153 = vmatpush1.msra.mxu0 0.0
        %2154 = vmatprep.subr.mxu0 0.0
        %2155 = vmatpush1.msra.mxu0 0.0
        %2156 = vmatprep.subr.mxu0 0.0
        %v2157 = vand.u32 %v493, 4294901760
        %2158 = vmatpush1.msra.mxu0 %v2157
        %2159 = vmatprep.subr.mxu0 0.0
        %v2160 = vand.u32 %v492, 4294901760
        %2161 = vmatpush1.msra.mxu0 %v2160
        %2162 = vmatprep.subr.mxu0 0.0
        %v2163 = vand.u32 %v491, 4294901760
        %2164 = vmatpush1.msra.mxu0 %v2163
        %2165 = vmatprep.subr.mxu0 0.0
        %v2166 = vand.u32 %v490, 4294901760
        %2167 = vmatpush1.msra.mxu0 %v2166
        %2168 = vmatprep.subr.mxu0 0.0
        %v2169 = vand.u32 %v489, 4294901760
        %2170 = vmatpush1.msra.mxu0 %v2169
        %2171 = vmatprep.subr.mxu0 0.0
        %v2172 = vand.u32 %v488, 4294901760
        %2173 = vmatpush1.msra.mxu0 %v2172
        %2174 = vmatprep.subr.mxu0 0.0
        %v2175 = vand.u32 %v487, 4294901760
        %2176 = vmatpush1.msra.mxu0 %v2175
        %2177 = vmatprep.subr.mxu0 0.0
        %v2178 = vand.u32 %v486, 4294901760
        %2179 = vmatpush1.msra.mxu0 %v2178
        %2180 = vmatprep.subr.mxu0 0.0
        %2181 = vmatpush2.msra.mxu0 0.0
        %2182 = vmatprep.subr.mxu0 0.0
        %2183 = vmatpush2.msra.mxu0 0.0
        %2184 = vmatprep.subr.mxu0 0.0
        %2185 = vmatpush2.msra.mxu0 0.0
        %2186 = vmatprep.subr.mxu0 0.0
        %2187 = vmatpush2.msra.mxu0 0.0
        %2188 = vmatprep.subr.mxu0 0.0
        %2189 = vmatpush2.msra.mxu0 0.0
        %2190 = vmatprep.subr.mxu0 0.0
        %2191 = vmatpush2.msra.mxu0 0.0
        %2192 = vmatprep.subr.mxu0 0.0
        %2193 = vmatpush2.msra.mxu0 0.0
        %2194 = vmatprep.subr.mxu0 0.0
        %2195 = vmatpush2.msra.mxu0 0.0
        %2196 = vmatprep.subr.mxu0 0.0
        %2197 = vmatpush2.msra.mxu0 0.0
        %2198 = vmatprep.subr.mxu0 0.0
        %2199 = vmatpush2.msra.mxu0 0.0
        %2200 = vmatprep.subr.mxu0 0.0
        %2201 = vmatpush2.msra.mxu0 0.0
        %2202 = vmatprep.subr.mxu0 0.0
        %2203 = vmatpush2.msra.mxu0 0.0
        %2204 = vmatprep.subr.mxu0 0.0
        %2205 = vmatpush2.msra.mxu0 0.0
        %2206 = vmatprep.subr.mxu0 0.0
        %2207 = vmatpush2.msra.mxu0 0.0
        %2208 = vmatprep.subr.mxu0 0.0
        %2209 = vmatpush2.msra.mxu0 0.0
        %2210 = vmatprep.subr.mxu0 0.0
        %2211 = vmatpush2.msra.mxu0 0.0
        %2212 = vmatprep.mubr.f32.mxu0 0.0
        %v2213 = vand.u32 %v1830, 4294901760
        %v2214 = vsub.f32 %v1830, %v2213
        %v2215 = vand.u32 %v2214, 4294901760
        %2216 = vmatmul.mubr.f32.gmra.mxu0 %v2215
        %v2217 = vpop.f32.mrf.mxu0
        %v2218 = vadd.f32 %v2130, %v2217
        %v2219 = vpop.f32.mrf.mxu0
        %2220 = vmatprep.mubr.f32.mxu0 0.0
        %v2221 = vand.u32 %v1833, 4294901760
        %v2222 = vsub.f32 %v1833, %v2221
        %v2223 = vand.u32 %v2222, 4294901760
        %2224 = vmatmul.mubr.f32.gmra.mxu0 %v2223
        %v2225 = vpop.f32.mrf.mxu0
        %v2226 = vadd.f32 %v2137, %v2225
        %v2227 = vpop.f32.mrf.mxu0
        %2228 = vdwg.mxu0
        %2229 = vmatprep.subr.mxu0 0.0
        %2230 = vmatpush1.msra.mxu0 0.0
        %2231 = vmatprep.subr.mxu0 0.0
        %2232 = vmatpush1.msra.mxu0 0.0
        %2233 = vmatprep.subr.mxu0 0.0
        %2234 = vmatpush1.msra.mxu0 0.0
        %2235 = vmatprep.subr.mxu0 0.0
        %2236 = vmatpush1.msra.mxu0 0.0
        %2237 = vmatprep.subr.mxu0 0.0
        %2238 = vmatpush1.msra.mxu0 0.0
        %2239 = vmatprep.subr.mxu0 0.0
        %2240 = vmatpush1.msra.mxu0 0.0
        %2241 = vmatprep.subr.mxu0 0.0
        %2242 = vmatpush1.msra.mxu0 0.0
        %2243 = vmatprep.subr.mxu0 0.0
        %2244 = vmatpush1.msra.mxu0 0.0
        %2245 = vmatprep.subr.mxu0 0.0
        %v2246 = vand.u32 %v493, 4294901760
        %v2247 = vsub.f32 %v493, %v2246
        %v2248 = vand.u32 %v2247, 4294901760
        %2249 = vmatpush1.msra.mxu0 %v2248
        %2250 = vmatprep.subr.mxu0 0.0
        %v2251 = vand.u32 %v492, 4294901760
        %v2252 = vsub.f32 %v492, %v2251
        %v2253 = vand.u32 %v2252, 4294901760
        %2254 = vmatpush1.msra.mxu0 %v2253
        %2255 = vmatprep.subr.mxu0 0.0
        %v2256 = vand.u32 %v491, 4294901760
        %v2257 = vsub.f32 %v491, %v2256
        %v2258 = vand.u32 %v2257, 4294901760
        %2259 = vmatpush1.msra.mxu0 %v2258
        %2260 = vmatprep.subr.mxu0 0.0
        %v2261 = vand.u32 %v490, 4294901760
        %v2262 = vsub.f32 %v490, %v2261
        %v2263 = vand.u32 %v2262, 4294901760
        %2264 = vmatpush1.msra.mxu0 %v2263
        %2265 = vmatprep.subr.mxu0 0.0
        %v2266 = vand.u32 %v489, 4294901760
        %v2267 = vsub.f32 %v489, %v2266
        %v2268 = vand.u32 %v2267, 4294901760
        %2269 = vmatpush1.msra.mxu0 %v2268
        %2270 = vmatprep.subr.mxu0 0.0
        %v2271 = vand.u32 %v488, 4294901760
        %v2272 = vsub.f32 %v488, %v2271
        %v2273 = vand.u32 %v2272, 4294901760
        %2274 = vmatpush1.msra.mxu0 %v2273
        %2275 = vmatprep.subr.mxu0 0.0
        %v2276 = vand.u32 %v487, 4294901760
        %v2277 = vsub.f32 %v487, %v2276
        %v2278 = vand.u32 %v2277, 4294901760
        %2279 = vmatpush1.msra.mxu0 %v2278
        %2280 = vmatprep.subr.mxu0 0.0
        %v2281 = vand.u32 %v486, 4294901760
        %v2282 = vsub.f32 %v486, %v2281
        %v2283 = vand.u32 %v2282, 4294901760
        %2284 = vmatpush1.msra.mxu0 %v2283
        %2285 = vmatprep.subr.mxu0 0.0
        %2286 = vmatpush2.msra.mxu0 0.0
        %2287 = vmatprep.subr.mxu0 0.0
        %2288 = vmatpush2.msra.mxu0 0.0
        %2289 = vmatprep.subr.mxu0 0.0
        %2290 = vmatpush2.msra.mxu0 0.0
        %2291 = vmatprep.subr.mxu0 0.0
        %2292 = vmatpush2.msra.mxu0 0.0
        %2293 = vmatprep.subr.mxu0 0.0
        %2294 = vmatpush2.msra.mxu0 0.0
        %2295 = vmatprep.subr.mxu0 0.0
        %2296 = vmatpush2.msra.mxu0 0.0
        %2297 = vmatprep.subr.mxu0 0.0
        %2298 = vmatpush2.msra.mxu0 0.0
        %2299 = vmatprep.subr.mxu0 0.0
        %2300 = vmatpush2.msra.mxu0 0.0
        %2301 = vmatprep.subr.mxu0 0.0
        %2302 = vmatpush2.msra.mxu0 0.0
        %2303 = vmatprep.subr.mxu0 0.0
        %2304 = vmatpush2.msra.mxu0 0.0
        %2305 = vmatprep.subr.mxu0 0.0
        %2306 = vmatpush2.msra.mxu0 0.0
        %2307 = vmatprep.subr.mxu0 0.0
        %2308 = vmatpush2.msra.mxu0 0.0
        %2309 = vmatprep.subr.mxu0 0.0
        %2310 = vmatpush2.msra.mxu0 0.0
        %2311 = vmatprep.subr.mxu0 0.0
        %2312 = vmatpush2.msra.mxu0 0.0
        %2313 = vmatprep.subr.mxu0 0.0
        %2314 = vmatpush2.msra.mxu0 0.0
        %2315 = vmatprep.subr.mxu0 0.0
        %2316 = vmatpush2.msra.mxu0 0.0
        %2317 = vmatprep.mubr.f32.mxu0 0.0
        %v2318 = vand.u32 %v1830, 4294901760
        %2319 = vmatmul.mubr.f32.gmra.mxu0 %v2318
        %v2320 = vpop.f32.mrf.mxu0
        %v2321 = vadd.f32 %v2218, %v2320
        %v2322 = vpop.f32.mrf.mxu0
        %2323 = vmatprep.mubr.f32.mxu0 0.0
        %v2324 = vand.u32 %v1833, 4294901760
        %2325 = vmatmul.mubr.f32.gmra.mxu0 %v2324
        %v2326 = vpop.f32.mrf.mxu0
        %v2327 = vadd.f32 %v2226, %v2326
        %v2328 = vpop.f32.mrf.mxu0
        %2329 = vdwg.mxu0
        %2330 = vmatprep.subr.mxu0 0.0
        %2331 = vmatpush1.msra.mxu0 0.0
        %2332 = vmatprep.subr.mxu0 0.0
        %2333 = vmatpush1.msra.mxu0 0.0
        %2334 = vmatprep.subr.mxu0 0.0
        %2335 = vmatpush1.msra.mxu0 0.0
        %2336 = vmatprep.subr.mxu0 0.0
        %2337 = vmatpush1.msra.mxu0 0.0
        %2338 = vmatprep.subr.mxu0 0.0
        %2339 = vmatpush1.msra.mxu0 0.0
        %2340 = vmatprep.subr.mxu0 0.0
        %2341 = vmatpush1.msra.mxu0 0.0
        %2342 = vmatprep.subr.mxu0 0.0
        %2343 = vmatpush1.msra.mxu0 0.0
        %2344 = vmatprep.subr.mxu0 0.0
        %2345 = vmatpush1.msra.mxu0 0.0
        %2346 = vmatprep.subr.mxu0 0.0
        %v2347 = vand.u32 %v493, 4294901760
        %2348 = vmatpush1.msra.mxu0 %v2347
        %2349 = vmatprep.subr.mxu0 0.0
        %v2350 = vand.u32 %v492, 4294901760
        %2351 = vmatpush1.msra.mxu0 %v2350
        %2352 = vmatprep.subr.mxu0 0.0
        %v2353 = vand.u32 %v491, 4294901760
        %2354 = vmatpush1.msra.mxu0 %v2353
        %2355 = vmatprep.subr.mxu0 0.0
        %v2356 = vand.u32 %v490, 4294901760
        %2357 = vmatpush1.msra.mxu0 %v2356
        %2358 = vmatprep.subr.mxu0 0.0
        %v2359 = vand.u32 %v489, 4294901760
        %2360 = vmatpush1.msra.mxu0 %v2359
        %2361 = vmatprep.subr.mxu0 0.0
        %v2362 = vand.u32 %v488, 4294901760
        %2363 = vmatpush1.msra.mxu0 %v2362
        %2364 = vmatprep.subr.mxu0 0.0
        %v2365 = vand.u32 %v487, 4294901760
        %2366 = vmatpush1.msra.mxu0 %v2365
        %2367 = vmatprep.subr.mxu0 0.0
        %v2368 = vand.u32 %v486, 4294901760
        %2369 = vmatpush1.msra.mxu0 %v2368
        %2370 = vmatprep.subr.mxu0 0.0
        %2371 = vmatpush2.msra.mxu0 0.0
        %2372 = vmatprep.subr.mxu0 0.0
        %2373 = vmatpush2.msra.mxu0 0.0
        %2374 = vmatprep.subr.mxu0 0.0
        %2375 = vmatpush2.msra.mxu0 0.0
        %2376 = vmatprep.subr.mxu0 0.0
        %2377 = vmatpush2.msra.mxu0 0.0
        %2378 = vmatprep.subr.mxu0 0.0
        %2379 = vmatpush2.msra.mxu0 0.0
        %2380 = vmatprep.subr.mxu0 0.0
        %2381 = vmatpush2.msra.mxu0 0.0
        %2382 = vmatprep.subr.mxu0 0.0
        %2383 = vmatpush2.msra.mxu0 0.0
        %2384 = vmatprep.subr.mxu0 0.0
        %2385 = vmatpush2.msra.mxu0 0.0
        %2386 = vmatprep.subr.mxu0 0.0
        %2387 = vmatpush2.msra.mxu0 0.0
        %2388 = vmatprep.subr.mxu0 0.0
        %2389 = vmatpush2.msra.mxu0 0.0
        %2390 = vmatprep.subr.mxu0 0.0
        %2391 = vmatpush2.msra.mxu0 0.0
        %2392 = vmatprep.subr.mxu0 0.0
        %2393 = vmatpush2.msra.mxu0 0.0
        %2394 = vmatprep.subr.mxu0 0.0
        %2395 = vmatpush2.msra.mxu0 0.0
        %2396 = vmatprep.subr.mxu0 0.0
        %2397 = vmatpush2.msra.mxu0 0.0
        %2398 = vmatprep.subr.mxu0 0.0
        %2399 = vmatpush2.msra.mxu0 0.0
        %2400 = vmatprep.subr.mxu0 0.0
        %2401 = vmatpush2.msra.mxu0 0.0
        %2402 = vmatprep.mubr.f32.mxu0 0.0
        %v2403 = vand.u32 %v1830, 4294901760
        %2404 = vmatmul.mubr.f32.gmra.mxu0 %v2403
        %v2405 = vpop.f32.mrf.mxu0
        %v2406 = vadd.f32 %v2321, %v2405
        %v2407 = vpop.f32.mrf.mxu0
        %2408 = vmatprep.mubr.f32.mxu0 0.0
        %v2409 = vand.u32 %v1833, 4294901760
        %2410 = vmatmul.mubr.f32.gmra.mxu0 %v2409
        %v2411 = vpop.f32.mrf.mxu0
        %v2412 = vadd.f32 %v2327, %v2411
        %v2413 = vpop.f32.mrf.mxu0
        %2414 = vdwg.mxu0
        %v2416 = vsel %vm656, %v630, 0
        %v2419 = vsel %vm656, %v631, 0
        %2421 = vmatprep.subr.mxu0 0.0
        %2422 = vmatpush1.msra.mxu0 0.0
        %2423 = vmatprep.subr.mxu0 0.0
        %2424 = vmatpush1.msra.mxu0 0.0
        %2425 = vmatprep.subr.mxu0 0.0
        %2426 = vmatpush1.msra.mxu0 0.0
        %2427 = vmatprep.subr.mxu0 0.0
        %2428 = vmatpush1.msra.mxu0 0.0
        %2429 = vmatprep.subr.mxu0 0.0
        %2430 = vmatpush1.msra.mxu0 0.0
        %2431 = vmatprep.subr.mxu0 0.0
        %2432 = vmatpush1.msra.mxu0 0.0
        %2433 = vmatprep.subr.mxu0 0.0
        %2434 = vmatpush1.msra.mxu0 0.0
        %2435 = vmatprep.subr.mxu0 0.0
        %2436 = vmatpush1.msra.mxu0 0.0
        %2437 = vmatprep.subr.mxu0 0.0
        %v2438 = vand.u32 %v461, 4294901760
        %2439 = vmatpush1.msra.mxu0 %v2438
        %2440 = vmatprep.subr.mxu0 0.0
        %v2441 = vand.u32 %v460, 4294901760
        %2442 = vmatpush1.msra.mxu0 %v2441
        %2443 = vmatprep.subr.mxu0 0.0
        %v2444 = vand.u32 %v459, 4294901760
        %2445 = vmatpush1.msra.mxu0 %v2444
        %2446 = vmatprep.subr.mxu0 0.0
        %v2447 = vand.u32 %v458, 4294901760
        %2448 = vmatpush1.msra.mxu0 %v2447
        %2449 = vmatprep.subr.mxu0 0.0
        %v2450 = vand.u32 %v457, 4294901760
        %2451 = vmatpush1.msra.mxu0 %v2450
        %2452 = vmatprep.subr.mxu0 0.0
        %v2453 = vand.u32 %v456, 4294901760
        %2454 = vmatpush1.msra.mxu0 %v2453
        %2455 = vmatprep.subr.mxu0 0.0
        %v2456 = vand.u32 %v455, 4294901760
        %2457 = vmatpush1.msra.mxu0 %v2456
        %2458 = vmatprep.subr.mxu0 0.0
        %v2459 = vand.u32 %v454, 4294901760
        %2460 = vmatpush1.msra.mxu0 %v2459
        %2461 = vmatprep.subr.mxu0 0.0
        %2462 = vmatpush2.msra.mxu0 0.0
        %2463 = vmatprep.subr.mxu0 0.0
        %2464 = vmatpush2.msra.mxu0 0.0
        %2465 = vmatprep.subr.mxu0 0.0
        %2466 = vmatpush2.msra.mxu0 0.0
        %2467 = vmatprep.subr.mxu0 0.0
        %2468 = vmatpush2.msra.mxu0 0.0
        %2469 = vmatprep.subr.mxu0 0.0
        %2470 = vmatpush2.msra.mxu0 0.0
        %2471 = vmatprep.subr.mxu0 0.0
        %2472 = vmatpush2.msra.mxu0 0.0
        %2473 = vmatprep.subr.mxu0 0.0
        %2474 = vmatpush2.msra.mxu0 0.0
        %2475 = vmatprep.subr.mxu0 0.0
        %2476 = vmatpush2.msra.mxu0 0.0
        %2477 = vmatprep.subr.mxu0 0.0
        %2478 = vmatpush2.msra.mxu0 0.0
        %2479 = vmatprep.subr.mxu0 0.0
        %2480 = vmatpush2.msra.mxu0 0.0
        %2481 = vmatprep.subr.mxu0 0.0
        %2482 = vmatpush2.msra.mxu0 0.0
        %2483 = vmatprep.subr.mxu0 0.0
        %2484 = vmatpush2.msra.mxu0 0.0
        %2485 = vmatprep.subr.mxu0 0.0
        %2486 = vmatpush2.msra.mxu0 0.0
        %2487 = vmatprep.subr.mxu0 0.0
        %2488 = vmatpush2.msra.mxu0 0.0
        %2489 = vmatprep.subr.mxu0 0.0
        %2490 = vmatpush2.msra.mxu0 0.0
        %2491 = vmatprep.subr.mxu0 0.0
        %2492 = vmatpush2.msra.mxu0 0.0
        %2493 = vmatprep.mubr.f32.mxu0 0.0
        %v2494 = vand.u32 %v2416, 4294901760
        %v2495 = vsub.f32 %v2416, %v2494
        %v2496 = vand.u32 %v2495, 4294901760
        %v2497 = vsub.f32 %v2495, %v2496
        %v2498 = vand.u32 %v2497, 4294901760
        %2499 = vmatmul.mubr.f32.gmra.mxu0 %v2498
        %v2500 = vpop.f32.mrf.mxu0
        %v2501 = vadd.f32 %v2406, %v2500
        %v2502 = vpop.f32.mrf.mxu0
        %2503 = vmatprep.mubr.f32.mxu0 0.0
        %v2504 = vand.u32 %v2419, 4294901760
        %v2505 = vsub.f32 %v2419, %v2504
        %v2506 = vand.u32 %v2505, 4294901760
        %v2507 = vsub.f32 %v2505, %v2506
        %v2508 = vand.u32 %v2507, 4294901760
        %2509 = vmatmul.mubr.f32.gmra.mxu0 %v2508
        %v2510 = vpop.f32.mrf.mxu0
        %v2511 = vadd.f32 %v2412, %v2510
        %v2512 = vpop.f32.mrf.mxu0
        %2513 = vdwg.mxu0
        %2514 = vmatprep.subr.mxu0 0.0
        %2515 = vmatpush1.msra.mxu0 0.0
        %2516 = vmatprep.subr.mxu0 0.0
        %2517 = vmatpush1.msra.mxu0 0.0
        %2518 = vmatprep.subr.mxu0 0.0
        %2519 = vmatpush1.msra.mxu0 0.0
        %2520 = vmatprep.subr.mxu0 0.0
        %2521 = vmatpush1.msra.mxu0 0.0
        %2522 = vmatprep.subr.mxu0 0.0
        %2523 = vmatpush1.msra.mxu0 0.0
        %2524 = vmatprep.subr.mxu0 0.0
        %2525 = vmatpush1.msra.mxu0 0.0
        %2526 = vmatprep.subr.mxu0 0.0
        %2527 = vmatpush1.msra.mxu0 0.0
        %2528 = vmatprep.subr.mxu0 0.0
        %2529 = vmatpush1.msra.mxu0 0.0
        %2530 = vmatprep.subr.mxu0 0.0
        %v2531 = vand.u32 %v461, 4294901760
        %v2532 = vsub.f32 %v461, %v2531
        %v2533 = vand.u32 %v2532, 4294901760
        %v2534 = vsub.f32 %v2532, %v2533
        %v2535 = vand.u32 %v2534, 4294901760
        %2536 = vmatpush1.msra.mxu0 %v2535
        %2537 = vmatprep.subr.mxu0 0.0
        %v2538 = vand.u32 %v460, 4294901760
        %v2539 = vsub.f32 %v460, %v2538
        %v2540 = vand.u32 %v2539, 4294901760
        %v2541 = vsub.f32 %v2539, %v2540
        %v2542 = vand.u32 %v2541, 4294901760
        %2543 = vmatpush1.msra.mxu0 %v2542
        %2544 = vmatprep.subr.mxu0 0.0
        %v2545 = vand.u32 %v459, 4294901760
        %v2546 = vsub.f32 %v459, %v2545
        %v2547 = vand.u32 %v2546, 4294901760
        %v2548 = vsub.f32 %v2546, %v2547
        %v2549 = vand.u32 %v2548, 4294901760
        %2550 = vmatpush1.msra.mxu0 %v2549
        %2551 = vmatprep.subr.mxu0 0.0
        %v2552 = vand.u32 %v458, 4294901760
        %v2553 = vsub.f32 %v458, %v2552
        %v2554 = vand.u32 %v2553, 4294901760
        %v2555 = vsub.f32 %v2553, %v2554
        %v2556 = vand.u32 %v2555, 4294901760
        %2557 = vmatpush1.msra.mxu0 %v2556
        %2558 = vmatprep.subr.mxu0 0.0
        %v2559 = vand.u32 %v457, 4294901760
        %v2560 = vsub.f32 %v457, %v2559
        %v2561 = vand.u32 %v2560, 4294901760
        %v2562 = vsub.f32 %v2560, %v2561
        %v2563 = vand.u32 %v2562, 4294901760
        %2564 = vmatpush1.msra.mxu0 %v2563
        %2565 = vmatprep.subr.mxu0 0.0
        %v2566 = vand.u32 %v456, 4294901760
        %v2567 = vsub.f32 %v456, %v2566
        %v2568 = vand.u32 %v2567, 4294901760
        %v2569 = vsub.f32 %v2567, %v2568
        %v2570 = vand.u32 %v2569, 4294901760
        %2571 = vmatpush1.msra.mxu0 %v2570
        %2572 = vmatprep.subr.mxu0 0.0
        %v2573 = vand.u32 %v455, 4294901760
        %v2574 = vsub.f32 %v455, %v2573
        %v2575 = vand.u32 %v2574, 4294901760
        %v2576 = vsub.f32 %v2574, %v2575
        %v2577 = vand.u32 %v2576, 4294901760
        %2578 = vmatpush1.msra.mxu0 %v2577
        %2579 = vmatprep.subr.mxu0 0.0
        %v2580 = vand.u32 %v454, 4294901760
        %v2581 = vsub.f32 %v454, %v2580
        %v2582 = vand.u32 %v2581, 4294901760
        %v2583 = vsub.f32 %v2581, %v2582
        %v2584 = vand.u32 %v2583, 4294901760
        %2585 = vmatpush1.msra.mxu0 %v2584
        %2586 = vmatprep.subr.mxu0 0.0
        %2587 = vmatpush2.msra.mxu0 0.0
        %2588 = vmatprep.subr.mxu0 0.0
        %2589 = vmatpush2.msra.mxu0 0.0
        %2590 = vmatprep.subr.mxu0 0.0
        %2591 = vmatpush2.msra.mxu0 0.0
        %2592 = vmatprep.subr.mxu0 0.0
        %2593 = vmatpush2.msra.mxu0 0.0
        %2594 = vmatprep.subr.mxu0 0.0
        %2595 = vmatpush2.msra.mxu0 0.0
        %2596 = vmatprep.subr.mxu0 0.0
        %2597 = vmatpush2.msra.mxu0 0.0
        %2598 = vmatprep.subr.mxu0 0.0
        %2599 = vmatpush2.msra.mxu0 0.0
        %2600 = vmatprep.subr.mxu0 0.0
        %2601 = vmatpush2.msra.mxu0 0.0
        %2602 = vmatprep.subr.mxu0 0.0
        %2603 = vmatpush2.msra.mxu0 0.0
        %2604 = vmatprep.subr.mxu0 0.0
        %2605 = vmatpush2.msra.mxu0 0.0
        %2606 = vmatprep.subr.mxu0 0.0
        %2607 = vmatpush2.msra.mxu0 0.0
        %2608 = vmatprep.subr.mxu0 0.0
        %2609 = vmatpush2.msra.mxu0 0.0
        %2610 = vmatprep.subr.mxu0 0.0
        %2611 = vmatpush2.msra.mxu0 0.0
        %2612 = vmatprep.subr.mxu0 0.0
        %2613 = vmatpush2.msra.mxu0 0.0
        %2614 = vmatprep.subr.mxu0 0.0
        %2615 = vmatpush2.msra.mxu0 0.0
        %2616 = vmatprep.subr.mxu0 0.0
        %2617 = vmatpush2.msra.mxu0 0.0
        %2618 = vmatprep.mubr.f32.mxu0 0.0
        %v2619 = vand.u32 %v2416, 4294901760
        %2620 = vmatmul.mubr.f32.gmra.mxu0 %v2619
        %v2621 = vpop.f32.mrf.mxu0
        %v2622 = vadd.f32 %v2501, %v2621
        %v2623 = vpop.f32.mrf.mxu0
        %2624 = vmatprep.mubr.f32.mxu0 0.0
        %v2625 = vand.u32 %v2419, 4294901760
        %2626 = vmatmul.mubr.f32.gmra.mxu0 %v2625
        %v2627 = vpop.f32.mrf.mxu0
        %v2628 = vadd.f32 %v2511, %v2627
        %v2629 = vpop.f32.mrf.mxu0
        %2630 = vdwg.mxu0
        %2631 = vmatprep.subr.mxu0 0.0
        %2632 = vmatpush1.msra.mxu0 0.0
        %2633 = vmatprep.subr.mxu0 0.0
        %2634 = vmatpush1.msra.mxu0 0.0
        %2635 = vmatprep.subr.mxu0 0.0
        %2636 = vmatpush1.msra.mxu0 0.0
        %2637 = vmatprep.subr.mxu0 0.0
        %2638 = vmatpush1.msra.mxu0 0.0
        %2639 = vmatprep.subr.mxu0 0.0
        %2640 = vmatpush1.msra.mxu0 0.0
        %2641 = vmatprep.subr.mxu0 0.0
        %2642 = vmatpush1.msra.mxu0 0.0
        %2643 = vmatprep.subr.mxu0 0.0
        %2644 = vmatpush1.msra.mxu0 0.0
        %2645 = vmatprep.subr.mxu0 0.0
        %2646 = vmatpush1.msra.mxu0 0.0
        %2647 = vmatprep.subr.mxu0 0.0
        %v2648 = vand.u32 %v461, 4294901760
        %v2649 = vsub.f32 %v461, %v2648
        %2650 = vmatpush1.msra.mxu0 %v2649
        %2651 = vmatprep.subr.mxu0 0.0
        %v2652 = vand.u32 %v460, 4294901760
        %v2653 = vsub.f32 %v460, %v2652
        %2654 = vmatpush1.msra.mxu0 %v2653
        %2655 = vmatprep.subr.mxu0 0.0
        %v2656 = vand.u32 %v459, 4294901760
        %v2657 = vsub.f32 %v459, %v2656
        %2658 = vmatpush1.msra.mxu0 %v2657
        %2659 = vmatprep.subr.mxu0 0.0
        %v2660 = vand.u32 %v458, 4294901760
        %v2661 = vsub.f32 %v458, %v2660
        %2662 = vmatpush1.msra.mxu0 %v2661
        %2663 = vmatprep.subr.mxu0 0.0
        %v2664 = vand.u32 %v457, 4294901760
        %v2665 = vsub.f32 %v457, %v2664
        %2666 = vmatpush1.msra.mxu0 %v2665
        %2667 = vmatprep.subr.mxu0 0.0
        %v2668 = vand.u32 %v456, 4294901760
        %v2669 = vsub.f32 %v456, %v2668
        %2670 = vmatpush1.msra.mxu0 %v2669
        %2671 = vmatprep.subr.mxu0 0.0
        %v2672 = vand.u32 %v455, 4294901760
        %v2673 = vsub.f32 %v455, %v2672
        %2674 = vmatpush1.msra.mxu0 %v2673
        %2675 = vmatprep.subr.mxu0 0.0
        %v2676 = vand.u32 %v454, 4294901760
        %v2677 = vsub.f32 %v454, %v2676
        %2678 = vmatpush1.msra.mxu0 %v2677
        %2679 = vmatprep.subr.mxu0 0.0
        %2680 = vmatpush2.msra.mxu0 0.0
        %2681 = vmatprep.subr.mxu0 0.0
        %2682 = vmatpush2.msra.mxu0 0.0
        %2683 = vmatprep.subr.mxu0 0.0
        %2684 = vmatpush2.msra.mxu0 0.0
        %2685 = vmatprep.subr.mxu0 0.0
        %2686 = vmatpush2.msra.mxu0 0.0
        %2687 = vmatprep.subr.mxu0 0.0
        %2688 = vmatpush2.msra.mxu0 0.0
        %2689 = vmatprep.subr.mxu0 0.0
        %2690 = vmatpush2.msra.mxu0 0.0
        %2691 = vmatprep.subr.mxu0 0.0
        %2692 = vmatpush2.msra.mxu0 0.0
        %2693 = vmatprep.subr.mxu0 0.0
        %2694 = vmatpush2.msra.mxu0 0.0
        %2695 = vmatprep.subr.mxu0 0.0
        %2696 = vmatpush2.msra.mxu0 0.0
        %2697 = vmatprep.subr.mxu0 0.0
        %2698 = vmatpush2.msra.mxu0 0.0
        %2699 = vmatprep.subr.mxu0 0.0
        %2700 = vmatpush2.msra.mxu0 0.0
        %2701 = vmatprep.subr.mxu0 0.0
        %2702 = vmatpush2.msra.mxu0 0.0
        %2703 = vmatprep.subr.mxu0 0.0
        %2704 = vmatpush2.msra.mxu0 0.0
        %2705 = vmatprep.subr.mxu0 0.0
        %2706 = vmatpush2.msra.mxu0 0.0
        %2707 = vmatprep.subr.mxu0 0.0
        %2708 = vmatpush2.msra.mxu0 0.0
        %2709 = vmatprep.subr.mxu0 0.0
        %2710 = vmatpush2.msra.mxu0 0.0
        %2711 = vmatprep.mubr.f32.mxu0 0.0
        %v2712 = vand.u32 %v2416, 4294901760
        %v2713 = vsub.f32 %v2416, %v2712
        %2714 = vmatmul.mubr.f32.gmra.mxu0 %v2713
        %v2715 = vpop.f32.mrf.mxu0
        %v2716 = vadd.f32 %v2622, %v2715
        %v2717 = vpop.f32.mrf.mxu0
        %2718 = vmatprep.mubr.f32.mxu0 0.0
        %v2719 = vand.u32 %v2419, 4294901760
        %v2720 = vsub.f32 %v2419, %v2719
        %2721 = vmatmul.mubr.f32.gmra.mxu0 %v2720
        %v2722 = vpop.f32.mrf.mxu0
        %v2723 = vadd.f32 %v2628, %v2722
        %v2724 = vpop.f32.mrf.mxu0
        %2725 = vdwg.mxu0
        %2726 = vmatprep.subr.mxu0 0.0
        %2727 = vmatpush1.msra.mxu0 0.0
        %2728 = vmatprep.subr.mxu0 0.0
        %2729 = vmatpush1.msra.mxu0 0.0
        %2730 = vmatprep.subr.mxu0 0.0
        %2731 = vmatpush1.msra.mxu0 0.0
        %2732 = vmatprep.subr.mxu0 0.0
        %2733 = vmatpush1.msra.mxu0 0.0
        %2734 = vmatprep.subr.mxu0 0.0
        %2735 = vmatpush1.msra.mxu0 0.0
        %2736 = vmatprep.subr.mxu0 0.0
        %2737 = vmatpush1.msra.mxu0 0.0
        %2738 = vmatprep.subr.mxu0 0.0
        %2739 = vmatpush1.msra.mxu0 0.0
        %2740 = vmatprep.subr.mxu0 0.0
        %2741 = vmatpush1.msra.mxu0 0.0
        %2742 = vmatprep.subr.mxu0 0.0
        %v2743 = vand.u32 %v461, 4294901760
        %2744 = vmatpush1.msra.mxu0 %v2743
        %2745 = vmatprep.subr.mxu0 0.0
        %v2746 = vand.u32 %v460, 4294901760
        %2747 = vmatpush1.msra.mxu0 %v2746
        %2748 = vmatprep.subr.mxu0 0.0
        %v2749 = vand.u32 %v459, 4294901760
        %2750 = vmatpush1.msra.mxu0 %v2749
        %2751 = vmatprep.subr.mxu0 0.0
        %v2752 = vand.u32 %v458, 4294901760
        %2753 = vmatpush1.msra.mxu0 %v2752
        %2754 = vmatprep.subr.mxu0 0.0
        %v2755 = vand.u32 %v457, 4294901760
        %2756 = vmatpush1.msra.mxu0 %v2755
        %2757 = vmatprep.subr.mxu0 0.0
        %v2758 = vand.u32 %v456, 4294901760
        %2759 = vmatpush1.msra.mxu0 %v2758
        %2760 = vmatprep.subr.mxu0 0.0
        %v2761 = vand.u32 %v455, 4294901760
        %2762 = vmatpush1.msra.mxu0 %v2761
        %2763 = vmatprep.subr.mxu0 0.0
        %v2764 = vand.u32 %v454, 4294901760
        %2765 = vmatpush1.msra.mxu0 %v2764
        %2766 = vmatprep.subr.mxu0 0.0
        %2767 = vmatpush2.msra.mxu0 0.0
        %2768 = vmatprep.subr.mxu0 0.0
        %2769 = vmatpush2.msra.mxu0 0.0
        %2770 = vmatprep.subr.mxu0 0.0
        %2771 = vmatpush2.msra.mxu0 0.0
        %2772 = vmatprep.subr.mxu0 0.0
        %2773 = vmatpush2.msra.mxu0 0.0
        %2774 = vmatprep.subr.mxu0 0.0
        %2775 = vmatpush2.msra.mxu0 0.0
        %2776 = vmatprep.subr.mxu0 0.0
        %2777 = vmatpush2.msra.mxu0 0.0
        %2778 = vmatprep.subr.mxu0 0.0
        %2779 = vmatpush2.msra.mxu0 0.0
        %2780 = vmatprep.subr.mxu0 0.0
        %2781 = vmatpush2.msra.mxu0 0.0
        %2782 = vmatprep.subr.mxu0 0.0
        %2783 = vmatpush2.msra.mxu0 0.0
        %2784 = vmatprep.subr.mxu0 0.0
        %2785 = vmatpush2.msra.mxu0 0.0
        %2786 = vmatprep.subr.mxu0 0.0
        %2787 = vmatpush2.msra.mxu0 0.0
        %2788 = vmatprep.subr.mxu0 0.0
        %2789 = vmatpush2.msra.mxu0 0.0
        %2790 = vmatprep.subr.mxu0 0.0
        %2791 = vmatpush2.msra.mxu0 0.0
        %2792 = vmatprep.subr.mxu0 0.0
        %2793 = vmatpush2.msra.mxu0 0.0
        %2794 = vmatprep.subr.mxu0 0.0
        %2795 = vmatpush2.msra.mxu0 0.0
        %2796 = vmatprep.subr.mxu0 0.0
        %2797 = vmatpush2.msra.mxu0 0.0
        %2798 = vmatprep.mubr.f32.mxu0 0.0
        %v2799 = vand.u32 %v2416, 4294901760
        %v2800 = vsub.f32 %v2416, %v2799
        %v2801 = vand.u32 %v2800, 4294901760
        %2802 = vmatmul.mubr.f32.gmra.mxu0 %v2801
        %v2803 = vpop.f32.mrf.mxu0
        %v2804 = vadd.f32 %v2716, %v2803
        %v2805 = vpop.f32.mrf.mxu0
        %2806 = vmatprep.mubr.f32.mxu0 0.0
        %v2807 = vand.u32 %v2419, 4294901760
        %v2808 = vsub.f32 %v2419, %v2807
        %v2809 = vand.u32 %v2808, 4294901760
        %2810 = vmatmul.mubr.f32.gmra.mxu0 %v2809
        %v2811 = vpop.f32.mrf.mxu0
        %v2812 = vadd.f32 %v2723, %v2811
        %v2813 = vpop.f32.mrf.mxu0
        %2814 = vdwg.mxu0
        %2815 = vmatprep.subr.mxu0 0.0
        %2816 = vmatpush1.msra.mxu0 0.0
        %2817 = vmatprep.subr.mxu0 0.0
        %2818 = vmatpush1.msra.mxu0 0.0
        %2819 = vmatprep.subr.mxu0 0.0
        %2820 = vmatpush1.msra.mxu0 0.0
        %2821 = vmatprep.subr.mxu0 0.0
        %2822 = vmatpush1.msra.mxu0 0.0
        %2823 = vmatprep.subr.mxu0 0.0
        %2824 = vmatpush1.msra.mxu0 0.0
        %2825 = vmatprep.subr.mxu0 0.0
        %2826 = vmatpush1.msra.mxu0 0.0
        %2827 = vmatprep.subr.mxu0 0.0
        %2828 = vmatpush1.msra.mxu0 0.0
        %2829 = vmatprep.subr.mxu0 0.0
        %2830 = vmatpush1.msra.mxu0 0.0
        %2831 = vmatprep.subr.mxu0 0.0
        %v2832 = vand.u32 %v461, 4294901760
        %v2833 = vsub.f32 %v461, %v2832
        %v2834 = vand.u32 %v2833, 4294901760
        %2835 = vmatpush1.msra.mxu0 %v2834
        %2836 = vmatprep.subr.mxu0 0.0
        %v2837 = vand.u32 %v460, 4294901760
        %v2838 = vsub.f32 %v460, %v2837
        %v2839 = vand.u32 %v2838, 4294901760
        %2840 = vmatpush1.msra.mxu0 %v2839
        %2841 = vmatprep.subr.mxu0 0.0
        %v2842 = vand.u32 %v459, 4294901760
        %v2843 = vsub.f32 %v459, %v2842
        %v2844 = vand.u32 %v2843, 4294901760
        %2845 = vmatpush1.msra.mxu0 %v2844
        %2846 = vmatprep.subr.mxu0 0.0
        %v2847 = vand.u32 %v458, 4294901760
        %v2848 = vsub.f32 %v458, %v2847
        %v2849 = vand.u32 %v2848, 4294901760
        %2850 = vmatpush1.msra.mxu0 %v2849
        %2851 = vmatprep.subr.mxu0 0.0
        %v2852 = vand.u32 %v457, 4294901760
        %v2853 = vsub.f32 %v457, %v2852
        %v2854 = vand.u32 %v2853, 4294901760
        %2855 = vmatpush1.msra.mxu0 %v2854
        %2856 = vmatprep.subr.mxu0 0.0
        %v2857 = vand.u32 %v456, 4294901760
        %v2858 = vsub.f32 %v456, %v2857
        %v2859 = vand.u32 %v2858, 4294901760
        %2860 = vmatpush1.msra.mxu0 %v2859
        %2861 = vmatprep.subr.mxu0 0.0
        %v2862 = vand.u32 %v455, 4294901760
        %v2863 = vsub.f32 %v455, %v2862
        %v2864 = vand.u32 %v2863, 4294901760
        %2865 = vmatpush1.msra.mxu0 %v2864
        %2866 = vmatprep.subr.mxu0 0.0
        %v2867 = vand.u32 %v454, 4294901760
        %v2868 = vsub.f32 %v454, %v2867
        %v2869 = vand.u32 %v2868, 4294901760
        %2870 = vmatpush1.msra.mxu0 %v2869
        %2871 = vmatprep.subr.mxu0 0.0
        %2872 = vmatpush2.msra.mxu0 0.0
        %2873 = vmatprep.subr.mxu0 0.0
        %2874 = vmatpush2.msra.mxu0 0.0
        %2875 = vmatprep.subr.mxu0 0.0
        %2876 = vmatpush2.msra.mxu0 0.0
        %2877 = vmatprep.subr.mxu0 0.0
        %2878 = vmatpush2.msra.mxu0 0.0
        %2879 = vmatprep.subr.mxu0 0.0
        %2880 = vmatpush2.msra.mxu0 0.0
        %2881 = vmatprep.subr.mxu0 0.0
        %2882 = vmatpush2.msra.mxu0 0.0
        %2883 = vmatprep.subr.mxu0 0.0
        %2884 = vmatpush2.msra.mxu0 0.0
        %2885 = vmatprep.subr.mxu0 0.0
        %2886 = vmatpush2.msra.mxu0 0.0
        %2887 = vmatprep.subr.mxu0 0.0
        %2888 = vmatpush2.msra.mxu0 0.0
        %2889 = vmatprep.subr.mxu0 0.0
        %2890 = vmatpush2.msra.mxu0 0.0
        %2891 = vmatprep.subr.mxu0 0.0
        %2892 = vmatpush2.msra.mxu0 0.0
        %2893 = vmatprep.subr.mxu0 0.0
        %2894 = vmatpush2.msra.mxu0 0.0
        %2895 = vmatprep.subr.mxu0 0.0
        %2896 = vmatpush2.msra.mxu0 0.0
        %2897 = vmatprep.subr.mxu0 0.0
        %2898 = vmatpush2.msra.mxu0 0.0
        %2899 = vmatprep.subr.mxu0 0.0
        %2900 = vmatpush2.msra.mxu0 0.0
        %2901 = vmatprep.subr.mxu0 0.0
        %2902 = vmatpush2.msra.mxu0 0.0
        %2903 = vmatprep.mubr.f32.mxu0 0.0
        %v2904 = vand.u32 %v2416, 4294901760
        %2905 = vmatmul.mubr.f32.gmra.mxu0 %v2904
        %v2906 = vpop.f32.mrf.mxu0
        %v2907 = vadd.f32 %v2804, %v2906
        %v2908 = vpop.f32.mrf.mxu0
        %2909 = vmatprep.mubr.f32.mxu0 0.0
        %v2910 = vand.u32 %v2419, 4294901760
        %2911 = vmatmul.mubr.f32.gmra.mxu0 %v2910
        %v2912 = vpop.f32.mrf.mxu0
        %v2913 = vadd.f32 %v2812, %v2912
        %v2914 = vpop.f32.mrf.mxu0
        %2915 = vdwg.mxu0
        %2916 = vmatprep.subr.mxu0 0.0
        %2917 = vmatpush1.msra.mxu0 0.0
        %2918 = vmatprep.subr.mxu0 0.0
        %2919 = vmatpush1.msra.mxu0 0.0
        %2920 = vmatprep.subr.mxu0 0.0
        %2921 = vmatpush1.msra.mxu0 0.0
        %2922 = vmatprep.subr.mxu0 0.0
        %2923 = vmatpush1.msra.mxu0 0.0
        %2924 = vmatprep.subr.mxu0 0.0
        %2925 = vmatpush1.msra.mxu0 0.0
        %2926 = vmatprep.subr.mxu0 0.0
        %2927 = vmatpush1.msra.mxu0 0.0
        %2928 = vmatprep.subr.mxu0 0.0
        %2929 = vmatpush1.msra.mxu0 0.0
        %2930 = vmatprep.subr.mxu0 0.0
        %2931 = vmatpush1.msra.mxu0 0.0
        %2932 = vmatprep.subr.mxu0 0.0
        %v2933 = vand.u32 %v461, 4294901760
        %2934 = vmatpush1.msra.mxu0 %v2933
        %2935 = vmatprep.subr.mxu0 0.0
        %v2936 = vand.u32 %v460, 4294901760
        %2937 = vmatpush1.msra.mxu0 %v2936
        %2938 = vmatprep.subr.mxu0 0.0
        %v2939 = vand.u32 %v459, 4294901760
        %2940 = vmatpush1.msra.mxu0 %v2939
        %2941 = vmatprep.subr.mxu0 0.0
        %v2942 = vand.u32 %v458, 4294901760
        %2943 = vmatpush1.msra.mxu0 %v2942
        %2944 = vmatprep.subr.mxu0 0.0
        %v2945 = vand.u32 %v457, 4294901760
        %2946 = vmatpush1.msra.mxu0 %v2945
        %2947 = vmatprep.subr.mxu0 0.0
        %v2948 = vand.u32 %v456, 4294901760
        %2949 = vmatpush1.msra.mxu0 %v2948
        %2950 = vmatprep.subr.mxu0 0.0
        %v2951 = vand.u32 %v455, 4294901760
        %2952 = vmatpush1.msra.mxu0 %v2951
        %2953 = vmatprep.subr.mxu0 0.0
        %v2954 = vand.u32 %v454, 4294901760
        %2955 = vmatpush1.msra.mxu0 %v2954
        %2956 = vmatprep.subr.mxu0 0.0
        %2957 = vmatpush2.msra.mxu0 0.0
        %2958 = vmatprep.subr.mxu0 0.0
        %2959 = vmatpush2.msra.mxu0 0.0
        %2960 = vmatprep.subr.mxu0 0.0
        %2961 = vmatpush2.msra.mxu0 0.0
        %2962 = vmatprep.subr.mxu0 0.0
        %2963 = vmatpush2.msra.mxu0 0.0
        %2964 = vmatprep.subr.mxu0 0.0
        %2965 = vmatpush2.msra.mxu0 0.0
        %2966 = vmatprep.subr.mxu0 0.0
        %2967 = vmatpush2.msra.mxu0 0.0
        %2968 = vmatprep.subr.mxu0 0.0
        %2969 = vmatpush2.msra.mxu0 0.0
        %2970 = vmatprep.subr.mxu0 0.0
        %2971 = vmatpush2.msra.mxu0 0.0
        %2972 = vmatprep.subr.mxu0 0.0
        %2973 = vmatpush2.msra.mxu0 0.0
        %2974 = vmatprep.subr.mxu0 0.0
        %2975 = vmatpush2.msra.mxu0 0.0
        %2976 = vmatprep.subr.mxu0 0.0
        %2977 = vmatpush2.msra.mxu0 0.0
        %2978 = vmatprep.subr.mxu0 0.0
        %2979 = vmatpush2.msra.mxu0 0.0
        %2980 = vmatprep.subr.mxu0 0.0
        %2981 = vmatpush2.msra.mxu0 0.0
        %2982 = vmatprep.subr.mxu0 0.0
        %2983 = vmatpush2.msra.mxu0 0.0
        %2984 = vmatprep.subr.mxu0 0.0
        %2985 = vmatpush2.msra.mxu0 0.0
        %2986 = vmatprep.subr.mxu0 0.0
        %2987 = vmatpush2.msra.mxu0 0.0
        %2988 = vmatprep.mubr.f32.mxu0 0.0
        %v2989 = vand.u32 %v2416, 4294901760
        %2990 = vmatmul.mubr.f32.gmra.mxu0 %v2989
        %v2991 = vpop.f32.mrf.mxu0
        %v2992 = vadd.f32 %v2907, %v2991
        %v2993 = vpop.f32.mrf.mxu0
        %2994 = vmatprep.mubr.f32.mxu0 0.0
        %v2995 = vand.u32 %v2419, 4294901760
        %2996 = vmatmul.mubr.f32.gmra.mxu0 %v2995
        %v2997 = vpop.f32.mrf.mxu0
        %v2998 = vadd.f32 %v2913, %v2997
        %v2999 = vpop.f32.mrf.mxu0
        %3000 = vdwg.mxu0
        %3001 = vst [vmem:[%s300] sm:$0xff] %v1820
        %3002 = vst [vmem:[%s300 + $0x8] sm:$0xff] %v2992
        %3003 = vst [vmem:[%s300 + $0x10] sm:$0xff] %v1826
        %3004 = vst [vmem:[%s300 + $0x18] sm:$0xff] %v2998
        %s3005 = sld [smem:[#allocation8 + $0xd]]
        %v3006 = vstv %s3005
        %v3007 = vmul.f32 %v312, %v3006
        %v3008 = vmul.f32 %v313, %v3006
        %v3009 = vadd.f32 %v3007, 0.0
        %v3010 = vadd.f32 %v3008, 0.0
        %s3011 = sld [smem:[#allocation8 + $0xc]]
        %v3012 = vstv %s3011
        %v3013 = vmul.f32 %v352, %v3012
        %v3014 = vmul.f32 %v353, %v3012
        %v3015 = vadd.f32 %v3013, 0.0
        %v3016 = vadd.f32 %v3014, 0.0
        %s3017 = sld [smem:[#allocation8 + $0xe]]
        %v3018 = vstv %s3017
        %v3019 = vmul.f32 %v312, %v3018
        %v3020 = vmul.f32 %v313, %v3018
        %v3021 = vadd.f32 %v3015, %v3019
        %v3022 = vadd.f32 %v3016, %v3020
        %s3023 = sld [smem:[#allocation8 + $0xa]]
        %v3024 = vstv %s3023
        %v3025 = vmul.f32 %v338, %v3024
        %v3026 = vmul.f32 %v344, %v3024
        %v3027 = vadd.f32 %v3025, 0.0
        %v3028 = vadd.f32 %v3026, 0.0
        %s3029 = sld [smem:[#allocation8 + $0x10]]
        %v3030 = vstv %s3029
        %v3031 = vmul.f32 %v312, %v3030
        %v3032 = vmul.f32 %v313, %v3030
        %v3033 = vadd.f32 %v3027, %v3031
        %v3034 = vadd.f32 %v3028, %v3032
        %s3035 = sld [smem:[#allocation8 + $0x9]]
        %v3036 = vstv %s3035
        %v3037 = vmul.f32 %v361, %v3036
        %v3038 = vmul.f32 %v362, %v3036
        %v3039 = vadd.f32 %v3037, 0.0
        %v3040 = vadd.f32 %v3038, 0.0
        %s3041 = sld [smem:[#allocation8 + $0xb]]
        %v3042 = vstv %s3041
        %v3043 = vmul.f32 %v338, %v3042
        %v3044 = vmul.f32 %v344, %v3042
        %v3045 = vadd.f32 %v3039, %v3043
        %v3046 = vadd.f32 %v3040, %v3044
        %s3047 = sld [smem:[#allocation8 + $0xf]]
        %v3048 = vstv %s3047
        %v3049 = vmul.f32 %v352, %v3048
        %v3050 = vmul.f32 %v353, %v3048
        %v3051 = vadd.f32 %v3045, %v3049
        %v3052 = vadd.f32 %v3046, %v3050
        %s3053 = sld [smem:[#allocation8 + $0x11]]
        %v3054 = vstv %s3053
        %v3055 = vmul.f32 %v312, %v3054
        %v3056 = vmul.f32 %v313, %v3054
        %v3057 = vadd.f32 %v3051, %v3055
        %v3058 = vadd.f32 %v3052, %v3056
        %s3059 = sld [smem:[#allocation8 + $0x28]]
        %v3060 = vstv %s3059
        %v3061 = vmul.f32 %v329, %v3060
        %v3062 = vmul.f32 %v330, %v3060
        %v3063 = vadd.f32 %v3009, %v3061
        %v3064 = vadd.f32 %v3010, %v3062
        %s3065 = sld [smem:[#allocation8 + $0x27]]
        %v3066 = vstv %s3065
        %v3067 = vmul.f32 %v380, %v3066
        %v3068 = vmul.f32 %v381, %v3066
        %v3069 = vadd.f32 %v3021, %v3067
        %v3070 = vadd.f32 %v3022, %v3068
        %s3071 = sld [smem:[#allocation8 + $0x29]]
        %v3072 = vstv %s3071
        %v3073 = vmul.f32 %v329, %v3072
        %v3074 = vmul.f32 %v330, %v3072
        %v3075 = vadd.f32 %v3069, %v3073
        %v3076 = vadd.f32 %v3070, %v3074
        %s3077 = sld [smem:[#allocation8 + $0x25]]
        %v3078 = vstv %s3077
        %v3079 = vmul.f32 %v367, %v3078
        %v3080 = vmul.f32 %v373, %v3078
        %v3081 = vadd.f32 %v3033, %v3079
        %v3082 = vadd.f32 %v3034, %v3080
        %s3083 = sld [smem:[#allocation8 + $0x2b]]
        %v3084 = vstv %s3083
        %v3085 = vmul.f32 %v329, %v3084
        %v3086 = vmul.f32 %v330, %v3084
        %v3087 = vadd.f32 %v3081, %v3085
        %v3088 = vadd.f32 %v3082, %v3086
        %s3089 = sld [smem:[#allocation8 + $0x24]]
        %v3090 = vstv %s3089
        %v3091 = vmul.f32 %v389, %v3090
        %v3092 = vmul.f32 %v390, %v3090
        %v3093 = vadd.f32 %v3057, %v3091
        %v3094 = vadd.f32 %v3058, %v3092
        %s3095 = sld [smem:[#allocation8 + $0x26]]
        %v3096 = vstv %s3095
        %v3097 = vmul.f32 %v367, %v3096
        %v3098 = vmul.f32 %v373, %v3096
        %v3099 = vadd.f32 %v3093, %v3097
        %v3100 = vadd.f32 %v3094, %v3098
        %s3101 = sld [smem:[#allocation8 + $0x2a]]
        %v3102 = vstv %s3101
        %v3103 = vmul.f32 %v380, %v3102
        %v3104 = vmul.f32 %v381, %v3102
        %v3105 = vadd.f32 %v3099, %v3103
        %v3106 = vadd.f32 %v3100, %v3104
        %s3107 = sld [smem:[#allocation8 + $0x2c]]
        %v3108 = vstv %s3107
        %v3109 = vmul.f32 %v329, %v3108
        %v3110 = vmul.f32 %v330, %v3108
        %v3111 = vadd.f32 %v3105, %v3109
        %v3112 = vadd.f32 %v3106, %v3110
        %s3113 = sld [smem:[#allocation8 + $0x43]]
        %v3114 = vstv %s3113
        %v3115 = vmul.f32 %v310, %v3114
        %v3116 = vmul.f32 %v311, %v3114
        %v3117 = vadd.f32 %v3063, %v3115
        %v3118 = vadd.f32 %v3064, %v3116
        %s3119 = sld [smem:[#allocation8 + $0x42]]
        %v3120 = vstv %s3119
        %v3121 = vmul.f32 %v408, %v3120
        %v3122 = vmul.f32 %v409, %v3120
        %v3123 = vadd.f32 %v3075, %v3121
        %v3124 = vadd.f32 %v3076, %v3122
        %s3125 = sld [smem:[#allocation8 + $0x44]]
        %v3126 = vstv %s3125
        %v3127 = vmul.f32 %v310, %v3126
        %v3128 = vmul.f32 %v311, %v3126
        %v3129 = vadd.f32 %v3123, %v3127
        %v3130 = vadd.f32 %v3124, %v3128
        %s3131 = sld [smem:[#allocation8 + $0x40]]
        %v3132 = vstv %s3131
        %v3133 = vmul.f32 %v395, %v3132
        %v3134 = vmul.f32 %v401, %v3132
        %v3135 = vadd.f32 %v3087, %v3133
        %v3136 = vadd.f32 %v3088, %v3134
        %s3137 = sld [smem:[#allocation8 + $0x46]]
        %v3138 = vstv %s3137
        %v3139 = vmul.f32 %v310, %v3138
        %v3140 = vmul.f32 %v311, %v3138
        %v3141 = vadd.f32 %v3135, %v3139
        %v3142 = vadd.f32 %v3136, %v3140
        %s3143 = sld [smem:[#allocation8 + $0x3f]]
        %v3144 = vstv %s3143
        %v3145 = vmul.f32 %v417, %v3144
        %v3146 = vmul.f32 %v418, %v3144
        %v3147 = vadd.f32 %v3111, %v3145
        %v3148 = vadd.f32 %v3112, %v3146
        %s3149 = sld [smem:[#allocation8 + $0x41]]
        %v3150 = vstv %s3149
        %v3151 = vmul.f32 %v395, %v3150
        %v3152 = vmul.f32 %v401, %v3150
        %v3153 = vadd.f32 %v3147, %v3151
        %v3154 = vadd.f32 %v3148, %v3152
        %s3155 = sld [smem:[#allocation8 + $0x45]]
        %v3156 = vstv %s3155
        %v3157 = vmul.f32 %v408, %v3156
        %v3158 = vmul.f32 %v409, %v3156
        %v3159 = vadd.f32 %v3153, %v3157
        %v3160 = vadd.f32 %v3154, %v3158
        %s3161 = sld [smem:[#allocation8 + $0x47]]
        %v3162 = vstv %s3161
        %v3163 = vmul.f32 %v310, %v3162
        %v3164 = vmul.f32 %v311, %v3162
        %v3165 = vadd.f32 %v3159, %v3163
        %v3166 = vadd.f32 %v3160, %v3164
        %v3168 = vsel %vm656, %v3129, 0
        %v3171 = vsel %vm656, %v3130, 0
        %3173 = vmatprep.subr.mxu0 0.0
        %3174 = vmatpush1.msra.mxu0 0.0
        %3175 = vmatprep.subr.mxu0 0.0
        %3176 = vmatpush1.msra.mxu0 0.0
        %3177 = vmatprep.subr.mxu0 0.0
        %3178 = vmatpush1.msra.mxu0 0.0
        %3179 = vmatprep.subr.mxu0 0.0
        %3180 = vmatpush1.msra.mxu0 0.0
        %3181 = vmatprep.subr.mxu0 0.0
        %3182 = vmatpush1.msra.mxu0 0.0
        %3183 = vmatprep.subr.mxu0 0.0
        %3184 = vmatpush1.msra.mxu0 0.0
        %3185 = vmatprep.subr.mxu0 0.0
        %3186 = vmatpush1.msra.mxu0 0.0
        %3187 = vmatprep.subr.mxu0 0.0
        %3188 = vmatpush1.msra.mxu0 0.0
        %3189 = vmatprep.subr.mxu0 0.0
        %v3190 = vand.u32 %v493, 4294901760
        %3191 = vmatpush1.msra.mxu0 %v3190
        %3192 = vmatprep.subr.mxu0 0.0
        %v3193 = vand.u32 %v492, 4294901760
        %3194 = vmatpush1.msra.mxu0 %v3193
        %3195 = vmatprep.subr.mxu0 0.0
        %v3196 = vand.u32 %v491, 4294901760
        %3197 = vmatpush1.msra.mxu0 %v3196
        %3198 = vmatprep.subr.mxu0 0.0
        %v3199 = vand.u32 %v490, 4294901760
        %3200 = vmatpush1.msra.mxu0 %v3199
        %3201 = vmatprep.subr.mxu0 0.0
        %v3202 = vand.u32 %v489, 4294901760
        %3203 = vmatpush1.msra.mxu0 %v3202
        %3204 = vmatprep.subr.mxu0 0.0
        %v3205 = vand.u32 %v488, 4294901760
        %3206 = vmatpush1.msra.mxu0 %v3205
        %3207 = vmatprep.subr.mxu0 0.0
        %v3208 = vand.u32 %v487, 4294901760
        %3209 = vmatpush1.msra.mxu0 %v3208
        %3210 = vmatprep.subr.mxu0 0.0
        %v3211 = vand.u32 %v486, 4294901760
        %3212 = vmatpush1.msra.mxu0 %v3211
        %3213 = vmatprep.subr.mxu0 0.0
        %3214 = vmatpush2.msra.mxu0 0.0
        %3215 = vmatprep.subr.mxu0 0.0
        %3216 = vmatpush2.msra.mxu0 0.0
        %3217 = vmatprep.subr.mxu0 0.0
        %3218 = vmatpush2.msra.mxu0 0.0
        %3219 = vmatprep.subr.mxu0 0.0
        %3220 = vmatpush2.msra.mxu0 0.0
        %3221 = vmatprep.subr.mxu0 0.0
        %3222 = vmatpush2.msra.mxu0 0.0
        %3223 = vmatprep.subr.mxu0 0.0
        %3224 = vmatpush2.msra.mxu0 0.0
        %3225 = vmatprep.subr.mxu0 0.0
        %3226 = vmatpush2.msra.mxu0 0.0
        %3227 = vmatprep.subr.mxu0 0.0
        %3228 = vmatpush2.msra.mxu0 0.0
        %3229 = vmatprep.subr.mxu0 0.0
        %3230 = vmatpush2.msra.mxu0 0.0
        %3231 = vmatprep.subr.mxu0 0.0
        %3232 = vmatpush2.msra.mxu0 0.0
        %3233 = vmatprep.subr.mxu0 0.0
        %3234 = vmatpush2.msra.mxu0 0.0
        %3235 = vmatprep.subr.mxu0 0.0
        %3236 = vmatpush2.msra.mxu0 0.0
        %3237 = vmatprep.subr.mxu0 0.0
        %3238 = vmatpush2.msra.mxu0 0.0
        %3239 = vmatprep.subr.mxu0 0.0
        %3240 = vmatpush2.msra.mxu0 0.0
        %3241 = vmatprep.subr.mxu0 0.0
        %3242 = vmatpush2.msra.mxu0 0.0
        %3243 = vmatprep.subr.mxu0 0.0
        %3244 = vmatpush2.msra.mxu0 0.0
        %3245 = vmatprep.mubr.f32.mxu0 0.0
        %v3246 = vand.u32 %v3168, 4294901760
        %v3247 = vsub.f32 %v3168, %v3246
        %v3248 = vand.u32 %v3247, 4294901760
        %v3249 = vsub.f32 %v3247, %v3248
        %v3250 = vand.u32 %v3249, 4294901760
        %3251 = vmatmul.mubr.f32.gmra.mxu0 %v3250
        %v3252 = vpop.f32.mrf.mxu0
        %v3253 = vadd.f32 0.0, %v3252
        %v3254 = vpop.f32.mrf.mxu0
        %3255 = vmatprep.mubr.f32.mxu0 0.0
        %v3256 = vand.u32 %v3171, 4294901760
        %v3257 = vsub.f32 %v3171, %v3256
        %v3258 = vand.u32 %v3257, 4294901760
        %v3259 = vsub.f32 %v3257, %v3258
        %v3260 = vand.u32 %v3259, 4294901760
        %3261 = vmatmul.mubr.f32.gmra.mxu0 %v3260
        %v3262 = vpop.f32.mrf.mxu0
        %v3263 = vadd.f32 0.0, %v3262
        %v3264 = vpop.f32.mrf.mxu0
        %3265 = vdwg.mxu0
        %3266 = vmatprep.subr.mxu0 0.0
        %3267 = vmatpush1.msra.mxu0 0.0
        %3268 = vmatprep.subr.mxu0 0.0
        %3269 = vmatpush1.msra.mxu0 0.0
        %3270 = vmatprep.subr.mxu0 0.0
        %3271 = vmatpush1.msra.mxu0 0.0
        %3272 = vmatprep.subr.mxu0 0.0
        %3273 = vmatpush1.msra.mxu0 0.0
        %3274 = vmatprep.subr.mxu0 0.0
        %3275 = vmatpush1.msra.mxu0 0.0
        %3276 = vmatprep.subr.mxu0 0.0
        %3277 = vmatpush1.msra.mxu0 0.0
        %3278 = vmatprep.subr.mxu0 0.0
        %3279 = vmatpush1.msra.mxu0 0.0
        %3280 = vmatprep.subr.mxu0 0.0
        %3281 = vmatpush1.msra.mxu0 0.0
        %3282 = vmatprep.subr.mxu0 0.0
        %v3283 = vand.u32 %v493, 4294901760
        %v3284 = vsub.f32 %v493, %v3283
        %v3285 = vand.u32 %v3284, 4294901760
        %v3286 = vsub.f32 %v3284, %v3285
        %v3287 = vand.u32 %v3286, 4294901760
        %3288 = vmatpush1.msra.mxu0 %v3287
        %3289 = vmatprep.subr.mxu0 0.0
        %v3290 = vand.u32 %v492, 4294901760
        %v3291 = vsub.f32 %v492, %v3290
        %v3292 = vand.u32 %v3291, 4294901760
        %v3293 = vsub.f32 %v3291, %v3292
        %v3294 = vand.u32 %v3293, 4294901760
        %3295 = vmatpush1.msra.mxu0 %v3294
        %3296 = vmatprep.subr.mxu0 0.0
        %v3297 = vand.u32 %v491, 4294901760
        %v3298 = vsub.f32 %v491, %v3297
        %v3299 = vand.u32 %v3298, 4294901760
        %v3300 = vsub.f32 %v3298, %v3299
        %v3301 = vand.u32 %v3300, 4294901760
        %3302 = vmatpush1.msra.mxu0 %v3301
        %3303 = vmatprep.subr.mxu0 0.0
        %v3304 = vand.u32 %v490, 4294901760
        %v3305 = vsub.f32 %v490, %v3304
        %v3306 = vand.u32 %v3305, 4294901760
        %v3307 = vsub.f32 %v3305, %v3306
        %v3308 = vand.u32 %v3307, 4294901760
        %3309 = vmatpush1.msra.mxu0 %v3308
        %3310 = vmatprep.subr.mxu0 0.0
        %v3311 = vand.u32 %v489, 4294901760
        %v3312 = vsub.f32 %v489, %v3311
        %v3313 = vand.u32 %v3312, 4294901760
        %v3314 = vsub.f32 %v3312, %v3313
        %v3315 = vand.u32 %v3314, 4294901760
        %3316 = vmatpush1.msra.mxu0 %v3315
        %3317 = vmatprep.subr.mxu0 0.0
        %v3318 = vand.u32 %v488, 4294901760
        %v3319 = vsub.f32 %v488, %v3318
        %v3320 = vand.u32 %v3319, 4294901760
        %v3321 = vsub.f32 %v3319, %v3320
        %v3322 = vand.u32 %v3321, 4294901760
        %3323 = vmatpush1.msra.mxu0 %v3322
        %3324 = vmatprep.subr.mxu0 0.0
        %v3325 = vand.u32 %v487, 4294901760
        %v3326 = vsub.f32 %v487, %v3325
        %v3327 = vand.u32 %v3326, 4294901760
        %v3328 = vsub.f32 %v3326, %v3327
        %v3329 = vand.u32 %v3328, 4294901760
        %3330 = vmatpush1.msra.mxu0 %v3329
        %3331 = vmatprep.subr.mxu0 0.0
        %v3332 = vand.u32 %v486, 4294901760
        %v3333 = vsub.f32 %v486, %v3332
        %v3334 = vand.u32 %v3333, 4294901760
        %v3335 = vsub.f32 %v3333, %v3334
        %v3336 = vand.u32 %v3335, 4294901760
        %3337 = vmatpush1.msra.mxu0 %v3336
        %3338 = vmatprep.subr.mxu0 0.0
        %3339 = vmatpush2.msra.mxu0 0.0
        %3340 = vmatprep.subr.mxu0 0.0
        %3341 = vmatpush2.msra.mxu0 0.0
        %3342 = vmatprep.subr.mxu0 0.0
        %3343 = vmatpush2.msra.mxu0 0.0
        %3344 = vmatprep.subr.mxu0 0.0
        %3345 = vmatpush2.msra.mxu0 0.0
        %3346 = vmatprep.subr.mxu0 0.0
        %3347 = vmatpush2.msra.mxu0 0.0
        %3348 = vmatprep.subr.mxu0 0.0
        %3349 = vmatpush2.msra.mxu0 0.0
        %3350 = vmatprep.subr.mxu0 0.0
        %3351 = vmatpush2.msra.mxu0 0.0
        %3352 = vmatprep.subr.mxu0 0.0
        %3353 = vmatpush2.msra.mxu0 0.0
        %3354 = vmatprep.subr.mxu0 0.0
        %3355 = vmatpush2.msra.mxu0 0.0
        %3356 = vmatprep.subr.mxu0 0.0
        %3357 = vmatpush2.msra.mxu0 0.0
        %3358 = vmatprep.subr.mxu0 0.0
        %3359 = vmatpush2.msra.mxu0 0.0
        %3360 = vmatprep.subr.mxu0 0.0
        %3361 = vmatpush2.msra.mxu0 0.0
        %3362 = vmatprep.subr.mxu0 0.0
        %3363 = vmatpush2.msra.mxu0 0.0
        %3364 = vmatprep.subr.mxu0 0.0
        %3365 = vmatpush2.msra.mxu0 0.0
        %3366 = vmatprep.subr.mxu0 0.0
        %3367 = vmatpush2.msra.mxu0 0.0
        %3368 = vmatprep.subr.mxu0 0.0
        %3369 = vmatpush2.msra.mxu0 0.0
        %3370 = vmatprep.mubr.f32.mxu0 0.0
        %v3371 = vand.u32 %v3168, 4294901760
        %3372 = vmatmul.mubr.f32.gmra.mxu0 %v3371
        %v3373 = vpop.f32.mrf.mxu0
        %v3374 = vadd.f32 %v3253, %v3373
        %v3375 = vpop.f32.mrf.mxu0
        %3376 = vmatprep.mubr.f32.mxu0 0.0
        %v3377 = vand.u32 %v3171, 4294901760
        %3378 = vmatmul.mubr.f32.gmra.mxu0 %v3377
        %v3379 = vpop.f32.mrf.mxu0
        %v3380 = vadd.f32 %v3263, %v3379
        %v3381 = vpop.f32.mrf.mxu0
        %3382 = vdwg.mxu0
        %3383 = vmatprep.subr.mxu0 0.0
        %3384 = vmatpush1.msra.mxu0 0.0
        %3385 = vmatprep.subr.mxu0 0.0
        %3386 = vmatpush1.msra.mxu0 0.0
        %3387 = vmatprep.subr.mxu0 0.0
        %3388 = vmatpush1.msra.mxu0 0.0
        %3389 = vmatprep.subr.mxu0 0.0
        %3390 = vmatpush1.msra.mxu0 0.0
        %3391 = vmatprep.subr.mxu0 0.0
        %3392 = vmatpush1.msra.mxu0 0.0
        %3393 = vmatprep.subr.mxu0 0.0
        %3394 = vmatpush1.msra.mxu0 0.0
        %3395 = vmatprep.subr.mxu0 0.0
        %3396 = vmatpush1.msra.mxu0 0.0
        %3397 = vmatprep.subr.mxu0 0.0
        %3398 = vmatpush1.msra.mxu0 0.0
        %3399 = vmatprep.subr.mxu0 0.0
        %v3400 = vand.u32 %v493, 4294901760
        %v3401 = vsub.f32 %v493, %v3400
        %3402 = vmatpush1.msra.mxu0 %v3401
        %3403 = vmatprep.subr.mxu0 0.0
        %v3404 = vand.u32 %v492, 4294901760
        %v3405 = vsub.f32 %v492, %v3404
        %3406 = vmatpush1.msra.mxu0 %v3405
        %3407 = vmatprep.subr.mxu0 0.0
        %v3408 = vand.u32 %v491, 4294901760
        %v3409 = vsub.f32 %v491, %v3408
        %3410 = vmatpush1.msra.mxu0 %v3409
        %3411 = vmatprep.subr.mxu0 0.0
        %v3412 = vand.u32 %v490, 4294901760
        %v3413 = vsub.f32 %v490, %v3412
        %3414 = vmatpush1.msra.mxu0 %v3413
        %3415 = vmatprep.subr.mxu0 0.0
        %v3416 = vand.u32 %v489, 4294901760
        %v3417 = vsub.f32 %v489, %v3416
        %3418 = vmatpush1.msra.mxu0 %v3417
        %3419 = vmatprep.subr.mxu0 0.0
        %v3420 = vand.u32 %v488, 4294901760
        %v3421 = vsub.f32 %v488, %v3420
        %3422 = vmatpush1.msra.mxu0 %v3421
        %3423 = vmatprep.subr.mxu0 0.0
        %v3424 = vand.u32 %v487, 4294901760
        %v3425 = vsub.f32 %v487, %v3424
        %3426 = vmatpush1.msra.mxu0 %v3425
        %3427 = vmatprep.subr.mxu0 0.0
        %v3428 = vand.u32 %v486, 4294901760
        %v3429 = vsub.f32 %v486, %v3428
        %3430 = vmatpush1.msra.mxu0 %v3429
        %3431 = vmatprep.subr.mxu0 0.0
        %3432 = vmatpush2.msra.mxu0 0.0
        %3433 = vmatprep.subr.mxu0 0.0
        %3434 = vmatpush2.msra.mxu0 0.0
        %3435 = vmatprep.subr.mxu0 0.0
        %3436 = vmatpush2.msra.mxu0 0.0
        %3437 = vmatprep.subr.mxu0 0.0
        %3438 = vmatpush2.msra.mxu0 0.0
        %3439 = vmatprep.subr.mxu0 0.0
        %3440 = vmatpush2.msra.mxu0 0.0
        %3441 = vmatprep.subr.mxu0 0.0
        %3442 = vmatpush2.msra.mxu0 0.0
        %3443 = vmatprep.subr.mxu0 0.0
        %3444 = vmatpush2.msra.mxu0 0.0
        %3445 = vmatprep.subr.mxu0 0.0
        %3446 = vmatpush2.msra.mxu0 0.0
        %3447 = vmatprep.subr.mxu0 0.0
        %3448 = vmatpush2.msra.mxu0 0.0
        %3449 = vmatprep.subr.mxu0 0.0
        %3450 = vmatpush2.msra.mxu0 0.0
        %3451 = vmatprep.subr.mxu0 0.0
        %3452 = vmatpush2.msra.mxu0 0.0
        %3453 = vmatprep.subr.mxu0 0.0
        %3454 = vmatpush2.msra.mxu0 0.0
        %3455 = vmatprep.subr.mxu0 0.0
        %3456 = vmatpush2.msra.mxu0 0.0
        %3457 = vmatprep.subr.mxu0 0.0
        %3458 = vmatpush2.msra.mxu0 0.0
        %3459 = vmatprep.subr.mxu0 0.0
        %3460 = vmatpush2.msra.mxu0 0.0
        %3461 = vmatprep.subr.mxu0 0.0
        %3462 = vmatpush2.msra.mxu0 0.0
        %3463 = vmatprep.mubr.f32.mxu0 0.0
        %v3464 = vand.u32 %v3168, 4294901760
        %v3465 = vsub.f32 %v3168, %v3464
        %3466 = vmatmul.mubr.f32.gmra.mxu0 %v3465
        %v3467 = vpop.f32.mrf.mxu0
        %v3468 = vadd.f32 %v3374, %v3467
        %v3469 = vpop.f32.mrf.mxu0
        %3470 = vmatprep.mubr.f32.mxu0 0.0
        %v3471 = vand.u32 %v3171, 4294901760
        %v3472 = vsub.f32 %v3171, %v3471
        %3473 = vmatmul.mubr.f32.gmra.mxu0 %v3472
        %v3474 = vpop.f32.mrf.mxu0
        %v3475 = vadd.f32 %v3380, %v3474
        %v3476 = vpop.f32.mrf.mxu0
        %3477 = vdwg.mxu0
        %3478 = vmatprep.subr.mxu0 0.0
        %3479 = vmatpush1.msra.mxu0 0.0
        %3480 = vmatprep.subr.mxu0 0.0
        %3481 = vmatpush1.msra.mxu0 0.0
        %3482 = vmatprep.subr.mxu0 0.0
        %3483 = vmatpush1.msra.mxu0 0.0
        %3484 = vmatprep.subr.mxu0 0.0
        %3485 = vmatpush1.msra.mxu0 0.0
        %3486 = vmatprep.subr.mxu0 0.0
        %3487 = vmatpush1.msra.mxu0 0.0
        %3488 = vmatprep.subr.mxu0 0.0
        %3489 = vmatpush1.msra.mxu0 0.0
        %3490 = vmatprep.subr.mxu0 0.0
        %3491 = vmatpush1.msra.mxu0 0.0
        %3492 = vmatprep.subr.mxu0 0.0
        %3493 = vmatpush1.msra.mxu0 0.0
        %3494 = vmatprep.subr.mxu0 0.0
        %v3495 = vand.u32 %v493, 4294901760
        %3496 = vmatpush1.msra.mxu0 %v3495
        %3497 = vmatprep.subr.mxu0 0.0
        %v3498 = vand.u32 %v492, 4294901760
        %3499 = vmatpush1.msra.mxu0 %v3498
        %3500 = vmatprep.subr.mxu0 0.0
        %v3501 = vand.u32 %v491, 4294901760
        %3502 = vmatpush1.msra.mxu0 %v3501
        %3503 = vmatprep.subr.mxu0 0.0
        %v3504 = vand.u32 %v490, 4294901760
        %3505 = vmatpush1.msra.mxu0 %v3504
        %3506 = vmatprep.subr.mxu0 0.0
        %v3507 = vand.u32 %v489, 4294901760
        %3508 = vmatpush1.msra.mxu0 %v3507
        %3509 = vmatprep.subr.mxu0 0.0
        %v3510 = vand.u32 %v488, 4294901760
        %3511 = vmatpush1.msra.mxu0 %v3510
        %3512 = vmatprep.subr.mxu0 0.0
        %v3513 = vand.u32 %v487, 4294901760
        %3514 = vmatpush1.msra.mxu0 %v3513
        %3515 = vmatprep.subr.mxu0 0.0
        %v3516 = vand.u32 %v486, 4294901760
        %3517 = vmatpush1.msra.mxu0 %v3516
        %3518 = vmatprep.subr.mxu0 0.0
        %3519 = vmatpush2.msra.mxu0 0.0
        %3520 = vmatprep.subr.mxu0 0.0
        %3521 = vmatpush2.msra.mxu0 0.0
        %3522 = vmatprep.subr.mxu0 0.0
        %3523 = vmatpush2.msra.mxu0 0.0
        %3524 = vmatprep.subr.mxu0 0.0
        %3525 = vmatpush2.msra.mxu0 0.0
        %3526 = vmatprep.subr.mxu0 0.0
        %3527 = vmatpush2.msra.mxu0 0.0
        %3528 = vmatprep.subr.mxu0 0.0
        %3529 = vmatpush2.msra.mxu0 0.0
        %3530 = vmatprep.subr.mxu0 0.0
        %3531 = vmatpush2.msra.mxu0 0.0
        %3532 = vmatprep.subr.mxu0 0.0
        %3533 = vmatpush2.msra.mxu0 0.0
        %3534 = vmatprep.subr.mxu0 0.0
        %3535 = vmatpush2.msra.mxu0 0.0
        %3536 = vmatprep.subr.mxu0 0.0
        %3537 = vmatpush2.msra.mxu0 0.0
        %3538 = vmatprep.subr.mxu0 0.0
        %3539 = vmatpush2.msra.mxu0 0.0
        %3540 = vmatprep.subr.mxu0 0.0
        %3541 = vmatpush2.msra.mxu0 0.0
        %3542 = vmatprep.subr.mxu0 0.0
        %3543 = vmatpush2.msra.mxu0 0.0
        %3544 = vmatprep.subr.mxu0 0.0
        %3545 = vmatpush2.msra.mxu0 0.0
        %3546 = vmatprep.subr.mxu0 0.0
        %3547 = vmatpush2.msra.mxu0 0.0
        %3548 = vmatprep.subr.mxu0 0.0
        %3549 = vmatpush2.msra.mxu0 0.0
        %3550 = vmatprep.mubr.f32.mxu0 0.0
        %v3551 = vand.u32 %v3168, 4294901760
        %v3552 = vsub.f32 %v3168, %v3551
        %v3553 = vand.u32 %v3552, 4294901760
        %3554 = vmatmul.mubr.f32.gmra.mxu0 %v3553
        %v3555 = vpop.f32.mrf.mxu0
        %v3556 = vadd.f32 %v3468, %v3555
        %v3557 = vpop.f32.mrf.mxu0
        %3558 = vmatprep.mubr.f32.mxu0 0.0
        %v3559 = vand.u32 %v3171, 4294901760
        %v3560 = vsub.f32 %v3171, %v3559
        %v3561 = vand.u32 %v3560, 4294901760
        %3562 = vmatmul.mubr.f32.gmra.mxu0 %v3561
        %v3563 = vpop.f32.mrf.mxu0
        %v3564 = vadd.f32 %v3475, %v3563
        %v3565 = vpop.f32.mrf.mxu0
        %3566 = vdwg.mxu0
        %3567 = vmatprep.subr.mxu0 0.0
        %3568 = vmatpush1.msra.mxu0 0.0
        %3569 = vmatprep.subr.mxu0 0.0
        %3570 = vmatpush1.msra.mxu0 0.0
        %3571 = vmatprep.subr.mxu0 0.0
        %3572 = vmatpush1.msra.mxu0 0.0
        %3573 = vmatprep.subr.mxu0 0.0
        %3574 = vmatpush1.msra.mxu0 0.0
        %3575 = vmatprep.subr.mxu0 0.0
        %3576 = vmatpush1.msra.mxu0 0.0
        %3577 = vmatprep.subr.mxu0 0.0
        %3578 = vmatpush1.msra.mxu0 0.0
        %3579 = vmatprep.subr.mxu0 0.0
        %3580 = vmatpush1.msra.mxu0 0.0
        %3581 = vmatprep.subr.mxu0 0.0
        %3582 = vmatpush1.msra.mxu0 0.0
        %3583 = vmatprep.subr.mxu0 0.0
        %v3584 = vand.u32 %v493, 4294901760
        %v3585 = vsub.f32 %v493, %v3584
        %v3586 = vand.u32 %v3585, 4294901760
        %3587 = vmatpush1.msra.mxu0 %v3586
        %3588 = vmatprep.subr.mxu0 0.0
        %v3589 = vand.u32 %v492, 4294901760
        %v3590 = vsub.f32 %v492, %v3589
        %v3591 = vand.u32 %v3590, 4294901760
        %3592 = vmatpush1.msra.mxu0 %v3591
        %3593 = vmatprep.subr.mxu0 0.0
        %v3594 = vand.u32 %v491, 4294901760
        %v3595 = vsub.f32 %v491, %v3594
        %v3596 = vand.u32 %v3595, 4294901760
        %3597 = vmatpush1.msra.mxu0 %v3596
        %3598 = vmatprep.subr.mxu0 0.0
        %v3599 = vand.u32 %v490, 4294901760
        %v3600 = vsub.f32 %v490, %v3599
        %v3601 = vand.u32 %v3600, 4294901760
        %3602 = vmatpush1.msra.mxu0 %v3601
        %3603 = vmatprep.subr.mxu0 0.0
        %v3604 = vand.u32 %v489, 4294901760
        %v3605 = vsub.f32 %v489, %v3604
        %v3606 = vand.u32 %v3605, 4294901760
        %3607 = vmatpush1.msra.mxu0 %v3606
        %3608 = vmatprep.subr.mxu0 0.0
        %v3609 = vand.u32 %v488, 4294901760
        %v3610 = vsub.f32 %v488, %v3609
        %v3611 = vand.u32 %v3610, 4294901760
        %3612 = vmatpush1.msra.mxu0 %v3611
        %3613 = vmatprep.subr.mxu0 0.0
        %v3614 = vand.u32 %v487, 4294901760
        %v3615 = vsub.f32 %v487, %v3614
        %v3616 = vand.u32 %v3615, 4294901760
        %3617 = vmatpush1.msra.mxu0 %v3616
        %3618 = vmatprep.subr.mxu0 0.0
        %v3619 = vand.u32 %v486, 4294901760
        %v3620 = vsub.f32 %v486, %v3619
        %v3621 = vand.u32 %v3620, 4294901760
        %3622 = vmatpush1.msra.mxu0 %v3621
        %3623 = vmatprep.subr.mxu0 0.0
        %3624 = vmatpush2.msra.mxu0 0.0
        %3625 = vmatprep.subr.mxu0 0.0
        %3626 = vmatpush2.msra.mxu0 0.0
        %3627 = vmatprep.subr.mxu0 0.0
        %3628 = vmatpush2.msra.mxu0 0.0
        %3629 = vmatprep.subr.mxu0 0.0
        %3630 = vmatpush2.msra.mxu0 0.0
        %3631 = vmatprep.subr.mxu0 0.0
        %3632 = vmatpush2.msra.mxu0 0.0
        %3633 = vmatprep.subr.mxu0 0.0
        %3634 = vmatpush2.msra.mxu0 0.0
        %3635 = vmatprep.subr.mxu0 0.0
        %3636 = vmatpush2.msra.mxu0 0.0
        %3637 = vmatprep.subr.mxu0 0.0
        %3638 = vmatpush2.msra.mxu0 0.0
        %3639 = vmatprep.subr.mxu0 0.0
        %3640 = vmatpush2.msra.mxu0 0.0
        %3641 = vmatprep.subr.mxu0 0.0
        %3642 = vmatpush2.msra.mxu0 0.0
        %3643 = vmatprep.subr.mxu0 0.0
        %3644 = vmatpush2.msra.mxu0 0.0
        %3645 = vmatprep.subr.mxu0 0.0
        %3646 = vmatpush2.msra.mxu0 0.0
        %3647 = vmatprep.subr.mxu0 0.0
        %3648 = vmatpush2.msra.mxu0 0.0
        %3649 = vmatprep.subr.mxu0 0.0
        %3650 = vmatpush2.msra.mxu0 0.0
        %3651 = vmatprep.subr.mxu0 0.0
        %3652 = vmatpush2.msra.mxu0 0.0
        %3653 = vmatprep.subr.mxu0 0.0
        %3654 = vmatpush2.msra.mxu0 0.0
        %3655 = vmatprep.mubr.f32.mxu0 0.0
        %v3656 = vand.u32 %v3168, 4294901760
        %3657 = vmatmul.mubr.f32.gmra.mxu0 %v3656
        %v3658 = vpop.f32.mrf.mxu0
        %v3659 = vadd.f32 %v3556, %v3658
        %v3660 = vpop.f32.mrf.mxu0
        %3661 = vmatprep.mubr.f32.mxu0 0.0
        %v3662 = vand.u32 %v3171, 4294901760
        %3663 = vmatmul.mubr.f32.gmra.mxu0 %v3662
        %v3664 = vpop.f32.mrf.mxu0
        %v3665 = vadd.f32 %v3564, %v3664
        %v3666 = vpop.f32.mrf.mxu0
        %3667 = vdwg.mxu0
        %3668 = vmatprep.subr.mxu0 0.0
        %3669 = vmatpush1.msra.mxu0 0.0
        %3670 = vmatprep.subr.mxu0 0.0
        %3671 = vmatpush1.msra.mxu0 0.0
        %3672 = vmatprep.subr.mxu0 0.0
        %3673 = vmatpush1.msra.mxu0 0.0
        %3674 = vmatprep.subr.mxu0 0.0
        %3675 = vmatpush1.msra.mxu0 0.0
        %3676 = vmatprep.subr.mxu0 0.0
        %3677 = vmatpush1.msra.mxu0 0.0
        %3678 = vmatprep.subr.mxu0 0.0
        %3679 = vmatpush1.msra.mxu0 0.0
        %3680 = vmatprep.subr.mxu0 0.0
        %3681 = vmatpush1.msra.mxu0 0.0
        %3682 = vmatprep.subr.mxu0 0.0
        %3683 = vmatpush1.msra.mxu0 0.0
        %3684 = vmatprep.subr.mxu0 0.0
        %v3685 = vand.u32 %v493, 4294901760
        %3686 = vmatpush1.msra.mxu0 %v3685
        %3687 = vmatprep.subr.mxu0 0.0
        %v3688 = vand.u32 %v492, 4294901760
        %3689 = vmatpush1.msra.mxu0 %v3688
        %3690 = vmatprep.subr.mxu0 0.0
        %v3691 = vand.u32 %v491, 4294901760
        %3692 = vmatpush1.msra.mxu0 %v3691
        %3693 = vmatprep.subr.mxu0 0.0
        %v3694 = vand.u32 %v490, 4294901760
        %3695 = vmatpush1.msra.mxu0 %v3694
        %3696 = vmatprep.subr.mxu0 0.0
        %v3697 = vand.u32 %v489, 4294901760
        %3698 = vmatpush1.msra.mxu0 %v3697
        %3699 = vmatprep.subr.mxu0 0.0
        %v3700 = vand.u32 %v488, 4294901760
        %3701 = vmatpush1.msra.mxu0 %v3700
        %3702 = vmatprep.subr.mxu0 0.0
        %v3703 = vand.u32 %v487, 4294901760
        %3704 = vmatpush1.msra.mxu0 %v3703
        %3705 = vmatprep.subr.mxu0 0.0
        %v3706 = vand.u32 %v486, 4294901760
        %3707 = vmatpush1.msra.mxu0 %v3706
        %3708 = vmatprep.subr.mxu0 0.0
        %3709 = vmatpush2.msra.mxu0 0.0
        %3710 = vmatprep.subr.mxu0 0.0
        %3711 = vmatpush2.msra.mxu0 0.0
        %3712 = vmatprep.subr.mxu0 0.0
        %3713 = vmatpush2.msra.mxu0 0.0
        %3714 = vmatprep.subr.mxu0 0.0
        %3715 = vmatpush2.msra.mxu0 0.0
        %3716 = vmatprep.subr.mxu0 0.0
        %3717 = vmatpush2.msra.mxu0 0.0
        %3718 = vmatprep.subr.mxu0 0.0
        %3719 = vmatpush2.msra.mxu0 0.0
        %3720 = vmatprep.subr.mxu0 0.0
        %3721 = vmatpush2.msra.mxu0 0.0
        %3722 = vmatprep.subr.mxu0 0.0
        %3723 = vmatpush2.msra.mxu0 0.0
        %3724 = vmatprep.subr.mxu0 0.0
        %3725 = vmatpush2.msra.mxu0 0.0
        %3726 = vmatprep.subr.mxu0 0.0
        %3727 = vmatpush2.msra.mxu0 0.0
        %3728 = vmatprep.subr.mxu0 0.0
        %3729 = vmatpush2.msra.mxu0 0.0
        %3730 = vmatprep.subr.mxu0 0.0
        %3731 = vmatpush2.msra.mxu0 0.0
        %3732 = vmatprep.subr.mxu0 0.0
        %3733 = vmatpush2.msra.mxu0 0.0
        %3734 = vmatprep.subr.mxu0 0.0
        %3735 = vmatpush2.msra.mxu0 0.0
        %3736 = vmatprep.subr.mxu0 0.0
        %3737 = vmatpush2.msra.mxu0 0.0
        %3738 = vmatprep.subr.mxu0 0.0
        %3739 = vmatpush2.msra.mxu0 0.0
        %3740 = vmatprep.mubr.f32.mxu0 0.0
        %v3741 = vand.u32 %v3168, 4294901760
        %3742 = vmatmul.mubr.f32.gmra.mxu0 %v3741
        %v3743 = vpop.f32.mrf.mxu0
        %v3744 = vadd.f32 %v3659, %v3743
        %v3745 = vpop.f32.mrf.mxu0
        %3746 = vmatprep.mubr.f32.mxu0 0.0
        %v3747 = vand.u32 %v3171, 4294901760
        %3748 = vmatmul.mubr.f32.gmra.mxu0 %v3747
        %v3749 = vpop.f32.mrf.mxu0
        %v3750 = vadd.f32 %v3665, %v3749
        %v3751 = vpop.f32.mrf.mxu0
        %3752 = vdwg.mxu0
        %v3754 = vsel %vm656, %v3117, 0
        %v3757 = vsel %vm656, %v3118, 0
        %3759 = vmatprep.subr.mxu0 0.0
        %3760 = vmatpush1.msra.mxu0 0.0
        %3761 = vmatprep.subr.mxu0 0.0
        %3762 = vmatpush1.msra.mxu0 0.0
        %3763 = vmatprep.subr.mxu0 0.0
        %3764 = vmatpush1.msra.mxu0 0.0
        %3765 = vmatprep.subr.mxu0 0.0
        %3766 = vmatpush1.msra.mxu0 0.0
        %3767 = vmatprep.subr.mxu0 0.0
        %3768 = vmatpush1.msra.mxu0 0.0
        %3769 = vmatprep.subr.mxu0 0.0
        %3770 = vmatpush1.msra.mxu0 0.0
        %3771 = vmatprep.subr.mxu0 0.0
        %3772 = vmatpush1.msra.mxu0 0.0
        %3773 = vmatprep.subr.mxu0 0.0
        %3774 = vmatpush1.msra.mxu0 0.0
        %3775 = vmatprep.subr.mxu0 0.0
        %v3776 = vand.u32 %v461, 4294901760
        %3777 = vmatpush1.msra.mxu0 %v3776
        %3778 = vmatprep.subr.mxu0 0.0
        %v3779 = vand.u32 %v460, 4294901760
        %3780 = vmatpush1.msra.mxu0 %v3779
        %3781 = vmatprep.subr.mxu0 0.0
        %v3782 = vand.u32 %v459, 4294901760
        %3783 = vmatpush1.msra.mxu0 %v3782
        %3784 = vmatprep.subr.mxu0 0.0
        %v3785 = vand.u32 %v458, 4294901760
        %3786 = vmatpush1.msra.mxu0 %v3785
        %3787 = vmatprep.subr.mxu0 0.0
        %v3788 = vand.u32 %v457, 4294901760
        %3789 = vmatpush1.msra.mxu0 %v3788
        %3790 = vmatprep.subr.mxu0 0.0
        %v3791 = vand.u32 %v456, 4294901760
        %3792 = vmatpush1.msra.mxu0 %v3791
        %3793 = vmatprep.subr.mxu0 0.0
        %v3794 = vand.u32 %v455, 4294901760
        %3795 = vmatpush1.msra.mxu0 %v3794
        %3796 = vmatprep.subr.mxu0 0.0
        %v3797 = vand.u32 %v454, 4294901760
        %3798 = vmatpush1.msra.mxu0 %v3797
        %3799 = vmatprep.subr.mxu0 0.0
        %3800 = vmatpush2.msra.mxu0 0.0
        %3801 = vmatprep.subr.mxu0 0.0
        %3802 = vmatpush2.msra.mxu0 0.0
        %3803 = vmatprep.subr.mxu0 0.0
        %3804 = vmatpush2.msra.mxu0 0.0
        %3805 = vmatprep.subr.mxu0 0.0
        %3806 = vmatpush2.msra.mxu0 0.0
        %3807 = vmatprep.subr.mxu0 0.0
        %3808 = vmatpush2.msra.mxu0 0.0
        %3809 = vmatprep.subr.mxu0 0.0
        %3810 = vmatpush2.msra.mxu0 0.0
        %3811 = vmatprep.subr.mxu0 0.0
        %3812 = vmatpush2.msra.mxu0 0.0
        %3813 = vmatprep.subr.mxu0 0.0
        %3814 = vmatpush2.msra.mxu0 0.0
        %3815 = vmatprep.subr.mxu0 0.0
        %3816 = vmatpush2.msra.mxu0 0.0
        %3817 = vmatprep.subr.mxu0 0.0
        %3818 = vmatpush2.msra.mxu0 0.0
        %3819 = vmatprep.subr.mxu0 0.0
        %3820 = vmatpush2.msra.mxu0 0.0
        %3821 = vmatprep.subr.mxu0 0.0
        %3822 = vmatpush2.msra.mxu0 0.0
        %3823 = vmatprep.subr.mxu0 0.0
        %3824 = vmatpush2.msra.mxu0 0.0
        %3825 = vmatprep.subr.mxu0 0.0
        %3826 = vmatpush2.msra.mxu0 0.0
        %3827 = vmatprep.subr.mxu0 0.0
        %3828 = vmatpush2.msra.mxu0 0.0
        %3829 = vmatprep.subr.mxu0 0.0
        %3830 = vmatpush2.msra.mxu0 0.0
        %3831 = vmatprep.mubr.f32.mxu0 0.0
        %v3832 = vand.u32 %v3754, 4294901760
        %v3833 = vsub.f32 %v3754, %v3832
        %v3834 = vand.u32 %v3833, 4294901760
        %v3835 = vsub.f32 %v3833, %v3834
        %v3836 = vand.u32 %v3835, 4294901760
        %3837 = vmatmul.mubr.f32.gmra.mxu0 %v3836
        %v3838 = vpop.f32.mrf.mxu0
        %v3839 = vadd.f32 %v3744, %v3838
        %v3840 = vpop.f32.mrf.mxu0
        %3841 = vmatprep.mubr.f32.mxu0 0.0
        %v3842 = vand.u32 %v3757, 4294901760
        %v3843 = vsub.f32 %v3757, %v3842
        %v3844 = vand.u32 %v3843, 4294901760
        %v3845 = vsub.f32 %v3843, %v3844
        %v3846 = vand.u32 %v3845, 4294901760
        %3847 = vmatmul.mubr.f32.gmra.mxu0 %v3846
        %v3848 = vpop.f32.mrf.mxu0
        %v3849 = vadd.f32 %v3750, %v3848
        %v3850 = vpop.f32.mrf.mxu0
        %3851 = vdwg.mxu0
        %3852 = vmatprep.subr.mxu0 0.0
        %3853 = vmatpush1.msra.mxu0 0.0
        %3854 = vmatprep.subr.mxu0 0.0
        %3855 = vmatpush1.msra.mxu0 0.0
        %3856 = vmatprep.subr.mxu0 0.0
        %3857 = vmatpush1.msra.mxu0 0.0
        %3858 = vmatprep.subr.mxu0 0.0
        %3859 = vmatpush1.msra.mxu0 0.0
        %3860 = vmatprep.subr.mxu0 0.0
        %3861 = vmatpush1.msra.mxu0 0.0
        %3862 = vmatprep.subr.mxu0 0.0
        %3863 = vmatpush1.msra.mxu0 0.0
        %3864 = vmatprep.subr.mxu0 0.0
        %3865 = vmatpush1.msra.mxu0 0.0
        %3866 = vmatprep.subr.mxu0 0.0
        %3867 = vmatpush1.msra.mxu0 0.0
        %3868 = vmatprep.subr.mxu0 0.0
        %v3869 = vand.u32 %v461, 4294901760
        %v3870 = vsub.f32 %v461, %v3869
        %v3871 = vand.u32 %v3870, 4294901760
        %v3872 = vsub.f32 %v3870, %v3871
        %v3873 = vand.u32 %v3872, 4294901760
        %3874 = vmatpush1.msra.mxu0 %v3873
        %3875 = vmatprep.subr.mxu0 0.0
        %v3876 = vand.u32 %v460, 4294901760
        %v3877 = vsub.f32 %v460, %v3876
        %v3878 = vand.u32 %v3877, 4294901760
        %v3879 = vsub.f32 %v3877, %v3878
        %v3880 = vand.u32 %v3879, 4294901760
        %3881 = vmatpush1.msra.mxu0 %v3880
        %3882 = vmatprep.subr.mxu0 0.0
        %v3883 = vand.u32 %v459, 4294901760
        %v3884 = vsub.f32 %v459, %v3883
        %v3885 = vand.u32 %v3884, 4294901760
        %v3886 = vsub.f32 %v3884, %v3885
        %v3887 = vand.u32 %v3886, 4294901760
        %3888 = vmatpush1.msra.mxu0 %v3887
        %3889 = vmatprep.subr.mxu0 0.0
        %v3890 = vand.u32 %v458, 4294901760
        %v3891 = vsub.f32 %v458, %v3890
        %v3892 = vand.u32 %v3891, 4294901760
        %v3893 = vsub.f32 %v3891, %v3892
        %v3894 = vand.u32 %v3893, 4294901760
        %3895 = vmatpush1.msra.mxu0 %v3894
        %3896 = vmatprep.subr.mxu0 0.0
        %v3897 = vand.u32 %v457, 4294901760
        %v3898 = vsub.f32 %v457, %v3897
        %v3899 = vand.u32 %v3898, 4294901760
        %v3900 = vsub.f32 %v3898, %v3899
        %v3901 = vand.u32 %v3900, 4294901760
        %3902 = vmatpush1.msra.mxu0 %v3901
        %3903 = vmatprep.subr.mxu0 0.0
        %v3904 = vand.u32 %v456, 4294901760
        %v3905 = vsub.f32 %v456, %v3904
        %v3906 = vand.u32 %v3905, 4294901760
        %v3907 = vsub.f32 %v3905, %v3906
        %v3908 = vand.u32 %v3907, 4294901760
        %3909 = vmatpush1.msra.mxu0 %v3908
        %3910 = vmatprep.subr.mxu0 0.0
        %v3911 = vand.u32 %v455, 4294901760
        %v3912 = vsub.f32 %v455, %v3911
        %v3913 = vand.u32 %v3912, 4294901760
        %v3914 = vsub.f32 %v3912, %v3913
        %v3915 = vand.u32 %v3914, 4294901760
        %3916 = vmatpush1.msra.mxu0 %v3915
        %3917 = vmatprep.subr.mxu0 0.0
        %v3918 = vand.u32 %v454, 4294901760
        %v3919 = vsub.f32 %v454, %v3918
        %v3920 = vand.u32 %v3919, 4294901760
        %v3921 = vsub.f32 %v3919, %v3920
        %v3922 = vand.u32 %v3921, 4294901760
        %3923 = vmatpush1.msra.mxu0 %v3922
        %3924 = vmatprep.subr.mxu0 0.0
        %3925 = vmatpush2.msra.mxu0 0.0
        %3926 = vmatprep.subr.mxu0 0.0
        %3927 = vmatpush2.msra.mxu0 0.0
        %3928 = vmatprep.subr.mxu0 0.0
        %3929 = vmatpush2.msra.mxu0 0.0
        %3930 = vmatprep.subr.mxu0 0.0
        %3931 = vmatpush2.msra.mxu0 0.0
        %3932 = vmatprep.subr.mxu0 0.0
        %3933 = vmatpush2.msra.mxu0 0.0
        %3934 = vmatprep.subr.mxu0 0.0
        %3935 = vmatpush2.msra.mxu0 0.0
        %3936 = vmatprep.subr.mxu0 0.0
        %3937 = vmatpush2.msra.mxu0 0.0
        %3938 = vmatprep.subr.mxu0 0.0
        %3939 = vmatpush2.msra.mxu0 0.0
        %3940 = vmatprep.subr.mxu0 0.0
        %3941 = vmatpush2.msra.mxu0 0.0
        %3942 = vmatprep.subr.mxu0 0.0
        %3943 = vmatpush2.msra.mxu0 0.0
        %3944 = vmatprep.subr.mxu0 0.0
        %3945 = vmatpush2.msra.mxu0 0.0
        %3946 = vmatprep.subr.mxu0 0.0
        %3947 = vmatpush2.msra.mxu0 0.0
        %3948 = vmatprep.subr.mxu0 0.0
        %3949 = vmatpush2.msra.mxu0 0.0
        %3950 = vmatprep.subr.mxu0 0.0
        %3951 = vmatpush2.msra.mxu0 0.0
        %3952 = vmatprep.subr.mxu0 0.0
        %3953 = vmatpush2.msra.mxu0 0.0
        %3954 = vmatprep.subr.mxu0 0.0
        %3955 = vmatpush2.msra.mxu0 0.0
        %3956 = vmatprep.mubr.f32.mxu0 0.0
        %v3957 = vand.u32 %v3754, 4294901760
        %3958 = vmatmul.mubr.f32.gmra.mxu0 %v3957
        %v3959 = vpop.f32.mrf.mxu0
        %v3960 = vadd.f32 %v3839, %v3959
        %v3961 = vpop.f32.mrf.mxu0
        %3962 = vmatprep.mubr.f32.mxu0 0.0
        %v3963 = vand.u32 %v3757, 4294901760
        %3964 = vmatmul.mubr.f32.gmra.mxu0 %v3963
        %v3965 = vpop.f32.mrf.mxu0
        %v3966 = vadd.f32 %v3849, %v3965
        %v3967 = vpop.f32.mrf.mxu0
        %3968 = vdwg.mxu0
        %3969 = vmatprep.subr.mxu0 0.0
        %3970 = vmatpush1.msra.mxu0 0.0
        %3971 = vmatprep.subr.mxu0 0.0
        %3972 = vmatpush1.msra.mxu0 0.0
        %3973 = vmatprep.subr.mxu0 0.0
        %3974 = vmatpush1.msra.mxu0 0.0
        %3975 = vmatprep.subr.mxu0 0.0
        %3976 = vmatpush1.msra.mxu0 0.0
        %3977 = vmatprep.subr.mxu0 0.0
        %3978 = vmatpush1.msra.mxu0 0.0
        %3979 = vmatprep.subr.mxu0 0.0
        %3980 = vmatpush1.msra.mxu0 0.0
        %3981 = vmatprep.subr.mxu0 0.0
        %3982 = vmatpush1.msra.mxu0 0.0
        %3983 = vmatprep.subr.mxu0 0.0
        %3984 = vmatpush1.msra.mxu0 0.0
        %3985 = vmatprep.subr.mxu0 0.0
        %v3986 = vand.u32 %v461, 4294901760
        %v3987 = vsub.f32 %v461, %v3986
        %3988 = vmatpush1.msra.mxu0 %v3987
        %3989 = vmatprep.subr.mxu0 0.0
        %v3990 = vand.u32 %v460, 4294901760
        %v3991 = vsub.f32 %v460, %v3990
        %3992 = vmatpush1.msra.mxu0 %v3991
        %3993 = vmatprep.subr.mxu0 0.0
        %v3994 = vand.u32 %v459, 4294901760
        %v3995 = vsub.f32 %v459, %v3994
        %3996 = vmatpush1.msra.mxu0 %v3995
        %3997 = vmatprep.subr.mxu0 0.0
        %v3998 = vand.u32 %v458, 4294901760
        %v3999 = vsub.f32 %v458, %v3998
        %4000 = vmatpush1.msra.mxu0 %v3999
        %4001 = vmatprep.subr.mxu0 0.0
        %v4002 = vand.u32 %v457, 4294901760
        %v4003 = vsub.f32 %v457, %v4002
        %4004 = vmatpush1.msra.mxu0 %v4003
        %4005 = vmatprep.subr.mxu0 0.0
        %v4006 = vand.u32 %v456, 4294901760
        %v4007 = vsub.f32 %v456, %v4006
        %4008 = vmatpush1.msra.mxu0 %v4007
        %4009 = vmatprep.subr.mxu0 0.0
        %v4010 = vand.u32 %v455, 4294901760
        %v4011 = vsub.f32 %v455, %v4010
        %4012 = vmatpush1.msra.mxu0 %v4011
        %4013 = vmatprep.subr.mxu0 0.0
        %v4014 = vand.u32 %v454, 4294901760
        %v4015 = vsub.f32 %v454, %v4014
        %4016 = vmatpush1.msra.mxu0 %v4015
        %4017 = vmatprep.subr.mxu0 0.0
        %4018 = vmatpush2.msra.mxu0 0.0
        %4019 = vmatprep.subr.mxu0 0.0
        %4020 = vmatpush2.msra.mxu0 0.0
        %4021 = vmatprep.subr.mxu0 0.0
        %4022 = vmatpush2.msra.mxu0 0.0
        %4023 = vmatprep.subr.mxu0 0.0
        %4024 = vmatpush2.msra.mxu0 0.0
        %4025 = vmatprep.subr.mxu0 0.0
        %4026 = vmatpush2.msra.mxu0 0.0
        %4027 = vmatprep.subr.mxu0 0.0
        %4028 = vmatpush2.msra.mxu0 0.0
        %4029 = vmatprep.subr.mxu0 0.0
        %4030 = vmatpush2.msra.mxu0 0.0
        %4031 = vmatprep.subr.mxu0 0.0
        %4032 = vmatpush2.msra.mxu0 0.0
        %4033 = vmatprep.subr.mxu0 0.0
        %4034 = vmatpush2.msra.mxu0 0.0
        %4035 = vmatprep.subr.mxu0 0.0
        %4036 = vmatpush2.msra.mxu0 0.0
        %4037 = vmatprep.subr.mxu0 0.0
        %4038 = vmatpush2.msra.mxu0 0.0
        %4039 = vmatprep.subr.mxu0 0.0
        %4040 = vmatpush2.msra.mxu0 0.0
        %4041 = vmatprep.subr.mxu0 0.0
        %4042 = vmatpush2.msra.mxu0 0.0
        %4043 = vmatprep.subr.mxu0 0.0
        %4044 = vmatpush2.msra.mxu0 0.0
        %4045 = vmatprep.subr.mxu0 0.0
        %4046 = vmatpush2.msra.mxu0 0.0
        %4047 = vmatprep.subr.mxu0 0.0
        %4048 = vmatpush2.msra.mxu0 0.0
        %4049 = vmatprep.mubr.f32.mxu0 0.0
        %v4050 = vand.u32 %v3754, 4294901760
        %v4051 = vsub.f32 %v3754, %v4050
        %4052 = vmatmul.mubr.f32.gmra.mxu0 %v4051
        %v4053 = vpop.f32.mrf.mxu0
        %v4054 = vadd.f32 %v3960, %v4053
        %v4055 = vpop.f32.mrf.mxu0
        %4056 = vmatprep.mubr.f32.mxu0 0.0
        %v4057 = vand.u32 %v3757, 4294901760
        %v4058 = vsub.f32 %v3757, %v4057
        %4059 = vmatmul.mubr.f32.gmra.mxu0 %v4058
        %v4060 = vpop.f32.mrf.mxu0
        %v4061 = vadd.f32 %v3966, %v4060
        %v4062 = vpop.f32.mrf.mxu0
        %4063 = vdwg.mxu0
        %4064 = vmatprep.subr.mxu0 0.0
        %4065 = vmatpush1.msra.mxu0 0.0
        %4066 = vmatprep.subr.mxu0 0.0
        %4067 = vmatpush1.msra.mxu0 0.0
        %4068 = vmatprep.subr.mxu0 0.0
        %4069 = vmatpush1.msra.mxu0 0.0
        %4070 = vmatprep.subr.mxu0 0.0
        %4071 = vmatpush1.msra.mxu0 0.0
        %4072 = vmatprep.subr.mxu0 0.0
        %4073 = vmatpush1.msra.mxu0 0.0
        %4074 = vmatprep.subr.mxu0 0.0
        %4075 = vmatpush1.msra.mxu0 0.0
        %4076 = vmatprep.subr.mxu0 0.0
        %4077 = vmatpush1.msra.mxu0 0.0
        %4078 = vmatprep.subr.mxu0 0.0
        %4079 = vmatpush1.msra.mxu0 0.0
        %4080 = vmatprep.subr.mxu0 0.0
        %v4081 = vand.u32 %v461, 4294901760
        %4082 = vmatpush1.msra.mxu0 %v4081
        %4083 = vmatprep.subr.mxu0 0.0
        %v4084 = vand.u32 %v460, 4294901760
        %4085 = vmatpush1.msra.mxu0 %v4084
        %4086 = vmatprep.subr.mxu0 0.0
        %v4087 = vand.u32 %v459, 4294901760
        %4088 = vmatpush1.msra.mxu0 %v4087
        %4089 = vmatprep.subr.mxu0 0.0
        %v4090 = vand.u32 %v458, 4294901760
        %4091 = vmatpush1.msra.mxu0 %v4090
        %4092 = vmatprep.subr.mxu0 0.0
        %v4093 = vand.u32 %v457, 4294901760
        %4094 = vmatpush1.msra.mxu0 %v4093
        %4095 = vmatprep.subr.mxu0 0.0
        %v4096 = vand.u32 %v456, 4294901760
        %4097 = vmatpush1.msra.mxu0 %v4096
        %4098 = vmatprep.subr.mxu0 0.0
        %v4099 = vand.u32 %v455, 4294901760
        %4100 = vmatpush1.msra.mxu0 %v4099
        %4101 = vmatprep.subr.mxu0 0.0
        %v4102 = vand.u32 %v454, 4294901760
        %4103 = vmatpush1.msra.mxu0 %v4102
        %4104 = vmatprep.subr.mxu0 0.0
        %4105 = vmatpush2.msra.mxu0 0.0
        %4106 = vmatprep.subr.mxu0 0.0
        %4107 = vmatpush2.msra.mxu0 0.0
        %4108 = vmatprep.subr.mxu0 0.0
        %4109 = vmatpush2.msra.mxu0 0.0
        %4110 = vmatprep.subr.mxu0 0.0
        %4111 = vmatpush2.msra.mxu0 0.0
        %4112 = vmatprep.subr.mxu0 0.0
        %4113 = vmatpush2.msra.mxu0 0.0
        %4114 = vmatprep.subr.mxu0 0.0
        %4115 = vmatpush2.msra.mxu0 0.0
        %4116 = vmatprep.subr.mxu0 0.0
        %4117 = vmatpush2.msra.mxu0 0.0
        %4118 = vmatprep.subr.mxu0 0.0
        %4119 = vmatpush2.msra.mxu0 0.0
        %4120 = vmatprep.subr.mxu0 0.0
        %4121 = vmatpush2.msra.mxu0 0.0
        %4122 = vmatprep.subr.mxu0 0.0
        %4123 = vmatpush2.msra.mxu0 0.0
        %4124 = vmatprep.subr.mxu0 0.0
        %4125 = vmatpush2.msra.mxu0 0.0
        %4126 = vmatprep.subr.mxu0 0.0
        %4127 = vmatpush2.msra.mxu0 0.0
        %4128 = vmatprep.subr.mxu0 0.0
        %4129 = vmatpush2.msra.mxu0 0.0
        %4130 = vmatprep.subr.mxu0 0.0
        %4131 = vmatpush2.msra.mxu0 0.0
        %4132 = vmatprep.subr.mxu0 0.0
        %4133 = vmatpush2.msra.mxu0 0.0
        %4134 = vmatprep.subr.mxu0 0.0
        %4135 = vmatpush2.msra.mxu0 0.0
        %4136 = vmatprep.mubr.f32.mxu0 0.0
        %v4137 = vand.u32 %v3754, 4294901760
        %v4138 = vsub.f32 %v3754, %v4137
        %v4139 = vand.u32 %v4138, 4294901760
        %4140 = vmatmul.mubr.f32.gmra.mxu0 %v4139
        %v4141 = vpop.f32.mrf.mxu0
        %v4142 = vadd.f32 %v4054, %v4141
        %v4143 = vpop.f32.mrf.mxu0
        %4144 = vmatprep.mubr.f32.mxu0 0.0
        %v4145 = vand.u32 %v3757, 4294901760
        %v4146 = vsub.f32 %v3757, %v4145
        %v4147 = vand.u32 %v4146, 4294901760
        %4148 = vmatmul.mubr.f32.gmra.mxu0 %v4147
        %v4149 = vpop.f32.mrf.mxu0
        %v4150 = vadd.f32 %v4061, %v4149
        %v4151 = vpop.f32.mrf.mxu0
        %4152 = vdwg.mxu0
        %4153 = vmatprep.subr.mxu0 0.0
        %4154 = vmatpush1.msra.mxu0 0.0
        %4155 = vmatprep.subr.mxu0 0.0
        %4156 = vmatpush1.msra.mxu0 0.0
        %4157 = vmatprep.subr.mxu0 0.0
        %4158 = vmatpush1.msra.mxu0 0.0
        %4159 = vmatprep.subr.mxu0 0.0
        %4160 = vmatpush1.msra.mxu0 0.0
        %4161 = vmatprep.subr.mxu0 0.0
        %4162 = vmatpush1.msra.mxu0 0.0
        %4163 = vmatprep.subr.mxu0 0.0
        %4164 = vmatpush1.msra.mxu0 0.0
        %4165 = vmatprep.subr.mxu0 0.0
        %4166 = vmatpush1.msra.mxu0 0.0
        %4167 = vmatprep.subr.mxu0 0.0
        %4168 = vmatpush1.msra.mxu0 0.0
        %4169 = vmatprep.subr.mxu0 0.0
        %v4170 = vand.u32 %v461, 4294901760
        %v4171 = vsub.f32 %v461, %v4170
        %v4172 = vand.u32 %v4171, 4294901760
        %4173 = vmatpush1.msra.mxu0 %v4172
        %4174 = vmatprep.subr.mxu0 0.0
        %v4175 = vand.u32 %v460, 4294901760
        %v4176 = vsub.f32 %v460, %v4175
        %v4177 = vand.u32 %v4176, 4294901760
        %4178 = vmatpush1.msra.mxu0 %v4177
        %4179 = vmatprep.subr.mxu0 0.0
        %v4180 = vand.u32 %v459, 4294901760
        %v4181 = vsub.f32 %v459, %v4180
        %v4182 = vand.u32 %v4181, 4294901760
        %4183 = vmatpush1.msra.mxu0 %v4182
        %4184 = vmatprep.subr.mxu0 0.0
        %v4185 = vand.u32 %v458, 4294901760
        %v4186 = vsub.f32 %v458, %v4185
        %v4187 = vand.u32 %v4186, 4294901760
        %4188 = vmatpush1.msra.mxu0 %v4187
        %4189 = vmatprep.subr.mxu0 0.0
        %v4190 = vand.u32 %v457, 4294901760
        %v4191 = vsub.f32 %v457, %v4190
        %v4192 = vand.u32 %v4191, 4294901760
        %4193 = vmatpush1.msra.mxu0 %v4192
        %4194 = vmatprep.subr.mxu0 0.0
        %v4195 = vand.u32 %v456, 4294901760
        %v4196 = vsub.f32 %v456, %v4195
        %v4197 = vand.u32 %v4196, 4294901760
        %4198 = vmatpush1.msra.mxu0 %v4197
        %4199 = vmatprep.subr.mxu0 0.0
        %v4200 = vand.u32 %v455, 4294901760
        %v4201 = vsub.f32 %v455, %v4200
        %v4202 = vand.u32 %v4201, 4294901760
        %4203 = vmatpush1.msra.mxu0 %v4202
        %4204 = vmatprep.subr.mxu0 0.0
        %v4205 = vand.u32 %v454, 4294901760
        %v4206 = vsub.f32 %v454, %v4205
        %v4207 = vand.u32 %v4206, 4294901760
        %4208 = vmatpush1.msra.mxu0 %v4207
        %4209 = vmatprep.subr.mxu0 0.0
        %4210 = vmatpush2.msra.mxu0 0.0
        %4211 = vmatprep.subr.mxu0 0.0
        %4212 = vmatpush2.msra.mxu0 0.0
        %4213 = vmatprep.subr.mxu0 0.0
        %4214 = vmatpush2.msra.mxu0 0.0
        %4215 = vmatprep.subr.mxu0 0.0
        %4216 = vmatpush2.msra.mxu0 0.0
        %4217 = vmatprep.subr.mxu0 0.0
        %4218 = vmatpush2.msra.mxu0 0.0
        %4219 = vmatprep.subr.mxu0 0.0
        %4220 = vmatpush2.msra.mxu0 0.0
        %4221 = vmatprep.subr.mxu0 0.0
        %4222 = vmatpush2.msra.mxu0 0.0
        %4223 = vmatprep.subr.mxu0 0.0
        %4224 = vmatpush2.msra.mxu0 0.0
        %4225 = vmatprep.subr.mxu0 0.0
        %4226 = vmatpush2.msra.mxu0 0.0
        %4227 = vmatprep.subr.mxu0 0.0
        %4228 = vmatpush2.msra.mxu0 0.0
        %4229 = vmatprep.subr.mxu0 0.0
        %4230 = vmatpush2.msra.mxu0 0.0
        %4231 = vmatprep.subr.mxu0 0.0
        %4232 = vmatpush2.msra.mxu0 0.0
        %4233 = vmatprep.subr.mxu0 0.0
        %4234 = vmatpush2.msra.mxu0 0.0
        %4235 = vmatprep.subr.mxu0 0.0
        %4236 = vmatpush2.msra.mxu0 0.0
        %4237 = vmatprep.subr.mxu0 0.0
        %4238 = vmatpush2.msra.mxu0 0.0
        %4239 = vmatprep.subr.mxu0 0.0
        %4240 = vmatpush2.msra.mxu0 0.0
        %4241 = vmatprep.mubr.f32.mxu0 0.0
        %v4242 = vand.u32 %v3754, 4294901760
        %4243 = vmatmul.mubr.f32.gmra.mxu0 %v4242
        %v4244 = vpop.f32.mrf.mxu0
        %v4245 = vadd.f32 %v4142, %v4244
        %v4246 = vpop.f32.mrf.mxu0
        %4247 = vmatprep.mubr.f32.mxu0 0.0
        %v4248 = vand.u32 %v3757, 4294901760
        %4249 = vmatmul.mubr.f32.gmra.mxu0 %v4248
        %v4250 = vpop.f32.mrf.mxu0
        %v4251 = vadd.f32 %v4150, %v4250
        %v4252 = vpop.f32.mrf.mxu0
        %4253 = vdwg.mxu0
        %4254 = vmatprep.subr.mxu0 0.0
        %4255 = vmatpush1.msra.mxu0 0.0
        %4256 = vmatprep.subr.mxu0 0.0
        %4257 = vmatpush1.msra.mxu0 0.0
        %4258 = vmatprep.subr.mxu0 0.0
        %4259 = vmatpush1.msra.mxu0 0.0
        %4260 = vmatprep.subr.mxu0 0.0
        %4261 = vmatpush1.msra.mxu0 0.0
        %4262 = vmatprep.subr.mxu0 0.0
        %4263 = vmatpush1.msra.mxu0 0.0
        %4264 = vmatprep.subr.mxu0 0.0
        %4265 = vmatpush1.msra.mxu0 0.0
        %4266 = vmatprep.subr.mxu0 0.0
        %4267 = vmatpush1.msra.mxu0 0.0
        %4268 = vmatprep.subr.mxu0 0.0
        %4269 = vmatpush1.msra.mxu0 0.0
        %4270 = vmatprep.subr.mxu0 0.0
        %v4271 = vand.u32 %v461, 4294901760
        %4272 = vmatpush1.msra.mxu0 %v4271
        %4273 = vmatprep.subr.mxu0 0.0
        %v4274 = vand.u32 %v460, 4294901760
        %4275 = vmatpush1.msra.mxu0 %v4274
        %4276 = vmatprep.subr.mxu0 0.0
        %v4277 = vand.u32 %v459, 4294901760
        %4278 = vmatpush1.msra.mxu0 %v4277
        %4279 = vmatprep.subr.mxu0 0.0
        %v4280 = vand.u32 %v458, 4294901760
        %4281 = vmatpush1.msra.mxu0 %v4280
        %4282 = vmatprep.subr.mxu0 0.0
        %v4283 = vand.u32 %v457, 4294901760
        %4284 = vmatpush1.msra.mxu0 %v4283
        %4285 = vmatprep.subr.mxu0 0.0
        %v4286 = vand.u32 %v456, 4294901760
        %4287 = vmatpush1.msra.mxu0 %v4286
        %4288 = vmatprep.subr.mxu0 0.0
        %v4289 = vand.u32 %v455, 4294901760
        %4290 = vmatpush1.msra.mxu0 %v4289
        %4291 = vmatprep.subr.mxu0 0.0
        %v4292 = vand.u32 %v454, 4294901760
        %4293 = vmatpush1.msra.mxu0 %v4292
        %4294 = vmatprep.subr.mxu0 0.0
        %4295 = vmatpush2.msra.mxu0 0.0
        %4296 = vmatprep.subr.mxu0 0.0
        %4297 = vmatpush2.msra.mxu0 0.0
        %4298 = vmatprep.subr.mxu0 0.0
        %4299 = vmatpush2.msra.mxu0 0.0
        %4300 = vmatprep.subr.mxu0 0.0
        %4301 = vmatpush2.msra.mxu0 0.0
        %4302 = vmatprep.subr.mxu0 0.0
        %4303 = vmatpush2.msra.mxu0 0.0
        %4304 = vmatprep.subr.mxu0 0.0
        %4305 = vmatpush2.msra.mxu0 0.0
        %4306 = vmatprep.subr.mxu0 0.0
        %4307 = vmatpush2.msra.mxu0 0.0
        %4308 = vmatprep.subr.mxu0 0.0
        %4309 = vmatpush2.msra.mxu0 0.0
        %4310 = vmatprep.subr.mxu0 0.0
        %4311 = vmatpush2.msra.mxu0 0.0
        %4312 = vmatprep.subr.mxu0 0.0
        %4313 = vmatpush2.msra.mxu0 0.0
        %4314 = vmatprep.subr.mxu0 0.0
        %4315 = vmatpush2.msra.mxu0 0.0
        %4316 = vmatprep.subr.mxu0 0.0
        %4317 = vmatpush2.msra.mxu0 0.0
        %4318 = vmatprep.subr.mxu0 0.0
        %4319 = vmatpush2.msra.mxu0 0.0
        %4320 = vmatprep.subr.mxu0 0.0
        %4321 = vmatpush2.msra.mxu0 0.0
        %4322 = vmatprep.subr.mxu0 0.0
        %4323 = vmatpush2.msra.mxu0 0.0
        %4324 = vmatprep.subr.mxu0 0.0
        %4325 = vmatpush2.msra.mxu0 0.0
        %4326 = vmatprep.mubr.f32.mxu0 0.0
        %v4327 = vand.u32 %v3754, 4294901760
        %4328 = vmatmul.mubr.f32.gmra.mxu0 %v4327
        %v4329 = vpop.f32.mrf.mxu0
        %v4330 = vadd.f32 %v4245, %v4329
        %v4331 = vpop.f32.mrf.mxu0
        %4332 = vmatprep.mubr.f32.mxu0 0.0
        %v4333 = vand.u32 %v3757, 4294901760
        %4334 = vmatmul.mubr.f32.gmra.mxu0 %v4333
        %v4335 = vpop.f32.mrf.mxu0
        %v4336 = vadd.f32 %v4251, %v4335
        %v4337 = vpop.f32.mrf.mxu0
        %4338 = vdwg.mxu0
        %v4340 = vsel %vm656, %v3165, 0
        %v4343 = vsel %vm656, %v3166, 0
        %4345 = vmatprep.subr.mxu0 0.0
        %4346 = vmatpush1.msra.mxu0 0.0
        %4347 = vmatprep.subr.mxu0 0.0
        %4348 = vmatpush1.msra.mxu0 0.0
        %4349 = vmatprep.subr.mxu0 0.0
        %4350 = vmatpush1.msra.mxu0 0.0
        %4351 = vmatprep.subr.mxu0 0.0
        %4352 = vmatpush1.msra.mxu0 0.0
        %4353 = vmatprep.subr.mxu0 0.0
        %4354 = vmatpush1.msra.mxu0 0.0
        %4355 = vmatprep.subr.mxu0 0.0
        %4356 = vmatpush1.msra.mxu0 0.0
        %4357 = vmatprep.subr.mxu0 0.0
        %4358 = vmatpush1.msra.mxu0 0.0
        %4359 = vmatprep.subr.mxu0 0.0
        %4360 = vmatpush1.msra.mxu0 0.0
        %4361 = vmatprep.subr.mxu0 0.0
        %v4362 = vand.u32 %v493, 4294901760
        %4363 = vmatpush1.msra.mxu0 %v4362
        %4364 = vmatprep.subr.mxu0 0.0
        %v4365 = vand.u32 %v492, 4294901760
        %4366 = vmatpush1.msra.mxu0 %v4365
        %4367 = vmatprep.subr.mxu0 0.0
        %v4368 = vand.u32 %v491, 4294901760
        %4369 = vmatpush1.msra.mxu0 %v4368
        %4370 = vmatprep.subr.mxu0 0.0
        %v4371 = vand.u32 %v490, 4294901760
        %4372 = vmatpush1.msra.mxu0 %v4371
        %4373 = vmatprep.subr.mxu0 0.0
        %v4374 = vand.u32 %v489, 4294901760
        %4375 = vmatpush1.msra.mxu0 %v4374
        %4376 = vmatprep.subr.mxu0 0.0
        %v4377 = vand.u32 %v488, 4294901760
        %4378 = vmatpush1.msra.mxu0 %v4377
        %4379 = vmatprep.subr.mxu0 0.0
        %v4380 = vand.u32 %v487, 4294901760
        %4381 = vmatpush1.msra.mxu0 %v4380
        %4382 = vmatprep.subr.mxu0 0.0
        %v4383 = vand.u32 %v486, 4294901760
        %4384 = vmatpush1.msra.mxu0 %v4383
        %4385 = vmatprep.subr.mxu0 0.0
        %4386 = vmatpush2.msra.mxu0 0.0
        %4387 = vmatprep.subr.mxu0 0.0
        %4388 = vmatpush2.msra.mxu0 0.0
        %4389 = vmatprep.subr.mxu0 0.0
        %4390 = vmatpush2.msra.mxu0 0.0
        %4391 = vmatprep.subr.mxu0 0.0
        %4392 = vmatpush2.msra.mxu0 0.0
        %4393 = vmatprep.subr.mxu0 0.0
        %4394 = vmatpush2.msra.mxu0 0.0
        %4395 = vmatprep.subr.mxu0 0.0
        %4396 = vmatpush2.msra.mxu0 0.0
        %4397 = vmatprep.subr.mxu0 0.0
        %4398 = vmatpush2.msra.mxu0 0.0
        %4399 = vmatprep.subr.mxu0 0.0
        %4400 = vmatpush2.msra.mxu0 0.0
        %4401 = vmatprep.subr.mxu0 0.0
        %4402 = vmatpush2.msra.mxu0 0.0
        %4403 = vmatprep.subr.mxu0 0.0
        %4404 = vmatpush2.msra.mxu0 0.0
        %4405 = vmatprep.subr.mxu0 0.0
        %4406 = vmatpush2.msra.mxu0 0.0
        %4407 = vmatprep.subr.mxu0 0.0
        %4408 = vmatpush2.msra.mxu0 0.0
        %4409 = vmatprep.subr.mxu0 0.0
        %4410 = vmatpush2.msra.mxu0 0.0
        %4411 = vmatprep.subr.mxu0 0.0
        %4412 = vmatpush2.msra.mxu0 0.0
        %4413 = vmatprep.subr.mxu0 0.0
        %4414 = vmatpush2.msra.mxu0 0.0
        %4415 = vmatprep.subr.mxu0 0.0
        %4416 = vmatpush2.msra.mxu0 0.0
        %4417 = vmatprep.mubr.f32.mxu0 0.0
        %v4418 = vand.u32 %v4340, 4294901760
        %v4419 = vsub.f32 %v4340, %v4418
        %v4420 = vand.u32 %v4419, 4294901760
        %v4421 = vsub.f32 %v4419, %v4420
        %v4422 = vand.u32 %v4421, 4294901760
        %4423 = vmatmul.mubr.f32.gmra.mxu0 %v4422
        %v4424 = vpop.f32.mrf.mxu0
        %v4425 = vadd.f32 0.0, %v4424
        %v4426 = vpop.f32.mrf.mxu0
        %4427 = vmatprep.mubr.f32.mxu0 0.0
        %v4428 = vand.u32 %v4343, 4294901760
        %v4429 = vsub.f32 %v4343, %v4428
        %v4430 = vand.u32 %v4429, 4294901760
        %v4431 = vsub.f32 %v4429, %v4430
        %v4432 = vand.u32 %v4431, 4294901760
        %4433 = vmatmul.mubr.f32.gmra.mxu0 %v4432
        %v4434 = vpop.f32.mrf.mxu0
        %v4435 = vadd.f32 0.0, %v4434
        %v4436 = vpop.f32.mrf.mxu0
        %4437 = vdwg.mxu0
        %4438 = vmatprep.subr.mxu0 0.0
        %4439 = vmatpush1.msra.mxu0 0.0
        %4440 = vmatprep.subr.mxu0 0.0
        %4441 = vmatpush1.msra.mxu0 0.0
        %4442 = vmatprep.subr.mxu0 0.0
        %4443 = vmatpush1.msra.mxu0 0.0
        %4444 = vmatprep.subr.mxu0 0.0
        %4445 = vmatpush1.msra.mxu0 0.0
        %4446 = vmatprep.subr.mxu0 0.0
        %4447 = vmatpush1.msra.mxu0 0.0
        %4448 = vmatprep.subr.mxu0 0.0
        %4449 = vmatpush1.msra.mxu0 0.0
        %4450 = vmatprep.subr.mxu0 0.0
        %4451 = vmatpush1.msra.mxu0 0.0
        %4452 = vmatprep.subr.mxu0 0.0
        %4453 = vmatpush1.msra.mxu0 0.0
        %4454 = vmatprep.subr.mxu0 0.0
        %v4455 = vand.u32 %v493, 4294901760
        %v4456 = vsub.f32 %v493, %v4455
        %v4457 = vand.u32 %v4456, 4294901760
        %v4458 = vsub.f32 %v4456, %v4457
        %v4459 = vand.u32 %v4458, 4294901760
        %4460 = vmatpush1.msra.mxu0 %v4459
        %4461 = vmatprep.subr.mxu0 0.0
        %v4462 = vand.u32 %v492, 4294901760
        %v4463 = vsub.f32 %v492, %v4462
        %v4464 = vand.u32 %v4463, 4294901760
        %v4465 = vsub.f32 %v4463, %v4464
        %v4466 = vand.u32 %v4465, 4294901760
        %4467 = vmatpush1.msra.mxu0 %v4466
        %4468 = vmatprep.subr.mxu0 0.0
        %v4469 = vand.u32 %v491, 4294901760
        %v4470 = vsub.f32 %v491, %v4469
        %v4471 = vand.u32 %v4470, 4294901760
        %v4472 = vsub.f32 %v4470, %v4471
        %v4473 = vand.u32 %v4472, 4294901760
        %4474 = vmatpush1.msra.mxu0 %v4473
        %4475 = vmatprep.subr.mxu0 0.0
        %v4476 = vand.u32 %v490, 4294901760
        %v4477 = vsub.f32 %v490, %v4476
        %v4478 = vand.u32 %v4477, 4294901760
        %v4479 = vsub.f32 %v4477, %v4478
        %v4480 = vand.u32 %v4479, 4294901760
        %4481 = vmatpush1.msra.mxu0 %v4480
        %4482 = vmatprep.subr.mxu0 0.0
        %v4483 = vand.u32 %v489, 4294901760
        %v4484 = vsub.f32 %v489, %v4483
        %v4485 = vand.u32 %v4484, 4294901760
        %v4486 = vsub.f32 %v4484, %v4485
        %v4487 = vand.u32 %v4486, 4294901760
        %4488 = vmatpush1.msra.mxu0 %v4487
        %4489 = vmatprep.subr.mxu0 0.0
        %v4490 = vand.u32 %v488, 4294901760
        %v4491 = vsub.f32 %v488, %v4490
        %v4492 = vand.u32 %v4491, 4294901760
        %v4493 = vsub.f32 %v4491, %v4492
        %v4494 = vand.u32 %v4493, 4294901760
        %4495 = vmatpush1.msra.mxu0 %v4494
        %4496 = vmatprep.subr.mxu0 0.0
        %v4497 = vand.u32 %v487, 4294901760
        %v4498 = vsub.f32 %v487, %v4497
        %v4499 = vand.u32 %v4498, 4294901760
        %v4500 = vsub.f32 %v4498, %v4499
        %v4501 = vand.u32 %v4500, 4294901760
        %4502 = vmatpush1.msra.mxu0 %v4501
        %4503 = vmatprep.subr.mxu0 0.0
        %v4504 = vand.u32 %v486, 4294901760
        %v4505 = vsub.f32 %v486, %v4504
        %v4506 = vand.u32 %v4505, 4294901760
        %v4507 = vsub.f32 %v4505, %v4506
        %v4508 = vand.u32 %v4507, 4294901760
        %4509 = vmatpush1.msra.mxu0 %v4508
        %4510 = vmatprep.subr.mxu0 0.0
        %4511 = vmatpush2.msra.mxu0 0.0
        %4512 = vmatprep.subr.mxu0 0.0
        %4513 = vmatpush2.msra.mxu0 0.0
        %4514 = vmatprep.subr.mxu0 0.0
        %4515 = vmatpush2.msra.mxu0 0.0
        %4516 = vmatprep.subr.mxu0 0.0
        %4517 = vmatpush2.msra.mxu0 0.0
        %4518 = vmatprep.subr.mxu0 0.0
        %4519 = vmatpush2.msra.mxu0 0.0
        %4520 = vmatprep.subr.mxu0 0.0
        %4521 = vmatpush2.msra.mxu0 0.0
        %4522 = vmatprep.subr.mxu0 0.0
        %4523 = vmatpush2.msra.mxu0 0.0
        %4524 = vmatprep.subr.mxu0 0.0
        %4525 = vmatpush2.msra.mxu0 0.0
        %4526 = vmatprep.subr.mxu0 0.0
        %4527 = vmatpush2.msra.mxu0 0.0
        %4528 = vmatprep.subr.mxu0 0.0
        %4529 = vmatpush2.msra.mxu0 0.0
        %4530 = vmatprep.subr.mxu0 0.0
        %4531 = vmatpush2.msra.mxu0 0.0
        %4532 = vmatprep.subr.mxu0 0.0
        %4533 = vmatpush2.msra.mxu0 0.0
        %4534 = vmatprep.subr.mxu0 0.0
        %4535 = vmatpush2.msra.mxu0 0.0
        %4536 = vmatprep.subr.mxu0 0.0
        %4537 = vmatpush2.msra.mxu0 0.0
        %4538 = vmatprep.subr.mxu0 0.0
        %4539 = vmatpush2.msra.mxu0 0.0
        %4540 = vmatprep.subr.mxu0 0.0
        %4541 = vmatpush2.msra.mxu0 0.0
        %4542 = vmatprep.mubr.f32.mxu0 0.0
        %v4543 = vand.u32 %v4340, 4294901760
        %4544 = vmatmul.mubr.f32.gmra.mxu0 %v4543
        %v4545 = vpop.f32.mrf.mxu0
        %v4546 = vadd.f32 %v4425, %v4545
        %v4547 = vpop.f32.mrf.mxu0
        %4548 = vmatprep.mubr.f32.mxu0 0.0
        %v4549 = vand.u32 %v4343, 4294901760
        %4550 = vmatmul.mubr.f32.gmra.mxu0 %v4549
        %v4551 = vpop.f32.mrf.mxu0
        %v4552 = vadd.f32 %v4435, %v4551
        %v4553 = vpop.f32.mrf.mxu0
        %4554 = vdwg.mxu0
        %4555 = vmatprep.subr.mxu0 0.0
        %4556 = vmatpush1.msra.mxu0 0.0
        %4557 = vmatprep.subr.mxu0 0.0
        %4558 = vmatpush1.msra.mxu0 0.0
        %4559 = vmatprep.subr.mxu0 0.0
        %4560 = vmatpush1.msra.mxu0 0.0
        %4561 = vmatprep.subr.mxu0 0.0
        %4562 = vmatpush1.msra.mxu0 0.0
        %4563 = vmatprep.subr.mxu0 0.0
        %4564 = vmatpush1.msra.mxu0 0.0
        %4565 = vmatprep.subr.mxu0 0.0
        %4566 = vmatpush1.msra.mxu0 0.0
        %4567 = vmatprep.subr.mxu0 0.0
        %4568 = vmatpush1.msra.mxu0 0.0
        %4569 = vmatprep.subr.mxu0 0.0
        %4570 = vmatpush1.msra.mxu0 0.0
        %4571 = vmatprep.subr.mxu0 0.0
        %v4572 = vand.u32 %v493, 4294901760
        %v4573 = vsub.f32 %v493, %v4572
        %4574 = vmatpush1.msra.mxu0 %v4573
        %4575 = vmatprep.subr.mxu0 0.0
        %v4576 = vand.u32 %v492, 4294901760
        %v4577 = vsub.f32 %v492, %v4576
        %4578 = vmatpush1.msra.mxu0 %v4577
        %4579 = vmatprep.subr.mxu0 0.0
        %v4580 = vand.u32 %v491, 4294901760
        %v4581 = vsub.f32 %v491, %v4580
        %4582 = vmatpush1.msra.mxu0 %v4581
        %4583 = vmatprep.subr.mxu0 0.0
        %v4584 = vand.u32 %v490, 4294901760
        %v4585 = vsub.f32 %v490, %v4584
        %4586 = vmatpush1.msra.mxu0 %v4585
        %4587 = vmatprep.subr.mxu0 0.0
        %v4588 = vand.u32 %v489, 4294901760
        %v4589 = vsub.f32 %v489, %v4588
        %4590 = vmatpush1.msra.mxu0 %v4589
        %4591 = vmatprep.subr.mxu0 0.0
        %v4592 = vand.u32 %v488, 4294901760
        %v4593 = vsub.f32 %v488, %v4592
        %4594 = vmatpush1.msra.mxu0 %v4593
        %4595 = vmatprep.subr.mxu0 0.0
        %v4596 = vand.u32 %v487, 4294901760
        %v4597 = vsub.f32 %v487, %v4596
        %4598 = vmatpush1.msra.mxu0 %v4597
        %4599 = vmatprep.subr.mxu0 0.0
        %v4600 = vand.u32 %v486, 4294901760
        %v4601 = vsub.f32 %v486, %v4600
        %4602 = vmatpush1.msra.mxu0 %v4601
        %4603 = vmatprep.subr.mxu0 0.0
        %4604 = vmatpush2.msra.mxu0 0.0
        %4605 = vmatprep.subr.mxu0 0.0
        %4606 = vmatpush2.msra.mxu0 0.0
        %4607 = vmatprep.subr.mxu0 0.0
        %4608 = vmatpush2.msra.mxu0 0.0
        %4609 = vmatprep.subr.mxu0 0.0
        %4610 = vmatpush2.msra.mxu0 0.0
        %4611 = vmatprep.subr.mxu0 0.0
        %4612 = vmatpush2.msra.mxu0 0.0
        %4613 = vmatprep.subr.mxu0 0.0
        %4614 = vmatpush2.msra.mxu0 0.0
        %4615 = vmatprep.subr.mxu0 0.0
        %4616 = vmatpush2.msra.mxu0 0.0
        %4617 = vmatprep.subr.mxu0 0.0
        %4618 = vmatpush2.msra.mxu0 0.0
        %4619 = vmatprep.subr.mxu0 0.0
        %4620 = vmatpush2.msra.mxu0 0.0
        %4621 = vmatprep.subr.mxu0 0.0
        %4622 = vmatpush2.msra.mxu0 0.0
        %4623 = vmatprep.subr.mxu0 0.0
        %4624 = vmatpush2.msra.mxu0 0.0
        %4625 = vmatprep.subr.mxu0 0.0
        %4626 = vmatpush2.msra.mxu0 0.0
        %4627 = vmatprep.subr.mxu0 0.0
        %4628 = vmatpush2.msra.mxu0 0.0
        %4629 = vmatprep.subr.mxu0 0.0
        %4630 = vmatpush2.msra.mxu0 0.0
        %4631 = vmatprep.subr.mxu0 0.0
        %4632 = vmatpush2.msra.mxu0 0.0
        %4633 = vmatprep.subr.mxu0 0.0
        %4634 = vmatpush2.msra.mxu0 0.0
        %4635 = vmatprep.mubr.f32.mxu0 0.0
        %v4636 = vand.u32 %v4340, 4294901760
        %v4637 = vsub.f32 %v4340, %v4636
        %4638 = vmatmul.mubr.f32.gmra.mxu0 %v4637
        %v4639 = vpop.f32.mrf.mxu0
        %v4640 = vadd.f32 %v4546, %v4639
        %v4641 = vpop.f32.mrf.mxu0
        %4642 = vmatprep.mubr.f32.mxu0 0.0
        %v4643 = vand.u32 %v4343, 4294901760
        %v4644 = vsub.f32 %v4343, %v4643
        %4645 = vmatmul.mubr.f32.gmra.mxu0 %v4644
        %v4646 = vpop.f32.mrf.mxu0
        %v4647 = vadd.f32 %v4552, %v4646
        %v4648 = vpop.f32.mrf.mxu0
        %4649 = vdwg.mxu0
        %4650 = vmatprep.subr.mxu0 0.0
        %4651 = vmatpush1.msra.mxu0 0.0
        %4652 = vmatprep.subr.mxu0 0.0
        %4653 = vmatpush1.msra.mxu0 0.0
        %4654 = vmatprep.subr.mxu0 0.0
        %4655 = vmatpush1.msra.mxu0 0.0
        %4656 = vmatprep.subr.mxu0 0.0
        %4657 = vmatpush1.msra.mxu0 0.0
        %4658 = vmatprep.subr.mxu0 0.0
        %4659 = vmatpush1.msra.mxu0 0.0
        %4660 = vmatprep.subr.mxu0 0.0
        %4661 = vmatpush1.msra.mxu0 0.0
        %4662 = vmatprep.subr.mxu0 0.0
        %4663 = vmatpush1.msra.mxu0 0.0
        %4664 = vmatprep.subr.mxu0 0.0
        %4665 = vmatpush1.msra.mxu0 0.0
        %4666 = vmatprep.subr.mxu0 0.0
        %v4667 = vand.u32 %v493, 4294901760
        %4668 = vmatpush1.msra.mxu0 %v4667
        %4669 = vmatprep.subr.mxu0 0.0
        %v4670 = vand.u32 %v492, 4294901760
        %4671 = vmatpush1.msra.mxu0 %v4670
        %4672 = vmatprep.subr.mxu0 0.0
        %v4673 = vand.u32 %v491, 4294901760
        %4674 = vmatpush1.msra.mxu0 %v4673
        %4675 = vmatprep.subr.mxu0 0.0
        %v4676 = vand.u32 %v490, 4294901760
        %4677 = vmatpush1.msra.mxu0 %v4676
        %4678 = vmatprep.subr.mxu0 0.0
        %v4679 = vand.u32 %v489, 4294901760
        %4680 = vmatpush1.msra.mxu0 %v4679
        %4681 = vmatprep.subr.mxu0 0.0
        %v4682 = vand.u32 %v488, 4294901760
        %4683 = vmatpush1.msra.mxu0 %v4682
        %4684 = vmatprep.subr.mxu0 0.0
        %v4685 = vand.u32 %v487, 4294901760
        %4686 = vmatpush1.msra.mxu0 %v4685
        %4687 = vmatprep.subr.mxu0 0.0
        %v4688 = vand.u32 %v486, 4294901760
        %4689 = vmatpush1.msra.mxu0 %v4688
        %4690 = vmatprep.subr.mxu0 0.0
        %4691 = vmatpush2.msra.mxu0 0.0
        %4692 = vmatprep.subr.mxu0 0.0
        %4693 = vmatpush2.msra.mxu0 0.0
        %4694 = vmatprep.subr.mxu0 0.0
        %4695 = vmatpush2.msra.mxu0 0.0
        %4696 = vmatprep.subr.mxu0 0.0
        %4697 = vmatpush2.msra.mxu0 0.0
        %4698 = vmatprep.subr.mxu0 0.0
        %4699 = vmatpush2.msra.mxu0 0.0
        %4700 = vmatprep.subr.mxu0 0.0
        %4701 = vmatpush2.msra.mxu0 0.0
        %4702 = vmatprep.subr.mxu0 0.0
        %4703 = vmatpush2.msra.mxu0 0.0
        %4704 = vmatprep.subr.mxu0 0.0
        %4705 = vmatpush2.msra.mxu0 0.0
        %4706 = vmatprep.subr.mxu0 0.0
        %4707 = vmatpush2.msra.mxu0 0.0
        %4708 = vmatprep.subr.mxu0 0.0
        %4709 = vmatpush2.msra.mxu0 0.0
        %4710 = vmatprep.subr.mxu0 0.0
        %4711 = vmatpush2.msra.mxu0 0.0
        %4712 = vmatprep.subr.mxu0 0.0
        %4713 = vmatpush2.msra.mxu0 0.0
        %4714 = vmatprep.subr.mxu0 0.0
        %4715 = vmatpush2.msra.mxu0 0.0
        %4716 = vmatprep.subr.mxu0 0.0
        %4717 = vmatpush2.msra.mxu0 0.0
        %4718 = vmatprep.subr.mxu0 0.0
        %4719 = vmatpush2.msra.mxu0 0.0
        %4720 = vmatprep.subr.mxu0 0.0
        %4721 = vmatpush2.msra.mxu0 0.0
        %4722 = vmatprep.mubr.f32.mxu0 0.0
        %v4723 = vand.u32 %v4340, 4294901760
        %v4724 = vsub.f32 %v4340, %v4723
        %v4725 = vand.u32 %v4724, 4294901760
        %4726 = vmatmul.mubr.f32.gmra.mxu0 %v4725
        %v4727 = vpop.f32.mrf.mxu0
        %v4728 = vadd.f32 %v4640, %v4727
        %v4729 = vpop.f32.mrf.mxu0
        %4730 = vmatprep.mubr.f32.mxu0 0.0
        %v4731 = vand.u32 %v4343, 4294901760
        %v4732 = vsub.f32 %v4343, %v4731
        %v4733 = vand.u32 %v4732, 4294901760
        %4734 = vmatmul.mubr.f32.gmra.mxu0 %v4733
        %v4735 = vpop.f32.mrf.mxu0
        %v4736 = vadd.f32 %v4647, %v4735
        %v4737 = vpop.f32.mrf.mxu0
        %4738 = vdwg.mxu0
        %4739 = vmatprep.subr.mxu0 0.0
        %4740 = vmatpush1.msra.mxu0 0.0
        %4741 = vmatprep.subr.mxu0 0.0
        %4742 = vmatpush1.msra.mxu0 0.0
        %4743 = vmatprep.subr.mxu0 0.0
        %4744 = vmatpush1.msra.mxu0 0.0
        %4745 = vmatprep.subr.mxu0 0.0
        %4746 = vmatpush1.msra.mxu0 0.0
        %4747 = vmatprep.subr.mxu0 0.0
        %4748 = vmatpush1.msra.mxu0 0.0
        %4749 = vmatprep.subr.mxu0 0.0
        %4750 = vmatpush1.msra.mxu0 0.0
        %4751 = vmatprep.subr.mxu0 0.0
        %4752 = vmatpush1.msra.mxu0 0.0
        %4753 = vmatprep.subr.mxu0 0.0
        %4754 = vmatpush1.msra.mxu0 0.0
        %4755 = vmatprep.subr.mxu0 0.0
        %v4756 = vand.u32 %v493, 4294901760
        %v4757 = vsub.f32 %v493, %v4756
        %v4758 = vand.u32 %v4757, 4294901760
        %4759 = vmatpush1.msra.mxu0 %v4758
        %4760 = vmatprep.subr.mxu0 0.0
        %v4761 = vand.u32 %v492, 4294901760
        %v4762 = vsub.f32 %v492, %v4761
        %v4763 = vand.u32 %v4762, 4294901760
        %4764 = vmatpush1.msra.mxu0 %v4763
        %4765 = vmatprep.subr.mxu0 0.0
        %v4766 = vand.u32 %v491, 4294901760
        %v4767 = vsub.f32 %v491, %v4766
        %v4768 = vand.u32 %v4767, 4294901760
        %4769 = vmatpush1.msra.mxu0 %v4768
        %4770 = vmatprep.subr.mxu0 0.0
        %v4771 = vand.u32 %v490, 4294901760
        %v4772 = vsub.f32 %v490, %v4771
        %v4773 = vand.u32 %v4772, 4294901760
        %4774 = vmatpush1.msra.mxu0 %v4773
        %4775 = vmatprep.subr.mxu0 0.0
        %v4776 = vand.u32 %v489, 4294901760
        %v4777 = vsub.f32 %v489, %v4776
        %v4778 = vand.u32 %v4777, 4294901760
        %4779 = vmatpush1.msra.mxu0 %v4778
        %4780 = vmatprep.subr.mxu0 0.0
        %v4781 = vand.u32 %v488, 4294901760
        %v4782 = vsub.f32 %v488, %v4781
        %v4783 = vand.u32 %v4782, 4294901760
        %4784 = vmatpush1.msra.mxu0 %v4783
        %4785 = vmatprep.subr.mxu0 0.0
        %v4786 = vand.u32 %v487, 4294901760
        %v4787 = vsub.f32 %v487, %v4786
        %v4788 = vand.u32 %v4787, 4294901760
        %4789 = vmatpush1.msra.mxu0 %v4788
        %4790 = vmatprep.subr.mxu0 0.0
        %v4791 = vand.u32 %v486, 4294901760
        %v4792 = vsub.f32 %v486, %v4791
        %v4793 = vand.u32 %v4792, 4294901760
        %4794 = vmatpush1.msra.mxu0 %v4793
        %4795 = vmatprep.subr.mxu0 0.0
        %4796 = vmatpush2.msra.mxu0 0.0
        %4797 = vmatprep.subr.mxu0 0.0
        %4798 = vmatpush2.msra.mxu0 0.0
        %4799 = vmatprep.subr.mxu0 0.0
        %4800 = vmatpush2.msra.mxu0 0.0
        %4801 = vmatprep.subr.mxu0 0.0
        %4802 = vmatpush2.msra.mxu0 0.0
        %4803 = vmatprep.subr.mxu0 0.0
        %4804 = vmatpush2.msra.mxu0 0.0
        %4805 = vmatprep.subr.mxu0 0.0
        %4806 = vmatpush2.msra.mxu0 0.0
        %4807 = vmatprep.subr.mxu0 0.0
        %4808 = vmatpush2.msra.mxu0 0.0
        %4809 = vmatprep.subr.mxu0 0.0
        %4810 = vmatpush2.msra.mxu0 0.0
        %4811 = vmatprep.subr.mxu0 0.0
        %4812 = vmatpush2.msra.mxu0 0.0
        %4813 = vmatprep.subr.mxu0 0.0
        %4814 = vmatpush2.msra.mxu0 0.0
        %4815 = vmatprep.subr.mxu0 0.0
        %4816 = vmatpush2.msra.mxu0 0.0
        %4817 = vmatprep.subr.mxu0 0.0
        %4818 = vmatpush2.msra.mxu0 0.0
        %4819 = vmatprep.subr.mxu0 0.0
        %4820 = vmatpush2.msra.mxu0 0.0
        %4821 = vmatprep.subr.mxu0 0.0
        %4822 = vmatpush2.msra.mxu0 0.0
        %4823 = vmatprep.subr.mxu0 0.0
        %4824 = vmatpush2.msra.mxu0 0.0
        %4825 = vmatprep.subr.mxu0 0.0
        %4826 = vmatpush2.msra.mxu0 0.0
        %4827 = vmatprep.mubr.f32.mxu0 0.0
        %v4828 = vand.u32 %v4340, 4294901760
        %4829 = vmatmul.mubr.f32.gmra.mxu0 %v4828
        %v4830 = vpop.f32.mrf.mxu0
        %v4831 = vadd.f32 %v4728, %v4830
        %v4832 = vpop.f32.mrf.mxu0
        %4833 = vmatprep.mubr.f32.mxu0 0.0
        %v4834 = vand.u32 %v4343, 4294901760
        %4835 = vmatmul.mubr.f32.gmra.mxu0 %v4834
        %v4836 = vpop.f32.mrf.mxu0
        %v4837 = vadd.f32 %v4736, %v4836
        %v4838 = vpop.f32.mrf.mxu0
        %4839 = vdwg.mxu0
        %4840 = vmatprep.subr.mxu0 0.0
        %4841 = vmatpush1.msra.mxu0 0.0
        %4842 = vmatprep.subr.mxu0 0.0
        %4843 = vmatpush1.msra.mxu0 0.0
        %4844 = vmatprep.subr.mxu0 0.0
        %4845 = vmatpush1.msra.mxu0 0.0
        %4846 = vmatprep.subr.mxu0 0.0
        %4847 = vmatpush1.msra.mxu0 0.0
        %4848 = vmatprep.subr.mxu0 0.0
        %4849 = vmatpush1.msra.mxu0 0.0
        %4850 = vmatprep.subr.mxu0 0.0
        %4851 = vmatpush1.msra.mxu0 0.0
        %4852 = vmatprep.subr.mxu0 0.0
        %4853 = vmatpush1.msra.mxu0 0.0
        %4854 = vmatprep.subr.mxu0 0.0
        %4855 = vmatpush1.msra.mxu0 0.0
        %4856 = vmatprep.subr.mxu0 0.0
        %v4857 = vand.u32 %v493, 4294901760
        %4858 = vmatpush1.msra.mxu0 %v4857
        %4859 = vmatprep.subr.mxu0 0.0
        %v4860 = vand.u32 %v492, 4294901760
        %4861 = vmatpush1.msra.mxu0 %v4860
        %4862 = vmatprep.subr.mxu0 0.0
        %v4863 = vand.u32 %v491, 4294901760
        %4864 = vmatpush1.msra.mxu0 %v4863
        %4865 = vmatprep.subr.mxu0 0.0
        %v4866 = vand.u32 %v490, 4294901760
        %4867 = vmatpush1.msra.mxu0 %v4866
        %4868 = vmatprep.subr.mxu0 0.0
        %v4869 = vand.u32 %v489, 4294901760
        %4870 = vmatpush1.msra.mxu0 %v4869
        %4871 = vmatprep.subr.mxu0 0.0
        %v4872 = vand.u32 %v488, 4294901760
        %4873 = vmatpush1.msra.mxu0 %v4872
        %4874 = vmatprep.subr.mxu0 0.0
        %v4875 = vand.u32 %v487, 4294901760
        %4876 = vmatpush1.msra.mxu0 %v4875
        %4877 = vmatprep.subr.mxu0 0.0
        %v4878 = vand.u32 %v486, 4294901760
        %4879 = vmatpush1.msra.mxu0 %v4878
        %4880 = vmatprep.subr.mxu0 0.0
        %4881 = vmatpush2.msra.mxu0 0.0
        %4882 = vmatprep.subr.mxu0 0.0
        %4883 = vmatpush2.msra.mxu0 0.0
        %4884 = vmatprep.subr.mxu0 0.0
        %4885 = vmatpush2.msra.mxu0 0.0
        %4886 = vmatprep.subr.mxu0 0.0
        %4887 = vmatpush2.msra.mxu0 0.0
        %4888 = vmatprep.subr.mxu0 0.0
        %4889 = vmatpush2.msra.mxu0 0.0
        %4890 = vmatprep.subr.mxu0 0.0
        %4891 = vmatpush2.msra.mxu0 0.0
        %4892 = vmatprep.subr.mxu0 0.0
        %4893 = vmatpush2.msra.mxu0 0.0
        %4894 = vmatprep.subr.mxu0 0.0
        %4895 = vmatpush2.msra.mxu0 0.0
        %4896 = vmatprep.subr.mxu0 0.0
        %4897 = vmatpush2.msra.mxu0 0.0
        %4898 = vmatprep.subr.mxu0 0.0
        %4899 = vmatpush2.msra.mxu0 0.0
        %4900 = vmatprep.subr.mxu0 0.0
        %4901 = vmatpush2.msra.mxu0 0.0
        %4902 = vmatprep.subr.mxu0 0.0
        %4903 = vmatpush2.msra.mxu0 0.0
        %4904 = vmatprep.subr.mxu0 0.0
        %4905 = vmatpush2.msra.mxu0 0.0
        %4906 = vmatprep.subr.mxu0 0.0
        %4907 = vmatpush2.msra.mxu0 0.0
        %4908 = vmatprep.subr.mxu0 0.0
        %4909 = vmatpush2.msra.mxu0 0.0
        %4910 = vmatprep.subr.mxu0 0.0
        %4911 = vmatpush2.msra.mxu0 0.0
        %4912 = vmatprep.mubr.f32.mxu0 0.0
        %v4913 = vand.u32 %v4340, 4294901760
        %4914 = vmatmul.mubr.f32.gmra.mxu0 %v4913
        %v4915 = vpop.f32.mrf.mxu0
        %v4916 = vadd.f32 %v4831, %v4915
        %v4917 = vpop.f32.mrf.mxu0
        %4918 = vmatprep.mubr.f32.mxu0 0.0
        %v4919 = vand.u32 %v4343, 4294901760
        %4920 = vmatmul.mubr.f32.gmra.mxu0 %v4919
        %v4921 = vpop.f32.mrf.mxu0
        %v4922 = vadd.f32 %v4837, %v4921
        %v4923 = vpop.f32.mrf.mxu0
        %4924 = vdwg.mxu0
        %v4926 = vsel %vm656, %v3141, 0
        %v4929 = vsel %vm656, %v3142, 0
        %4931 = vmatprep.subr.mxu0 0.0
        %4932 = vmatpush1.msra.mxu0 0.0
        %4933 = vmatprep.subr.mxu0 0.0
        %4934 = vmatpush1.msra.mxu0 0.0
        %4935 = vmatprep.subr.mxu0 0.0
        %4936 = vmatpush1.msra.mxu0 0.0
        %4937 = vmatprep.subr.mxu0 0.0
        %4938 = vmatpush1.msra.mxu0 0.0
        %4939 = vmatprep.subr.mxu0 0.0
        %4940 = vmatpush1.msra.mxu0 0.0
        %4941 = vmatprep.subr.mxu0 0.0
        %4942 = vmatpush1.msra.mxu0 0.0
        %4943 = vmatprep.subr.mxu0 0.0
        %4944 = vmatpush1.msra.mxu0 0.0
        %4945 = vmatprep.subr.mxu0 0.0
        %4946 = vmatpush1.msra.mxu0 0.0
        %4947 = vmatprep.subr.mxu0 0.0
        %v4948 = vand.u32 %v461, 4294901760
        %4949 = vmatpush1.msra.mxu0 %v4948
        %4950 = vmatprep.subr.mxu0 0.0
        %v4951 = vand.u32 %v460, 4294901760
        %4952 = vmatpush1.msra.mxu0 %v4951
        %4953 = vmatprep.subr.mxu0 0.0
        %v4954 = vand.u32 %v459, 4294901760
        %4955 = vmatpush1.msra.mxu0 %v4954
        %4956 = vmatprep.subr.mxu0 0.0
        %v4957 = vand.u32 %v458, 4294901760
        %4958 = vmatpush1.msra.mxu0 %v4957
        %4959 = vmatprep.subr.mxu0 0.0
        %v4960 = vand.u32 %v457, 4294901760
        %4961 = vmatpush1.msra.mxu0 %v4960
        %4962 = vmatprep.subr.mxu0 0.0
        %v4963 = vand.u32 %v456, 4294901760
        %4964 = vmatpush1.msra.mxu0 %v4963
        %4965 = vmatprep.subr.mxu0 0.0
        %v4966 = vand.u32 %v455, 4294901760
        %4967 = vmatpush1.msra.mxu0 %v4966
        %4968 = vmatprep.subr.mxu0 0.0
        %v4969 = vand.u32 %v454, 4294901760
        %4970 = vmatpush1.msra.mxu0 %v4969
        %4971 = vmatprep.subr.mxu0 0.0
        %4972 = vmatpush2.msra.mxu0 0.0
        %4973 = vmatprep.subr.mxu0 0.0
        %4974 = vmatpush2.msra.mxu0 0.0
        %4975 = vmatprep.subr.mxu0 0.0
        %4976 = vmatpush2.msra.mxu0 0.0
        %4977 = vmatprep.subr.mxu0 0.0
        %4978 = vmatpush2.msra.mxu0 0.0
        %4979 = vmatprep.subr.mxu0 0.0
        %4980 = vmatpush2.msra.mxu0 0.0
        %4981 = vmatprep.subr.mxu0 0.0
        %4982 = vmatpush2.msra.mxu0 0.0
        %4983 = vmatprep.subr.mxu0 0.0
        %4984 = vmatpush2.msra.mxu0 0.0
        %4985 = vmatprep.subr.mxu0 0.0
        %4986 = vmatpush2.msra.mxu0 0.0
        %4987 = vmatprep.subr.mxu0 0.0
        %4988 = vmatpush2.msra.mxu0 0.0
        %4989 = vmatprep.subr.mxu0 0.0
        %4990 = vmatpush2.msra.mxu0 0.0
        %4991 = vmatprep.subr.mxu0 0.0
        %4992 = vmatpush2.msra.mxu0 0.0
        %4993 = vmatprep.subr.mxu0 0.0
        %4994 = vmatpush2.msra.mxu0 0.0
        %4995 = vmatprep.subr.mxu0 0.0
        %4996 = vmatpush2.msra.mxu0 0.0
        %4997 = vmatprep.subr.mxu0 0.0
        %4998 = vmatpush2.msra.mxu0 0.0
        %4999 = vmatprep.subr.mxu0 0.0
        %5000 = vmatpush2.msra.mxu0 0.0
        %5001 = vmatprep.subr.mxu0 0.0
        %5002 = vmatpush2.msra.mxu0 0.0
        %5003 = vmatprep.mubr.f32.mxu0 0.0
        %v5004 = vand.u32 %v4926, 4294901760
        %v5005 = vsub.f32 %v4926, %v5004
        %v5006 = vand.u32 %v5005, 4294901760
        %v5007 = vsub.f32 %v5005, %v5006
        %v5008 = vand.u32 %v5007, 4294901760
        %5009 = vmatmul.mubr.f32.gmra.mxu0 %v5008
        %v5010 = vpop.f32.mrf.mxu0
        %v5011 = vadd.f32 %v4916, %v5010
        %v5012 = vpop.f32.mrf.mxu0
        %5013 = vmatprep.mubr.f32.mxu0 0.0
        %v5014 = vand.u32 %v4929, 4294901760
        %v5015 = vsub.f32 %v4929, %v5014
        %v5016 = vand.u32 %v5015, 4294901760
        %v5017 = vsub.f32 %v5015, %v5016
        %v5018 = vand.u32 %v5017, 4294901760
        %5019 = vmatmul.mubr.f32.gmra.mxu0 %v5018
        %v5020 = vpop.f32.mrf.mxu0
        %v5021 = vadd.f32 %v4922, %v5020
        %v5022 = vpop.f32.mrf.mxu0
        %5023 = vdwg.mxu0
        %5024 = vmatprep.subr.mxu0 0.0
        %5025 = vmatpush1.msra.mxu0 0.0
        %5026 = vmatprep.subr.mxu0 0.0
        %5027 = vmatpush1.msra.mxu0 0.0
        %5028 = vmatprep.subr.mxu0 0.0
        %5029 = vmatpush1.msra.mxu0 0.0
        %5030 = vmatprep.subr.mxu0 0.0
        %5031 = vmatpush1.msra.mxu0 0.0
        %5032 = vmatprep.subr.mxu0 0.0
        %5033 = vmatpush1.msra.mxu0 0.0
        %5034 = vmatprep.subr.mxu0 0.0
        %5035 = vmatpush1.msra.mxu0 0.0
        %5036 = vmatprep.subr.mxu0 0.0
        %5037 = vmatpush1.msra.mxu0 0.0
        %5038 = vmatprep.subr.mxu0 0.0
        %5039 = vmatpush1.msra.mxu0 0.0
        %5040 = vmatprep.subr.mxu0 0.0
        %v5041 = vand.u32 %v461, 4294901760
        %v5042 = vsub.f32 %v461, %v5041
        %v5043 = vand.u32 %v5042, 4294901760
        %v5044 = vsub.f32 %v5042, %v5043
        %v5045 = vand.u32 %v5044, 4294901760
        %5046 = vmatpush1.msra.mxu0 %v5045
        %5047 = vmatprep.subr.mxu0 0.0
        %v5048 = vand.u32 %v460, 4294901760
        %v5049 = vsub.f32 %v460, %v5048
        %v5050 = vand.u32 %v5049, 4294901760
        %v5051 = vsub.f32 %v5049, %v5050
        %v5052 = vand.u32 %v5051, 4294901760
        %5053 = vmatpush1.msra.mxu0 %v5052
        %5054 = vmatprep.subr.mxu0 0.0
        %v5055 = vand.u32 %v459, 4294901760
        %v5056 = vsub.f32 %v459, %v5055
        %v5057 = vand.u32 %v5056, 4294901760
        %v5058 = vsub.f32 %v5056, %v5057
        %v5059 = vand.u32 %v5058, 4294901760
        %5060 = vmatpush1.msra.mxu0 %v5059
        %5061 = vmatprep.subr.mxu0 0.0
        %v5062 = vand.u32 %v458, 4294901760
        %v5063 = vsub.f32 %v458, %v5062
        %v5064 = vand.u32 %v5063, 4294901760
        %v5065 = vsub.f32 %v5063, %v5064
        %v5066 = vand.u32 %v5065, 4294901760
        %5067 = vmatpush1.msra.mxu0 %v5066
        %5068 = vmatprep.subr.mxu0 0.0
        %v5069 = vand.u32 %v457, 4294901760
        %v5070 = vsub.f32 %v457, %v5069
        %v5071 = vand.u32 %v5070, 4294901760
        %v5072 = vsub.f32 %v5070, %v5071
        %v5073 = vand.u32 %v5072, 4294901760
        %5074 = vmatpush1.msra.mxu0 %v5073
        %5075 = vmatprep.subr.mxu0 0.0
        %v5076 = vand.u32 %v456, 4294901760
        %v5077 = vsub.f32 %v456, %v5076
        %v5078 = vand.u32 %v5077, 4294901760
        %v5079 = vsub.f32 %v5077, %v5078
        %v5080 = vand.u32 %v5079, 4294901760
        %5081 = vmatpush1.msra.mxu0 %v5080
        %5082 = vmatprep.subr.mxu0 0.0
        %v5083 = vand.u32 %v455, 4294901760
        %v5084 = vsub.f32 %v455, %v5083
        %v5085 = vand.u32 %v5084, 4294901760
        %v5086 = vsub.f32 %v5084, %v5085
        %v5087 = vand.u32 %v5086, 4294901760
        %5088 = vmatpush1.msra.mxu0 %v5087
        %5089 = vmatprep.subr.mxu0 0.0
        %v5090 = vand.u32 %v454, 4294901760
        %v5091 = vsub.f32 %v454, %v5090
        %v5092 = vand.u32 %v5091, 4294901760
        %v5093 = vsub.f32 %v5091, %v5092
        %v5094 = vand.u32 %v5093, 4294901760
        %5095 = vmatpush1.msra.mxu0 %v5094
        %5096 = vmatprep.subr.mxu0 0.0
        %5097 = vmatpush2.msra.mxu0 0.0
        %5098 = vmatprep.subr.mxu0 0.0
        %5099 = vmatpush2.msra.mxu0 0.0
        %5100 = vmatprep.subr.mxu0 0.0
        %5101 = vmatpush2.msra.mxu0 0.0
        %5102 = vmatprep.subr.mxu0 0.0
        %5103 = vmatpush2.msra.mxu0 0.0
        %5104 = vmatprep.subr.mxu0 0.0
        %5105 = vmatpush2.msra.mxu0 0.0
        %5106 = vmatprep.subr.mxu0 0.0
        %5107 = vmatpush2.msra.mxu0 0.0
        %5108 = vmatprep.subr.mxu0 0.0
        %5109 = vmatpush2.msra.mxu0 0.0
        %5110 = vmatprep.subr.mxu0 0.0
        %5111 = vmatpush2.msra.mxu0 0.0
        %5112 = vmatprep.subr.mxu0 0.0
        %5113 = vmatpush2.msra.mxu0 0.0
        %5114 = vmatprep.subr.mxu0 0.0
        %5115 = vmatpush2.msra.mxu0 0.0
        %5116 = vmatprep.subr.mxu0 0.0
        %5117 = vmatpush2.msra.mxu0 0.0
        %5118 = vmatprep.subr.mxu0 0.0
        %5119 = vmatpush2.msra.mxu0 0.0
        %5120 = vmatprep.subr.mxu0 0.0
        %5121 = vmatpush2.msra.mxu0 0.0
        %5122 = vmatprep.subr.mxu0 0.0
        %5123 = vmatpush2.msra.mxu0 0.0
        %5124 = vmatprep.subr.mxu0 0.0
        %5125 = vmatpush2.msra.mxu0 0.0
        %5126 = vmatprep.subr.mxu0 0.0
        %5127 = vmatpush2.msra.mxu0 0.0
        %5128 = vmatprep.mubr.f32.mxu0 0.0
        %v5129 = vand.u32 %v4926, 4294901760
        %5130 = vmatmul.mubr.f32.gmra.mxu0 %v5129
        %v5131 = vpop.f32.mrf.mxu0
        %v5132 = vadd.f32 %v5011, %v5131
        %v5133 = vpop.f32.mrf.mxu0
        %5134 = vmatprep.mubr.f32.mxu0 0.0
        %v5135 = vand.u32 %v4929, 4294901760
        %5136 = vmatmul.mubr.f32.gmra.mxu0 %v5135
        %v5137 = vpop.f32.mrf.mxu0
        %v5138 = vadd.f32 %v5021, %v5137
        %v5139 = vpop.f32.mrf.mxu0
        %5140 = vdwg.mxu0
        %5141 = vmatprep.subr.mxu0 0.0
        %5142 = vmatpush1.msra.mxu0 0.0
        %5143 = vmatprep.subr.mxu0 0.0
        %5144 = vmatpush1.msra.mxu0 0.0
        %5145 = vmatprep.subr.mxu0 0.0
        %5146 = vmatpush1.msra.mxu0 0.0
        %5147 = vmatprep.subr.mxu0 0.0
        %5148 = vmatpush1.msra.mxu0 0.0
        %5149 = vmatprep.subr.mxu0 0.0
        %5150 = vmatpush1.msra.mxu0 0.0
        %5151 = vmatprep.subr.mxu0 0.0
        %5152 = vmatpush1.msra.mxu0 0.0
        %5153 = vmatprep.subr.mxu0 0.0
        %5154 = vmatpush1.msra.mxu0 0.0
        %5155 = vmatprep.subr.mxu0 0.0
        %5156 = vmatpush1.msra.mxu0 0.0
        %5157 = vmatprep.subr.mxu0 0.0
        %v5158 = vand.u32 %v461, 4294901760
        %v5159 = vsub.f32 %v461, %v5158
        %5160 = vmatpush1.msra.mxu0 %v5159
        %5161 = vmatprep.subr.mxu0 0.0
        %v5162 = vand.u32 %v460, 4294901760
        %v5163 = vsub.f32 %v460, %v5162
        %5164 = vmatpush1.msra.mxu0 %v5163
        %5165 = vmatprep.subr.mxu0 0.0
        %v5166 = vand.u32 %v459, 4294901760
        %v5167 = vsub.f32 %v459, %v5166
        %5168 = vmatpush1.msra.mxu0 %v5167
        %5169 = vmatprep.subr.mxu0 0.0
        %v5170 = vand.u32 %v458, 4294901760
        %v5171 = vsub.f32 %v458, %v5170
        %5172 = vmatpush1.msra.mxu0 %v5171
        %5173 = vmatprep.subr.mxu0 0.0
        %v5174 = vand.u32 %v457, 4294901760
        %v5175 = vsub.f32 %v457, %v5174
        %5176 = vmatpush1.msra.mxu0 %v5175
        %5177 = vmatprep.subr.mxu0 0.0
        %v5178 = vand.u32 %v456, 4294901760
        %v5179 = vsub.f32 %v456, %v5178
        %5180 = vmatpush1.msra.mxu0 %v5179
        %5181 = vmatprep.subr.mxu0 0.0
        %v5182 = vand.u32 %v455, 4294901760
        %v5183 = vsub.f32 %v455, %v5182
        %5184 = vmatpush1.msra.mxu0 %v5183
        %5185 = vmatprep.subr.mxu0 0.0
        %v5186 = vand.u32 %v454, 4294901760
        %v5187 = vsub.f32 %v454, %v5186
        %5188 = vmatpush1.msra.mxu0 %v5187
        %5189 = vmatprep.subr.mxu0 0.0
        %5190 = vmatpush2.msra.mxu0 0.0
        %5191 = vmatprep.subr.mxu0 0.0
        %5192 = vmatpush2.msra.mxu0 0.0
        %5193 = vmatprep.subr.mxu0 0.0
        %5194 = vmatpush2.msra.mxu0 0.0
        %5195 = vmatprep.subr.mxu0 0.0
        %5196 = vmatpush2.msra.mxu0 0.0
        %5197 = vmatprep.subr.mxu0 0.0
        %5198 = vmatpush2.msra.mxu0 0.0
        %5199 = vmatprep.subr.mxu0 0.0
        %5200 = vmatpush2.msra.mxu0 0.0
        %5201 = vmatprep.subr.mxu0 0.0
        %5202 = vmatpush2.msra.mxu0 0.0
        %5203 = vmatprep.subr.mxu0 0.0
        %5204 = vmatpush2.msra.mxu0 0.0
        %5205 = vmatprep.subr.mxu0 0.0
        %5206 = vmatpush2.msra.mxu0 0.0
        %5207 = vmatprep.subr.mxu0 0.0
        %5208 = vmatpush2.msra.mxu0 0.0
        %5209 = vmatprep.subr.mxu0 0.0
        %5210 = vmatpush2.msra.mxu0 0.0
        %5211 = vmatprep.subr.mxu0 0.0
        %5212 = vmatpush2.msra.mxu0 0.0
        %5213 = vmatprep.subr.mxu0 0.0
        %5214 = vmatpush2.msra.mxu0 0.0
        %5215 = vmatprep.subr.mxu0 0.0
        %5216 = vmatpush2.msra.mxu0 0.0
        %5217 = vmatprep.subr.mxu0 0.0
        %5218 = vmatpush2.msra.mxu0 0.0
        %5219 = vmatprep.subr.mxu0 0.0
        %5220 = vmatpush2.msra.mxu0 0.0
        %5221 = vmatprep.mubr.f32.mxu0 0.0
        %v5222 = vand.u32 %v4926, 4294901760
        %v5223 = vsub.f32 %v4926, %v5222
        %5224 = vmatmul.mubr.f32.gmra.mxu0 %v5223
        %v5225 = vpop.f32.mrf.mxu0
        %v5226 = vadd.f32 %v5132, %v5225
        %v5227 = vpop.f32.mrf.mxu0
        %5228 = vmatprep.mubr.f32.mxu0 0.0
        %v5229 = vand.u32 %v4929, 4294901760
        %v5230 = vsub.f32 %v4929, %v5229
        %5231 = vmatmul.mubr.f32.gmra.mxu0 %v5230
        %v5232 = vpop.f32.mrf.mxu0
        %v5233 = vadd.f32 %v5138, %v5232
        %v5234 = vpop.f32.mrf.mxu0
        %5235 = vdwg.mxu0
        %5236 = vmatprep.subr.mxu0 0.0
        %5237 = vmatpush1.msra.mxu0 0.0
        %5238 = vmatprep.subr.mxu0 0.0
        %5239 = vmatpush1.msra.mxu0 0.0
        %5240 = vmatprep.subr.mxu0 0.0
        %5241 = vmatpush1.msra.mxu0 0.0
        %5242 = vmatprep.subr.mxu0 0.0
        %5243 = vmatpush1.msra.mxu0 0.0
        %5244 = vmatprep.subr.mxu0 0.0
        %5245 = vmatpush1.msra.mxu0 0.0
        %5246 = vmatprep.subr.mxu0 0.0
        %5247 = vmatpush1.msra.mxu0 0.0
        %5248 = vmatprep.subr.mxu0 0.0
        %5249 = vmatpush1.msra.mxu0 0.0
        %5250 = vmatprep.subr.mxu0 0.0
        %5251 = vmatpush1.msra.mxu0 0.0
        %5252 = vmatprep.subr.mxu0 0.0
        %v5253 = vand.u32 %v461, 4294901760
        %5254 = vmatpush1.msra.mxu0 %v5253
        %5255 = vmatprep.subr.mxu0 0.0
        %v5256 = vand.u32 %v460, 4294901760
        %5257 = vmatpush1.msra.mxu0 %v5256
        %5258 = vmatprep.subr.mxu0 0.0
        %v5259 = vand.u32 %v459, 4294901760
        %5260 = vmatpush1.msra.mxu0 %v5259
        %5261 = vmatprep.subr.mxu0 0.0
        %v5262 = vand.u32 %v458, 4294901760
        %5263 = vmatpush1.msra.mxu0 %v5262
        %5264 = vmatprep.subr.mxu0 0.0
        %v5265 = vand.u32 %v457, 4294901760
        %5266 = vmatpush1.msra.mxu0 %v5265
        %5267 = vmatprep.subr.mxu0 0.0
        %v5268 = vand.u32 %v456, 4294901760
        %5269 = vmatpush1.msra.mxu0 %v5268
        %5270 = vmatprep.subr.mxu0 0.0
        %v5271 = vand.u32 %v455, 4294901760
        %5272 = vmatpush1.msra.mxu0 %v5271
        %5273 = vmatprep.subr.mxu0 0.0
        %v5274 = vand.u32 %v454, 4294901760
        %5275 = vmatpush1.msra.mxu0 %v5274
        %5276 = vmatprep.subr.mxu0 0.0
        %5277 = vmatpush2.msra.mxu0 0.0
        %5278 = vmatprep.subr.mxu0 0.0
        %5279 = vmatpush2.msra.mxu0 0.0
        %5280 = vmatprep.subr.mxu0 0.0
        %5281 = vmatpush2.msra.mxu0 0.0
        %5282 = vmatprep.subr.mxu0 0.0
        %5283 = vmatpush2.msra.mxu0 0.0
        %5284 = vmatprep.subr.mxu0 0.0
        %5285 = vmatpush2.msra.mxu0 0.0
        %5286 = vmatprep.subr.mxu0 0.0
        %5287 = vmatpush2.msra.mxu0 0.0
        %5288 = vmatprep.subr.mxu0 0.0
        %5289 = vmatpush2.msra.mxu0 0.0
        %5290 = vmatprep.subr.mxu0 0.0
        %5291 = vmatpush2.msra.mxu0 0.0
        %5292 = vmatprep.subr.mxu0 0.0
        %5293 = vmatpush2.msra.mxu0 0.0
        %5294 = vmatprep.subr.mxu0 0.0
        %5295 = vmatpush2.msra.mxu0 0.0
        %5296 = vmatprep.subr.mxu0 0.0
        %5297 = vmatpush2.msra.mxu0 0.0
        %5298 = vmatprep.subr.mxu0 0.0
        %5299 = vmatpush2.msra.mxu0 0.0
        %5300 = vmatprep.subr.mxu0 0.0
        %5301 = vmatpush2.msra.mxu0 0.0
        %5302 = vmatprep.subr.mxu0 0.0
        %5303 = vmatpush2.msra.mxu0 0.0
        %5304 = vmatprep.subr.mxu0 0.0
        %5305 = vmatpush2.msra.mxu0 0.0
        %5306 = vmatprep.subr.mxu0 0.0
        %5307 = vmatpush2.msra.mxu0 0.0
        %5308 = vmatprep.mubr.f32.mxu0 0.0
        %v5309 = vand.u32 %v4926, 4294901760
        %v5310 = vsub.f32 %v4926, %v5309
        %v5311 = vand.u32 %v5310, 4294901760
        %5312 = vmatmul.mubr.f32.gmra.mxu0 %v5311
        %v5313 = vpop.f32.mrf.mxu0
        %v5314 = vadd.f32 %v5226, %v5313
        %v5315 = vpop.f32.mrf.mxu0
        %5316 = vmatprep.mubr.f32.mxu0 0.0
        %v5317 = vand.u32 %v4929, 4294901760
        %v5318 = vsub.f32 %v4929, %v5317
        %v5319 = vand.u32 %v5318, 4294901760
        %5320 = vmatmul.mubr.f32.gmra.mxu0 %v5319
        %v5321 = vpop.f32.mrf.mxu0
        %v5322 = vadd.f32 %v5233, %v5321
        %v5323 = vpop.f32.mrf.mxu0
        %5324 = vdwg.mxu0
        %5325 = vmatprep.subr.mxu0 0.0
        %5326 = vmatpush1.msra.mxu0 0.0
        %5327 = vmatprep.subr.mxu0 0.0
        %5328 = vmatpush1.msra.mxu0 0.0
        %5329 = vmatprep.subr.mxu0 0.0
        %5330 = vmatpush1.msra.mxu0 0.0
        %5331 = vmatprep.subr.mxu0 0.0
        %5332 = vmatpush1.msra.mxu0 0.0
        %5333 = vmatprep.subr.mxu0 0.0
        %5334 = vmatpush1.msra.mxu0 0.0
        %5335 = vmatprep.subr.mxu0 0.0
        %5336 = vmatpush1.msra.mxu0 0.0
        %5337 = vmatprep.subr.mxu0 0.0
        %5338 = vmatpush1.msra.mxu0 0.0
        %5339 = vmatprep.subr.mxu0 0.0
        %5340 = vmatpush1.msra.mxu0 0.0
        %5341 = vmatprep.subr.mxu0 0.0
        %v5342 = vand.u32 %v461, 4294901760
        %v5343 = vsub.f32 %v461, %v5342
        %v5344 = vand.u32 %v5343, 4294901760
        %5345 = vmatpush1.msra.mxu0 %v5344
        %5346 = vmatprep.subr.mxu0 0.0
        %v5347 = vand.u32 %v460, 4294901760
        %v5348 = vsub.f32 %v460, %v5347
        %v5349 = vand.u32 %v5348, 4294901760
        %5350 = vmatpush1.msra.mxu0 %v5349
        %5351 = vmatprep.subr.mxu0 0.0
        %v5352 = vand.u32 %v459, 4294901760
        %v5353 = vsub.f32 %v459, %v5352
        %v5354 = vand.u32 %v5353, 4294901760
        %5355 = vmatpush1.msra.mxu0 %v5354
        %5356 = vmatprep.subr.mxu0 0.0
        %v5357 = vand.u32 %v458, 4294901760
        %v5358 = vsub.f32 %v458, %v5357
        %v5359 = vand.u32 %v5358, 4294901760
        %5360 = vmatpush1.msra.mxu0 %v5359
        %5361 = vmatprep.subr.mxu0 0.0
        %v5362 = vand.u32 %v457, 4294901760
        %v5363 = vsub.f32 %v457, %v5362
        %v5364 = vand.u32 %v5363, 4294901760
        %5365 = vmatpush1.msra.mxu0 %v5364
        %5366 = vmatprep.subr.mxu0 0.0
        %v5367 = vand.u32 %v456, 4294901760
        %v5368 = vsub.f32 %v456, %v5367
        %v5369 = vand.u32 %v5368, 4294901760
        %5370 = vmatpush1.msra.mxu0 %v5369
        %5371 = vmatprep.subr.mxu0 0.0
        %v5372 = vand.u32 %v455, 4294901760
        %v5373 = vsub.f32 %v455, %v5372
        %v5374 = vand.u32 %v5373, 4294901760
        %5375 = vmatpush1.msra.mxu0 %v5374
        %5376 = vmatprep.subr.mxu0 0.0
        %v5377 = vand.u32 %v454, 4294901760
        %v5378 = vsub.f32 %v454, %v5377
        %v5379 = vand.u32 %v5378, 4294901760
        %5380 = vmatpush1.msra.mxu0 %v5379
        %5381 = vmatprep.subr.mxu0 0.0
        %5382 = vmatpush2.msra.mxu0 0.0
        %5383 = vmatprep.subr.mxu0 0.0
        %5384 = vmatpush2.msra.mxu0 0.0
        %5385 = vmatprep.subr.mxu0 0.0
        %5386 = vmatpush2.msra.mxu0 0.0
        %5387 = vmatprep.subr.mxu0 0.0
        %5388 = vmatpush2.msra.mxu0 0.0
        %5389 = vmatprep.subr.mxu0 0.0
        %5390 = vmatpush2.msra.mxu0 0.0
        %5391 = vmatprep.subr.mxu0 0.0
        %5392 = vmatpush2.msra.mxu0 0.0
        %5393 = vmatprep.subr.mxu0 0.0
        %5394 = vmatpush2.msra.mxu0 0.0
        %5395 = vmatprep.subr.mxu0 0.0
        %5396 = vmatpush2.msra.mxu0 0.0
        %5397 = vmatprep.subr.mxu0 0.0
        %5398 = vmatpush2.msra.mxu0 0.0
        %5399 = vmatprep.subr.mxu0 0.0
        %5400 = vmatpush2.msra.mxu0 0.0
        %5401 = vmatprep.subr.mxu0 0.0
        %5402 = vmatpush2.msra.mxu0 0.0
        %5403 = vmatprep.subr.mxu0 0.0
        %5404 = vmatpush2.msra.mxu0 0.0
        %5405 = vmatprep.subr.mxu0 0.0
        %5406 = vmatpush2.msra.mxu0 0.0
        %5407 = vmatprep.subr.mxu0 0.0
        %5408 = vmatpush2.msra.mxu0 0.0
        %5409 = vmatprep.subr.mxu0 0.0
        %5410 = vmatpush2.msra.mxu0 0.0
        %5411 = vmatprep.subr.mxu0 0.0
        %5412 = vmatpush2.msra.mxu0 0.0
        %5413 = vmatprep.mubr.f32.mxu0 0.0
        %v5414 = vand.u32 %v4926, 4294901760
        %5415 = vmatmul.mubr.f32.gmra.mxu0 %v5414
        %v5416 = vpop.f32.mrf.mxu0
        %v5417 = vadd.f32 %v5314, %v5416
        %v5418 = vpop.f32.mrf.mxu0
        %5419 = vmatprep.mubr.f32.mxu0 0.0
        %v5420 = vand.u32 %v4929, 4294901760
        %5421 = vmatmul.mubr.f32.gmra.mxu0 %v5420
        %v5422 = vpop.f32.mrf.mxu0
        %v5423 = vadd.f32 %v5322, %v5422
        %v5424 = vpop.f32.mrf.mxu0
        %5425 = vdwg.mxu0
        %5426 = vmatprep.subr.mxu0 0.0
        %5427 = vmatpush1.msra.mxu0 0.0
        %5428 = vmatprep.subr.mxu0 0.0
        %5429 = vmatpush1.msra.mxu0 0.0
        %5430 = vmatprep.subr.mxu0 0.0
        %5431 = vmatpush1.msra.mxu0 0.0
        %5432 = vmatprep.subr.mxu0 0.0
        %5433 = vmatpush1.msra.mxu0 0.0
        %5434 = vmatprep.subr.mxu0 0.0
        %5435 = vmatpush1.msra.mxu0 0.0
        %5436 = vmatprep.subr.mxu0 0.0
        %5437 = vmatpush1.msra.mxu0 0.0
        %5438 = vmatprep.subr.mxu0 0.0
        %5439 = vmatpush1.msra.mxu0 0.0
        %5440 = vmatprep.subr.mxu0 0.0
        %5441 = vmatpush1.msra.mxu0 0.0
        %5442 = vmatprep.subr.mxu0 0.0
        %v5443 = vand.u32 %v461, 4294901760
        %5444 = vmatpush1.msra.mxu0 %v5443
        %5445 = vmatprep.subr.mxu0 0.0
        %v5446 = vand.u32 %v460, 4294901760
        %5447 = vmatpush1.msra.mxu0 %v5446
        %5448 = vmatprep.subr.mxu0 0.0
        %v5449 = vand.u32 %v459, 4294901760
        %5450 = vmatpush1.msra.mxu0 %v5449
        %5451 = vmatprep.subr.mxu0 0.0
        %v5452 = vand.u32 %v458, 4294901760
        %5453 = vmatpush1.msra.mxu0 %v5452
        %5454 = vmatprep.subr.mxu0 0.0
        %v5455 = vand.u32 %v457, 4294901760
        %5456 = vmatpush1.msra.mxu0 %v5455
        %5457 = vmatprep.subr.mxu0 0.0
        %v5458 = vand.u32 %v456, 4294901760
        %5459 = vmatpush1.msra.mxu0 %v5458
        %5460 = vmatprep.subr.mxu0 0.0
        %v5461 = vand.u32 %v455, 4294901760
        %5462 = vmatpush1.msra.mxu0 %v5461
        %5463 = vmatprep.subr.mxu0 0.0
        %v5464 = vand.u32 %v454, 4294901760
        %5465 = vmatpush1.msra.mxu0 %v5464
        %5466 = vmatprep.subr.mxu0 0.0
        %5467 = vmatpush2.msra.mxu0 0.0
        %5468 = vmatprep.subr.mxu0 0.0
        %5469 = vmatpush2.msra.mxu0 0.0
        %5470 = vmatprep.subr.mxu0 0.0
        %5471 = vmatpush2.msra.mxu0 0.0
        %5472 = vmatprep.subr.mxu0 0.0
        %5473 = vmatpush2.msra.mxu0 0.0
        %5474 = vmatprep.subr.mxu0 0.0
        %5475 = vmatpush2.msra.mxu0 0.0
        %5476 = vmatprep.subr.mxu0 0.0
        %5477 = vmatpush2.msra.mxu0 0.0
        %5478 = vmatprep.subr.mxu0 0.0
        %5479 = vmatpush2.msra.mxu0 0.0
        %5480 = vmatprep.subr.mxu0 0.0
        %5481 = vmatpush2.msra.mxu0 0.0
        %5482 = vmatprep.subr.mxu0 0.0
        %5483 = vmatpush2.msra.mxu0 0.0
        %5484 = vmatprep.subr.mxu0 0.0
        %5485 = vmatpush2.msra.mxu0 0.0
        %5486 = vmatprep.subr.mxu0 0.0
        %5487 = vmatpush2.msra.mxu0 0.0
        %5488 = vmatprep.subr.mxu0 0.0
        %5489 = vmatpush2.msra.mxu0 0.0
        %5490 = vmatprep.subr.mxu0 0.0
        %5491 = vmatpush2.msra.mxu0 0.0
        %5492 = vmatprep.subr.mxu0 0.0
        %5493 = vmatpush2.msra.mxu0 0.0
        %5494 = vmatprep.subr.mxu0 0.0
        %5495 = vmatpush2.msra.mxu0 0.0
        %5496 = vmatprep.subr.mxu0 0.0
        %5497 = vmatpush2.msra.mxu0 0.0
        %5498 = vmatprep.mubr.f32.mxu0 0.0
        %v5499 = vand.u32 %v4926, 4294901760
        %5500 = vmatmul.mubr.f32.gmra.mxu0 %v5499
        %v5501 = vpop.f32.mrf.mxu0
        %v5502 = vadd.f32 %v5417, %v5501
        %v5503 = vpop.f32.mrf.mxu0
        %5504 = vmatprep.mubr.f32.mxu0 0.0
        %v5505 = vand.u32 %v4929, 4294901760
        %5506 = vmatmul.mubr.f32.gmra.mxu0 %v5505
        %v5507 = vpop.f32.mrf.mxu0
        %v5508 = vadd.f32 %v5423, %v5507
        %v5509 = vpop.f32.mrf.mxu0
        %5510 = vdwg.mxu0
        %s5511 = scalar_lea.vmem %s300, 32 [#allocation9]
        %5512 = vst [vmem:[%s5511] sm:$0xff] %v4330
        %5513 = vst [vmem:[%s5511 + $0x8] sm:$0xff] %v5502
        %5514 = vst [vmem:[%s5511 + $0x10] sm:$0xff] %v4336
        %5515 = vst [vmem:[%s5511 + $0x18] sm:$0xff] %v5508
        %s5516 = sld [smem:[#allocation8 + $0x16]]
        %v5517 = vstv %s5516
        %v5518 = vmul.f32 %v312, %v5517
        %v5519 = vmul.f32 %v313, %v5517
        %v5520 = vadd.f32 %v5518, 0.0
        %v5521 = vadd.f32 %v5519, 0.0
        %s5522 = sld [smem:[#allocation8 + $0x15]]
        %v5523 = vstv %s5522
        %v5524 = vmul.f32 %v352, %v5523
        %v5525 = vmul.f32 %v353, %v5523
        %v5526 = vadd.f32 %v5524, 0.0
        %v5527 = vadd.f32 %v5525, 0.0
        %s5528 = sld [smem:[#allocation8 + $0x17]]
        %v5529 = vstv %s5528
        %v5530 = vmul.f32 %v312, %v5529
        %v5531 = vmul.f32 %v313, %v5529
        %v5532 = vadd.f32 %v5526, %v5530
        %v5533 = vadd.f32 %v5527, %v5531
        %s5534 = sld [smem:[#allocation8 + $0x13]]
        %v5535 = vstv %s5534
        %v5536 = vmul.f32 %v338, %v5535
        %v5537 = vmul.f32 %v344, %v5535
        %v5538 = vadd.f32 %v5536, 0.0
        %v5539 = vadd.f32 %v5537, 0.0
        %s5540 = sld [smem:[#allocation8 + $0x19]]
        %v5541 = vstv %s5540
        %v5542 = vmul.f32 %v312, %v5541
        %v5543 = vmul.f32 %v313, %v5541
        %v5544 = vadd.f32 %v5538, %v5542
        %v5545 = vadd.f32 %v5539, %v5543
        %s5546 = sld [smem:[#allocation8 + $0x12]]
        %v5547 = vstv %s5546
        %v5548 = vmul.f32 %v361, %v5547
        %v5549 = vmul.f32 %v362, %v5547
        %v5550 = vadd.f32 %v5548, 0.0
        %v5551 = vadd.f32 %v5549, 0.0
        %s5552 = sld [smem:[#allocation8 + $0x14]]
        %v5553 = vstv %s5552
        %v5554 = vmul.f32 %v338, %v5553
        %v5555 = vmul.f32 %v344, %v5553
        %v5556 = vadd.f32 %v5550, %v5554
        %v5557 = vadd.f32 %v5551, %v5555
        %s5558 = sld [smem:[#allocation8 + $0x18]]
        %v5559 = vstv %s5558
        %v5560 = vmul.f32 %v352, %v5559
        %v5561 = vmul.f32 %v353, %v5559
        %v5562 = vadd.f32 %v5556, %v5560
        %v5563 = vadd.f32 %v5557, %v5561
        %s5564 = sld [smem:[#allocation8 + $0x1a]]
        %v5565 = vstv %s5564
        %v5566 = vmul.f32 %v312, %v5565
        %v5567 = vmul.f32 %v313, %v5565
        %v5568 = vadd.f32 %v5562, %v5566
        %v5569 = vadd.f32 %v5563, %v5567
        %s5570 = sld [smem:[#allocation8 + $0x31]]
        %v5571 = vstv %s5570
        %v5572 = vmul.f32 %v329, %v5571
        %v5573 = vmul.f32 %v330, %v5571
        %v5574 = vadd.f32 %v5520, %v5572
        %v5575 = vadd.f32 %v5521, %v5573
        %s5576 = sld [smem:[#allocation8 + $0x30]]
        %v5577 = vstv %s5576
        %v5578 = vmul.f32 %v380, %v5577
        %v5579 = vmul.f32 %v381, %v5577
        %v5580 = vadd.f32 %v5532, %v5578
        %v5581 = vadd.f32 %v5533, %v5579
        %s5582 = sld [smem:[#allocation8 + $0x32]]
        %v5583 = vstv %s5582
        %v5584 = vmul.f32 %v329, %v5583
        %v5585 = vmul.f32 %v330, %v5583
        %v5586 = vadd.f32 %v5580, %v5584
        %v5587 = vadd.f32 %v5581, %v5585
        %s5588 = sld [smem:[#allocation8 + $0x2e]]
        %v5589 = vstv %s5588
        %v5590 = vmul.f32 %v367, %v5589
        %v5591 = vmul.f32 %v373, %v5589
        %v5592 = vadd.f32 %v5544, %v5590
        %v5593 = vadd.f32 %v5545, %v5591
        %s5594 = sld [smem:[#allocation8 + $0x34]]
        %v5595 = vstv %s5594
        %v5596 = vmul.f32 %v329, %v5595
        %v5597 = vmul.f32 %v330, %v5595
        %v5598 = vadd.f32 %v5592, %v5596
        %v5599 = vadd.f32 %v5593, %v5597
        %s5600 = sld [smem:[#allocation8 + $0x2d]]
        %v5601 = vstv %s5600
        %v5602 = vmul.f32 %v389, %v5601
        %v5603 = vmul.f32 %v390, %v5601
        %v5604 = vadd.f32 %v5568, %v5602
        %v5605 = vadd.f32 %v5569, %v5603
        %s5606 = sld [smem:[#allocation8 + $0x2f]]
        %v5607 = vstv %s5606
        %v5608 = vmul.f32 %v367, %v5607
        %v5609 = vmul.f32 %v373, %v5607
        %v5610 = vadd.f32 %v5604, %v5608
        %v5611 = vadd.f32 %v5605, %v5609
        %s5612 = sld [smem:[#allocation8 + $0x33]]
        %v5613 = vstv %s5612
        %v5614 = vmul.f32 %v380, %v5613
        %v5615 = vmul.f32 %v381, %v5613
        %v5616 = vadd.f32 %v5610, %v5614
        %v5617 = vadd.f32 %v5611, %v5615
        %s5618 = sld [smem:[#allocation8 + $0x35]]
        %v5619 = vstv %s5618
        %v5620 = vmul.f32 %v329, %v5619
        %v5621 = vmul.f32 %v330, %v5619
        %v5622 = vadd.f32 %v5616, %v5620
        %v5623 = vadd.f32 %v5617, %v5621
        %s5624 = sld [smem:[#allocation8 + $0x4c]]
        %v5625 = vstv %s5624
        %v5626 = vmul.f32 %v310, %v5625
        %v5627 = vmul.f32 %v311, %v5625
        %v5628 = vadd.f32 %v5574, %v5626
        %v5629 = vadd.f32 %v5575, %v5627
        %s5630 = sld [smem:[#allocation8 + $0x4b]]
        %v5631 = vstv %s5630
        %v5632 = vmul.f32 %v408, %v5631
        %v5633 = vmul.f32 %v409, %v5631
        %v5634 = vadd.f32 %v5586, %v5632
        %v5635 = vadd.f32 %v5587, %v5633
        %s5636 = sld [smem:[#allocation8 + $0x4d]]
        %v5637 = vstv %s5636
        %v5638 = vmul.f32 %v310, %v5637
        %v5639 = vmul.f32 %v311, %v5637
        %v5640 = vadd.f32 %v5634, %v5638
        %v5641 = vadd.f32 %v5635, %v5639
        %s5642 = sld [smem:[#allocation8 + $0x49]]
        %v5643 = vstv %s5642
        %v5644 = vmul.f32 %v395, %v5643
        %v5645 = vmul.f32 %v401, %v5643
        %v5646 = vadd.f32 %v5598, %v5644
        %v5647 = vadd.f32 %v5599, %v5645
        %s5648 = sld [smem:[#allocation8 + $0x4f]]
        %v5649 = vstv %s5648
        %v5650 = vmul.f32 %v310, %v5649
        %v5651 = vmul.f32 %v311, %v5649
        %v5652 = vadd.f32 %v5646, %v5650
        %v5653 = vadd.f32 %v5647, %v5651
        %s5654 = sld [smem:[#allocation8 + $0x48]]
        %v5655 = vstv %s5654
        %v5656 = vmul.f32 %v417, %v5655
        %v5657 = vmul.f32 %v418, %v5655
        %v5658 = vadd.f32 %v5622, %v5656
        %v5659 = vadd.f32 %v5623, %v5657
        %s5660 = sld [smem:[#allocation8 + $0x4a]]
        %v5661 = vstv %s5660
        %v5662 = vmul.f32 %v395, %v5661
        %v5663 = vmul.f32 %v401, %v5661
        %v5664 = vadd.f32 %v5658, %v5662
        %v5665 = vadd.f32 %v5659, %v5663
        %s5666 = sld [smem:[#allocation8 + $0x4e]]
        %v5667 = vstv %s5666
        %v5668 = vmul.f32 %v408, %v5667
        %v5669 = vmul.f32 %v409, %v5667
        %v5670 = vadd.f32 %v5664, %v5668
        %v5671 = vadd.f32 %v5665, %v5669
        %s5672 = sld [smem:[#allocation8 + $0x50]]
        %v5673 = vstv %s5672
        %v5674 = vmul.f32 %v310, %v5673
        %v5675 = vmul.f32 %v311, %v5673
        %v5676 = vadd.f32 %v5670, %v5674
        %v5677 = vadd.f32 %v5671, %v5675
        %v5679 = vsel %vm656, %v5640, 0
        %v5682 = vsel %vm656, %v5641, 0
        %5684 = vmatprep.subr.mxu0 0.0
        %5685 = vmatpush1.msra.mxu0 0.0
        %5686 = vmatprep.subr.mxu0 0.0
        %5687 = vmatpush1.msra.mxu0 0.0
        %5688 = vmatprep.subr.mxu0 0.0
        %5689 = vmatpush1.msra.mxu0 0.0
        %5690 = vmatprep.subr.mxu0 0.0
        %5691 = vmatpush1.msra.mxu0 0.0
        %5692 = vmatprep.subr.mxu0 0.0
        %5693 = vmatpush1.msra.mxu0 0.0
        %5694 = vmatprep.subr.mxu0 0.0
        %5695 = vmatpush1.msra.mxu0 0.0
        %5696 = vmatprep.subr.mxu0 0.0
        %5697 = vmatpush1.msra.mxu0 0.0
        %5698 = vmatprep.subr.mxu0 0.0
        %5699 = vmatpush1.msra.mxu0 0.0
        %5700 = vmatprep.subr.mxu0 0.0
        %v5701 = vand.u32 %v493, 4294901760
        %5702 = vmatpush1.msra.mxu0 %v5701
        %5703 = vmatprep.subr.mxu0 0.0
        %v5704 = vand.u32 %v492, 4294901760
        %5705 = vmatpush1.msra.mxu0 %v5704
        %5706 = vmatprep.subr.mxu0 0.0
        %v5707 = vand.u32 %v491, 4294901760
        %5708 = vmatpush1.msra.mxu0 %v5707
        %5709 = vmatprep.subr.mxu0 0.0
        %v5710 = vand.u32 %v490, 4294901760
        %5711 = vmatpush1.msra.mxu0 %v5710
        %5712 = vmatprep.subr.mxu0 0.0
        %v5713 = vand.u32 %v489, 4294901760
        %5714 = vmatpush1.msra.mxu0 %v5713
        %5715 = vmatprep.subr.mxu0 0.0
        %v5716 = vand.u32 %v488, 4294901760
        %5717 = vmatpush1.msra.mxu0 %v5716
        %5718 = vmatprep.subr.mxu0 0.0
        %v5719 = vand.u32 %v487, 4294901760
        %5720 = vmatpush1.msra.mxu0 %v5719
        %5721 = vmatprep.subr.mxu0 0.0
        %v5722 = vand.u32 %v486, 4294901760
        %5723 = vmatpush1.msra.mxu0 %v5722
        %5724 = vmatprep.subr.mxu0 0.0
        %5725 = vmatpush2.msra.mxu0 0.0
        %5726 = vmatprep.subr.mxu0 0.0
        %5727 = vmatpush2.msra.mxu0 0.0
        %5728 = vmatprep.subr.mxu0 0.0
        %5729 = vmatpush2.msra.mxu0 0.0
        %5730 = vmatprep.subr.mxu0 0.0
        %5731 = vmatpush2.msra.mxu0 0.0
        %5732 = vmatprep.subr.mxu0 0.0
        %5733 = vmatpush2.msra.mxu0 0.0
        %5734 = vmatprep.subr.mxu0 0.0
        %5735 = vmatpush2.msra.mxu0 0.0
        %5736 = vmatprep.subr.mxu0 0.0
        %5737 = vmatpush2.msra.mxu0 0.0
        %5738 = vmatprep.subr.mxu0 0.0
        %5739 = vmatpush2.msra.mxu0 0.0
        %5740 = vmatprep.subr.mxu0 0.0
        %5741 = vmatpush2.msra.mxu0 0.0
        %5742 = vmatprep.subr.mxu0 0.0
        %5743 = vmatpush2.msra.mxu0 0.0
        %5744 = vmatprep.subr.mxu0 0.0
        %5745 = vmatpush2.msra.mxu0 0.0
        %5746 = vmatprep.subr.mxu0 0.0
        %5747 = vmatpush2.msra.mxu0 0.0
        %5748 = vmatprep.subr.mxu0 0.0
        %5749 = vmatpush2.msra.mxu0 0.0
        %5750 = vmatprep.subr.mxu0 0.0
        %5751 = vmatpush2.msra.mxu0 0.0
        %5752 = vmatprep.subr.mxu0 0.0
        %5753 = vmatpush2.msra.mxu0 0.0
        %5754 = vmatprep.subr.mxu0 0.0
        %5755 = vmatpush2.msra.mxu0 0.0
        %5756 = vmatprep.mubr.f32.mxu0 0.0
        %v5757 = vand.u32 %v5679, 4294901760
        %v5758 = vsub.f32 %v5679, %v5757
        %v5759 = vand.u32 %v5758, 4294901760
        %v5760 = vsub.f32 %v5758, %v5759
        %v5761 = vand.u32 %v5760, 4294901760
        %5762 = vmatmul.mubr.f32.gmra.mxu0 %v5761
        %v5763 = vpop.f32.mrf.mxu0
        %v5764 = vadd.f32 0.0, %v5763
        %v5765 = vpop.f32.mrf.mxu0
        %5766 = vmatprep.mubr.f32.mxu0 0.0
        %v5767 = vand.u32 %v5682, 4294901760
        %v5768 = vsub.f32 %v5682, %v5767
        %v5769 = vand.u32 %v5768, 4294901760
        %v5770 = vsub.f32 %v5768, %v5769
        %v5771 = vand.u32 %v5770, 4294901760
        %5772 = vmatmul.mubr.f32.gmra.mxu0 %v5771
        %v5773 = vpop.f32.mrf.mxu0
        %v5774 = vadd.f32 0.0, %v5773
        %v5775 = vpop.f32.mrf.mxu0
        %5776 = vdwg.mxu0
        %5777 = vmatprep.subr.mxu0 0.0
        %5778 = vmatpush1.msra.mxu0 0.0
        %5779 = vmatprep.subr.mxu0 0.0
        %5780 = vmatpush1.msra.mxu0 0.0
        %5781 = vmatprep.subr.mxu0 0.0
        %5782 = vmatpush1.msra.mxu0 0.0
        %5783 = vmatprep.subr.mxu0 0.0
        %5784 = vmatpush1.msra.mxu0 0.0
        %5785 = vmatprep.subr.mxu0 0.0
        %5786 = vmatpush1.msra.mxu0 0.0
        %5787 = vmatprep.subr.mxu0 0.0
        %5788 = vmatpush1.msra.mxu0 0.0
        %5789 = vmatprep.subr.mxu0 0.0
        %5790 = vmatpush1.msra.mxu0 0.0
        %5791 = vmatprep.subr.mxu0 0.0
        %5792 = vmatpush1.msra.mxu0 0.0
        %5793 = vmatprep.subr.mxu0 0.0
        %v5794 = vand.u32 %v493, 4294901760
        %v5795 = vsub.f32 %v493, %v5794
        %v5796 = vand.u32 %v5795, 4294901760
        %v5797 = vsub.f32 %v5795, %v5796
        %v5798 = vand.u32 %v5797, 4294901760
        %5799 = vmatpush1.msra.mxu0 %v5798
        %5800 = vmatprep.subr.mxu0 0.0
        %v5801 = vand.u32 %v492, 4294901760
        %v5802 = vsub.f32 %v492, %v5801
        %v5803 = vand.u32 %v5802, 4294901760
        %v5804 = vsub.f32 %v5802, %v5803
        %v5805 = vand.u32 %v5804, 4294901760
        %5806 = vmatpush1.msra.mxu0 %v5805
        %5807 = vmatprep.subr.mxu0 0.0
        %v5808 = vand.u32 %v491, 4294901760
        %v5809 = vsub.f32 %v491, %v5808
        %v5810 = vand.u32 %v5809, 4294901760
        %v5811 = vsub.f32 %v5809, %v5810
        %v5812 = vand.u32 %v5811, 4294901760
        %5813 = vmatpush1.msra.mxu0 %v5812
        %5814 = vmatprep.subr.mxu0 0.0
        %v5815 = vand.u32 %v490, 4294901760
        %v5816 = vsub.f32 %v490, %v5815
        %v5817 = vand.u32 %v5816, 4294901760
        %v5818 = vsub.f32 %v5816, %v5817
        %v5819 = vand.u32 %v5818, 4294901760
        %5820 = vmatpush1.msra.mxu0 %v5819
        %5821 = vmatprep.subr.mxu0 0.0
        %v5822 = vand.u32 %v489, 4294901760
        %v5823 = vsub.f32 %v489, %v5822
        %v5824 = vand.u32 %v5823, 4294901760
        %v5825 = vsub.f32 %v5823, %v5824
        %v5826 = vand.u32 %v5825, 4294901760
        %5827 = vmatpush1.msra.mxu0 %v5826
        %5828 = vmatprep.subr.mxu0 0.0
        %v5829 = vand.u32 %v488, 4294901760
        %v5830 = vsub.f32 %v488, %v5829
        %v5831 = vand.u32 %v5830, 4294901760
        %v5832 = vsub.f32 %v5830, %v5831
        %v5833 = vand.u32 %v5832, 4294901760
        %5834 = vmatpush1.msra.mxu0 %v5833
        %5835 = vmatprep.subr.mxu0 0.0
        %v5836 = vand.u32 %v487, 4294901760
        %v5837 = vsub.f32 %v487, %v5836
        %v5838 = vand.u32 %v5837, 4294901760
        %v5839 = vsub.f32 %v5837, %v5838
        %v5840 = vand.u32 %v5839, 4294901760
        %5841 = vmatpush1.msra.mxu0 %v5840
        %5842 = vmatprep.subr.mxu0 0.0
        %v5843 = vand.u32 %v486, 4294901760
        %v5844 = vsub.f32 %v486, %v5843
        %v5845 = vand.u32 %v5844, 4294901760
        %v5846 = vsub.f32 %v5844, %v5845
        %v5847 = vand.u32 %v5846, 4294901760
        %5848 = vmatpush1.msra.mxu0 %v5847
        %5849 = vmatprep.subr.mxu0 0.0
        %5850 = vmatpush2.msra.mxu0 0.0
        %5851 = vmatprep.subr.mxu0 0.0
        %5852 = vmatpush2.msra.mxu0 0.0
        %5853 = vmatprep.subr.mxu0 0.0
        %5854 = vmatpush2.msra.mxu0 0.0
        %5855 = vmatprep.subr.mxu0 0.0
        %5856 = vmatpush2.msra.mxu0 0.0
        %5857 = vmatprep.subr.mxu0 0.0
        %5858 = vmatpush2.msra.mxu0 0.0
        %5859 = vmatprep.subr.mxu0 0.0
        %5860 = vmatpush2.msra.mxu0 0.0
        %5861 = vmatprep.subr.mxu0 0.0
        %5862 = vmatpush2.msra.mxu0 0.0
        %5863 = vmatprep.subr.mxu0 0.0
        %5864 = vmatpush2.msra.mxu0 0.0
        %5865 = vmatprep.subr.mxu0 0.0
        %5866 = vmatpush2.msra.mxu0 0.0
        %5867 = vmatprep.subr.mxu0 0.0
        %5868 = vmatpush2.msra.mxu0 0.0
        %5869 = vmatprep.subr.mxu0 0.0
        %5870 = vmatpush2.msra.mxu0 0.0
        %5871 = vmatprep.subr.mxu0 0.0
        %5872 = vmatpush2.msra.mxu0 0.0
        %5873 = vmatprep.subr.mxu0 0.0
        %5874 = vmatpush2.msra.mxu0 0.0
        %5875 = vmatprep.subr.mxu0 0.0
        %5876 = vmatpush2.msra.mxu0 0.0
        %5877 = vmatprep.subr.mxu0 0.0
        %5878 = vmatpush2.msra.mxu0 0.0
        %5879 = vmatprep.subr.mxu0 0.0
        %5880 = vmatpush2.msra.mxu0 0.0
        %5881 = vmatprep.mubr.f32.mxu0 0.0
        %v5882 = vand.u32 %v5679, 4294901760
        %5883 = vmatmul.mubr.f32.gmra.mxu0 %v5882
        %v5884 = vpop.f32.mrf.mxu0
        %v5885 = vadd.f32 %v5764, %v5884
        %v5886 = vpop.f32.mrf.mxu0
        %5887 = vmatprep.mubr.f32.mxu0 0.0
        %v5888 = vand.u32 %v5682, 4294901760
        %5889 = vmatmul.mubr.f32.gmra.mxu0 %v5888
        %v5890 = vpop.f32.mrf.mxu0
        %v5891 = vadd.f32 %v5774, %v5890
        %v5892 = vpop.f32.mrf.mxu0
        %5893 = vdwg.mxu0
        %5894 = vmatprep.subr.mxu0 0.0
        %5895 = vmatpush1.msra.mxu0 0.0
        %5896 = vmatprep.subr.mxu0 0.0
        %5897 = vmatpush1.msra.mxu0 0.0
        %5898 = vmatprep.subr.mxu0 0.0
        %5899 = vmatpush1.msra.mxu0 0.0
        %5900 = vmatprep.subr.mxu0 0.0
        %5901 = vmatpush1.msra.mxu0 0.0
        %5902 = vmatprep.subr.mxu0 0.0
        %5903 = vmatpush1.msra.mxu0 0.0
        %5904 = vmatprep.subr.mxu0 0.0
        %5905 = vmatpush1.msra.mxu0 0.0
        %5906 = vmatprep.subr.mxu0 0.0
        %5907 = vmatpush1.msra.mxu0 0.0
        %5908 = vmatprep.subr.mxu0 0.0
        %5909 = vmatpush1.msra.mxu0 0.0
        %5910 = vmatprep.subr.mxu0 0.0
        %v5911 = vand.u32 %v493, 4294901760
        %v5912 = vsub.f32 %v493, %v5911
        %5913 = vmatpush1.msra.mxu0 %v5912
        %5914 = vmatprep.subr.mxu0 0.0
        %v5915 = vand.u32 %v492, 4294901760
        %v5916 = vsub.f32 %v492, %v5915
        %5917 = vmatpush1.msra.mxu0 %v5916
        %5918 = vmatprep.subr.mxu0 0.0
        %v5919 = vand.u32 %v491, 4294901760
        %v5920 = vsub.f32 %v491, %v5919
        %5921 = vmatpush1.msra.mxu0 %v5920
        %5922 = vmatprep.subr.mxu0 0.0
        %v5923 = vand.u32 %v490, 4294901760
        %v5924 = vsub.f32 %v490, %v5923
        %5925 = vmatpush1.msra.mxu0 %v5924
        %5926 = vmatprep.subr.mxu0 0.0
        %v5927 = vand.u32 %v489, 4294901760
        %v5928 = vsub.f32 %v489, %v5927
        %5929 = vmatpush1.msra.mxu0 %v5928
        %5930 = vmatprep.subr.mxu0 0.0
        %v5931 = vand.u32 %v488, 4294901760
        %v5932 = vsub.f32 %v488, %v5931
        %5933 = vmatpush1.msra.mxu0 %v5932
        %5934 = vmatprep.subr.mxu0 0.0
        %v5935 = vand.u32 %v487, 4294901760
        %v5936 = vsub.f32 %v487, %v5935
        %5937 = vmatpush1.msra.mxu0 %v5936
        %5938 = vmatprep.subr.mxu0 0.0
        %v5939 = vand.u32 %v486, 4294901760
        %v5940 = vsub.f32 %v486, %v5939
        %5941 = vmatpush1.msra.mxu0 %v5940
        %5942 = vmatprep.subr.mxu0 0.0
        %5943 = vmatpush2.msra.mxu0 0.0
        %5944 = vmatprep.subr.mxu0 0.0
        %5945 = vmatpush2.msra.mxu0 0.0
        %5946 = vmatprep.subr.mxu0 0.0
        %5947 = vmatpush2.msra.mxu0 0.0
        %5948 = vmatprep.subr.mxu0 0.0
        %5949 = vmatpush2.msra.mxu0 0.0
        %5950 = vmatprep.subr.mxu0 0.0
        %5951 = vmatpush2.msra.mxu0 0.0
        %5952 = vmatprep.subr.mxu0 0.0
        %5953 = vmatpush2.msra.mxu0 0.0
        %5954 = vmatprep.subr.mxu0 0.0
        %5955 = vmatpush2.msra.mxu0 0.0
        %5956 = vmatprep.subr.mxu0 0.0
        %5957 = vmatpush2.msra.mxu0 0.0
        %5958 = vmatprep.subr.mxu0 0.0
        %5959 = vmatpush2.msra.mxu0 0.0
        %5960 = vmatprep.subr.mxu0 0.0
        %5961 = vmatpush2.msra.mxu0 0.0
        %5962 = vmatprep.subr.mxu0 0.0
        %5963 = vmatpush2.msra.mxu0 0.0
        %5964 = vmatprep.subr.mxu0 0.0
        %5965 = vmatpush2.msra.mxu0 0.0
        %5966 = vmatprep.subr.mxu0 0.0
        %5967 = vmatpush2.msra.mxu0 0.0
        %5968 = vmatprep.subr.mxu0 0.0
        %5969 = vmatpush2.msra.mxu0 0.0
        %5970 = vmatprep.subr.mxu0 0.0
        %5971 = vmatpush2.msra.mxu0 0.0
        %5972 = vmatprep.subr.mxu0 0.0
        %5973 = vmatpush2.msra.mxu0 0.0
        %5974 = vmatprep.mubr.f32.mxu0 0.0
        %v5975 = vand.u32 %v5679, 4294901760
        %v5976 = vsub.f32 %v5679, %v5975
        %5977 = vmatmul.mubr.f32.gmra.mxu0 %v5976
        %v5978 = vpop.f32.mrf.mxu0
        %v5979 = vadd.f32 %v5885, %v5978
        %v5980 = vpop.f32.mrf.mxu0
        %5981 = vmatprep.mubr.f32.mxu0 0.0
        %v5982 = vand.u32 %v5682, 4294901760
        %v5983 = vsub.f32 %v5682, %v5982
        %5984 = vmatmul.mubr.f32.gmra.mxu0 %v5983
        %v5985 = vpop.f32.mrf.mxu0
        %v5986 = vadd.f32 %v5891, %v5985
        %v5987 = vpop.f32.mrf.mxu0
        %5988 = vdwg.mxu0
        %5989 = vmatprep.subr.mxu0 0.0
        %5990 = vmatpush1.msra.mxu0 0.0
        %5991 = vmatprep.subr.mxu0 0.0
        %5992 = vmatpush1.msra.mxu0 0.0
        %5993 = vmatprep.subr.mxu0 0.0
        %5994 = vmatpush1.msra.mxu0 0.0
        %5995 = vmatprep.subr.mxu0 0.0
        %5996 = vmatpush1.msra.mxu0 0.0
        %5997 = vmatprep.subr.mxu0 0.0
        %5998 = vmatpush1.msra.mxu0 0.0
        %5999 = vmatprep.subr.mxu0 0.0
        %6000 = vmatpush1.msra.mxu0 0.0
        %6001 = vmatprep.subr.mxu0 0.0
        %6002 = vmatpush1.msra.mxu0 0.0
        %6003 = vmatprep.subr.mxu0 0.0
        %6004 = vmatpush1.msra.mxu0 0.0
        %6005 = vmatprep.subr.mxu0 0.0
        %v6006 = vand.u32 %v493, 4294901760
        %6007 = vmatpush1.msra.mxu0 %v6006
        %6008 = vmatprep.subr.mxu0 0.0
        %v6009 = vand.u32 %v492, 4294901760
        %6010 = vmatpush1.msra.mxu0 %v6009
        %6011 = vmatprep.subr.mxu0 0.0
        %v6012 = vand.u32 %v491, 4294901760
        %6013 = vmatpush1.msra.mxu0 %v6012
        %6014 = vmatprep.subr.mxu0 0.0
        %v6015 = vand.u32 %v490, 4294901760
        %6016 = vmatpush1.msra.mxu0 %v6015
        %6017 = vmatprep.subr.mxu0 0.0
        %v6018 = vand.u32 %v489, 4294901760
        %6019 = vmatpush1.msra.mxu0 %v6018
        %6020 = vmatprep.subr.mxu0 0.0
        %v6021 = vand.u32 %v488, 4294901760
        %6022 = vmatpush1.msra.mxu0 %v6021
        %6023 = vmatprep.subr.mxu0 0.0
        %v6024 = vand.u32 %v487, 4294901760
        %6025 = vmatpush1.msra.mxu0 %v6024
        %6026 = vmatprep.subr.mxu0 0.0
        %v6027 = vand.u32 %v486, 4294901760
        %6028 = vmatpush1.msra.mxu0 %v6027
        %6029 = vmatprep.subr.mxu0 0.0
        %6030 = vmatpush2.msra.mxu0 0.0
        %6031 = vmatprep.subr.mxu0 0.0
        %6032 = vmatpush2.msra.mxu0 0.0
        %6033 = vmatprep.subr.mxu0 0.0
        %6034 = vmatpush2.msra.mxu0 0.0
        %6035 = vmatprep.subr.mxu0 0.0
        %6036 = vmatpush2.msra.mxu0 0.0
        %6037 = vmatprep.subr.mxu0 0.0
        %6038 = vmatpush2.msra.mxu0 0.0
        %6039 = vmatprep.subr.mxu0 0.0
        %6040 = vmatpush2.msra.mxu0 0.0
        %6041 = vmatprep.subr.mxu0 0.0
        %6042 = vmatpush2.msra.mxu0 0.0
        %6043 = vmatprep.subr.mxu0 0.0
        %6044 = vmatpush2.msra.mxu0 0.0
        %6045 = vmatprep.subr.mxu0 0.0
        %6046 = vmatpush2.msra.mxu0 0.0
        %6047 = vmatprep.subr.mxu0 0.0
        %6048 = vmatpush2.msra.mxu0 0.0
        %6049 = vmatprep.subr.mxu0 0.0
        %6050 = vmatpush2.msra.mxu0 0.0
        %6051 = vmatprep.subr.mxu0 0.0
        %6052 = vmatpush2.msra.mxu0 0.0
        %6053 = vmatprep.subr.mxu0 0.0
        %6054 = vmatpush2.msra.mxu0 0.0
        %6055 = vmatprep.subr.mxu0 0.0
        %6056 = vmatpush2.msra.mxu0 0.0
        %6057 = vmatprep.subr.mxu0 0.0
        %6058 = vmatpush2.msra.mxu0 0.0
        %6059 = vmatprep.subr.mxu0 0.0
        %6060 = vmatpush2.msra.mxu0 0.0
        %6061 = vmatprep.mubr.f32.mxu0 0.0
        %v6062 = vand.u32 %v5679, 4294901760
        %v6063 = vsub.f32 %v5679, %v6062
        %v6064 = vand.u32 %v6063, 4294901760
        %6065 = vmatmul.mubr.f32.gmra.mxu0 %v6064
        %v6066 = vpop.f32.mrf.mxu0
        %v6067 = vadd.f32 %v5979, %v6066
        %v6068 = vpop.f32.mrf.mxu0
        %6069 = vmatprep.mubr.f32.mxu0 0.0
        %v6070 = vand.u32 %v5682, 4294901760
        %v6071 = vsub.f32 %v5682, %v6070
        %v6072 = vand.u32 %v6071, 4294901760
        %6073 = vmatmul.mubr.f32.gmra.mxu0 %v6072
        %v6074 = vpop.f32.mrf.mxu0
        %v6075 = vadd.f32 %v5986, %v6074
        %v6076 = vpop.f32.mrf.mxu0
        %6077 = vdwg.mxu0
        %6078 = vmatprep.subr.mxu0 0.0
        %6079 = vmatpush1.msra.mxu0 0.0
        %6080 = vmatprep.subr.mxu0 0.0
        %6081 = vmatpush1.msra.mxu0 0.0
        %6082 = vmatprep.subr.mxu0 0.0
        %6083 = vmatpush1.msra.mxu0 0.0
        %6084 = vmatprep.subr.mxu0 0.0
        %6085 = vmatpush1.msra.mxu0 0.0
        %6086 = vmatprep.subr.mxu0 0.0
        %6087 = vmatpush1.msra.mxu0 0.0
        %6088 = vmatprep.subr.mxu0 0.0
        %6089 = vmatpush1.msra.mxu0 0.0
        %6090 = vmatprep.subr.mxu0 0.0
        %6091 = vmatpush1.msra.mxu0 0.0
        %6092 = vmatprep.subr.mxu0 0.0
        %6093 = vmatpush1.msra.mxu0 0.0
        %6094 = vmatprep.subr.mxu0 0.0
        %v6095 = vand.u32 %v493, 4294901760
        %v6096 = vsub.f32 %v493, %v6095
        %v6097 = vand.u32 %v6096, 4294901760
        %6098 = vmatpush1.msra.mxu0 %v6097
        %6099 = vmatprep.subr.mxu0 0.0
        %v6100 = vand.u32 %v492, 4294901760
        %v6101 = vsub.f32 %v492, %v6100
        %v6102 = vand.u32 %v6101, 4294901760
        %6103 = vmatpush1.msra.mxu0 %v6102
        %6104 = vmatprep.subr.mxu0 0.0
        %v6105 = vand.u32 %v491, 4294901760
        %v6106 = vsub.f32 %v491, %v6105
        %v6107 = vand.u32 %v6106, 4294901760
        %6108 = vmatpush1.msra.mxu0 %v6107
        %6109 = vmatprep.subr.mxu0 0.0
        %v6110 = vand.u32 %v490, 4294901760
        %v6111 = vsub.f32 %v490, %v6110
        %v6112 = vand.u32 %v6111, 4294901760
        %6113 = vmatpush1.msra.mxu0 %v6112
        %6114 = vmatprep.subr.mxu0 0.0
        %v6115 = vand.u32 %v489, 4294901760
        %v6116 = vsub.f32 %v489, %v6115
        %v6117 = vand.u32 %v6116, 4294901760
        %6118 = vmatpush1.msra.mxu0 %v6117
        %6119 = vmatprep.subr.mxu0 0.0
        %v6120 = vand.u32 %v488, 4294901760
        %v6121 = vsub.f32 %v488, %v6120
        %v6122 = vand.u32 %v6121, 4294901760
        %6123 = vmatpush1.msra.mxu0 %v6122
        %6124 = vmatprep.subr.mxu0 0.0
        %v6125 = vand.u32 %v487, 4294901760
        %v6126 = vsub.f32 %v487, %v6125
        %v6127 = vand.u32 %v6126, 4294901760
        %6128 = vmatpush1.msra.mxu0 %v6127
        %6129 = vmatprep.subr.mxu0 0.0
        %v6130 = vand.u32 %v486, 4294901760
        %v6131 = vsub.f32 %v486, %v6130
        %v6132 = vand.u32 %v6131, 4294901760
        %6133 = vmatpush1.msra.mxu0 %v6132
        %6134 = vmatprep.subr.mxu0 0.0
        %6135 = vmatpush2.msra.mxu0 0.0
        %6136 = vmatprep.subr.mxu0 0.0
        %6137 = vmatpush2.msra.mxu0 0.0
        %6138 = vmatprep.subr.mxu0 0.0
        %6139 = vmatpush2.msra.mxu0 0.0
        %6140 = vmatprep.subr.mxu0 0.0
        %6141 = vmatpush2.msra.mxu0 0.0
        %6142 = vmatprep.subr.mxu0 0.0
        %6143 = vmatpush2.msra.mxu0 0.0
        %6144 = vmatprep.subr.mxu0 0.0
        %6145 = vmatpush2.msra.mxu0 0.0
        %6146 = vmatprep.subr.mxu0 0.0
        %6147 = vmatpush2.msra.mxu0 0.0
        %6148 = vmatprep.subr.mxu0 0.0
        %6149 = vmatpush2.msra.mxu0 0.0
        %6150 = vmatprep.subr.mxu0 0.0
        %6151 = vmatpush2.msra.mxu0 0.0
        %6152 = vmatprep.subr.mxu0 0.0
        %6153 = vmatpush2.msra.mxu0 0.0
        %6154 = vmatprep.subr.mxu0 0.0
        %6155 = vmatpush2.msra.mxu0 0.0
        %6156 = vmatprep.subr.mxu0 0.0
        %6157 = vmatpush2.msra.mxu0 0.0
        %6158 = vmatprep.subr.mxu0 0.0
        %6159 = vmatpush2.msra.mxu0 0.0
        %6160 = vmatprep.subr.mxu0 0.0
        %6161 = vmatpush2.msra.mxu0 0.0
        %6162 = vmatprep.subr.mxu0 0.0
        %6163 = vmatpush2.msra.mxu0 0.0
        %6164 = vmatprep.subr.mxu0 0.0
        %6165 = vmatpush2.msra.mxu0 0.0
        %6166 = vmatprep.mubr.f32.mxu0 0.0
        %v6167 = vand.u32 %v5679, 4294901760
        %6168 = vmatmul.mubr.f32.gmra.mxu0 %v6167
        %v6169 = vpop.f32.mrf.mxu0
        %v6170 = vadd.f32 %v6067, %v6169
        %v6171 = vpop.f32.mrf.mxu0
        %6172 = vmatprep.mubr.f32.mxu0 0.0
        %v6173 = vand.u32 %v5682, 4294901760
        %6174 = vmatmul.mubr.f32.gmra.mxu0 %v6173
        %v6175 = vpop.f32.mrf.mxu0
        %v6176 = vadd.f32 %v6075, %v6175
        %v6177 = vpop.f32.mrf.mxu0
        %6178 = vdwg.mxu0
        %6179 = vmatprep.subr.mxu0 0.0
        %6180 = vmatpush1.msra.mxu0 0.0
        %6181 = vmatprep.subr.mxu0 0.0
        %6182 = vmatpush1.msra.mxu0 0.0
        %6183 = vmatprep.subr.mxu0 0.0
        %6184 = vmatpush1.msra.mxu0 0.0
        %6185 = vmatprep.subr.mxu0 0.0
        %6186 = vmatpush1.msra.mxu0 0.0
        %6187 = vmatprep.subr.mxu0 0.0
        %6188 = vmatpush1.msra.mxu0 0.0
        %6189 = vmatprep.subr.mxu0 0.0
        %6190 = vmatpush1.msra.mxu0 0.0
        %6191 = vmatprep.subr.mxu0 0.0
        %6192 = vmatpush1.msra.mxu0 0.0
        %6193 = vmatprep.subr.mxu0 0.0
        %6194 = vmatpush1.msra.mxu0 0.0
        %6195 = vmatprep.subr.mxu0 0.0
        %v6196 = vand.u32 %v493, 4294901760
        %6197 = vmatpush1.msra.mxu0 %v6196
        %6198 = vmatprep.subr.mxu0 0.0
        %v6199 = vand.u32 %v492, 4294901760
        %6200 = vmatpush1.msra.mxu0 %v6199
        %6201 = vmatprep.subr.mxu0 0.0
        %v6202 = vand.u32 %v491, 4294901760
        %6203 = vmatpush1.msra.mxu0 %v6202
        %6204 = vmatprep.subr.mxu0 0.0
        %v6205 = vand.u32 %v490, 4294901760
        %6206 = vmatpush1.msra.mxu0 %v6205
        %6207 = vmatprep.subr.mxu0 0.0
        %v6208 = vand.u32 %v489, 4294901760
        %6209 = vmatpush1.msra.mxu0 %v6208
        %6210 = vmatprep.subr.mxu0 0.0
        %v6211 = vand.u32 %v488, 4294901760
        %6212 = vmatpush1.msra.mxu0 %v6211
        %6213 = vmatprep.subr.mxu0 0.0
        %v6214 = vand.u32 %v487, 4294901760
        %6215 = vmatpush1.msra.mxu0 %v6214
        %6216 = vmatprep.subr.mxu0 0.0
        %v6217 = vand.u32 %v486, 4294901760
        %6218 = vmatpush1.msra.mxu0 %v6217
        %6219 = vmatprep.subr.mxu0 0.0
        %6220 = vmatpush2.msra.mxu0 0.0
        %6221 = vmatprep.subr.mxu0 0.0
        %6222 = vmatpush2.msra.mxu0 0.0
        %6223 = vmatprep.subr.mxu0 0.0
        %6224 = vmatpush2.msra.mxu0 0.0
        %6225 = vmatprep.subr.mxu0 0.0
        %6226 = vmatpush2.msra.mxu0 0.0
        %6227 = vmatprep.subr.mxu0 0.0
        %6228 = vmatpush2.msra.mxu0 0.0
        %6229 = vmatprep.subr.mxu0 0.0
        %6230 = vmatpush2.msra.mxu0 0.0
        %6231 = vmatprep.subr.mxu0 0.0
        %6232 = vmatpush2.msra.mxu0 0.0
        %6233 = vmatprep.subr.mxu0 0.0
        %6234 = vmatpush2.msra.mxu0 0.0
        %6235 = vmatprep.subr.mxu0 0.0
        %6236 = vmatpush2.msra.mxu0 0.0
        %6237 = vmatprep.subr.mxu0 0.0
        %6238 = vmatpush2.msra.mxu0 0.0
        %6239 = vmatprep.subr.mxu0 0.0
        %6240 = vmatpush2.msra.mxu0 0.0
        %6241 = vmatprep.subr.mxu0 0.0
        %6242 = vmatpush2.msra.mxu0 0.0
        %6243 = vmatprep.subr.mxu0 0.0
        %6244 = vmatpush2.msra.mxu0 0.0
        %6245 = vmatprep.subr.mxu0 0.0
        %6246 = vmatpush2.msra.mxu0 0.0
        %6247 = vmatprep.subr.mxu0 0.0
        %6248 = vmatpush2.msra.mxu0 0.0
        %6249 = vmatprep.subr.mxu0 0.0
        %6250 = vmatpush2.msra.mxu0 0.0
        %6251 = vmatprep.mubr.f32.mxu0 0.0
        %v6252 = vand.u32 %v5679, 4294901760
        %6253 = vmatmul.mubr.f32.gmra.mxu0 %v6252
        %v6254 = vpop.f32.mrf.mxu0
        %v6255 = vadd.f32 %v6170, %v6254
        %v6256 = vpop.f32.mrf.mxu0
        %6257 = vmatprep.mubr.f32.mxu0 0.0
        %v6258 = vand.u32 %v5682, 4294901760
        %6259 = vmatmul.mubr.f32.gmra.mxu0 %v6258
        %v6260 = vpop.f32.mrf.mxu0
        %v6261 = vadd.f32 %v6176, %v6260
        %v6262 = vpop.f32.mrf.mxu0
        %6263 = vdwg.mxu0
        %v6265 = vsel %vm656, %v5628, 0
        %v6268 = vsel %vm656, %v5629, 0
        %6270 = vmatprep.subr.mxu0 0.0
        %6271 = vmatpush1.msra.mxu0 0.0
        %6272 = vmatprep.subr.mxu0 0.0
        %6273 = vmatpush1.msra.mxu0 0.0
        %6274 = vmatprep.subr.mxu0 0.0
        %6275 = vmatpush1.msra.mxu0 0.0
        %6276 = vmatprep.subr.mxu0 0.0
        %6277 = vmatpush1.msra.mxu0 0.0
        %6278 = vmatprep.subr.mxu0 0.0
        %6279 = vmatpush1.msra.mxu0 0.0
        %6280 = vmatprep.subr.mxu0 0.0
        %6281 = vmatpush1.msra.mxu0 0.0
        %6282 = vmatprep.subr.mxu0 0.0
        %6283 = vmatpush1.msra.mxu0 0.0
        %6284 = vmatprep.subr.mxu0 0.0
        %6285 = vmatpush1.msra.mxu0 0.0
        %6286 = vmatprep.subr.mxu0 0.0
        %v6287 = vand.u32 %v461, 4294901760
        %6288 = vmatpush1.msra.mxu0 %v6287
        %6289 = vmatprep.subr.mxu0 0.0
        %v6290 = vand.u32 %v460, 4294901760
        %6291 = vmatpush1.msra.mxu0 %v6290
        %6292 = vmatprep.subr.mxu0 0.0
        %v6293 = vand.u32 %v459, 4294901760
        %6294 = vmatpush1.msra.mxu0 %v6293
        %6295 = vmatprep.subr.mxu0 0.0
        %v6296 = vand.u32 %v458, 4294901760
        %6297 = vmatpush1.msra.mxu0 %v6296
        %6298 = vmatprep.subr.mxu0 0.0
        %v6299 = vand.u32 %v457, 4294901760
        %6300 = vmatpush1.msra.mxu0 %v6299
        %6301 = vmatprep.subr.mxu0 0.0
        %v6302 = vand.u32 %v456, 4294901760
        %6303 = vmatpush1.msra.mxu0 %v6302
        %6304 = vmatprep.subr.mxu0 0.0
        %v6305 = vand.u32 %v455, 4294901760
        %6306 = vmatpush1.msra.mxu0 %v6305
        %6307 = vmatprep.subr.mxu0 0.0
        %v6308 = vand.u32 %v454, 4294901760
        %6309 = vmatpush1.msra.mxu0 %v6308
        %6310 = vmatprep.subr.mxu0 0.0
        %6311 = vmatpush2.msra.mxu0 0.0
        %6312 = vmatprep.subr.mxu0 0.0
        %6313 = vmatpush2.msra.mxu0 0.0
        %6314 = vmatprep.subr.mxu0 0.0
        %6315 = vmatpush2.msra.mxu0 0.0
        %6316 = vmatprep.subr.mxu0 0.0
        %6317 = vmatpush2.msra.mxu0 0.0
        %6318 = vmatprep.subr.mxu0 0.0
        %6319 = vmatpush2.msra.mxu0 0.0
        %6320 = vmatprep.subr.mxu0 0.0
        %6321 = vmatpush2.msra.mxu0 0.0
        %6322 = vmatprep.subr.mxu0 0.0
        %6323 = vmatpush2.msra.mxu0 0.0
        %6324 = vmatprep.subr.mxu0 0.0
        %6325 = vmatpush2.msra.mxu0 0.0
        %6326 = vmatprep.subr.mxu0 0.0
        %6327 = vmatpush2.msra.mxu0 0.0
        %6328 = vmatprep.subr.mxu0 0.0
        %6329 = vmatpush2.msra.mxu0 0.0
        %6330 = vmatprep.subr.mxu0 0.0
        %6331 = vmatpush2.msra.mxu0 0.0
        %6332 = vmatprep.subr.mxu0 0.0
        %6333 = vmatpush2.msra.mxu0 0.0
        %6334 = vmatprep.subr.mxu0 0.0
        %6335 = vmatpush2.msra.mxu0 0.0
        %6336 = vmatprep.subr.mxu0 0.0
        %6337 = vmatpush2.msra.mxu0 0.0
        %6338 = vmatprep.subr.mxu0 0.0
        %6339 = vmatpush2.msra.mxu0 0.0
        %6340 = vmatprep.subr.mxu0 0.0
        %6341 = vmatpush2.msra.mxu0 0.0
        %6342 = vmatprep.mubr.f32.mxu0 0.0
        %v6343 = vand.u32 %v6265, 4294901760
        %v6344 = vsub.f32 %v6265, %v6343
        %v6345 = vand.u32 %v6344, 4294901760
        %v6346 = vsub.f32 %v6344, %v6345
        %v6347 = vand.u32 %v6346, 4294901760
        %6348 = vmatmul.mubr.f32.gmra.mxu0 %v6347
        %v6349 = vpop.f32.mrf.mxu0
        %v6350 = vadd.f32 %v6255, %v6349
        %v6351 = vpop.f32.mrf.mxu0
        %6352 = vmatprep.mubr.f32.mxu0 0.0
        %v6353 = vand.u32 %v6268, 4294901760
        %v6354 = vsub.f32 %v6268, %v6353
        %v6355 = vand.u32 %v6354, 4294901760
        %v6356 = vsub.f32 %v6354, %v6355
        %v6357 = vand.u32 %v6356, 4294901760
        %6358 = vmatmul.mubr.f32.gmra.mxu0 %v6357
        %v6359 = vpop.f32.mrf.mxu0
        %v6360 = vadd.f32 %v6261, %v6359
        %v6361 = vpop.f32.mrf.mxu0
        %6362 = vdwg.mxu0
        %6363 = vmatprep.subr.mxu0 0.0
        %6364 = vmatpush1.msra.mxu0 0.0
        %6365 = vmatprep.subr.mxu0 0.0
        %6366 = vmatpush1.msra.mxu0 0.0
        %6367 = vmatprep.subr.mxu0 0.0
        %6368 = vmatpush1.msra.mxu0 0.0
        %6369 = vmatprep.subr.mxu0 0.0
        %6370 = vmatpush1.msra.mxu0 0.0
        %6371 = vmatprep.subr.mxu0 0.0
        %6372 = vmatpush1.msra.mxu0 0.0
        %6373 = vmatprep.subr.mxu0 0.0
        %6374 = vmatpush1.msra.mxu0 0.0
        %6375 = vmatprep.subr.mxu0 0.0
        %6376 = vmatpush1.msra.mxu0 0.0
        %6377 = vmatprep.subr.mxu0 0.0
        %6378 = vmatpush1.msra.mxu0 0.0
        %6379 = vmatprep.subr.mxu0 0.0
        %v6380 = vand.u32 %v461, 4294901760
        %v6381 = vsub.f32 %v461, %v6380
        %v6382 = vand.u32 %v6381, 4294901760
        %v6383 = vsub.f32 %v6381, %v6382
        %v6384 = vand.u32 %v6383, 4294901760
        %6385 = vmatpush1.msra.mxu0 %v6384
        %6386 = vmatprep.subr.mxu0 0.0
        %v6387 = vand.u32 %v460, 4294901760
        %v6388 = vsub.f32 %v460, %v6387
        %v6389 = vand.u32 %v6388, 4294901760
        %v6390 = vsub.f32 %v6388, %v6389
        %v6391 = vand.u32 %v6390, 4294901760
        %6392 = vmatpush1.msra.mxu0 %v6391
        %6393 = vmatprep.subr.mxu0 0.0
        %v6394 = vand.u32 %v459, 4294901760
        %v6395 = vsub.f32 %v459, %v6394
        %v6396 = vand.u32 %v6395, 4294901760
        %v6397 = vsub.f32 %v6395, %v6396
        %v6398 = vand.u32 %v6397, 4294901760
        %6399 = vmatpush1.msra.mxu0 %v6398
        %6400 = vmatprep.subr.mxu0 0.0
        %v6401 = vand.u32 %v458, 4294901760
        %v6402 = vsub.f32 %v458, %v6401
        %v6403 = vand.u32 %v6402, 4294901760
        %v6404 = vsub.f32 %v6402, %v6403
        %v6405 = vand.u32 %v6404, 4294901760
        %6406 = vmatpush1.msra.mxu0 %v6405
        %6407 = vmatprep.subr.mxu0 0.0
        %v6408 = vand.u32 %v457, 4294901760
        %v6409 = vsub.f32 %v457, %v6408
        %v6410 = vand.u32 %v6409, 4294901760
        %v6411 = vsub.f32 %v6409, %v6410
        %v6412 = vand.u32 %v6411, 4294901760
        %6413 = vmatpush1.msra.mxu0 %v6412
        %6414 = vmatprep.subr.mxu0 0.0
        %v6415 = vand.u32 %v456, 4294901760
        %v6416 = vsub.f32 %v456, %v6415
        %v6417 = vand.u32 %v6416, 4294901760
        %v6418 = vsub.f32 %v6416, %v6417
        %v6419 = vand.u32 %v6418, 4294901760
        %6420 = vmatpush1.msra.mxu0 %v6419
        %6421 = vmatprep.subr.mxu0 0.0
        %v6422 = vand.u32 %v455, 4294901760
        %v6423 = vsub.f32 %v455, %v6422
        %v6424 = vand.u32 %v6423, 4294901760
        %v6425 = vsub.f32 %v6423, %v6424
        %v6426 = vand.u32 %v6425, 4294901760
        %6427 = vmatpush1.msra.mxu0 %v6426
        %6428 = vmatprep.subr.mxu0 0.0
        %v6429 = vand.u32 %v454, 4294901760
        %v6430 = vsub.f32 %v454, %v6429
        %v6431 = vand.u32 %v6430, 4294901760
        %v6432 = vsub.f32 %v6430, %v6431
        %v6433 = vand.u32 %v6432, 4294901760
        %6434 = vmatpush1.msra.mxu0 %v6433
        %6435 = vmatprep.subr.mxu0 0.0
        %6436 = vmatpush2.msra.mxu0 0.0
        %6437 = vmatprep.subr.mxu0 0.0
        %6438 = vmatpush2.msra.mxu0 0.0
        %6439 = vmatprep.subr.mxu0 0.0
        %6440 = vmatpush2.msra.mxu0 0.0
        %6441 = vmatprep.subr.mxu0 0.0
        %6442 = vmatpush2.msra.mxu0 0.0
        %6443 = vmatprep.subr.mxu0 0.0
        %6444 = vmatpush2.msra.mxu0 0.0
        %6445 = vmatprep.subr.mxu0 0.0
        %6446 = vmatpush2.msra.mxu0 0.0
        %6447 = vmatprep.subr.mxu0 0.0
        %6448 = vmatpush2.msra.mxu0 0.0
        %6449 = vmatprep.subr.mxu0 0.0
        %6450 = vmatpush2.msra.mxu0 0.0
        %6451 = vmatprep.subr.mxu0 0.0
        %6452 = vmatpush2.msra.mxu0 0.0
        %6453 = vmatprep.subr.mxu0 0.0
        %6454 = vmatpush2.msra.mxu0 0.0
        %6455 = vmatprep.subr.mxu0 0.0
        %6456 = vmatpush2.msra.mxu0 0.0
        %6457 = vmatprep.subr.mxu0 0.0
        %6458 = vmatpush2.msra.mxu0 0.0
        %6459 = vmatprep.subr.mxu0 0.0
        %6460 = vmatpush2.msra.mxu0 0.0
        %6461 = vmatprep.subr.mxu0 0.0
        %6462 = vmatpush2.msra.mxu0 0.0
        %6463 = vmatprep.subr.mxu0 0.0
        %6464 = vmatpush2.msra.mxu0 0.0
        %6465 = vmatprep.subr.mxu0 0.0
        %6466 = vmatpush2.msra.mxu0 0.0
        %6467 = vmatprep.mubr.f32.mxu0 0.0
        %v6468 = vand.u32 %v6265, 4294901760
        %6469 = vmatmul.mubr.f32.gmra.mxu0 %v6468
        %v6470 = vpop.f32.mrf.mxu0
        %v6471 = vadd.f32 %v6350, %v6470
        %v6472 = vpop.f32.mrf.mxu0
        %6473 = vmatprep.mubr.f32.mxu0 0.0
        %v6474 = vand.u32 %v6268, 4294901760
        %6475 = vmatmul.mubr.f32.gmra.mxu0 %v6474
        %v6476 = vpop.f32.mrf.mxu0
        %v6477 = vadd.f32 %v6360, %v6476
        %v6478 = vpop.f32.mrf.mxu0
        %6479 = vdwg.mxu0
        %6480 = vmatprep.subr.mxu0 0.0
        %6481 = vmatpush1.msra.mxu0 0.0
        %6482 = vmatprep.subr.mxu0 0.0
        %6483 = vmatpush1.msra.mxu0 0.0
        %6484 = vmatprep.subr.mxu0 0.0
        %6485 = vmatpush1.msra.mxu0 0.0
        %6486 = vmatprep.subr.mxu0 0.0
        %6487 = vmatpush1.msra.mxu0 0.0
        %6488 = vmatprep.subr.mxu0 0.0
        %6489 = vmatpush1.msra.mxu0 0.0
        %6490 = vmatprep.subr.mxu0 0.0
        %6491 = vmatpush1.msra.mxu0 0.0
        %6492 = vmatprep.subr.mxu0 0.0
        %6493 = vmatpush1.msra.mxu0 0.0
        %6494 = vmatprep.subr.mxu0 0.0
        %6495 = vmatpush1.msra.mxu0 0.0
        %6496 = vmatprep.subr.mxu0 0.0
        %v6497 = vand.u32 %v461, 4294901760
        %v6498 = vsub.f32 %v461, %v6497
        %6499 = vmatpush1.msra.mxu0 %v6498
        %6500 = vmatprep.subr.mxu0 0.0
        %v6501 = vand.u32 %v460, 4294901760
        %v6502 = vsub.f32 %v460, %v6501
        %6503 = vmatpush1.msra.mxu0 %v6502
        %6504 = vmatprep.subr.mxu0 0.0
        %v6505 = vand.u32 %v459, 4294901760
        %v6506 = vsub.f32 %v459, %v6505
        %6507 = vmatpush1.msra.mxu0 %v6506
        %6508 = vmatprep.subr.mxu0 0.0
        %v6509 = vand.u32 %v458, 4294901760
        %v6510 = vsub.f32 %v458, %v6509
        %6511 = vmatpush1.msra.mxu0 %v6510
        %6512 = vmatprep.subr.mxu0 0.0
        %v6513 = vand.u32 %v457, 4294901760
        %v6514 = vsub.f32 %v457, %v6513
        %6515 = vmatpush1.msra.mxu0 %v6514
        %6516 = vmatprep.subr.mxu0 0.0
        %v6517 = vand.u32 %v456, 4294901760
        %v6518 = vsub.f32 %v456, %v6517
        %6519 = vmatpush1.msra.mxu0 %v6518
        %6520 = vmatprep.subr.mxu0 0.0
        %v6521 = vand.u32 %v455, 4294901760
        %v6522 = vsub.f32 %v455, %v6521
        %6523 = vmatpush1.msra.mxu0 %v6522
        %6524 = vmatprep.subr.mxu0 0.0
        %v6525 = vand.u32 %v454, 4294901760
        %v6526 = vsub.f32 %v454, %v6525
        %6527 = vmatpush1.msra.mxu0 %v6526
        %6528 = vmatprep.subr.mxu0 0.0
        %6529 = vmatpush2.msra.mxu0 0.0
        %6530 = vmatprep.subr.mxu0 0.0
        %6531 = vmatpush2.msra.mxu0 0.0
        %6532 = vmatprep.subr.mxu0 0.0
        %6533 = vmatpush2.msra.mxu0 0.0
        %6534 = vmatprep.subr.mxu0 0.0
        %6535 = vmatpush2.msra.mxu0 0.0
        %6536 = vmatprep.subr.mxu0 0.0
        %6537 = vmatpush2.msra.mxu0 0.0
        %6538 = vmatprep.subr.mxu0 0.0
        %6539 = vmatpush2.msra.mxu0 0.0
        %6540 = vmatprep.subr.mxu0 0.0
        %6541 = vmatpush2.msra.mxu0 0.0
        %6542 = vmatprep.subr.mxu0 0.0
        %6543 = vmatpush2.msra.mxu0 0.0
        %6544 = vmatprep.subr.mxu0 0.0
        %6545 = vmatpush2.msra.mxu0 0.0
        %6546 = vmatprep.subr.mxu0 0.0
        %6547 = vmatpush2.msra.mxu0 0.0
        %6548 = vmatprep.subr.mxu0 0.0
        %6549 = vmatpush2.msra.mxu0 0.0
        %6550 = vmatprep.subr.mxu0 0.0
        %6551 = vmatpush2.msra.mxu0 0.0
        %6552 = vmatprep.subr.mxu0 0.0
        %6553 = vmatpush2.msra.mxu0 0.0
        %6554 = vmatprep.subr.mxu0 0.0
        %6555 = vmatpush2.msra.mxu0 0.0
        %6556 = vmatprep.subr.mxu0 0.0
        %6557 = vmatpush2.msra.mxu0 0.0
        %6558 = vmatprep.subr.mxu0 0.0
        %6559 = vmatpush2.msra.mxu0 0.0
        %6560 = vmatprep.mubr.f32.mxu0 0.0
        %v6561 = vand.u32 %v6265, 4294901760
        %v6562 = vsub.f32 %v6265, %v6561
        %6563 = vmatmul.mubr.f32.gmra.mxu0 %v6562
        %v6564 = vpop.f32.mrf.mxu0
        %v6565 = vadd.f32 %v6471, %v6564
        %v6566 = vpop.f32.mrf.mxu0
        %6567 = vmatprep.mubr.f32.mxu0 0.0
        %v6568 = vand.u32 %v6268, 4294901760
        %v6569 = vsub.f32 %v6268, %v6568
        %6570 = vmatmul.mubr.f32.gmra.mxu0 %v6569
        %v6571 = vpop.f32.mrf.mxu0
        %v6572 = vadd.f32 %v6477, %v6571
        %v6573 = vpop.f32.mrf.mxu0
        %6574 = vdwg.mxu0
        %6575 = vmatprep.subr.mxu0 0.0
        %6576 = vmatpush1.msra.mxu0 0.0
        %6577 = vmatprep.subr.mxu0 0.0
        %6578 = vmatpush1.msra.mxu0 0.0
        %6579 = vmatprep.subr.mxu0 0.0
        %6580 = vmatpush1.msra.mxu0 0.0
        %6581 = vmatprep.subr.mxu0 0.0
        %6582 = vmatpush1.msra.mxu0 0.0
        %6583 = vmatprep.subr.mxu0 0.0
        %6584 = vmatpush1.msra.mxu0 0.0
        %6585 = vmatprep.subr.mxu0 0.0
        %6586 = vmatpush1.msra.mxu0 0.0
        %6587 = vmatprep.subr.mxu0 0.0
        %6588 = vmatpush1.msra.mxu0 0.0
        %6589 = vmatprep.subr.mxu0 0.0
        %6590 = vmatpush1.msra.mxu0 0.0
        %6591 = vmatprep.subr.mxu0 0.0
        %v6592 = vand.u32 %v461, 4294901760
        %6593 = vmatpush1.msra.mxu0 %v6592
        %6594 = vmatprep.subr.mxu0 0.0
        %v6595 = vand.u32 %v460, 4294901760
        %6596 = vmatpush1.msra.mxu0 %v6595
        %6597 = vmatprep.subr.mxu0 0.0
        %v6598 = vand.u32 %v459, 4294901760
        %6599 = vmatpush1.msra.mxu0 %v6598
        %6600 = vmatprep.subr.mxu0 0.0
        %v6601 = vand.u32 %v458, 4294901760
        %6602 = vmatpush1.msra.mxu0 %v6601
        %6603 = vmatprep.subr.mxu0 0.0
        %v6604 = vand.u32 %v457, 4294901760
        %6605 = vmatpush1.msra.mxu0 %v6604
        %6606 = vmatprep.subr.mxu0 0.0
        %v6607 = vand.u32 %v456, 4294901760
        %6608 = vmatpush1.msra.mxu0 %v6607
        %6609 = vmatprep.subr.mxu0 0.0
        %v6610 = vand.u32 %v455, 4294901760
        %6611 = vmatpush1.msra.mxu0 %v6610
        %6612 = vmatprep.subr.mxu0 0.0
        %v6613 = vand.u32 %v454, 4294901760
        %6614 = vmatpush1.msra.mxu0 %v6613
        %6615 = vmatprep.subr.mxu0 0.0
        %6616 = vmatpush2.msra.mxu0 0.0
        %6617 = vmatprep.subr.mxu0 0.0
        %6618 = vmatpush2.msra.mxu0 0.0
        %6619 = vmatprep.subr.mxu0 0.0
        %6620 = vmatpush2.msra.mxu0 0.0
        %6621 = vmatprep.subr.mxu0 0.0
        %6622 = vmatpush2.msra.mxu0 0.0
        %6623 = vmatprep.subr.mxu0 0.0
        %6624 = vmatpush2.msra.mxu0 0.0
        %6625 = vmatprep.subr.mxu0 0.0
        %6626 = vmatpush2.msra.mxu0 0.0
        %6627 = vmatprep.subr.mxu0 0.0
        %6628 = vmatpush2.msra.mxu0 0.0
        %6629 = vmatprep.subr.mxu0 0.0
        %6630 = vmatpush2.msra.mxu0 0.0
        %6631 = vmatprep.subr.mxu0 0.0
        %6632 = vmatpush2.msra.mxu0 0.0
        %6633 = vmatprep.subr.mxu0 0.0
        %6634 = vmatpush2.msra.mxu0 0.0
        %6635 = vmatprep.subr.mxu0 0.0
        %6636 = vmatpush2.msra.mxu0 0.0
        %6637 = vmatprep.subr.mxu0 0.0
        %6638 = vmatpush2.msra.mxu0 0.0
        %6639 = vmatprep.subr.mxu0 0.0
        %6640 = vmatpush2.msra.mxu0 0.0
        %6641 = vmatprep.subr.mxu0 0.0
        %6642 = vmatpush2.msra.mxu0 0.0
        %6643 = vmatprep.subr.mxu0 0.0
        %6644 = vmatpush2.msra.mxu0 0.0
        %6645 = vmatprep.subr.mxu0 0.0
        %6646 = vmatpush2.msra.mxu0 0.0
        %6647 = vmatprep.mubr.f32.mxu0 0.0
        %v6648 = vand.u32 %v6265, 4294901760
        %v6649 = vsub.f32 %v6265, %v6648
        %v6650 = vand.u32 %v6649, 4294901760
        %6651 = vmatmul.mubr.f32.gmra.mxu0 %v6650
        %v6652 = vpop.f32.mrf.mxu0
        %v6653 = vadd.f32 %v6565, %v6652
        %v6654 = vpop.f32.mrf.mxu0
        %6655 = vmatprep.mubr.f32.mxu0 0.0
        %v6656 = vand.u32 %v6268, 4294901760
        %v6657 = vsub.f32 %v6268, %v6656
        %v6658 = vand.u32 %v6657, 4294901760
        %6659 = vmatmul.mubr.f32.gmra.mxu0 %v6658
        %v6660 = vpop.f32.mrf.mxu0
        %v6661 = vadd.f32 %v6572, %v6660
        %v6662 = vpop.f32.mrf.mxu0
        %6663 = vdwg.mxu0
        %6664 = vmatprep.subr.mxu0 0.0
        %6665 = vmatpush1.msra.mxu0 0.0
        %6666 = vmatprep.subr.mxu0 0.0
        %6667 = vmatpush1.msra.mxu0 0.0
        %6668 = vmatprep.subr.mxu0 0.0
        %6669 = vmatpush1.msra.mxu0 0.0
        %6670 = vmatprep.subr.mxu0 0.0
        %6671 = vmatpush1.msra.mxu0 0.0
        %6672 = vmatprep.subr.mxu0 0.0
        %6673 = vmatpush1.msra.mxu0 0.0
        %6674 = vmatprep.subr.mxu0 0.0
        %6675 = vmatpush1.msra.mxu0 0.0
        %6676 = vmatprep.subr.mxu0 0.0
        %6677 = vmatpush1.msra.mxu0 0.0
        %6678 = vmatprep.subr.mxu0 0.0
        %6679 = vmatpush1.msra.mxu0 0.0
        %6680 = vmatprep.subr.mxu0 0.0
        %v6681 = vand.u32 %v461, 4294901760
        %v6682 = vsub.f32 %v461, %v6681
        %v6683 = vand.u32 %v6682, 4294901760
        %6684 = vmatpush1.msra.mxu0 %v6683
        %6685 = vmatprep.subr.mxu0 0.0
        %v6686 = vand.u32 %v460, 4294901760
        %v6687 = vsub.f32 %v460, %v6686
        %v6688 = vand.u32 %v6687, 4294901760
        %6689 = vmatpush1.msra.mxu0 %v6688
        %6690 = vmatprep.subr.mxu0 0.0
        %v6691 = vand.u32 %v459, 4294901760
        %v6692 = vsub.f32 %v459, %v6691
        %v6693 = vand.u32 %v6692, 4294901760
        %6694 = vmatpush1.msra.mxu0 %v6693
        %6695 = vmatprep.subr.mxu0 0.0
        %v6696 = vand.u32 %v458, 4294901760
        %v6697 = vsub.f32 %v458, %v6696
        %v6698 = vand.u32 %v6697, 4294901760
        %6699 = vmatpush1.msra.mxu0 %v6698
        %6700 = vmatprep.subr.mxu0 0.0
        %v6701 = vand.u32 %v457, 4294901760
        %v6702 = vsub.f32 %v457, %v6701
        %v6703 = vand.u32 %v6702, 4294901760
        %6704 = vmatpush1.msra.mxu0 %v6703
        %6705 = vmatprep.subr.mxu0 0.0
        %v6706 = vand.u32 %v456, 4294901760
        %v6707 = vsub.f32 %v456, %v6706
        %v6708 = vand.u32 %v6707, 4294901760
        %6709 = vmatpush1.msra.mxu0 %v6708
        %6710 = vmatprep.subr.mxu0 0.0
        %v6711 = vand.u32 %v455, 4294901760
        %v6712 = vsub.f32 %v455, %v6711
        %v6713 = vand.u32 %v6712, 4294901760
        %6714 = vmatpush1.msra.mxu0 %v6713
        %6715 = vmatprep.subr.mxu0 0.0
        %v6716 = vand.u32 %v454, 4294901760
        %v6717 = vsub.f32 %v454, %v6716
        %v6718 = vand.u32 %v6717, 4294901760
        %6719 = vmatpush1.msra.mxu0 %v6718
        %6720 = vmatprep.subr.mxu0 0.0
        %6721 = vmatpush2.msra.mxu0 0.0
        %6722 = vmatprep.subr.mxu0 0.0
        %6723 = vmatpush2.msra.mxu0 0.0
        %6724 = vmatprep.subr.mxu0 0.0
        %6725 = vmatpush2.msra.mxu0 0.0
        %6726 = vmatprep.subr.mxu0 0.0
        %6727 = vmatpush2.msra.mxu0 0.0
        %6728 = vmatprep.subr.mxu0 0.0
        %6729 = vmatpush2.msra.mxu0 0.0
        %6730 = vmatprep.subr.mxu0 0.0
        %6731 = vmatpush2.msra.mxu0 0.0
        %6732 = vmatprep.subr.mxu0 0.0
        %6733 = vmatpush2.msra.mxu0 0.0
        %6734 = vmatprep.subr.mxu0 0.0
        %6735 = vmatpush2.msra.mxu0 0.0
        %6736 = vmatprep.subr.mxu0 0.0
        %6737 = vmatpush2.msra.mxu0 0.0
        %6738 = vmatprep.subr.mxu0 0.0
        %6739 = vmatpush2.msra.mxu0 0.0
        %6740 = vmatprep.subr.mxu0 0.0
        %6741 = vmatpush2.msra.mxu0 0.0
        %6742 = vmatprep.subr.mxu0 0.0
        %6743 = vmatpush2.msra.mxu0 0.0
        %6744 = vmatprep.subr.mxu0 0.0
        %6745 = vmatpush2.msra.mxu0 0.0
        %6746 = vmatprep.subr.mxu0 0.0
        %6747 = vmatpush2.msra.mxu0 0.0
        %6748 = vmatprep.subr.mxu0 0.0
        %6749 = vmatpush2.msra.mxu0 0.0
        %6750 = vmatprep.subr.mxu0 0.0
        %6751 = vmatpush2.msra.mxu0 0.0
        %6752 = vmatprep.mubr.f32.mxu0 0.0
        %v6753 = vand.u32 %v6265, 4294901760
        %6754 = vmatmul.mubr.f32.gmra.mxu0 %v6753
        %v6755 = vpop.f32.mrf.mxu0
        %v6756 = vadd.f32 %v6653, %v6755
        %v6757 = vpop.f32.mrf.mxu0
        %6758 = vmatprep.mubr.f32.mxu0 0.0
        %v6759 = vand.u32 %v6268, 4294901760
        %6760 = vmatmul.mubr.f32.gmra.mxu0 %v6759
        %v6761 = vpop.f32.mrf.mxu0
        %v6762 = vadd.f32 %v6661, %v6761
        %v6763 = vpop.f32.mrf.mxu0
        %6764 = vdwg.mxu0
        %6765 = vmatprep.subr.mxu0 0.0
        %6766 = vmatpush1.msra.mxu0 0.0
        %6767 = vmatprep.subr.mxu0 0.0
        %6768 = vmatpush1.msra.mxu0 0.0
        %6769 = vmatprep.subr.mxu0 0.0
        %6770 = vmatpush1.msra.mxu0 0.0
        %6771 = vmatprep.subr.mxu0 0.0
        %6772 = vmatpush1.msra.mxu0 0.0
        %6773 = vmatprep.subr.mxu0 0.0
        %6774 = vmatpush1.msra.mxu0 0.0
        %6775 = vmatprep.subr.mxu0 0.0
        %6776 = vmatpush1.msra.mxu0 0.0
        %6777 = vmatprep.subr.mxu0 0.0
        %6778 = vmatpush1.msra.mxu0 0.0
        %6779 = vmatprep.subr.mxu0 0.0
        %6780 = vmatpush1.msra.mxu0 0.0
        %6781 = vmatprep.subr.mxu0 0.0
        %v6782 = vand.u32 %v461, 4294901760
        %6783 = vmatpush1.msra.mxu0 %v6782
        %6784 = vmatprep.subr.mxu0 0.0
        %v6785 = vand.u32 %v460, 4294901760
        %6786 = vmatpush1.msra.mxu0 %v6785
        %6787 = vmatprep.subr.mxu0 0.0
        %v6788 = vand.u32 %v459, 4294901760
        %6789 = vmatpush1.msra.mxu0 %v6788
        %6790 = vmatprep.subr.mxu0 0.0
        %v6791 = vand.u32 %v458, 4294901760
        %6792 = vmatpush1.msra.mxu0 %v6791
        %6793 = vmatprep.subr.mxu0 0.0
        %v6794 = vand.u32 %v457, 4294901760
        %6795 = vmatpush1.msra.mxu0 %v6794
        %6796 = vmatprep.subr.mxu0 0.0
        %v6797 = vand.u32 %v456, 4294901760
        %6798 = vmatpush1.msra.mxu0 %v6797
        %6799 = vmatprep.subr.mxu0 0.0
        %v6800 = vand.u32 %v455, 4294901760
        %6801 = vmatpush1.msra.mxu0 %v6800
        %6802 = vmatprep.subr.mxu0 0.0
        %v6803 = vand.u32 %v454, 4294901760
        %6804 = vmatpush1.msra.mxu0 %v6803
        %6805 = vmatprep.subr.mxu0 0.0
        %6806 = vmatpush2.msra.mxu0 0.0
        %6807 = vmatprep.subr.mxu0 0.0
        %6808 = vmatpush2.msra.mxu0 0.0
        %6809 = vmatprep.subr.mxu0 0.0
        %6810 = vmatpush2.msra.mxu0 0.0
        %6811 = vmatprep.subr.mxu0 0.0
        %6812 = vmatpush2.msra.mxu0 0.0
        %6813 = vmatprep.subr.mxu0 0.0
        %6814 = vmatpush2.msra.mxu0 0.0
        %6815 = vmatprep.subr.mxu0 0.0
        %6816 = vmatpush2.msra.mxu0 0.0
        %6817 = vmatprep.subr.mxu0 0.0
        %6818 = vmatpush2.msra.mxu0 0.0
        %6819 = vmatprep.subr.mxu0 0.0
        %6820 = vmatpush2.msra.mxu0 0.0
        %6821 = vmatprep.subr.mxu0 0.0
        %6822 = vmatpush2.msra.mxu0 0.0
        %6823 = vmatprep.subr.mxu0 0.0
        %6824 = vmatpush2.msra.mxu0 0.0
        %6825 = vmatprep.subr.mxu0 0.0
        %6826 = vmatpush2.msra.mxu0 0.0
        %6827 = vmatprep.subr.mxu0 0.0
        %6828 = vmatpush2.msra.mxu0 0.0
        %6829 = vmatprep.subr.mxu0 0.0
        %6830 = vmatpush2.msra.mxu0 0.0
        %6831 = vmatprep.subr.mxu0 0.0
        %6832 = vmatpush2.msra.mxu0 0.0
        %6833 = vmatprep.subr.mxu0 0.0
        %6834 = vmatpush2.msra.mxu0 0.0
        %6835 = vmatprep.subr.mxu0 0.0
        %6836 = vmatpush2.msra.mxu0 0.0
        %6837 = vmatprep.mubr.f32.mxu0 0.0
        %v6838 = vand.u32 %v6265, 4294901760
        %6839 = vmatmul.mubr.f32.gmra.mxu0 %v6838
        %v6840 = vpop.f32.mrf.mxu0
        %v6841 = vadd.f32 %v6756, %v6840
        %v6842 = vpop.f32.mrf.mxu0
        %6843 = vmatprep.mubr.f32.mxu0 0.0
        %v6844 = vand.u32 %v6268, 4294901760
        %6845 = vmatmul.mubr.f32.gmra.mxu0 %v6844
        %v6846 = vpop.f32.mrf.mxu0
        %v6847 = vadd.f32 %v6762, %v6846
        %v6848 = vpop.f32.mrf.mxu0
        %6849 = vdwg.mxu0
        %v6851 = vsel %vm656, %v5676, 0
        %v6854 = vsel %vm656, %v5677, 0
        %6856 = vmatprep.subr.mxu0 0.0
        %6857 = vmatpush1.msra.mxu0 0.0
        %6858 = vmatprep.subr.mxu0 0.0
        %6859 = vmatpush1.msra.mxu0 0.0
        %6860 = vmatprep.subr.mxu0 0.0
        %6861 = vmatpush1.msra.mxu0 0.0
        %6862 = vmatprep.subr.mxu0 0.0
        %6863 = vmatpush1.msra.mxu0 0.0
        %6864 = vmatprep.subr.mxu0 0.0
        %6865 = vmatpush1.msra.mxu0 0.0
        %6866 = vmatprep.subr.mxu0 0.0
        %6867 = vmatpush1.msra.mxu0 0.0
        %6868 = vmatprep.subr.mxu0 0.0
        %6869 = vmatpush1.msra.mxu0 0.0
        %6870 = vmatprep.subr.mxu0 0.0
        %6871 = vmatpush1.msra.mxu0 0.0
        %6872 = vmatprep.subr.mxu0 0.0
        %v6873 = vand.u32 %v493, 4294901760
        %6874 = vmatpush1.msra.mxu0 %v6873
        %6875 = vmatprep.subr.mxu0 0.0
        %v6876 = vand.u32 %v492, 4294901760
        %6877 = vmatpush1.msra.mxu0 %v6876
        %6878 = vmatprep.subr.mxu0 0.0
        %v6879 = vand.u32 %v491, 4294901760
        %6880 = vmatpush1.msra.mxu0 %v6879
        %6881 = vmatprep.subr.mxu0 0.0
        %v6882 = vand.u32 %v490, 4294901760
        %6883 = vmatpush1.msra.mxu0 %v6882
        %6884 = vmatprep.subr.mxu0 0.0
        %v6885 = vand.u32 %v489, 4294901760
        %6886 = vmatpush1.msra.mxu0 %v6885
        %6887 = vmatprep.subr.mxu0 0.0
        %v6888 = vand.u32 %v488, 4294901760
        %6889 = vmatpush1.msra.mxu0 %v6888
        %6890 = vmatprep.subr.mxu0 0.0
        %v6891 = vand.u32 %v487, 4294901760
        %6892 = vmatpush1.msra.mxu0 %v6891
        %6893 = vmatprep.subr.mxu0 0.0
        %v6894 = vand.u32 %v486, 4294901760
        %6895 = vmatpush1.msra.mxu0 %v6894
        %6896 = vmatprep.subr.mxu0 0.0
        %6897 = vmatpush2.msra.mxu0 0.0
        %6898 = vmatprep.subr.mxu0 0.0
        %6899 = vmatpush2.msra.mxu0 0.0
        %6900 = vmatprep.subr.mxu0 0.0
        %6901 = vmatpush2.msra.mxu0 0.0
        %6902 = vmatprep.subr.mxu0 0.0
        %6903 = vmatpush2.msra.mxu0 0.0
        %6904 = vmatprep.subr.mxu0 0.0
        %6905 = vmatpush2.msra.mxu0 0.0
        %6906 = vmatprep.subr.mxu0 0.0
        %6907 = vmatpush2.msra.mxu0 0.0
        %6908 = vmatprep.subr.mxu0 0.0
        %6909 = vmatpush2.msra.mxu0 0.0
        %6910 = vmatprep.subr.mxu0 0.0
        %6911 = vmatpush2.msra.mxu0 0.0
        %6912 = vmatprep.subr.mxu0 0.0
        %6913 = vmatpush2.msra.mxu0 0.0
        %6914 = vmatprep.subr.mxu0 0.0
        %6915 = vmatpush2.msra.mxu0 0.0
        %6916 = vmatprep.subr.mxu0 0.0
        %6917 = vmatpush2.msra.mxu0 0.0
        %6918 = vmatprep.subr.mxu0 0.0
        %6919 = vmatpush2.msra.mxu0 0.0
        %6920 = vmatprep.subr.mxu0 0.0
        %6921 = vmatpush2.msra.mxu0 0.0
        %6922 = vmatprep.subr.mxu0 0.0
        %6923 = vmatpush2.msra.mxu0 0.0
        %6924 = vmatprep.subr.mxu0 0.0
        %6925 = vmatpush2.msra.mxu0 0.0
        %6926 = vmatprep.subr.mxu0 0.0
        %6927 = vmatpush2.msra.mxu0 0.0
        %6928 = vmatprep.mubr.f32.mxu0 0.0
        %v6929 = vand.u32 %v6851, 4294901760
        %v6930 = vsub.f32 %v6851, %v6929
        %v6931 = vand.u32 %v6930, 4294901760
        %v6932 = vsub.f32 %v6930, %v6931
        %v6933 = vand.u32 %v6932, 4294901760
        %6934 = vmatmul.mubr.f32.gmra.mxu0 %v6933
        %v6935 = vpop.f32.mrf.mxu0
        %v6936 = vadd.f32 0.0, %v6935
        %v6937 = vpop.f32.mrf.mxu0
        %6938 = vmatprep.mubr.f32.mxu0 0.0
        %v6939 = vand.u32 %v6854, 4294901760
        %v6940 = vsub.f32 %v6854, %v6939
        %v6941 = vand.u32 %v6940, 4294901760
        %v6942 = vsub.f32 %v6940, %v6941
        %v6943 = vand.u32 %v6942, 4294901760
        %6944 = vmatmul.mubr.f32.gmra.mxu0 %v6943
        %v6945 = vpop.f32.mrf.mxu0
        %v6946 = vadd.f32 0.0, %v6945
        %v6947 = vpop.f32.mrf.mxu0
        %6948 = vdwg.mxu0
        %6949 = vmatprep.subr.mxu0 0.0
        %6950 = vmatpush1.msra.mxu0 0.0
        %6951 = vmatprep.subr.mxu0 0.0
        %6952 = vmatpush1.msra.mxu0 0.0
        %6953 = vmatprep.subr.mxu0 0.0
        %6954 = vmatpush1.msra.mxu0 0.0
        %6955 = vmatprep.subr.mxu0 0.0
        %6956 = vmatpush1.msra.mxu0 0.0
        %6957 = vmatprep.subr.mxu0 0.0
        %6958 = vmatpush1.msra.mxu0 0.0
        %6959 = vmatprep.subr.mxu0 0.0
        %6960 = vmatpush1.msra.mxu0 0.0
        %6961 = vmatprep.subr.mxu0 0.0
        %6962 = vmatpush1.msra.mxu0 0.0
        %6963 = vmatprep.subr.mxu0 0.0
        %6964 = vmatpush1.msra.mxu0 0.0
        %6965 = vmatprep.subr.mxu0 0.0
        %v6966 = vand.u32 %v493, 4294901760
        %v6967 = vsub.f32 %v493, %v6966
        %v6968 = vand.u32 %v6967, 4294901760
        %v6969 = vsub.f32 %v6967, %v6968
        %v6970 = vand.u32 %v6969, 4294901760
        %6971 = vmatpush1.msra.mxu0 %v6970
        %6972 = vmatprep.subr.mxu0 0.0
        %v6973 = vand.u32 %v492, 4294901760
        %v6974 = vsub.f32 %v492, %v6973
        %v6975 = vand.u32 %v6974, 4294901760
        %v6976 = vsub.f32 %v6974, %v6975
        %v6977 = vand.u32 %v6976, 4294901760
        %6978 = vmatpush1.msra.mxu0 %v6977
        %6979 = vmatprep.subr.mxu0 0.0
        %v6980 = vand.u32 %v491, 4294901760
        %v6981 = vsub.f32 %v491, %v6980
        %v6982 = vand.u32 %v6981, 4294901760
        %v6983 = vsub.f32 %v6981, %v6982
        %v6984 = vand.u32 %v6983, 4294901760
        %6985 = vmatpush1.msra.mxu0 %v6984
        %6986 = vmatprep.subr.mxu0 0.0
        %v6987 = vand.u32 %v490, 4294901760
        %v6988 = vsub.f32 %v490, %v6987
        %v6989 = vand.u32 %v6988, 4294901760
        %v6990 = vsub.f32 %v6988, %v6989
        %v6991 = vand.u32 %v6990, 4294901760
        %6992 = vmatpush1.msra.mxu0 %v6991
        %6993 = vmatprep.subr.mxu0 0.0
        %v6994 = vand.u32 %v489, 4294901760
        %v6995 = vsub.f32 %v489, %v6994
        %v6996 = vand.u32 %v6995, 4294901760
        %v6997 = vsub.f32 %v6995, %v6996
        %v6998 = vand.u32 %v6997, 4294901760
        %6999 = vmatpush1.msra.mxu0 %v6998
        %7000 = vmatprep.subr.mxu0 0.0
        %v7001 = vand.u32 %v488, 4294901760
        %v7002 = vsub.f32 %v488, %v7001
        %v7003 = vand.u32 %v7002, 4294901760
        %v7004 = vsub.f32 %v7002, %v7003
        %v7005 = vand.u32 %v7004, 4294901760
        %7006 = vmatpush1.msra.mxu0 %v7005
        %7007 = vmatprep.subr.mxu0 0.0
        %v7008 = vand.u32 %v487, 4294901760
        %v7009 = vsub.f32 %v487, %v7008
        %v7010 = vand.u32 %v7009, 4294901760
        %v7011 = vsub.f32 %v7009, %v7010
        %v7012 = vand.u32 %v7011, 4294901760
        %7013 = vmatpush1.msra.mxu0 %v7012
        %7014 = vmatprep.subr.mxu0 0.0
        %v7015 = vand.u32 %v486, 4294901760
        %v7016 = vsub.f32 %v486, %v7015
        %v7017 = vand.u32 %v7016, 4294901760
        %v7018 = vsub.f32 %v7016, %v7017
        %v7019 = vand.u32 %v7018, 4294901760
        %7020 = vmatpush1.msra.mxu0 %v7019
        %7021 = vmatprep.subr.mxu0 0.0
        %7022 = vmatpush2.msra.mxu0 0.0
        %7023 = vmatprep.subr.mxu0 0.0
        %7024 = vmatpush2.msra.mxu0 0.0
        %7025 = vmatprep.subr.mxu0 0.0
        %7026 = vmatpush2.msra.mxu0 0.0
        %7027 = vmatprep.subr.mxu0 0.0
        %7028 = vmatpush2.msra.mxu0 0.0
        %7029 = vmatprep.subr.mxu0 0.0
        %7030 = vmatpush2.msra.mxu0 0.0
        %7031 = vmatprep.subr.mxu0 0.0
        %7032 = vmatpush2.msra.mxu0 0.0
        %7033 = vmatprep.subr.mxu0 0.0
        %7034 = vmatpush2.msra.mxu0 0.0
        %7035 = vmatprep.subr.mxu0 0.0
        %7036 = vmatpush2.msra.mxu0 0.0
        %7037 = vmatprep.subr.mxu0 0.0
        %7038 = vmatpush2.msra.mxu0 0.0
        %7039 = vmatprep.subr.mxu0 0.0
        %7040 = vmatpush2.msra.mxu0 0.0
        %7041 = vmatprep.subr.mxu0 0.0
        %7042 = vmatpush2.msra.mxu0 0.0
        %7043 = vmatprep.subr.mxu0 0.0
        %7044 = vmatpush2.msra.mxu0 0.0
        %7045 = vmatprep.subr.mxu0 0.0
        %7046 = vmatpush2.msra.mxu0 0.0
        %7047 = vmatprep.subr.mxu0 0.0
        %7048 = vmatpush2.msra.mxu0 0.0
        %7049 = vmatprep.subr.mxu0 0.0
        %7050 = vmatpush2.msra.mxu0 0.0
        %7051 = vmatprep.subr.mxu0 0.0
        %7052 = vmatpush2.msra.mxu0 0.0
        %7053 = vmatprep.mubr.f32.mxu0 0.0
        %v7054 = vand.u32 %v6851, 4294901760
        %7055 = vmatmul.mubr.f32.gmra.mxu0 %v7054
        %v7056 = vpop.f32.mrf.mxu0
        %v7057 = vadd.f32 %v6936, %v7056
        %v7058 = vpop.f32.mrf.mxu0
        %7059 = vmatprep.mubr.f32.mxu0 0.0
        %v7060 = vand.u32 %v6854, 4294901760
        %7061 = vmatmul.mubr.f32.gmra.mxu0 %v7060
        %v7062 = vpop.f32.mrf.mxu0
        %v7063 = vadd.f32 %v6946, %v7062
        %v7064 = vpop.f32.mrf.mxu0
        %7065 = vdwg.mxu0
        %7066 = vmatprep.subr.mxu0 0.0
        %7067 = vmatpush1.msra.mxu0 0.0
        %7068 = vmatprep.subr.mxu0 0.0
        %7069 = vmatpush1.msra.mxu0 0.0
        %7070 = vmatprep.subr.mxu0 0.0
        %7071 = vmatpush1.msra.mxu0 0.0
        %7072 = vmatprep.subr.mxu0 0.0
        %7073 = vmatpush1.msra.mxu0 0.0
        %7074 = vmatprep.subr.mxu0 0.0
        %7075 = vmatpush1.msra.mxu0 0.0
        %7076 = vmatprep.subr.mxu0 0.0
        %7077 = vmatpush1.msra.mxu0 0.0
        %7078 = vmatprep.subr.mxu0 0.0
        %7079 = vmatpush1.msra.mxu0 0.0
        %7080 = vmatprep.subr.mxu0 0.0
        %7081 = vmatpush1.msra.mxu0 0.0
        %7082 = vmatprep.subr.mxu0 0.0
        %v7083 = vand.u32 %v493, 4294901760
        %v7084 = vsub.f32 %v493, %v7083
        %7085 = vmatpush1.msra.mxu0 %v7084
        %7086 = vmatprep.subr.mxu0 0.0
        %v7087 = vand.u32 %v492, 4294901760
        %v7088 = vsub.f32 %v492, %v7087
        %7089 = vmatpush1.msra.mxu0 %v7088
        %7090 = vmatprep.subr.mxu0 0.0
        %v7091 = vand.u32 %v491, 4294901760
        %v7092 = vsub.f32 %v491, %v7091
        %7093 = vmatpush1.msra.mxu0 %v7092
        %7094 = vmatprep.subr.mxu0 0.0
        %v7095 = vand.u32 %v490, 4294901760
        %v7096 = vsub.f32 %v490, %v7095
        %7097 = vmatpush1.msra.mxu0 %v7096
        %7098 = vmatprep.subr.mxu0 0.0
        %v7099 = vand.u32 %v489, 4294901760
        %v7100 = vsub.f32 %v489, %v7099
        %7101 = vmatpush1.msra.mxu0 %v7100
        %7102 = vmatprep.subr.mxu0 0.0
        %v7103 = vand.u32 %v488, 4294901760
        %v7104 = vsub.f32 %v488, %v7103
        %7105 = vmatpush1.msra.mxu0 %v7104
        %7106 = vmatprep.subr.mxu0 0.0
        %v7107 = vand.u32 %v487, 4294901760
        %v7108 = vsub.f32 %v487, %v7107
        %7109 = vmatpush1.msra.mxu0 %v7108
        %7110 = vmatprep.subr.mxu0 0.0
        %v7111 = vand.u32 %v486, 4294901760
        %v7112 = vsub.f32 %v486, %v7111
        %7113 = vmatpush1.msra.mxu0 %v7112
        %7114 = vmatprep.subr.mxu0 0.0
        %7115 = vmatpush2.msra.mxu0 0.0
        %7116 = vmatprep.subr.mxu0 0.0
        %7117 = vmatpush2.msra.mxu0 0.0
        %7118 = vmatprep.subr.mxu0 0.0
        %7119 = vmatpush2.msra.mxu0 0.0
        %7120 = vmatprep.subr.mxu0 0.0
        %7121 = vmatpush2.msra.mxu0 0.0
        %7122 = vmatprep.subr.mxu0 0.0
        %7123 = vmatpush2.msra.mxu0 0.0
        %7124 = vmatprep.subr.mxu0 0.0
        %7125 = vmatpush2.msra.mxu0 0.0
        %7126 = vmatprep.subr.mxu0 0.0
        %7127 = vmatpush2.msra.mxu0 0.0
        %7128 = vmatprep.subr.mxu0 0.0
        %7129 = vmatpush2.msra.mxu0 0.0
        %7130 = vmatprep.subr.mxu0 0.0
        %7131 = vmatpush2.msra.mxu0 0.0
        %7132 = vmatprep.subr.mxu0 0.0
        %7133 = vmatpush2.msra.mxu0 0.0
        %7134 = vmatprep.subr.mxu0 0.0
        %7135 = vmatpush2.msra.mxu0 0.0
        %7136 = vmatprep.subr.mxu0 0.0
        %7137 = vmatpush2.msra.mxu0 0.0
        %7138 = vmatprep.subr.mxu0 0.0
        %7139 = vmatpush2.msra.mxu0 0.0
        %7140 = vmatprep.subr.mxu0 0.0
        %7141 = vmatpush2.msra.mxu0 0.0
        %7142 = vmatprep.subr.mxu0 0.0
        %7143 = vmatpush2.msra.mxu0 0.0
        %7144 = vmatprep.subr.mxu0 0.0
        %7145 = vmatpush2.msra.mxu0 0.0
        %7146 = vmatprep.mubr.f32.mxu0 0.0
        %v7147 = vand.u32 %v6851, 4294901760
        %v7148 = vsub.f32 %v6851, %v7147
        %7149 = vmatmul.mubr.f32.gmra.mxu0 %v7148
        %v7150 = vpop.f32.mrf.mxu0
        %v7151 = vadd.f32 %v7057, %v7150
        %v7152 = vpop.f32.mrf.mxu0
        %7153 = vmatprep.mubr.f32.mxu0 0.0
        %v7154 = vand.u32 %v6854, 4294901760
        %v7155 = vsub.f32 %v6854, %v7154
        %7156 = vmatmul.mubr.f32.gmra.mxu0 %v7155
        %v7157 = vpop.f32.mrf.mxu0
        %v7158 = vadd.f32 %v7063, %v7157
        %v7159 = vpop.f32.mrf.mxu0
        %7160 = vdwg.mxu0
        %7161 = vmatprep.subr.mxu0 0.0
        %7162 = vmatpush1.msra.mxu0 0.0
        %7163 = vmatprep.subr.mxu0 0.0
        %7164 = vmatpush1.msra.mxu0 0.0
        %7165 = vmatprep.subr.mxu0 0.0
        %7166 = vmatpush1.msra.mxu0 0.0
        %7167 = vmatprep.subr.mxu0 0.0
        %7168 = vmatpush1.msra.mxu0 0.0
        %7169 = vmatprep.subr.mxu0 0.0
        %7170 = vmatpush1.msra.mxu0 0.0
        %7171 = vmatprep.subr.mxu0 0.0
        %7172 = vmatpush1.msra.mxu0 0.0
        %7173 = vmatprep.subr.mxu0 0.0
        %7174 = vmatpush1.msra.mxu0 0.0
        %7175 = vmatprep.subr.mxu0 0.0
        %7176 = vmatpush1.msra.mxu0 0.0
        %7177 = vmatprep.subr.mxu0 0.0
        %v7178 = vand.u32 %v493, 4294901760
        %7179 = vmatpush1.msra.mxu0 %v7178
        %7180 = vmatprep.subr.mxu0 0.0
        %v7181 = vand.u32 %v492, 4294901760
        %7182 = vmatpush1.msra.mxu0 %v7181
        %7183 = vmatprep.subr.mxu0 0.0
        %v7184 = vand.u32 %v491, 4294901760
        %7185 = vmatpush1.msra.mxu0 %v7184
        %7186 = vmatprep.subr.mxu0 0.0
        %v7187 = vand.u32 %v490, 4294901760
        %7188 = vmatpush1.msra.mxu0 %v7187
        %7189 = vmatprep.subr.mxu0 0.0
        %v7190 = vand.u32 %v489, 4294901760
        %7191 = vmatpush1.msra.mxu0 %v7190
        %7192 = vmatprep.subr.mxu0 0.0
        %v7193 = vand.u32 %v488, 4294901760
        %7194 = vmatpush1.msra.mxu0 %v7193
        %7195 = vmatprep.subr.mxu0 0.0
        %v7196 = vand.u32 %v487, 4294901760
        %7197 = vmatpush1.msra.mxu0 %v7196
        %7198 = vmatprep.subr.mxu0 0.0
        %v7199 = vand.u32 %v486, 4294901760
        %7200 = vmatpush1.msra.mxu0 %v7199
        %7201 = vmatprep.subr.mxu0 0.0
        %7202 = vmatpush2.msra.mxu0 0.0
        %7203 = vmatprep.subr.mxu0 0.0
        %7204 = vmatpush2.msra.mxu0 0.0
        %7205 = vmatprep.subr.mxu0 0.0
        %7206 = vmatpush2.msra.mxu0 0.0
        %7207 = vmatprep.subr.mxu0 0.0
        %7208 = vmatpush2.msra.mxu0 0.0
        %7209 = vmatprep.subr.mxu0 0.0
        %7210 = vmatpush2.msra.mxu0 0.0
        %7211 = vmatprep.subr.mxu0 0.0
        %7212 = vmatpush2.msra.mxu0 0.0
        %7213 = vmatprep.subr.mxu0 0.0
        %7214 = vmatpush2.msra.mxu0 0.0
        %7215 = vmatprep.subr.mxu0 0.0
        %7216 = vmatpush2.msra.mxu0 0.0
        %7217 = vmatprep.subr.mxu0 0.0
        %7218 = vmatpush2.msra.mxu0 0.0
        %7219 = vmatprep.subr.mxu0 0.0
        %7220 = vmatpush2.msra.mxu0 0.0
        %7221 = vmatprep.subr.mxu0 0.0
        %7222 = vmatpush2.msra.mxu0 0.0
        %7223 = vmatprep.subr.mxu0 0.0
        %7224 = vmatpush2.msra.mxu0 0.0
        %7225 = vmatprep.subr.mxu0 0.0
        %7226 = vmatpush2.msra.mxu0 0.0
        %7227 = vmatprep.subr.mxu0 0.0
        %7228 = vmatpush2.msra.mxu0 0.0
        %7229 = vmatprep.subr.mxu0 0.0
        %7230 = vmatpush2.msra.mxu0 0.0
        %7231 = vmatprep.subr.mxu0 0.0
        %7232 = vmatpush2.msra.mxu0 0.0
        %7233 = vmatprep.mubr.f32.mxu0 0.0
        %v7234 = vand.u32 %v6851, 4294901760
        %v7235 = vsub.f32 %v6851, %v7234
        %v7236 = vand.u32 %v7235, 4294901760
        %7237 = vmatmul.mubr.f32.gmra.mxu0 %v7236
        %v7238 = vpop.f32.mrf.mxu0
        %v7239 = vadd.f32 %v7151, %v7238
        %v7240 = vpop.f32.mrf.mxu0
        %7241 = vmatprep.mubr.f32.mxu0 0.0
        %v7242 = vand.u32 %v6854, 4294901760
        %v7243 = vsub.f32 %v6854, %v7242
        %v7244 = vand.u32 %v7243, 4294901760
        %7245 = vmatmul.mubr.f32.gmra.mxu0 %v7244
        %v7246 = vpop.f32.mrf.mxu0
        %v7247 = vadd.f32 %v7158, %v7246
        %v7248 = vpop.f32.mrf.mxu0
        %7249 = vdwg.mxu0
        %7250 = vmatprep.subr.mxu0 0.0
        %7251 = vmatpush1.msra.mxu0 0.0
        %7252 = vmatprep.subr.mxu0 0.0
        %7253 = vmatpush1.msra.mxu0 0.0
        %7254 = vmatprep.subr.mxu0 0.0
        %7255 = vmatpush1.msra.mxu0 0.0
        %7256 = vmatprep.subr.mxu0 0.0
        %7257 = vmatpush1.msra.mxu0 0.0
        %7258 = vmatprep.subr.mxu0 0.0
        %7259 = vmatpush1.msra.mxu0 0.0
        %7260 = vmatprep.subr.mxu0 0.0
        %7261 = vmatpush1.msra.mxu0 0.0
        %7262 = vmatprep.subr.mxu0 0.0
        %7263 = vmatpush1.msra.mxu0 0.0
        %7264 = vmatprep.subr.mxu0 0.0
        %7265 = vmatpush1.msra.mxu0 0.0
        %7266 = vmatprep.subr.mxu0 0.0
        %v7267 = vand.u32 %v493, 4294901760
        %v7268 = vsub.f32 %v493, %v7267
        %v7269 = vand.u32 %v7268, 4294901760
        %7270 = vmatpush1.msra.mxu0 %v7269
        %7271 = vmatprep.subr.mxu0 0.0
        %v7272 = vand.u32 %v492, 4294901760
        %v7273 = vsub.f32 %v492, %v7272
        %v7274 = vand.u32 %v7273, 4294901760
        %7275 = vmatpush1.msra.mxu0 %v7274
        %7276 = vmatprep.subr.mxu0 0.0
        %v7277 = vand.u32 %v491, 4294901760
        %v7278 = vsub.f32 %v491, %v7277
        %v7279 = vand.u32 %v7278, 4294901760
        %7280 = vmatpush1.msra.mxu0 %v7279
        %7281 = vmatprep.subr.mxu0 0.0
        %v7282 = vand.u32 %v490, 4294901760
        %v7283 = vsub.f32 %v490, %v7282
        %v7284 = vand.u32 %v7283, 4294901760
        %7285 = vmatpush1.msra.mxu0 %v7284
        %7286 = vmatprep.subr.mxu0 0.0
        %v7287 = vand.u32 %v489, 4294901760
        %v7288 = vsub.f32 %v489, %v7287
        %v7289 = vand.u32 %v7288, 4294901760
        %7290 = vmatpush1.msra.mxu0 %v7289
        %7291 = vmatprep.subr.mxu0 0.0
        %v7292 = vand.u32 %v488, 4294901760
        %v7293 = vsub.f32 %v488, %v7292
        %v7294 = vand.u32 %v7293, 4294901760
        %7295 = vmatpush1.msra.mxu0 %v7294
        %7296 = vmatprep.subr.mxu0 0.0
        %v7297 = vand.u32 %v487, 4294901760
        %v7298 = vsub.f32 %v487, %v7297
        %v7299 = vand.u32 %v7298, 4294901760
        %7300 = vmatpush1.msra.mxu0 %v7299
        %7301 = vmatprep.subr.mxu0 0.0
        %v7302 = vand.u32 %v486, 4294901760
        %v7303 = vsub.f32 %v486, %v7302
        %v7304 = vand.u32 %v7303, 4294901760
        %7305 = vmatpush1.msra.mxu0 %v7304
        %7306 = vmatprep.subr.mxu0 0.0
        %7307 = vmatpush2.msra.mxu0 0.0
        %7308 = vmatprep.subr.mxu0 0.0
        %7309 = vmatpush2.msra.mxu0 0.0
        %7310 = vmatprep.subr.mxu0 0.0
        %7311 = vmatpush2.msra.mxu0 0.0
        %7312 = vmatprep.subr.mxu0 0.0
        %7313 = vmatpush2.msra.mxu0 0.0
        %7314 = vmatprep.subr.mxu0 0.0
        %7315 = vmatpush2.msra.mxu0 0.0
        %7316 = vmatprep.subr.mxu0 0.0
        %7317 = vmatpush2.msra.mxu0 0.0
        %7318 = vmatprep.subr.mxu0 0.0
        %7319 = vmatpush2.msra.mxu0 0.0
        %7320 = vmatprep.subr.mxu0 0.0
        %7321 = vmatpush2.msra.mxu0 0.0
        %7322 = vmatprep.subr.mxu0 0.0
        %7323 = vmatpush2.msra.mxu0 0.0
        %7324 = vmatprep.subr.mxu0 0.0
        %7325 = vmatpush2.msra.mxu0 0.0
        %7326 = vmatprep.subr.mxu0 0.0
        %7327 = vmatpush2.msra.mxu0 0.0
        %7328 = vmatprep.subr.mxu0 0.0
        %7329 = vmatpush2.msra.mxu0 0.0
        %7330 = vmatprep.subr.mxu0 0.0
        %7331 = vmatpush2.msra.mxu0 0.0
        %7332 = vmatprep.subr.mxu0 0.0
        %7333 = vmatpush2.msra.mxu0 0.0
        %7334 = vmatprep.subr.mxu0 0.0
        %7335 = vmatpush2.msra.mxu0 0.0
        %7336 = vmatprep.subr.mxu0 0.0
        %7337 = vmatpush2.msra.mxu0 0.0
        %7338 = vmatprep.mubr.f32.mxu0 0.0
        %v7339 = vand.u32 %v6851, 4294901760
        %7340 = vmatmul.mubr.f32.gmra.mxu0 %v7339
        %v7341 = vpop.f32.mrf.mxu0
        %v7342 = vadd.f32 %v7239, %v7341
        %v7343 = vpop.f32.mrf.mxu0
        %7344 = vmatprep.mubr.f32.mxu0 0.0
        %v7345 = vand.u32 %v6854, 4294901760
        %7346 = vmatmul.mubr.f32.gmra.mxu0 %v7345
        %v7347 = vpop.f32.mrf.mxu0
        %v7348 = vadd.f32 %v7247, %v7347
        %v7349 = vpop.f32.mrf.mxu0
        %7350 = vdwg.mxu0
        %7351 = vmatprep.subr.mxu0 0.0
        %7352 = vmatpush1.msra.mxu0 0.0
        %7353 = vmatprep.subr.mxu0 0.0
        %7354 = vmatpush1.msra.mxu0 0.0
        %7355 = vmatprep.subr.mxu0 0.0
        %7356 = vmatpush1.msra.mxu0 0.0
        %7357 = vmatprep.subr.mxu0 0.0
        %7358 = vmatpush1.msra.mxu0 0.0
        %7359 = vmatprep.subr.mxu0 0.0
        %7360 = vmatpush1.msra.mxu0 0.0
        %7361 = vmatprep.subr.mxu0 0.0
        %7362 = vmatpush1.msra.mxu0 0.0
        %7363 = vmatprep.subr.mxu0 0.0
        %7364 = vmatpush1.msra.mxu0 0.0
        %7365 = vmatprep.subr.mxu0 0.0
        %7366 = vmatpush1.msra.mxu0 0.0
        %7367 = vmatprep.subr.mxu0 0.0
        %v7368 = vand.u32 %v493, 4294901760
        %7369 = vmatpush1.msra.mxu0 %v7368
        %7370 = vmatprep.subr.mxu0 0.0
        %v7371 = vand.u32 %v492, 4294901760
        %7372 = vmatpush1.msra.mxu0 %v7371
        %7373 = vmatprep.subr.mxu0 0.0
        %v7374 = vand.u32 %v491, 4294901760
        %7375 = vmatpush1.msra.mxu0 %v7374
        %7376 = vmatprep.subr.mxu0 0.0
        %v7377 = vand.u32 %v490, 4294901760
        %7378 = vmatpush1.msra.mxu0 %v7377
        %7379 = vmatprep.subr.mxu0 0.0
        %v7380 = vand.u32 %v489, 4294901760
        %7381 = vmatpush1.msra.mxu0 %v7380
        %7382 = vmatprep.subr.mxu0 0.0
        %v7383 = vand.u32 %v488, 4294901760
        %7384 = vmatpush1.msra.mxu0 %v7383
        %7385 = vmatprep.subr.mxu0 0.0
        %v7386 = vand.u32 %v487, 4294901760
        %7387 = vmatpush1.msra.mxu0 %v7386
        %7388 = vmatprep.subr.mxu0 0.0
        %v7389 = vand.u32 %v486, 4294901760
        %7390 = vmatpush1.msra.mxu0 %v7389
        %7391 = vmatprep.subr.mxu0 0.0
        %7392 = vmatpush2.msra.mxu0 0.0
        %7393 = vmatprep.subr.mxu0 0.0
        %7394 = vmatpush2.msra.mxu0 0.0
        %7395 = vmatprep.subr.mxu0 0.0
        %7396 = vmatpush2.msra.mxu0 0.0
        %7397 = vmatprep.subr.mxu0 0.0
        %7398 = vmatpush2.msra.mxu0 0.0
        %7399 = vmatprep.subr.mxu0 0.0
        %7400 = vmatpush2.msra.mxu0 0.0
        %7401 = vmatprep.subr.mxu0 0.0
        %7402 = vmatpush2.msra.mxu0 0.0
        %7403 = vmatprep.subr.mxu0 0.0
        %7404 = vmatpush2.msra.mxu0 0.0
        %7405 = vmatprep.subr.mxu0 0.0
        %7406 = vmatpush2.msra.mxu0 0.0
        %7407 = vmatprep.subr.mxu0 0.0
        %7408 = vmatpush2.msra.mxu0 0.0
        %7409 = vmatprep.subr.mxu0 0.0
        %7410 = vmatpush2.msra.mxu0 0.0
        %7411 = vmatprep.subr.mxu0 0.0
        %7412 = vmatpush2.msra.mxu0 0.0
        %7413 = vmatprep.subr.mxu0 0.0
        %7414 = vmatpush2.msra.mxu0 0.0
        %7415 = vmatprep.subr.mxu0 0.0
        %7416 = vmatpush2.msra.mxu0 0.0
        %7417 = vmatprep.subr.mxu0 0.0
        %7418 = vmatpush2.msra.mxu0 0.0
        %7419 = vmatprep.subr.mxu0 0.0
        %7420 = vmatpush2.msra.mxu0 0.0
        %7421 = vmatprep.subr.mxu0 0.0
        %7422 = vmatpush2.msra.mxu0 0.0
        %7423 = vmatprep.mubr.f32.mxu0 0.0
        %v7424 = vand.u32 %v6851, 4294901760
        %7425 = vmatmul.mubr.f32.gmra.mxu0 %v7424
        %v7426 = vpop.f32.mrf.mxu0
        %v7427 = vadd.f32 %v7342, %v7426
        %v7428 = vpop.f32.mrf.mxu0
        %7429 = vmatprep.mubr.f32.mxu0 0.0
        %v7430 = vand.u32 %v6854, 4294901760
        %7431 = vmatmul.mubr.f32.gmra.mxu0 %v7430
        %v7432 = vpop.f32.mrf.mxu0
        %v7433 = vadd.f32 %v7348, %v7432
        %v7434 = vpop.f32.mrf.mxu0
        %7435 = vdwg.mxu0
        %v7437 = vsel %vm656, %v5652, 0
        %v7440 = vsel %vm656, %v5653, 0
        %7442 = vmatprep.subr.mxu0 0.0
        %7443 = vmatpush1.msra.mxu0 0.0
        %7444 = vmatprep.subr.mxu0 0.0
        %7445 = vmatpush1.msra.mxu0 0.0
        %7446 = vmatprep.subr.mxu0 0.0
        %7447 = vmatpush1.msra.mxu0 0.0
        %7448 = vmatprep.subr.mxu0 0.0
        %7449 = vmatpush1.msra.mxu0 0.0
        %7450 = vmatprep.subr.mxu0 0.0
        %7451 = vmatpush1.msra.mxu0 0.0
        %7452 = vmatprep.subr.mxu0 0.0
        %7453 = vmatpush1.msra.mxu0 0.0
        %7454 = vmatprep.subr.mxu0 0.0
        %7455 = vmatpush1.msra.mxu0 0.0
        %7456 = vmatprep.subr.mxu0 0.0
        %7457 = vmatpush1.msra.mxu0 0.0
        %7458 = vmatprep.subr.mxu0 0.0
        %v7459 = vand.u32 %v461, 4294901760
        %7460 = vmatpush1.msra.mxu0 %v7459
        %7461 = vmatprep.subr.mxu0 0.0
        %v7462 = vand.u32 %v460, 4294901760
        %7463 = vmatpush1.msra.mxu0 %v7462
        %7464 = vmatprep.subr.mxu0 0.0
        %v7465 = vand.u32 %v459, 4294901760
        %7466 = vmatpush1.msra.mxu0 %v7465
        %7467 = vmatprep.subr.mxu0 0.0
        %v7468 = vand.u32 %v458, 4294901760
        %7469 = vmatpush1.msra.mxu0 %v7468
        %7470 = vmatprep.subr.mxu0 0.0
        %v7471 = vand.u32 %v457, 4294901760
        %7472 = vmatpush1.msra.mxu0 %v7471
        %7473 = vmatprep.subr.mxu0 0.0
        %v7474 = vand.u32 %v456, 4294901760
        %7475 = vmatpush1.msra.mxu0 %v7474
        %7476 = vmatprep.subr.mxu0 0.0
        %v7477 = vand.u32 %v455, 4294901760
        %7478 = vmatpush1.msra.mxu0 %v7477
        %7479 = vmatprep.subr.mxu0 0.0
        %v7480 = vand.u32 %v454, 4294901760
        %7481 = vmatpush1.msra.mxu0 %v7480
        %7482 = vmatprep.subr.mxu0 0.0
        %7483 = vmatpush2.msra.mxu0 0.0
        %7484 = vmatprep.subr.mxu0 0.0
        %7485 = vmatpush2.msra.mxu0 0.0
        %7486 = vmatprep.subr.mxu0 0.0
        %7487 = vmatpush2.msra.mxu0 0.0
        %7488 = vmatprep.subr.mxu0 0.0
        %7489 = vmatpush2.msra.mxu0 0.0
        %7490 = vmatprep.subr.mxu0 0.0
        %7491 = vmatpush2.msra.mxu0 0.0
        %7492 = vmatprep.subr.mxu0 0.0
        %7493 = vmatpush2.msra.mxu0 0.0
        %7494 = vmatprep.subr.mxu0 0.0
        %7495 = vmatpush2.msra.mxu0 0.0
        %7496 = vmatprep.subr.mxu0 0.0
        %7497 = vmatpush2.msra.mxu0 0.0
        %7498 = vmatprep.subr.mxu0 0.0
        %7499 = vmatpush2.msra.mxu0 0.0
        %7500 = vmatprep.subr.mxu0 0.0
        %7501 = vmatpush2.msra.mxu0 0.0
        %7502 = vmatprep.subr.mxu0 0.0
        %7503 = vmatpush2.msra.mxu0 0.0
        %7504 = vmatprep.subr.mxu0 0.0
        %7505 = vmatpush2.msra.mxu0 0.0
        %7506 = vmatprep.subr.mxu0 0.0
        %7507 = vmatpush2.msra.mxu0 0.0
        %7508 = vmatprep.subr.mxu0 0.0
        %7509 = vmatpush2.msra.mxu0 0.0
        %7510 = vmatprep.subr.mxu0 0.0
        %7511 = vmatpush2.msra.mxu0 0.0
        %7512 = vmatprep.subr.mxu0 0.0
        %7513 = vmatpush2.msra.mxu0 0.0
        %7514 = vmatprep.mubr.f32.mxu0 0.0
        %v7515 = vand.u32 %v7437, 4294901760
        %v7516 = vsub.f32 %v7437, %v7515
        %v7517 = vand.u32 %v7516, 4294901760
        %v7518 = vsub.f32 %v7516, %v7517
        %v7519 = vand.u32 %v7518, 4294901760
        %7520 = vmatmul.mubr.f32.gmra.mxu0 %v7519
        %v7521 = vpop.f32.mrf.mxu0
        %v7522 = vadd.f32 %v7427, %v7521
        %v7523 = vpop.f32.mrf.mxu0
        %7524 = vmatprep.mubr.f32.mxu0 0.0
        %v7525 = vand.u32 %v7440, 4294901760
        %v7526 = vsub.f32 %v7440, %v7525
        %v7527 = vand.u32 %v7526, 4294901760
        %v7528 = vsub.f32 %v7526, %v7527
        %v7529 = vand.u32 %v7528, 4294901760
        %7530 = vmatmul.mubr.f32.gmra.mxu0 %v7529
        %v7531 = vpop.f32.mrf.mxu0
        %v7532 = vadd.f32 %v7433, %v7531
        %v7533 = vpop.f32.mrf.mxu0
        %7534 = vdwg.mxu0
        %7535 = vmatprep.subr.mxu0 0.0
        %7536 = vmatpush1.msra.mxu0 0.0
        %7537 = vmatprep.subr.mxu0 0.0
        %7538 = vmatpush1.msra.mxu0 0.0
        %7539 = vmatprep.subr.mxu0 0.0
        %7540 = vmatpush1.msra.mxu0 0.0
        %7541 = vmatprep.subr.mxu0 0.0
        %7542 = vmatpush1.msra.mxu0 0.0
        %7543 = vmatprep.subr.mxu0 0.0
        %7544 = vmatpush1.msra.mxu0 0.0
        %7545 = vmatprep.subr.mxu0 0.0
        %7546 = vmatpush1.msra.mxu0 0.0
        %7547 = vmatprep.subr.mxu0 0.0
        %7548 = vmatpush1.msra.mxu0 0.0
        %7549 = vmatprep.subr.mxu0 0.0
        %7550 = vmatpush1.msra.mxu0 0.0
        %7551 = vmatprep.subr.mxu0 0.0
        %v7552 = vand.u32 %v461, 4294901760
        %v7553 = vsub.f32 %v461, %v7552
        %v7554 = vand.u32 %v7553, 4294901760
        %v7555 = vsub.f32 %v7553, %v7554
        %v7556 = vand.u32 %v7555, 4294901760
        %7557 = vmatpush1.msra.mxu0 %v7556
        %7558 = vmatprep.subr.mxu0 0.0
        %v7559 = vand.u32 %v460, 4294901760
        %v7560 = vsub.f32 %v460, %v7559
        %v7561 = vand.u32 %v7560, 4294901760
        %v7562 = vsub.f32 %v7560, %v7561
        %v7563 = vand.u32 %v7562, 4294901760
        %7564 = vmatpush1.msra.mxu0 %v7563
        %7565 = vmatprep.subr.mxu0 0.0
        %v7566 = vand.u32 %v459, 4294901760
        %v7567 = vsub.f32 %v459, %v7566
        %v7568 = vand.u32 %v7567, 4294901760
        %v7569 = vsub.f32 %v7567, %v7568
        %v7570 = vand.u32 %v7569, 4294901760
        %7571 = vmatpush1.msra.mxu0 %v7570
        %7572 = vmatprep.subr.mxu0 0.0
        %v7573 = vand.u32 %v458, 4294901760
        %v7574 = vsub.f32 %v458, %v7573
        %v7575 = vand.u32 %v7574, 4294901760
        %v7576 = vsub.f32 %v7574, %v7575
        %v7577 = vand.u32 %v7576, 4294901760
        %7578 = vmatpush1.msra.mxu0 %v7577
        %7579 = vmatprep.subr.mxu0 0.0
        %v7580 = vand.u32 %v457, 4294901760
        %v7581 = vsub.f32 %v457, %v7580
        %v7582 = vand.u32 %v7581, 4294901760
        %v7583 = vsub.f32 %v7581, %v7582
        %v7584 = vand.u32 %v7583, 4294901760
        %7585 = vmatpush1.msra.mxu0 %v7584
        %7586 = vmatprep.subr.mxu0 0.0
        %v7587 = vand.u32 %v456, 4294901760
        %v7588 = vsub.f32 %v456, %v7587
        %v7589 = vand.u32 %v7588, 4294901760
        %v7590 = vsub.f32 %v7588, %v7589
        %v7591 = vand.u32 %v7590, 4294901760
        %7592 = vmatpush1.msra.mxu0 %v7591
        %7593 = vmatprep.subr.mxu0 0.0
        %v7594 = vand.u32 %v455, 4294901760
        %v7595 = vsub.f32 %v455, %v7594
        %v7596 = vand.u32 %v7595, 4294901760
        %v7597 = vsub.f32 %v7595, %v7596
        %v7598 = vand.u32 %v7597, 4294901760
        %7599 = vmatpush1.msra.mxu0 %v7598
        %7600 = vmatprep.subr.mxu0 0.0
        %v7601 = vand.u32 %v454, 4294901760
        %v7602 = vsub.f32 %v454, %v7601
        %v7603 = vand.u32 %v7602, 4294901760
        %v7604 = vsub.f32 %v7602, %v7603
        %v7605 = vand.u32 %v7604, 4294901760
        %7606 = vmatpush1.msra.mxu0 %v7605
        %7607 = vmatprep.subr.mxu0 0.0
        %7608 = vmatpush2.msra.mxu0 0.0
        %7609 = vmatprep.subr.mxu0 0.0
        %7610 = vmatpush2.msra.mxu0 0.0
        %7611 = vmatprep.subr.mxu0 0.0
        %7612 = vmatpush2.msra.mxu0 0.0
        %7613 = vmatprep.subr.mxu0 0.0
        %7614 = vmatpush2.msra.mxu0 0.0
        %7615 = vmatprep.subr.mxu0 0.0
        %7616 = vmatpush2.msra.mxu0 0.0
        %7617 = vmatprep.subr.mxu0 0.0
        %7618 = vmatpush2.msra.mxu0 0.0
        %7619 = vmatprep.subr.mxu0 0.0
        %7620 = vmatpush2.msra.mxu0 0.0
        %7621 = vmatprep.subr.mxu0 0.0
        %7622 = vmatpush2.msra.mxu0 0.0
        %7623 = vmatprep.subr.mxu0 0.0
        %7624 = vmatpush2.msra.mxu0 0.0
        %7625 = vmatprep.subr.mxu0 0.0
        %7626 = vmatpush2.msra.mxu0 0.0
        %7627 = vmatprep.subr.mxu0 0.0
        %7628 = vmatpush2.msra.mxu0 0.0
        %7629 = vmatprep.subr.mxu0 0.0
        %7630 = vmatpush2.msra.mxu0 0.0
        %7631 = vmatprep.subr.mxu0 0.0
        %7632 = vmatpush2.msra.mxu0 0.0
        %7633 = vmatprep.subr.mxu0 0.0
        %7634 = vmatpush2.msra.mxu0 0.0
        %7635 = vmatprep.subr.mxu0 0.0
        %7636 = vmatpush2.msra.mxu0 0.0
        %7637 = vmatprep.subr.mxu0 0.0
        %7638 = vmatpush2.msra.mxu0 0.0
        %7639 = vmatprep.mubr.f32.mxu0 0.0
        %v7640 = vand.u32 %v7437, 4294901760
        %7641 = vmatmul.mubr.f32.gmra.mxu0 %v7640
        %v7642 = vpop.f32.mrf.mxu0
        %v7643 = vadd.f32 %v7522, %v7642
        %v7644 = vpop.f32.mrf.mxu0
        %7645 = vmatprep.mubr.f32.mxu0 0.0
        %v7646 = vand.u32 %v7440, 4294901760
        %7647 = vmatmul.mubr.f32.gmra.mxu0 %v7646
        %v7648 = vpop.f32.mrf.mxu0
        %v7649 = vadd.f32 %v7532, %v7648
        %v7650 = vpop.f32.mrf.mxu0
        %7651 = vdwg.mxu0
        %7652 = vmatprep.subr.mxu0 0.0
        %7653 = vmatpush1.msra.mxu0 0.0
        %7654 = vmatprep.subr.mxu0 0.0
        %7655 = vmatpush1.msra.mxu0 0.0
        %7656 = vmatprep.subr.mxu0 0.0
        %7657 = vmatpush1.msra.mxu0 0.0
        %7658 = vmatprep.subr.mxu0 0.0
        %7659 = vmatpush1.msra.mxu0 0.0
        %7660 = vmatprep.subr.mxu0 0.0
        %7661 = vmatpush1.msra.mxu0 0.0
        %7662 = vmatprep.subr.mxu0 0.0
        %7663 = vmatpush1.msra.mxu0 0.0
        %7664 = vmatprep.subr.mxu0 0.0
        %7665 = vmatpush1.msra.mxu0 0.0
        %7666 = vmatprep.subr.mxu0 0.0
        %7667 = vmatpush1.msra.mxu0 0.0
        %7668 = vmatprep.subr.mxu0 0.0
        %v7669 = vand.u32 %v461, 4294901760
        %v7670 = vsub.f32 %v461, %v7669
        %7671 = vmatpush1.msra.mxu0 %v7670
        %7672 = vmatprep.subr.mxu0 0.0
        %v7673 = vand.u32 %v460, 4294901760
        %v7674 = vsub.f32 %v460, %v7673
        %7675 = vmatpush1.msra.mxu0 %v7674
        %7676 = vmatprep.subr.mxu0 0.0
        %v7677 = vand.u32 %v459, 4294901760
        %v7678 = vsub.f32 %v459, %v7677
        %7679 = vmatpush1.msra.mxu0 %v7678
        %7680 = vmatprep.subr.mxu0 0.0
        %v7681 = vand.u32 %v458, 4294901760
        %v7682 = vsub.f32 %v458, %v7681
        %7683 = vmatpush1.msra.mxu0 %v7682
        %7684 = vmatprep.subr.mxu0 0.0
        %v7685 = vand.u32 %v457, 4294901760
        %v7686 = vsub.f32 %v457, %v7685
        %7687 = vmatpush1.msra.mxu0 %v7686
        %7688 = vmatprep.subr.mxu0 0.0
        %v7689 = vand.u32 %v456, 4294901760
        %v7690 = vsub.f32 %v456, %v7689
        %7691 = vmatpush1.msra.mxu0 %v7690
        %7692 = vmatprep.subr.mxu0 0.0
        %v7693 = vand.u32 %v455, 4294901760
        %v7694 = vsub.f32 %v455, %v7693
        %7695 = vmatpush1.msra.mxu0 %v7694
        %7696 = vmatprep.subr.mxu0 0.0
        %v7697 = vand.u32 %v454, 4294901760
        %v7698 = vsub.f32 %v454, %v7697
        %7699 = vmatpush1.msra.mxu0 %v7698
        %7700 = vmatprep.subr.mxu0 0.0
        %7701 = vmatpush2.msra.mxu0 0.0
        %7702 = vmatprep.subr.mxu0 0.0
        %7703 = vmatpush2.msra.mxu0 0.0
        %7704 = vmatprep.subr.mxu0 0.0
        %7705 = vmatpush2.msra.mxu0 0.0
        %7706 = vmatprep.subr.mxu0 0.0
        %7707 = vmatpush2.msra.mxu0 0.0
        %7708 = vmatprep.subr.mxu0 0.0
        %7709 = vmatpush2.msra.mxu0 0.0
        %7710 = vmatprep.subr.mxu0 0.0
        %7711 = vmatpush2.msra.mxu0 0.0
        %7712 = vmatprep.subr.mxu0 0.0
        %7713 = vmatpush2.msra.mxu0 0.0
        %7714 = vmatprep.subr.mxu0 0.0
        %7715 = vmatpush2.msra.mxu0 0.0
        %7716 = vmatprep.subr.mxu0 0.0
        %7717 = vmatpush2.msra.mxu0 0.0
        %7718 = vmatprep.subr.mxu0 0.0
        %7719 = vmatpush2.msra.mxu0 0.0
        %7720 = vmatprep.subr.mxu0 0.0
        %7721 = vmatpush2.msra.mxu0 0.0
        %7722 = vmatprep.subr.mxu0 0.0
        %7723 = vmatpush2.msra.mxu0 0.0
        %7724 = vmatprep.subr.mxu0 0.0
        %7725 = vmatpush2.msra.mxu0 0.0
        %7726 = vmatprep.subr.mxu0 0.0
        %7727 = vmatpush2.msra.mxu0 0.0
        %7728 = vmatprep.subr.mxu0 0.0
        %7729 = vmatpush2.msra.mxu0 0.0
        %7730 = vmatprep.subr.mxu0 0.0
        %7731 = vmatpush2.msra.mxu0 0.0
        %7732 = vmatprep.mubr.f32.mxu0 0.0
        %v7733 = vand.u32 %v7437, 4294901760
        %v7734 = vsub.f32 %v7437, %v7733
        %7735 = vmatmul.mubr.f32.gmra.mxu0 %v7734
        %v7736 = vpop.f32.mrf.mxu0
        %v7737 = vadd.f32 %v7643, %v7736
        %v7738 = vpop.f32.mrf.mxu0
        %7739 = vmatprep.mubr.f32.mxu0 0.0
        %v7740 = vand.u32 %v7440, 4294901760
        %v7741 = vsub.f32 %v7440, %v7740
        %7742 = vmatmul.mubr.f32.gmra.mxu0 %v7741
        %v7743 = vpop.f32.mrf.mxu0
        %v7744 = vadd.f32 %v7649, %v7743
        %v7745 = vpop.f32.mrf.mxu0
        %7746 = vdwg.mxu0
        %7747 = vmatprep.subr.mxu0 0.0
        %7748 = vmatpush1.msra.mxu0 0.0
        %7749 = vmatprep.subr.mxu0 0.0
        %7750 = vmatpush1.msra.mxu0 0.0
        %7751 = vmatprep.subr.mxu0 0.0
        %7752 = vmatpush1.msra.mxu0 0.0
        %7753 = vmatprep.subr.mxu0 0.0
        %7754 = vmatpush1.msra.mxu0 0.0
        %7755 = vmatprep.subr.mxu0 0.0
        %7756 = vmatpush1.msra.mxu0 0.0
        %7757 = vmatprep.subr.mxu0 0.0
        %7758 = vmatpush1.msra.mxu0 0.0
        %7759 = vmatprep.subr.mxu0 0.0
        %7760 = vmatpush1.msra.mxu0 0.0
        %7761 = vmatprep.subr.mxu0 0.0
        %7762 = vmatpush1.msra.mxu0 0.0
        %7763 = vmatprep.subr.mxu0 0.0
        %v7764 = vand.u32 %v461, 4294901760
        %7765 = vmatpush1.msra.mxu0 %v7764
        %7766 = vmatprep.subr.mxu0 0.0
        %v7767 = vand.u32 %v460, 4294901760
        %7768 = vmatpush1.msra.mxu0 %v7767
        %7769 = vmatprep.subr.mxu0 0.0
        %v7770 = vand.u32 %v459, 4294901760
        %7771 = vmatpush1.msra.mxu0 %v7770
        %7772 = vmatprep.subr.mxu0 0.0
        %v7773 = vand.u32 %v458, 4294901760
        %7774 = vmatpush1.msra.mxu0 %v7773
        %7775 = vmatprep.subr.mxu0 0.0
        %v7776 = vand.u32 %v457, 4294901760
        %7777 = vmatpush1.msra.mxu0 %v7776
        %7778 = vmatprep.subr.mxu0 0.0
        %v7779 = vand.u32 %v456, 4294901760
        %7780 = vmatpush1.msra.mxu0 %v7779
        %7781 = vmatprep.subr.mxu0 0.0
        %v7782 = vand.u32 %v455, 4294901760
        %7783 = vmatpush1.msra.mxu0 %v7782
        %7784 = vmatprep.subr.mxu0 0.0
        %v7785 = vand.u32 %v454, 4294901760
        %7786 = vmatpush1.msra.mxu0 %v7785
        %7787 = vmatprep.subr.mxu0 0.0
        %7788 = vmatpush2.msra.mxu0 0.0
        %7789 = vmatprep.subr.mxu0 0.0
        %7790 = vmatpush2.msra.mxu0 0.0
        %7791 = vmatprep.subr.mxu0 0.0
        %7792 = vmatpush2.msra.mxu0 0.0
        %7793 = vmatprep.subr.mxu0 0.0
        %7794 = vmatpush2.msra.mxu0 0.0
        %7795 = vmatprep.subr.mxu0 0.0
        %7796 = vmatpush2.msra.mxu0 0.0
        %7797 = vmatprep.subr.mxu0 0.0
        %7798 = vmatpush2.msra.mxu0 0.0
        %7799 = vmatprep.subr.mxu0 0.0
        %7800 = vmatpush2.msra.mxu0 0.0
        %7801 = vmatprep.subr.mxu0 0.0
        %7802 = vmatpush2.msra.mxu0 0.0
        %7803 = vmatprep.subr.mxu0 0.0
        %7804 = vmatpush2.msra.mxu0 0.0
        %7805 = vmatprep.subr.mxu0 0.0
        %7806 = vmatpush2.msra.mxu0 0.0
        %7807 = vmatprep.subr.mxu0 0.0
        %7808 = vmatpush2.msra.mxu0 0.0
        %7809 = vmatprep.subr.mxu0 0.0
        %7810 = vmatpush2.msra.mxu0 0.0
        %7811 = vmatprep.subr.mxu0 0.0
        %7812 = vmatpush2.msra.mxu0 0.0
        %7813 = vmatprep.subr.mxu0 0.0
        %7814 = vmatpush2.msra.mxu0 0.0
        %7815 = vmatprep.subr.mxu0 0.0
        %7816 = vmatpush2.msra.mxu0 0.0
        %7817 = vmatprep.subr.mxu0 0.0
        %7818 = vmatpush2.msra.mxu0 0.0
        %7819 = vmatprep.mubr.f32.mxu0 0.0
        %v7820 = vand.u32 %v7437, 4294901760
        %v7821 = vsub.f32 %v7437, %v7820
        %v7822 = vand.u32 %v7821, 4294901760
        %7823 = vmatmul.mubr.f32.gmra.mxu0 %v7822
        %v7824 = vpop.f32.mrf.mxu0
        %v7825 = vadd.f32 %v7737, %v7824
        %v7826 = vpop.f32.mrf.mxu0
        %7827 = vmatprep.mubr.f32.mxu0 0.0
        %v7828 = vand.u32 %v7440, 4294901760
        %v7829 = vsub.f32 %v7440, %v7828
        %v7830 = vand.u32 %v7829, 4294901760
        %7831 = vmatmul.mubr.f32.gmra.mxu0 %v7830
        %v7832 = vpop.f32.mrf.mxu0
        %v7833 = vadd.f32 %v7744, %v7832
        %v7834 = vpop.f32.mrf.mxu0
        %7835 = vdwg.mxu0
        %7836 = vmatprep.subr.mxu0 0.0
        %7837 = vmatpush1.msra.mxu0 0.0
        %7838 = vmatprep.subr.mxu0 0.0
        %7839 = vmatpush1.msra.mxu0 0.0
        %7840 = vmatprep.subr.mxu0 0.0
        %7841 = vmatpush1.msra.mxu0 0.0
        %7842 = vmatprep.subr.mxu0 0.0
        %7843 = vmatpush1.msra.mxu0 0.0
        %7844 = vmatprep.subr.mxu0 0.0
        %7845 = vmatpush1.msra.mxu0 0.0
        %7846 = vmatprep.subr.mxu0 0.0
        %7847 = vmatpush1.msra.mxu0 0.0
        %7848 = vmatprep.subr.mxu0 0.0
        %7849 = vmatpush1.msra.mxu0 0.0
        %7850 = vmatprep.subr.mxu0 0.0
        %7851 = vmatpush1.msra.mxu0 0.0
        %7852 = vmatprep.subr.mxu0 0.0
        %v7853 = vand.u32 %v461, 4294901760
        %v7854 = vsub.f32 %v461, %v7853
        %v7855 = vand.u32 %v7854, 4294901760
        %7856 = vmatpush1.msra.mxu0 %v7855
        %7857 = vmatprep.subr.mxu0 0.0
        %v7858 = vand.u32 %v460, 4294901760
        %v7859 = vsub.f32 %v460, %v7858
        %v7860 = vand.u32 %v7859, 4294901760
        %7861 = vmatpush1.msra.mxu0 %v7860
        %7862 = vmatprep.subr.mxu0 0.0
        %v7863 = vand.u32 %v459, 4294901760
        %v7864 = vsub.f32 %v459, %v7863
        %v7865 = vand.u32 %v7864, 4294901760
        %7866 = vmatpush1.msra.mxu0 %v7865
        %7867 = vmatprep.subr.mxu0 0.0
        %v7868 = vand.u32 %v458, 4294901760
        %v7869 = vsub.f32 %v458, %v7868
        %v7870 = vand.u32 %v7869, 4294901760
        %7871 = vmatpush1.msra.mxu0 %v7870
        %7872 = vmatprep.subr.mxu0 0.0
        %v7873 = vand.u32 %v457, 4294901760
        %v7874 = vsub.f32 %v457, %v7873
        %v7875 = vand.u32 %v7874, 4294901760
        %7876 = vmatpush1.msra.mxu0 %v7875
        %7877 = vmatprep.subr.mxu0 0.0
        %v7878 = vand.u32 %v456, 4294901760
        %v7879 = vsub.f32 %v456, %v7878
        %v7880 = vand.u32 %v7879, 4294901760
        %7881 = vmatpush1.msra.mxu0 %v7880
        %7882 = vmatprep.subr.mxu0 0.0
        %v7883 = vand.u32 %v455, 4294901760
        %v7884 = vsub.f32 %v455, %v7883
        %v7885 = vand.u32 %v7884, 4294901760
        %7886 = vmatpush1.msra.mxu0 %v7885
        %7887 = vmatprep.subr.mxu0 0.0
        %v7888 = vand.u32 %v454, 4294901760
        %v7889 = vsub.f32 %v454, %v7888
        %v7890 = vand.u32 %v7889, 4294901760
        %7891 = vmatpush1.msra.mxu0 %v7890
        %7892 = vmatprep.subr.mxu0 0.0
        %7893 = vmatpush2.msra.mxu0 0.0
        %7894 = vmatprep.subr.mxu0 0.0
        %7895 = vmatpush2.msra.mxu0 0.0
        %7896 = vmatprep.subr.mxu0 0.0
        %7897 = vmatpush2.msra.mxu0 0.0
        %7898 = vmatprep.subr.mxu0 0.0
        %7899 = vmatpush2.msra.mxu0 0.0
        %7900 = vmatprep.subr.mxu0 0.0
        %7901 = vmatpush2.msra.mxu0 0.0
        %7902 = vmatprep.subr.mxu0 0.0
        %7903 = vmatpush2.msra.mxu0 0.0
        %7904 = vmatprep.subr.mxu0 0.0
        %7905 = vmatpush2.msra.mxu0 0.0
        %7906 = vmatprep.subr.mxu0 0.0
        %7907 = vmatpush2.msra.mxu0 0.0
        %7908 = vmatprep.subr.mxu0 0.0
        %7909 = vmatpush2.msra.mxu0 0.0
        %7910 = vmatprep.subr.mxu0 0.0
        %7911 = vmatpush2.msra.mxu0 0.0
        %7912 = vmatprep.subr.mxu0 0.0
        %7913 = vmatpush2.msra.mxu0 0.0
        %7914 = vmatprep.subr.mxu0 0.0
        %7915 = vmatpush2.msra.mxu0 0.0
        %7916 = vmatprep.subr.mxu0 0.0
        %7917 = vmatpush2.msra.mxu0 0.0
        %7918 = vmatprep.subr.mxu0 0.0
        %7919 = vmatpush2.msra.mxu0 0.0
        %7920 = vmatprep.subr.mxu0 0.0
        %7921 = vmatpush2.msra.mxu0 0.0
        %7922 = vmatprep.subr.mxu0 0.0
        %7923 = vmatpush2.msra.mxu0 0.0
        %7924 = vmatprep.mubr.f32.mxu0 0.0
        %v7925 = vand.u32 %v7437, 4294901760
        %7926 = vmatmul.mubr.f32.gmra.mxu0 %v7925
        %v7927 = vpop.f32.mrf.mxu0
        %v7928 = vadd.f32 %v7825, %v7927
        %v7929 = vpop.f32.mrf.mxu0
        %7930 = vmatprep.mubr.f32.mxu0 0.0
        %v7931 = vand.u32 %v7440, 4294901760
        %7932 = vmatmul.mubr.f32.gmra.mxu0 %v7931
        %v7933 = vpop.f32.mrf.mxu0
        %v7934 = vadd.f32 %v7833, %v7933
        %v7935 = vpop.f32.mrf.mxu0
        %7936 = vdwg.mxu0
        %7937 = vmatprep.subr.mxu0 0.0
        %7938 = vmatpush1.msra.mxu0 0.0
        %7939 = vmatprep.subr.mxu0 0.0
        %7940 = vmatpush1.msra.mxu0 0.0
        %7941 = vmatprep.subr.mxu0 0.0
        %7942 = vmatpush1.msra.mxu0 0.0
        %7943 = vmatprep.subr.mxu0 0.0
        %7944 = vmatpush1.msra.mxu0 0.0
        %7945 = vmatprep.subr.mxu0 0.0
        %7946 = vmatpush1.msra.mxu0 0.0
        %7947 = vmatprep.subr.mxu0 0.0
        %7948 = vmatpush1.msra.mxu0 0.0
        %7949 = vmatprep.subr.mxu0 0.0
        %7950 = vmatpush1.msra.mxu0 0.0
        %7951 = vmatprep.subr.mxu0 0.0
        %7952 = vmatpush1.msra.mxu0 0.0
        %7953 = vmatprep.subr.mxu0 0.0
        %v7954 = vand.u32 %v461, 4294901760
        %7955 = vmatpush1.msra.mxu0 %v7954
        %7956 = vmatprep.subr.mxu0 0.0
        %v7957 = vand.u32 %v460, 4294901760
        %7958 = vmatpush1.msra.mxu0 %v7957
        %7959 = vmatprep.subr.mxu0 0.0
        %v7960 = vand.u32 %v459, 4294901760
        %7961 = vmatpush1.msra.mxu0 %v7960
        %7962 = vmatprep.subr.mxu0 0.0
        %v7963 = vand.u32 %v458, 4294901760
        %7964 = vmatpush1.msra.mxu0 %v7963
        %7965 = vmatprep.subr.mxu0 0.0
        %v7966 = vand.u32 %v457, 4294901760
        %7967 = vmatpush1.msra.mxu0 %v7966
        %7968 = vmatprep.subr.mxu0 0.0
        %v7969 = vand.u32 %v456, 4294901760
        %7970 = vmatpush1.msra.mxu0 %v7969
        %7971 = vmatprep.subr.mxu0 0.0
        %v7972 = vand.u32 %v455, 4294901760
        %7973 = vmatpush1.msra.mxu0 %v7972
        %7974 = vmatprep.subr.mxu0 0.0
        %v7975 = vand.u32 %v454, 4294901760
        %7976 = vmatpush1.msra.mxu0 %v7975
        %7977 = vmatprep.subr.mxu0 0.0
        %7978 = vmatpush2.msra.mxu0 0.0
        %7979 = vmatprep.subr.mxu0 0.0
        %7980 = vmatpush2.msra.mxu0 0.0
        %7981 = vmatprep.subr.mxu0 0.0
        %7982 = vmatpush2.msra.mxu0 0.0
        %7983 = vmatprep.subr.mxu0 0.0
        %7984 = vmatpush2.msra.mxu0 0.0
        %7985 = vmatprep.subr.mxu0 0.0
        %7986 = vmatpush2.msra.mxu0 0.0
        %7987 = vmatprep.subr.mxu0 0.0
        %7988 = vmatpush2.msra.mxu0 0.0
        %7989 = vmatprep.subr.mxu0 0.0
        %7990 = vmatpush2.msra.mxu0 0.0
        %7991 = vmatprep.subr.mxu0 0.0
        %7992 = vmatpush2.msra.mxu0 0.0
        %7993 = vmatprep.subr.mxu0 0.0
        %7994 = vmatpush2.msra.mxu0 0.0
        %7995 = vmatprep.subr.mxu0 0.0
        %7996 = vmatpush2.msra.mxu0 0.0
        %7997 = vmatprep.subr.mxu0 0.0
        %7998 = vmatpush2.msra.mxu0 0.0
        %7999 = vmatprep.subr.mxu0 0.0
        %8000 = vmatpush2.msra.mxu0 0.0
        %8001 = vmatprep.subr.mxu0 0.0
        %8002 = vmatpush2.msra.mxu0 0.0
        %8003 = vmatprep.subr.mxu0 0.0
        %8004 = vmatpush2.msra.mxu0 0.0
        %8005 = vmatprep.subr.mxu0 0.0
        %8006 = vmatpush2.msra.mxu0 0.0
        %8007 = vmatprep.subr.mxu0 0.0
        %8008 = vmatpush2.msra.mxu0 0.0
        %8009 = vmatprep.mubr.f32.mxu0 0.0
        %v8010 = vand.u32 %v7437, 4294901760
        %8011 = vmatmul.mubr.f32.gmra.mxu0 %v8010
        %v8012 = vpop.f32.mrf.mxu0
        %v8013 = vadd.f32 %v7928, %v8012
        %v8014 = vpop.f32.mrf.mxu0
        %8015 = vmatprep.mubr.f32.mxu0 0.0
        %v8016 = vand.u32 %v7440, 4294901760
        %8017 = vmatmul.mubr.f32.gmra.mxu0 %v8016
        %v8018 = vpop.f32.mrf.mxu0
        %v8019 = vadd.f32 %v7934, %v8018
        %v8020 = vpop.f32.mrf.mxu0
        %8021 = vdwg.mxu0
        %s8022 = scalar_lea.vmem %s300, 64 [#allocation9]
        %8023 = vst [vmem:[%s8022] sm:$0xff] %v6841
        %8024 = vst [vmem:[%s8022 + $0x8] sm:$0xff] %v8013
        %8025 = vst [vmem:[%s8022 + $0x10] sm:$0xff] %v6847
        %8026 = vst [vmem:[%s8022 + $0x18] sm:$0xff] %v8019
        %s8027 = sand.u32 %s131, 1
        %s8028 = scalar_lea.sflag [#allocation4], %s8027
        %s8029 = sand.u32 %s131, 1
        %s8030 = smul.addr %s8029, 96
        %s8031 = scalar_lea.vmem [#allocation9], %s8030
        // Predicated region
        $region45: #{tpu_custom_call.1} parent=31 // pred_check
          %p8032 = pneg %p141
        $region46: #{tpu_custom_call.1} parent=31 // pred_check_branch
          %8034 = sbr.rel (%p8032) target = $region48
        $region47: #{tpu_custom_call.1} parent=31 // pred_region
          #allocation13 [shape = 'u32[6]{0}', space=smem, size = 0x18, scoped, tag = 'DMA stride descriptor']
          %s8035 = smul.u32 2, %s29
          %s8037 = ssub.s32 1536, 1536
          %8038 = vsyncadd %s8028, %s8037
          %s8039 = smul.addr %s8035, 2
          %s8040 = smul.addr %s28, 36
          %s8041 = sadd.s32 %s8039, %s8040
          %s8042 = smul.addr %s8041, 128
          %s8043 = scalar_lea.hbm %s3, %s8042
          %s8045 = sshll.u32 1, 14
          %s8046 = sxor.u32 4294967295, %s8045
          %s8049 = sshll.u32 7, 18
          %s8050 = sxor.u32 4294967295, %s8049
          %s8051 = sand.u32 0, %s8050
          %s8053 = sor.u32 %s8051, 0
          %s8054 = sshll.u32 %s8031, 4
          %s8055 = int_to_ptr.vmem [resolvable:$true] %s8054
          %8061 = sst [smem:[#allocation13]] 512
          %s8062 = scalar_lea.smem [#allocation13], 1
          %8063 = sst [smem:[%s8062]] 1536
          %s8064 = scalar_lea.smem [#allocation13], 2
          %8065 = sst [smem:[%s8064]] 2
          %s8066 = scalar_lea.smem [#allocation13], 3
          %8067 = sst [smem:[%s8066]] 256
          %s8068 = scalar_lea.smem [#allocation13], 4
          %8069 = sst [smem:[%s8068]] 256
          %s8070 = scalar_lea.smem [#allocation13], 5
          %8071 = sst [smem:[%s8070]] 16
          %8073 = dma.general %s8055, 1536, %s8043, %s8028, 131072, [#allocation13], %s8053, 0
        $region48: #{tpu_custom_call.1} parent=31 // pred_fallthru
          _
      $region32: #{tpu_custom_call.1} parent=5 // pred_fallthru
        _
      %p8074 = scmp.le.s32.totalorder 2, %s19
      // Predicated region
      $region49: #{tpu_custom_call.1} parent=5 // pred_check
        %p8075 = pneg %p8074
      $region50: #{tpu_custom_call.1} parent=5 // pred_check_branch
        %8077 = sbr.rel (%p8075) target = $region52
      $region51: #{tpu_custom_call.1} parent=5 // pred_region
        %s8078 = ssub.s32 %s19, 2
        // Predicated region
        $region53: #{tpu_custom_call.1} parent=51 // pred_check
          %p8079 = pneg %p147
        $region54: #{tpu_custom_call.1} parent=51 // pred_check_branch
          %8081 = sbr.rel (%p8079) target = $region56
        $region55: #{tpu_custom_call.1} parent=51 // pred_region
          %s8082 = sand.u32 %s132, 1
          %s8083 = scalar_lea.sflag [#allocation4], %s8082
          %s8084 = sand.u32 %s132, 1
          %s8085 = smul.addr %s8084, 96
          %s8086 = scalar_lea.vmem [#allocation9], %s8085
          %8087 = dma.done %s8083, 1536
        $region56: #{tpu_custom_call.1} parent=51 // pred_fallthru
          _
      $region52: #{tpu_custom_call.1} parent=5 // pred_fallthru
        _
    $region6: #{tpu_custom_call.1} parent=1 // loop_footer
      %s23 = sadd.s32 1, %s19
    $region7: #{tpu_custom_call.1} parent=1 // loop_footer_branch
      %18 = sbr.rel target = $region3
    $region8: #{tpu_custom_call.1} parent=1 // loop_exit
      _
    %8088 = vsyncpa [#allocation3], 1
    %s8089 = scalar_lea.sflag [#allocation3], 1
    %8090 = vsyncpa %s8089, 1
    %8091 = vsyncpa [#allocation7], 1
    %s8092 = scalar_lea.sflag [#allocation7], 1
    %8093 = vsyncpa %s8092, 1
    %8094 = vsyncpa [#allocation4], 1
    %s8095 = scalar_lea.sflag [#allocation4], 1
    %8096 = vsyncpa %s8095, 1
    %8097 = vsyncpa [#allocation5], 1
    %s8098 = scalar_lea.sflag [#allocation5], 1
    %8099 = vsyncpa %s8098, 1

</llo_original>
